<compile_context>
chip_gen: v7x
topology: tpu7x:2x2x1
jax: 0.10.0
libtpu: 0.0.40
codegen_flags: <defaults>
</compile_context>

<pallas_src>
import functools

import jax
import jax.numpy as jnp
import numpy as np
from jax.experimental import pallas as pl
from jax.experimental.pallas import tpu as pltpu

LN_EPS = 1e-5
_INV_SQRT2 = 0.7071067811865476

PARAM_ORDER = ["g1", "b1", "g2", "b2",
               "wq", "wk", "wv", "wproj", "bproj",
               "gB1", "bB1", "w11", "b11", "w12", "b12",
               "gB2", "bB2", "w21", "b21", "w22", "b22"]


def _layernorm(x, gamma, beta):
    mu = jnp.mean(x, axis=-1, keepdims=True)
    var = jnp.mean((x - mu) ** 2, axis=-1, keepdims=True)
    return (x - mu) * jax.lax.rsqrt(var + LN_EPS) * gamma + beta


def _gelu_exact(x):
    # nn.GELU() default = exact (erf) GELU
    return 0.5 * x * (1.0 + jax.lax.erf(x * _INV_SQRT2))


# ---------------------------------------------------------------------------
# Kernel
# ---------------------------------------------------------------------------
def _cablock_kernel(num_heads,
                    x1_ref, x2_ref,
                    g1_ref, b1_ref, g2_ref, b2_ref,
                    wq_ref, wk_ref, wv_ref, wproj_ref, bproj_ref,
                    gB1_ref, bB1_ref, w11_ref, b11_ref, w12_ref, b12_ref,
                    gB2_ref, bB2_ref, w21_ref, b21_ref, w22_ref, b22_ref,
                    out_ref,
                    q_scr, k_scr, v_scr, att_scr):
    Bt, N, C = x1_ref.shape
    R = Bt * N
    hd = C // num_heads
    mm_dtype = wq_ref.dtype            # bf16 if weights were cast, else f32
    f32 = jnp.float32

    # LayerNorm both streams and stack row-wise so every shared matmul sees 2R rows.
    x1n = _layernorm(x1_ref[...].reshape(R, C).astype(f32), g1_ref[...], b1_ref[...])
    x2n = _layernorm(x2_ref[...].reshape(R, C).astype(f32), g2_ref[...], b2_ref[...])
    xn = jnp.concatenate([x1n, x2n], axis=0).astype(mm_dtype)       # (2R, C)

    # q / k / v via three big-M matmuls (wq was pre-scaled by 1/sqrt(hd) offline).
    q = jnp.dot(xn, wq_ref[...], preferred_element_type=f32)        # (2R, C)
    # Cross attention: swap only the q halves (stream-2 queries first) so batch
    # b<Bt pairs q2 with (k1, v1) and b>=Bt pairs q1 with (k2, v2); the proj
    # output halves then map to the residuals in natural order.
    q_scr[:Bt, :, :] = q[R:].reshape(Bt, N, C)
    q_scr[Bt:, :, :] = q[:R].reshape(Bt, N, C)
    k_scr[...] = jnp.dot(xn, wk_ref[...],
                         preferred_element_type=f32).reshape(2 * Bt, N, C)
    v_scr[...] = jnp.dot(xn, wv_ref[...],
                         preferred_element_type=f32).reshape(2 * Bt, N, C)

    # Per-head attention, batched over (both streams x Bt); each head's output
    # goes straight into its lane window of att_scr (no list + concat).
    for h in range(num_heads):                   # static unroll over heads
        lo = h * hd
        qh = q_scr[:, :, lo:lo + hd]
        kh = k_scr[:, :, lo:lo + hd]
        vh = v_scr[:, :, lo:lo + hd]
        s = jax.lax.dot_general(qh, kh, (((2,), (2,)), ((0,), (0,))),
                                preferred_element_type=f32)          # (2Bt,N,N)
        s = s - jnp.max(s, axis=-1, keepdims=True)
        p = jnp.exp(s)
        p = p * pl.reciprocal(jnp.sum(p, axis=-1, keepdims=True), approx=True)
        att_scr[:, :, lo:lo + hd] = jax.lax.dot_general(
            p, vh, (((2,), (1,)), ((0,), (0,))),
            preferred_element_type=f32)                               # (2Bt,N,hd)

    # Shared output projection for both streams in one matmul.
    att = att_scr[...].reshape(2 * R, C).astype(mm_dtype)
    proj = jnp.dot(att, wproj_ref[...],
                   preferred_element_type=f32) + bproj_ref[...]

    # Swapped residuals of the PyTorch forward (q halves already swapped above),
    # re-reading x1/x2 here to keep their live range short.
    y1 = proj[:R] + x1_ref[...].reshape(R, C).astype(f32)   # x2att + x1
    y2 = proj[R:] + x2_ref[...].reshape(R, C).astype(f32)   # x1att + x2

    def mlp_block(y, g, b, w1, b1v, w2, b2v):
        z = _layernorm(y, g, b).astype(mm_dtype)
        hdn = _gelu_exact(jnp.dot(z, w1, preferred_element_type=f32) + b1v)
        return jnp.dot(hdn.astype(mm_dtype), w2,
                       preferred_element_type=f32) + b2v

    y1 = y1 + mlp_block(y1, gB1_ref[...], bB1_ref[...],
                        w11_ref[...], b11_ref[...], w12_ref[...], b12_ref[...])
    y2 = y2 + mlp_block(y2, gB2_ref[...], bB2_ref[...],
                        w21_ref[...], b21_ref[...], w22_ref[...], b22_ref[...])

    # Fused torch.cat([x1, x2], 2) as a single (R, 2C) slab.
    if C % 128 == 0:
        # lane-aligned halves: store directly, no concat temp
        out_ref[:, :C] = y1.astype(out_ref.dtype)
        out_ref[:, C:] = y2.astype(out_ref.dtype)
    else:
        out_ref[...] = jnp.concatenate([y1, y2], axis=-1).astype(out_ref.dtype)


# ---------------------------------------------------------------------------
# Wrapper helpers
# ---------------------------------------------------------------------------
def _vmem_budget_bytes():
    """Per-generation VMEM budget: ~96 MiB on v5e/v6e, ~48 MiB on v7x."""
    phys = 64 * 1024 * 1024            # conservative default (v7x physical)
    try:
        phys = int(pltpu.get_tpu_info().vmem_capacity_bytes)
    except Exception:
        pass
    return (phys * 3) // 4             # leave compiler headroom


def _vmem_step_bytes(bt, N, C, hidden, x_bytes, mm_bytes):
    """Rough per-step VMEM footprint estimate for tile-size selection."""
    R = bt * N
    weights = (4 * C * C + 4 * C * hidden) * mm_bytes          # single-buffered
    small = (10 * C + 2 * hidden) * 4
    io = 2 * (2 * R * C * x_bytes) + 2 * (R * 2 * C * x_bytes)  # dbl-buffered tiles
    scratch = 4 * (2 * R * C) * 4                               # q/k/v/att f32
    live = (3 * 2 * R * C * 4            # xn / q / proj transients
            + 2 * (2 * bt * N * N * 4)   # scores + probs (one head)
            + 2 * (R * hidden * 4)       # MLP hidden
            + 2 * R * C * mm_bytes)
    return weights + small + io + scratch + live


def _choose_batch_tile(B, N, C, hidden, x_bytes, mm_bytes, budget,
                       target_rows=1024, max_rows=4096):
    cands = [d for d in range(1, B + 1) if B % d == 0]
    if B > 1:
        # keep >= 2 grid steps so both v7x TensorCores get work
        cands = [d for d in cands if d <= B // 2] or [1]
    bt = 1
    for d in cands:
        if d * N > max_rows:
            break
        if _vmem_step_bytes(d, N, C, hidden, x_bytes, mm_bytes) > budget:
            break
        bt = d
        if d * N >= target_rows:
            break
    return bt


def _param_spec(arr, single_buffer):
    nd = arr.ndim
    imap = lambda b, _nd=nd: (0,) * _nd
    if single_buffer:
        try:
            # grid-invariant params: no need for double buffering
            return pl.BlockSpec(arr.shape, imap, pipeline_mode=pl.Buffered(1))
        except Exception:
            pass
    return pl.BlockSpec(arr.shape, imap)


def prepare_params(params, num_heads, matmul_dtype=jnp.bfloat16):
    """One-time parameter prep: split qkv, fold the attention scale into wq,
    cast matmul weights to matmul_dtype (LayerNorm params / biases stay f32)."""
    C = params["wqkv"].shape[0]
    hd = C // num_heads
    scale = float(hd) ** -0.5
    mm = jnp.dtype(matmul_dtype)
    wqkv = params["wqkv"].astype(jnp.float32)
    prep = {
        "g1": params["g1"], "b1": params["b1"],
        "g2": params["g2"], "b2": params["b2"],
        "wq": (wqkv[:, 0:C] * scale).astype(mm),
        "wk": wqkv[:, C:2 * C].astype(mm),
        "wv": wqkv[:, 2 * C:3 * C].astype(mm),
        "wproj": params["wproj"].astype(mm),
        "bproj": params["bproj"],
        "gB1": params["gB1"], "bB1": params["bB1"],
        "w11": params["w11"].astype(mm), "b11": params["b11"],
        "w12": params["w12"].astype(mm), "b12": params["b12"],
        "gB2": params["gB2"], "bB2": params["bB2"],
        "w21": params["w21"].astype(mm), "b21": params["b21"],
        "w22": params["w22"].astype(mm), "b22": params["b22"],
    }
    return prep


def cablock_pallas(x1, x2, prep, num_heads=8):
    B, N, C = x1.shape
    assert x2.shape == (B, N, C)
    assert C % num_heads == 0
    assert N % 8 == 0, "token count must be a multiple of 8 (sublane tiling)"

    hidden = prep["w11"].shape[1]
    mm_bytes = jnp.dtype(prep["wq"].dtype).itemsize
    x_bytes = jnp.dtype(x1.dtype).itemsize
    budget = _vmem_budget_bytes()
    bt = _choose_batch_tile(B, N, C, hidden, x_bytes, mm_bytes, budget)
    grid = (B // bt,)

    in_data_spec = pl.BlockSpec((bt, N, C), lambda b: (b, 0, 0))
    # Lane-fused cat output: one (bt*N, 2C) slab per step, reshaped in wrapper.
    out_spec = pl.BlockSpec((bt * N, 2 * C), lambda b: (b, 0))
    plist = [prep[k] for k in PARAM_ORDER]

    def build_and_run(single_buffer_params):
        grid_spec = pltpu.PrefetchScalarGridSpec(
            num_scalar_prefetch=0,
            grid=grid,
            in_specs=[in_data_spec, in_data_spec]
                     + [_param_spec(a, single_buffer_params) for a in plist],
            out_specs=out_spec,
            scratch_shapes=[pltpu.VMEM((2 * bt, N, C), jnp.float32)
                            for _ in range(4)],       # q, k, v, att
        )
        return pl.pallas_call(
            functools.partial(_cablock_kernel, num_heads),
            grid_spec=grid_spec,
            out_shape=jax.ShapeDtypeStruct((B * N, 2 * C), x1.dtype),
            compiler_params=pltpu.CompilerParams(
                dimension_semantics=("parallel",),
                vmem_limit_bytes=int(budget),
            ),
        )(x1, x2, *plist)

    try:
        out2d = build_and_run(True)
    except Exception:
        # Fallback for jax versions without single-buffer pipeline_mode support.
        out2d = build_and_run(False)
    return out2d.reshape(B, N, 2 * C)


# ---------------------------------------------------------------------------
# Pure-JAX reference and parameter init (for validation)
# ---------------------------------------------------------------------------
def cablock_reference(x1, x2, params, num_heads=8):
    B, N, C = x1.shape
    hd = C // num_heads
    scale = float(hd) ** -0.5
    p = params

    x1n = _layernorm(x1, p["g1"], p["b1"])
    x2n = _layernorm(x2, p["g2"], p["b2"])

    def split_heads(x):  # (B,N,C) -> (B,H,N,hd)
        return x.reshape(B, N, num_heads, hd).transpose(0, 2, 1, 3)

    qkv1 = x1n @ p["wqkv"]
    qkv2 = x2n @ p["wqkv"]
    q1, k1, v1 = (split_heads(qkv1[..., i * C:(i + 1) * C]) for i in range(3))
    q2, k2, v2 = (split_heads(qkv2[..., i * C:(i + 1) * C]) for i in range(3))

    def attn(q, k, v):
        s = jnp.einsum("bhnd,bhmd->bhnm", q, k) * scale
        a = jax.nn.softmax(s, axis=-1)
        o = jnp.einsum("bhnm,bhmd->bhnd", a, v)
        return o.transpose(0, 2, 1, 3).reshape(B, N, C)

    x1att = attn(q1, k2, v2) @ p["wproj"] + p["bproj"]
    x2att = attn(q2, k1, v1) @ p["wproj"] + p["bproj"]

    y1 = x2att + x1
    y2 = x1att + x2

    def mlp_block(y, g, b, w1, b1, w2, b2):
        z = _layernorm(y, g, b)
        h = jax.nn.gelu(z @ w1 + b1, approximate=False)
        return h @ w2 + b2

    y1 = y1 + mlp_block(y1, p["gB1"], p["bB1"], p["w11"], p["b11"], p["w12"], p["b12"])
    y2 = y2 + mlp_block(y2, p["gB2"], p["bB2"], p["w21"], p["b21"], p["w22"], p["b22"])
    return jnp.concatenate([y1, y2], axis=2)


def init_params(key, dim, tokens_hidden_dim):
    ks = jax.random.split(key, 8)
    f32 = jnp.float32

    def w(k, shape, s=0.02):
        return (s * jax.random.normal(k, shape)).astype(f32)

    return {
        # LayerNorm affine params: gamma=1, beta=0 (PyTorch default init)
        "g1": jnp.ones((1, dim), f32), "b1": jnp.zeros((1, dim), f32),
        "g2": jnp.ones((1, dim), f32), "b2": jnp.zeros((1, dim), f32),
        "gB1": jnp.ones((1, dim), f32), "bB1": jnp.zeros((1, dim), f32),
        "gB2": jnp.ones((1, dim), f32), "bB2": jnp.zeros((1, dim), f32),
        # Attention: qkv (no bias), proj (with bias) — stored as (in, out)
        "wqkv": w(ks[0], (dim, 3 * dim)),
        "wproj": w(ks[1], (dim, dim)),
        "bproj": w(ks[2], (1, dim), s=0.01),
        # block1 MLP
        "w11": w(ks[3], (dim, tokens_hidden_dim)),
        "b11": w(ks[4], (1, tokens_hidden_dim), s=0.01),
        "w12": w(ks[5], (tokens_hidden_dim, dim)),
        "b12": jnp.zeros((1, dim), f32),
        # block2 MLP
        "w21": w(ks[6], (dim, tokens_hidden_dim)),
        "b21": jnp.zeros((1, tokens_hidden_dim), f32),
        "w22": w(ks[7], (tokens_hidden_dim, dim)),
        "b22": jnp.zeros((1, dim), f32),
    }


if __name__ == "__main__":
    B, N, C = 2, 8, 32          # small shapes; dim == hidden_dim as in CABlock
    NUM_HEADS = 8               # Attention default; head_dim = 4
    TOKENS_HIDDEN = 16

    key = jax.random.PRNGKey(0)
    kx1, kx2, kp = jax.random.split(key, 3)
    x1 = jax.random.normal(kx1, (B, N, C), dtype=jnp.float32)
    x2 = jax.random.normal(kx2, (B, N, C), dtype=jnp.float32)
    params = init_params(kp, C, TOKENS_HIDDEN)

    ref = jax.block_until_ready(cablock_reference(x1, x2, params, num_heads=NUM_HEADS))

    # Default (bf16 matmul inputs, f32 accumulation) path.
    prep_bf16 = prepare_params(params, NUM_HEADS, matmul_dtype=jnp.bfloat16)
    out = jax.block_until_ready(cablock_pallas(x1, x2, prep_bf16, num_heads=NUM_HEADS))
    assert out.shape == (B, N, 2 * C)
    np.testing.assert_allclose(np.asarray(out), np.asarray(ref), rtol=3e-2, atol=3e-2)

    # f32 matmul path — tighter check (approx reciprocal -> slightly loosened).
    prep_f32 = prepare_params(params, NUM_HEADS, matmul_dtype=jnp.float32)
    out_f32 = jax.block_until_ready(cablock_pallas(x1, x2, prep_f32, num_heads=NUM_HEADS))
    np.testing.assert_allclose(np.asarray(out_f32), np.asarray(ref), rtol=5e-3, atol=5e-3)

    print("KERNEL_OK")
</pallas_src>

<mosaic_0001>
module attributes {stable_mosaic.version = 11 : i64} {
  func.func @_cablock_kernel(%arg0: i32, %arg1: memref<1x8x32xf32, #tpu.memory_space<vmem>>, %arg2: memref<1x8x32xf32, #tpu.memory_space<vmem>>, %arg3: memref<1x32xf32, #tpu.memory_space<vmem>>, %arg4: memref<1x32xf32, #tpu.memory_space<vmem>>, %arg5: memref<1x32xf32, #tpu.memory_space<vmem>>, %arg6: memref<1x32xf32, #tpu.memory_space<vmem>>, %arg7: memref<32x32xbf16, #tpu.memory_space<vmem>>, %arg8: memref<32x32xbf16, #tpu.memory_space<vmem>>, %arg9: memref<32x32xbf16, #tpu.memory_space<vmem>>, %arg10: memref<32x32xbf16, #tpu.memory_space<vmem>>, %arg11: memref<1x32xf32, #tpu.memory_space<vmem>>, %arg12: memref<1x32xf32, #tpu.memory_space<vmem>>, %arg13: memref<1x32xf32, #tpu.memory_space<vmem>>, %arg14: memref<32x16xbf16, #tpu.memory_space<vmem>>, %arg15: memref<1x16xf32, #tpu.memory_space<vmem>>, %arg16: memref<16x32xbf16, #tpu.memory_space<vmem>>, %arg17: memref<1x32xf32, #tpu.memory_space<vmem>>, %arg18: memref<1x32xf32, #tpu.memory_space<vmem>>, %arg19: memref<1x32xf32, #tpu.memory_space<vmem>>, %arg20: memref<32x16xbf16, #tpu.memory_space<vmem>>, %arg21: memref<1x16xf32, #tpu.memory_space<vmem>>, %arg22: memref<16x32xbf16, #tpu.memory_space<vmem>>, %arg23: memref<1x32xf32, #tpu.memory_space<vmem>>, %arg24: memref<8x64xf32, #tpu.memory_space<vmem>>, %arg25: memref<2x8x32xf32, #tpu.memory_space<vmem>>, %arg26: memref<2x8x32xf32, #tpu.memory_space<vmem>>, %arg27: memref<2x8x32xf32, #tpu.memory_space<vmem>>, %arg28: memref<2x8x32xf32, #tpu.memory_space<vmem>>) attributes {dimension_semantics = [#tpu.dimension_semantics<parallel>], iteration_bounds = array<i64: 2>, scalar_prefetch = 0 : i64, scratch_operands = 4 : i64, tpu.core_type = #tpu.core_type<tc>, window_params = [{transform_indices = @transform_0, window_bounds = array<i64: 1, 8, 32>}, {transform_indices = @transform_1, window_bounds = array<i64: 1, 8, 32>}, {pipeline_mode = #tpu.pipeline_mode<synchronous>, transform_indices = @transform_2, window_bounds = array<i64: 1, 32>}, {pipeline_mode = #tpu.pipeline_mode<synchronous>, transform_indices = @transform_3, window_bounds = array<i64: 1, 32>}, {pipeline_mode = #tpu.pipeline_mode<synchronous>, transform_indices = @transform_4, window_bounds = array<i64: 1, 32>}, {pipeline_mode = #tpu.pipeline_mode<synchronous>, transform_indices = @transform_5, window_bounds = array<i64: 1, 32>}, {pipeline_mode = #tpu.pipeline_mode<synchronous>, transform_indices = @transform_6, window_bounds = array<i64: 32, 32>}, {pipeline_mode = #tpu.pipeline_mode<synchronous>, transform_indices = @transform_7, window_bounds = array<i64: 32, 32>}, {pipeline_mode = #tpu.pipeline_mode<synchronous>, transform_indices = @transform_8, window_bounds = array<i64: 32, 32>}, {pipeline_mode = #tpu.pipeline_mode<synchronous>, transform_indices = @transform_9, window_bounds = array<i64: 32, 32>}, {pipeline_mode = #tpu.pipeline_mode<synchronous>, transform_indices = @transform_10, window_bounds = array<i64: 1, 32>}, {pipeline_mode = #tpu.pipeline_mode<synchronous>, transform_indices = @transform_11, window_bounds = array<i64: 1, 32>}, {pipeline_mode = #tpu.pipeline_mode<synchronous>, transform_indices = @transform_12, window_bounds = array<i64: 1, 32>}, {pipeline_mode = #tpu.pipeline_mode<synchronous>, transform_indices = @transform_13, window_bounds = array<i64: 32, 16>}, {pipeline_mode = #tpu.pipeline_mode<synchronous>, transform_indices = @transform_14, window_bounds = array<i64: 1, 16>}, {pipeline_mode = #tpu.pipeline_mode<synchronous>, transform_indices = @transform_15, window_bounds = array<i64: 16, 32>}, {pipeline_mode = #tpu.pipeline_mode<synchronous>, transform_indices = @transform_16, window_bounds = array<i64: 1, 32>}, {pipeline_mode = #tpu.pipeline_mode<synchronous>, transform_indices = @transform_17, window_bounds = array<i64: 1, 32>}, {pipeline_mode = #tpu.pipeline_mode<synchronous>, transform_indices = @transform_18, window_bounds = array<i64: 1, 32>}, {pipeline_mode = #tpu.pipeline_mode<synchronous>, transform_indices = @transform_19, window_bounds = array<i64: 32, 16>}, {pipeline_mode = #tpu.pipeline_mode<synchronous>, transform_indices = @transform_20, window_bounds = array<i64: 1, 16>}, {pipeline_mode = #tpu.pipeline_mode<synchronous>, transform_indices = @transform_21, window_bounds = array<i64: 16, 32>}, {pipeline_mode = #tpu.pipeline_mode<synchronous>, transform_indices = @transform_22, window_bounds = array<i64: 1, 32>}, {transform_indices = @transform_23, window_bounds = array<i64: 8, 64>}]} {
    %c0 = arith.constant 0 : index
    %c0_0 = arith.constant 0 : index
    %c0_1 = arith.constant 0 : index
    %0 = vector.load %arg1[%c0, %c0_0, %c0_1] : memref<1x8x32xf32, #tpu.memory_space<vmem>>, vector<1x8x32xf32>
    %1 = vector.shape_cast %0 : vector<1x8x32xf32> to vector<8x32xf32>
    %c0_2 = arith.constant 0 : index
    %c0_3 = arith.constant 0 : index
    %2 = vector.load %arg3[%c0_2, %c0_3] : memref<1x32xf32, #tpu.memory_space<vmem>>, vector<1x32xf32>
    %c0_4 = arith.constant 0 : index
    %c0_5 = arith.constant 0 : index
    %3 = vector.load %arg4[%c0_4, %c0_5] : memref<1x32xf32, #tpu.memory_space<vmem>>, vector<1x32xf32>
    %cst = arith.constant dense<0.000000e+00> : vector<8xf32>
    %4 = vector.multi_reduction <add>, %1, %cst [1] : vector<8x32xf32> to vector<8xf32>
    %5 = vector.shape_cast %4 : vector<8xf32> to vector<8x1xf32>
    %cst_6 = arith.constant 3.200000e+01 : f32
    %6 = vector.broadcast %cst_6 : f32 to vector<8x1xf32>
    %7 = arith.divf %5, %6 : vector<8x1xf32>
    %8 = vector.broadcast %7 : vector<8x1xf32> to vector<8x32xf32>
    %9 = arith.subf %1, %8 : vector<8x32xf32>
    %10 = arith.mulf %9, %9 : vector<8x32xf32>
    %cst_7 = arith.constant dense<0.000000e+00> : vector<8xf32>
    %11 = vector.multi_reduction <add>, %10, %cst_7 [1] : vector<8x32xf32> to vector<8xf32>
    %12 = vector.shape_cast %11 : vector<8xf32> to vector<8x1xf32>
    %cst_8 = arith.constant 3.200000e+01 : f32
    %13 = vector.broadcast %cst_8 : f32 to vector<8x1xf32>
    %14 = arith.divf %12, %13 : vector<8x1xf32>
    %15 = vector.broadcast %7 : vector<8x1xf32> to vector<8x32xf32>
    %16 = arith.subf %1, %15 : vector<8x32xf32>
    %cst_9 = arith.constant 9.99999974E-6 : f32
    %17 = vector.broadcast %cst_9 : f32 to vector<8x1xf32>
    %18 = arith.addf %14, %17 : vector<8x1xf32>
    %19 = math.rsqrt %18 : vector<8x1xf32>
    %20 = vector.broadcast %19 : vector<8x1xf32> to vector<8x32xf32>
    %21 = arith.mulf %16, %20 : vector<8x32xf32>
    %22 = vector.broadcast %2 : vector<1x32xf32> to vector<8x32xf32>
    %23 = arith.mulf %21, %22 : vector<8x32xf32>
    %24 = vector.broadcast %3 : vector<1x32xf32> to vector<8x32xf32>
    %25 = arith.addf %23, %24 : vector<8x32xf32>
    %c0_10 = arith.constant 0 : index
    %c0_11 = arith.constant 0 : index
    %c0_12 = arith.constant 0 : index
    %26 = vector.load %arg2[%c0_10, %c0_11, %c0_12] : memref<1x8x32xf32, #tpu.memory_space<vmem>>, vector<1x8x32xf32>
    %27 = vector.shape_cast %26 : vector<1x8x32xf32> to vector<8x32xf32>
    %c0_13 = arith.constant 0 : index
    %c0_14 = arith.constant 0 : index
    %28 = vector.load %arg5[%c0_13, %c0_14] : memref<1x32xf32, #tpu.memory_space<vmem>>, vector<1x32xf32>
    %c0_15 = arith.constant 0 : index
    %c0_16 = arith.constant 0 : index
    %29 = vector.load %arg6[%c0_15, %c0_16] : memref<1x32xf32, #tpu.memory_space<vmem>>, vector<1x32xf32>
    %cst_17 = arith.constant dense<0.000000e+00> : vector<8xf32>
    %30 = vector.multi_reduction <add>, %27, %cst_17 [1] : vector<8x32xf32> to vector<8xf32>
    %31 = vector.shape_cast %30 : vector<8xf32> to vector<8x1xf32>
    %cst_18 = arith.constant 3.200000e+01 : f32
    %32 = vector.broadcast %cst_18 : f32 to vector<8x1xf32>
    %33 = arith.divf %31, %32 : vector<8x1xf32>
    %34 = vector.broadcast %33 : vector<8x1xf32> to vector<8x32xf32>
    %35 = arith.subf %27, %34 : vector<8x32xf32>
    %36 = arith.mulf %35, %35 : vector<8x32xf32>
    %cst_19 = arith.constant dense<0.000000e+00> : vector<8xf32>
    %37 = vector.multi_reduction <add>, %36, %cst_19 [1] : vector<8x32xf32> to vector<8xf32>
    %38 = vector.shape_cast %37 : vector<8xf32> to vector<8x1xf32>
    %cst_20 = arith.constant 3.200000e+01 : f32
    %39 = vector.broadcast %cst_20 : f32 to vector<8x1xf32>
    %40 = arith.divf %38, %39 : vector<8x1xf32>
    %41 = vector.broadcast %33 : vector<8x1xf32> to vector<8x32xf32>
    %42 = arith.subf %27, %41 : vector<8x32xf32>
    %cst_21 = arith.constant 9.99999974E-6 : f32
    %43 = vector.broadcast %cst_21 : f32 to vector<8x1xf32>
    %44 = arith.addf %40, %43 : vector<8x1xf32>
    %45 = math.rsqrt %44 : vector<8x1xf32>
    %46 = vector.broadcast %45 : vector<8x1xf32> to vector<8x32xf32>
    %47 = arith.mulf %42, %46 : vector<8x32xf32>
    %48 = vector.broadcast %28 : vector<1x32xf32> to vector<8x32xf32>
    %49 = arith.mulf %47, %48 : vector<8x32xf32>
    %50 = vector.broadcast %29 : vector<1x32xf32> to vector<8x32xf32>
    %51 = arith.addf %49, %50 : vector<8x32xf32>
    %52 = tpu.concatenate %25, %51 in 0 : vector<8x32xf32>, vector<8x32xf32> -> vector<16x32xf32>
    %53 = arith.truncf %52 : vector<16x32xf32> to vector<16x32xbf16>
    %c0_22 = arith.constant 0 : index
    %c0_23 = arith.constant 0 : index
    %54 = vector.load %arg7[%c0_22, %c0_23] : memref<32x32xbf16, #tpu.memory_space<vmem>>, vector<32x32xbf16>
    %cst_24 = arith.constant dense<0.000000e+00> : vector<16x32xf32>
    %55 = tpu.matmul %53, %54, %cst_24 {dimension_numbers = #tpu.dot_dimension_numbers<[1], [0], [0], [1], [0, 0, 1, 1], [], []>} : vector<16x32xbf16>, vector<32x32xbf16>, vector<16x32xf32> -> vector<16x32xf32>
    %56 = vector.extract_strided_slice %55 {offsets = [8, 0], sizes = [8, 32], strides = [1, 1]} : vector<16x32xf32> to vector<8x32xf32>
    %57 = vector.shape_cast %56 : vector<8x32xf32> to vector<1x8x32xf32>
    %c0_25 = arith.constant 0 : index
    %c0_26 = arith.constant 0 : index
    %c0_27 = arith.constant 0 : index
    %58 = vector.load %arg25[%c0_25, %c0_26, %c0_27] : memref<2x8x32xf32, #tpu.memory_space<vmem>>, vector<1x8x32xf32>
    tpu.vector_store %arg25[%c0_25, %c0_26, %c0_27], %57 {strides = array<i32>} : memref<2x8x32xf32, #tpu.memory_space<vmem>>, vector<1x8x32xf32>,
    %59 = vector.extract_strided_slice %55 {offsets = [0, 0], sizes = [8, 32], strides = [1, 1]} : vector<16x32xf32> to vector<8x32xf32>
    %60 = vector.shape_cast %59 : vector<8x32xf32> to vector<1x8x32xf32>
    %c1 = arith.constant 1 : index
    %c0_28 = arith.constant 0 : index
    %c0_29 = arith.constant 0 : index
    %61 = vector.load %arg25[%c1, %c0_28, %c0_29] : memref<2x8x32xf32, #tpu.memory_space<vmem>>, vector<1x8x32xf32>
    tpu.vector_store %arg25[%c1, %c0_28, %c0_29], %60 {strides = array<i32>} : memref<2x8x32xf32, #tpu.memory_space<vmem>>, vector<1x8x32xf32>,
    %c0_30 = arith.constant 0 : index
    %c0_31 = arith.constant 0 : index
    %62 = vector.load %arg8[%c0_30, %c0_31] : memref<32x32xbf16, #tpu.memory_space<vmem>>, vector<32x32xbf16>
    %cst_32 = arith.constant dense<0.000000e+00> : vector<16x32xf32>
    %63 = tpu.matmul %53, %62, %cst_32 {dimension_numbers = #tpu.dot_dimension_numbers<[1], [0], [0], [1], [0, 0, 1, 1], [], []>} : vector<16x32xbf16>, vector<32x32xbf16>, vector<16x32xf32> -> vector<16x32xf32>
    %64 = vector.shape_cast %63 : vector<16x32xf32> to vector<2x8x32xf32>
    %c0_33 = arith.constant 0 : index
    %c0_34 = arith.constant 0 : index
    %c0_35 = arith.constant 0 : index
    %65 = vector.load %arg26[%c0_33, %c0_34, %c0_35] : memref<2x8x32xf32, #tpu.memory_space<vmem>>, vector<2x8x32xf32>
    tpu.vector_store %arg26[%c0_33, %c0_34, %c0_35], %64 {strides = array<i32>} : memref<2x8x32xf32, #tpu.memory_space<vmem>>, vector<2x8x32xf32>,
    %c0_36 = arith.constant 0 : index
    %c0_37 = arith.constant 0 : index
    %66 = vector.load %arg9[%c0_36, %c0_37] : memref<32x32xbf16, #tpu.memory_space<vmem>>, vector<32x32xbf16>
    %cst_38 = arith.constant dense<0.000000e+00> : vector<16x32xf32>
    %67 = tpu.matmul %53, %66, %cst_38 {dimension_numbers = #tpu.dot_dimension_numbers<[1], [0], [0], [1], [0, 0, 1, 1], [], []>} : vector<16x32xbf16>, vector<32x32xbf16>, vector<16x32xf32> -> vector<16x32xf32>
    %68 = vector.shape_cast %67 : vector<16x32xf32> to vector<2x8x32xf32>
    %c0_39 = arith.constant 0 : index
    %c0_40 = arith.constant 0 : index
    %c0_41 = arith.constant 0 : index
    %69 = vector.load %arg27[%c0_39, %c0_40, %c0_41] : memref<2x8x32xf32, #tpu.memory_space<vmem>>, vector<2x8x32xf32>
    tpu.vector_store %arg27[%c0_39, %c0_40, %c0_41], %68 {strides = array<i32>} : memref<2x8x32xf32, #tpu.memory_space<vmem>>, vector<2x8x32xf32>,
    %c0_42 = arith.constant 0 : index
    %c0_43 = arith.constant 0 : index
    %c0_44 = arith.constant 0 : index
    %70 = vector.load %arg25[%c0_42, %c0_43, %c0_44] : memref<2x8x32xf32, #tpu.memory_space<vmem>>, vector<2x8x4xf32>
    %c0_45 = arith.constant 0 : index
    %c0_46 = arith.constant 0 : index
    %c0_47 = arith.constant 0 : index
    %71 = vector.load %arg26[%c0_45, %c0_46, %c0_47] : memref<2x8x32xf32, #tpu.memory_space<vmem>>, vector<2x8x4xf32>
    %c0_48 = arith.constant 0 : index
    %c0_49 = arith.constant 0 : index
    %c0_50 = arith.constant 0 : index
    %72 = vector.load %arg27[%c0_48, %c0_49, %c0_50] : memref<2x8x32xf32, #tpu.memory_space<vmem>>, vector<2x8x4xf32>
    %cst_51 = arith.constant dense<0.000000e+00> : vector<2x8x8xf32>
    %73 = tpu.matmul %70, %71, %cst_51 {dimension_numbers = #tpu.dot_dimension_numbers<[2], [2], [1], [1], [0, 0, 0, 1, 1, 1], [0], [0]>} : vector<2x8x4xf32>, vector<2x8x4xf32>, vector<2x8x8xf32> -> vector<2x8x8xf32>
    %cst_52 = arith.constant dense<0xFF800000> : vector<2x8xf32>
    %74 = vector.multi_reduction <maximumf>, %73, %cst_52 [2] : vector<2x8x8xf32> to vector<2x8xf32>
    %75 = vector.shape_cast %74 : vector<2x8xf32> to vector<2x8x1xf32>
    %76 = vector.broadcast %75 : vector<2x8x1xf32> to vector<2x8x8xf32>
    %77 = arith.subf %73, %76 : vector<2x8x8xf32>
    %78 = math.exp %77 : vector<2x8x8xf32>
    %cst_53 = arith.constant dense<0.000000e+00> : vector<2x8xf32>
    %79 = vector.multi_reduction <add>, %78, %cst_53 [2] : vector<2x8x8xf32> to vector<2x8xf32>
    %80 = vector.shape_cast %79 : vector<2x8xf32> to vector<2x8x1xf32>
    %81 = tpu.reciprocal %80 {approx = true} : vector<2x8x1xf32> -> vector<2x8x1xf32>
    %82 = vector.broadcast %81 : vector<2x8x1xf32> to vector<2x8x8xf32>
    %83 = arith.mulf %78, %82 : vector<2x8x8xf32>
    %cst_54 = arith.constant dense<0.000000e+00> : vector<2x8x4xf32>
    %84 = tpu.matmul %83, %72, %cst_54 {dimension_numbers = #tpu.dot_dimension_numbers<[2], [1], [1], [2], [0, 0, 0, 1, 1, 2], [0], [0]>} : vector<2x8x8xf32>, vector<2x8x4xf32>, vector<2x8x4xf32> -> vector<2x8x4xf32>
    %c0_55 = arith.constant 0 : index
    %c0_56 = arith.constant 0 : index
    %c0_57 = arith.constant 0 : index
    %85 = vector.load %arg28[%c0_55, %c0_56, %c0_57] : memref<2x8x32xf32, #tpu.memory_space<vmem>>, vector<2x8x4xf32>
    tpu.vector_store %arg28[%c0_55, %c0_56, %c0_57], %84 {strides = array<i32>} : memref<2x8x32xf32, #tpu.memory_space<vmem>>, vector<2x8x4xf32>,
    %c0_58 = arith.constant 0 : index
    %c0_59 = arith.constant 0 : index
    %c4 = arith.constant 4 : index
    %86 = vector.load %arg25[%c0_58, %c0_59, %c4] : memref<2x8x32xf32, #tpu.memory_space<vmem>>, vector<2x8x4xf32>
    %c0_60 = arith.constant 0 : index
    %c0_61 = arith.constant 0 : index
    %c4_62 = arith.constant 4 : index
    %87 = vector.load %arg26[%c0_60, %c0_61, %c4_62] : memref<2x8x32xf32, #tpu.memory_space<vmem>>, vector<2x8x4xf32>
    %c0_63 = arith.constant 0 : index
    %c0_64 = arith.constant 0 : index
    %c4_65 = arith.constant 4 : index
    %88 = vector.load %arg27[%c0_63, %c0_64, %c4_65] : memref<2x8x32xf32, #tpu.memory_space<vmem>>, vector<2x8x4xf32>
    %cst_66 = arith.constant dense<0.000000e+00> : vector<2x8x8xf32>
    %89 = tpu.matmul %86, %87, %cst_66 {dimension_numbers = #tpu.dot_dimension_numbers<[2], [2], [1], [1], [0, 0, 0, 1, 1, 1], [0], [0]>} : vector<2x8x4xf32>, vector<2x8x4xf32>, vector<2x8x8xf32> -> vector<2x8x8xf32>
    %cst_67 = arith.constant dense<0xFF800000> : vector<2x8xf32>
    %90 = vector.multi_reduction <maximumf>, %89, %cst_67 [2] : vector<2x8x8xf32> to vector<2x8xf32>
    %91 = vector.shape_cast %90 : vector<2x8xf32> to vector<2x8x1xf32>
    %92 = vector.broadcast %91 : vector<2x8x1xf32> to vector<2x8x8xf32>
    %93 = arith.subf %89, %92 : vector<2x8x8xf32>
    %94 = math.exp %93 : vector<2x8x8xf32>
    %cst_68 = arith.constant dense<0.000000e+00> : vector<2x8xf32>
    %95 = vector.multi_reduction <add>, %94, %cst_68 [2] : vector<2x8x8xf32> to vector<2x8xf32>
    %96 = vector.shape_cast %95 : vector<2x8xf32> to vector<2x8x1xf32>
    %97 = tpu.reciprocal %96 {approx = true} : vector<2x8x1xf32> -> vector<2x8x1xf32>
    %98 = vector.broadcast %97 : vector<2x8x1xf32> to vector<2x8x8xf32>
    %99 = arith.mulf %94, %98 : vector<2x8x8xf32>
    %cst_69 = arith.constant dense<0.000000e+00> : vector<2x8x4xf32>
    %100 = tpu.matmul %99, %88, %cst_69 {dimension_numbers = #tpu.dot_dimension_numbers<[2], [1], [1], [2], [0, 0, 0, 1, 1, 2], [0], [0]>} : vector<2x8x8xf32>, vector<2x8x4xf32>, vector<2x8x4xf32> -> vector<2x8x4xf32>
    %c0_70 = arith.constant 0 : index
    %c0_71 = arith.constant 0 : index
    %c4_72 = arith.constant 4 : index
    %101 = vector.load %arg28[%c0_70, %c0_71, %c4_72] : memref<2x8x32xf32, #tpu.memory_space<vmem>>, vector<2x8x4xf32>
    tpu.vector_store %arg28[%c0_70, %c0_71, %c4_72], %100 {strides = array<i32>} : memref<2x8x32xf32, #tpu.memory_space<vmem>>, vector<2x8x4xf32>,
    %c0_73 = arith.constant 0 : index
    %c0_74 = arith.constant 0 : index
    %c8 = arith.constant 8 : index
    %102 = vector.load %arg25[%c0_73, %c0_74, %c8] : memref<2x8x32xf32, #tpu.memory_space<vmem>>, vector<2x8x4xf32>
    %c0_75 = arith.constant 0 : index
    %c0_76 = arith.constant 0 : index
    %c8_77 = arith.constant 8 : index
    %103 = vector.load %arg26[%c0_75, %c0_76, %c8_77] : memref<2x8x32xf32, #tpu.memory_space<vmem>>, vector<2x8x4xf32>
    %c0_78 = arith.constant 0 : index
    %c0_79 = arith.constant 0 : index
    %c8_80 = arith.constant 8 : index
    %104 = vector.load %arg27[%c0_78, %c0_79, %c8_80] : memref<2x8x32xf32, #tpu.memory_space<vmem>>, vector<2x8x4xf32>
    %cst_81 = arith.constant dense<0.000000e+00> : vector<2x8x8xf32>
    %105 = tpu.matmul %102, %103, %cst_81 {dimension_numbers = #tpu.dot_dimension_numbers<[2], [2], [1], [1], [0, 0, 0, 1, 1, 1], [0], [0]>} : vector<2x8x4xf32>, vector<2x8x4xf32>, vector<2x8x8xf32> -> vector<2x8x8xf32>
    %cst_82 = arith.constant dense<0xFF800000> : vector<2x8xf32>
    %106 = vector.multi_reduction <maximumf>, %105, %cst_82 [2] : vector<2x8x8xf32> to vector<2x8xf32>
    %107 = vector.shape_cast %106 : vector<2x8xf32> to vector<2x8x1xf32>
    %108 = vector.broadcast %107 : vector<2x8x1xf32> to vector<2x8x8xf32>
    %109 = arith.subf %105, %108 : vector<2x8x8xf32>
    %110 = math.exp %109 : vector<2x8x8xf32>
    %cst_83 = arith.constant dense<0.000000e+00> : vector<2x8xf32>
    %111 = vector.multi_reduction <add>, %110, %cst_83 [2] : vector<2x8x8xf32> to vector<2x8xf32>
    %112 = vector.shape_cast %111 : vector<2x8xf32> to vector<2x8x1xf32>
    %113 = tpu.reciprocal %112 {approx = true} : vector<2x8x1xf32> -> vector<2x8x1xf32>
    %114 = vector.broadcast %113 : vector<2x8x1xf32> to vector<2x8x8xf32>
    %115 = arith.mulf %110, %114 : vector<2x8x8xf32>
    %cst_84 = arith.constant dense<0.000000e+00> : vector<2x8x4xf32>
    %116 = tpu.matmul %115, %104, %cst_84 {dimension_numbers = #tpu.dot_dimension_numbers<[2], [1], [1], [2], [0, 0, 0, 1, 1, 2], [0], [0]>} : vector<2x8x8xf32>, vector<2x8x4xf32>, vector<2x8x4xf32> -> vector<2x8x4xf32>
    %c0_85 = arith.constant 0 : index
    %c0_86 = arith.constant 0 : index
    %c8_87 = arith.constant 8 : index
    %117 = vector.load %arg28[%c0_85, %c0_86, %c8_87] : memref<2x8x32xf32, #tpu.memory_space<vmem>>, vector<2x8x4xf32>
    tpu.vector_store %arg28[%c0_85, %c0_86, %c8_87], %116 {strides = array<i32>} : memref<2x8x32xf32, #tpu.memory_space<vmem>>, vector<2x8x4xf32>,
    %c0_88 = arith.constant 0 : index
    %c0_89 = arith.constant 0 : index
    %c12 = arith.constant 12 : index
    %118 = vector.load %arg25[%c0_88, %c0_89, %c12] : memref<2x8x32xf32, #tpu.memory_space<vmem>>, vector<2x8x4xf32>
    %c0_90 = arith.constant 0 : index
    %c0_91 = arith.constant 0 : index
    %c12_92 = arith.constant 12 : index
    %119 = vector.load %arg26[%c0_90, %c0_91, %c12_92] : memref<2x8x32xf32, #tpu.memory_space<vmem>>, vector<2x8x4xf32>
    %c0_93 = arith.constant 0 : index
    %c0_94 = arith.constant 0 : index
    %c12_95 = arith.constant 12 : index
    %120 = vector.load %arg27[%c0_93, %c0_94, %c12_95] : memref<2x8x32xf32, #tpu.memory_space<vmem>>, vector<2x8x4xf32>
    %cst_96 = arith.constant dense<0.000000e+00> : vector<2x8x8xf32>
    %121 = tpu.matmul %118, %119, %cst_96 {dimension_numbers = #tpu.dot_dimension_numbers<[2], [2], [1], [1], [0, 0, 0, 1, 1, 1], [0], [0]>} : vector<2x8x4xf32>, vector<2x8x4xf32>, vector<2x8x8xf32> -> vector<2x8x8xf32>
    %cst_97 = arith.constant dense<0xFF800000> : vector<2x8xf32>
    %122 = vector.multi_reduction <maximumf>, %121, %cst_97 [2] : vector<2x8x8xf32> to vector<2x8xf32>
    %123 = vector.shape_cast %122 : vector<2x8xf32> to vector<2x8x1xf32>
    %124 = vector.broadcast %123 : vector<2x8x1xf32> to vector<2x8x8xf32>
    %125 = arith.subf %121, %124 : vector<2x8x8xf32>
    %126 = math.exp %125 : vector<2x8x8xf32>
    %cst_98 = arith.constant dense<0.000000e+00> : vector<2x8xf32>
    %127 = vector.multi_reduction <add>, %126, %cst_98 [2] : vector<2x8x8xf32> to vector<2x8xf32>
    %128 = vector.shape_cast %127 : vector<2x8xf32> to vector<2x8x1xf32>
    %129 = tpu.reciprocal %128 {approx = true} : vector<2x8x1xf32> -> vector<2x8x1xf32>
    %130 = vector.broadcast %129 : vector<2x8x1xf32> to vector<2x8x8xf32>
    %131 = arith.mulf %126, %130 : vector<2x8x8xf32>
    %cst_99 = arith.constant dense<0.000000e+00> : vector<2x8x4xf32>
    %132 = tpu.matmul %131, %120, %cst_99 {dimension_numbers = #tpu.dot_dimension_numbers<[2], [1], [1], [2], [0, 0, 0, 1, 1, 2], [0], [0]>} : vector<2x8x8xf32>, vector<2x8x4xf32>, vector<2x8x4xf32> -> vector<2x8x4xf32>
    %c0_100 = arith.constant 0 : index
    %c0_101 = arith.constant 0 : index
    %c12_102 = arith.constant 12 : index
    %133 = vector.load %arg28[%c0_100, %c0_101, %c12_102] : memref<2x8x32xf32, #tpu.memory_space<vmem>>, vector<2x8x4xf32>
    tpu.vector_store %arg28[%c0_100, %c0_101, %c12_102], %132 {strides = array<i32>} : memref<2x8x32xf32, #tpu.memory_space<vmem>>, vector<2x8x4xf32>,
    %c0_103 = arith.constant 0 : index
    %c0_104 = arith.constant 0 : index
    %c16 = arith.constant 16 : index
    %134 = vector.load %arg25[%c0_103, %c0_104, %c16] : memref<2x8x32xf32, #tpu.memory_space<vmem>>, vector<2x8x4xf32>
    %c0_105 = arith.constant 0 : index
    %c0_106 = arith.constant 0 : index
    %c16_107 = arith.constant 16 : index
    %135 = vector.load %arg26[%c0_105, %c0_106, %c16_107] : memref<2x8x32xf32, #tpu.memory_space<vmem>>, vector<2x8x4xf32>
    %c0_108 = arith.constant 0 : index
    %c0_109 = arith.constant 0 : index
    %c16_110 = arith.constant 16 : index
    %136 = vector.load %arg27[%c0_108, %c0_109, %c16_110] : memref<2x8x32xf32, #tpu.memory_space<vmem>>, vector<2x8x4xf32>
    %cst_111 = arith.constant dense<0.000000e+00> : vector<2x8x8xf32>
    %137 = tpu.matmul %134, %135, %cst_111 {dimension_numbers = #tpu.dot_dimension_numbers<[2], [2], [1], [1], [0, 0, 0, 1, 1, 1], [0], [0]>} : vector<2x8x4xf32>, vector<2x8x4xf32>, vector<2x8x8xf32> -> vector<2x8x8xf32>
    %cst_112 = arith.constant dense<0xFF800000> : vector<2x8xf32>
    %138 = vector.multi_reduction <maximumf>, %137, %cst_112 [2] : vector<2x8x8xf32> to vector<2x8xf32>
    %139 = vector.shape_cast %138 : vector<2x8xf32> to vector<2x8x1xf32>
    %140 = vector.broadcast %139 : vector<2x8x1xf32> to vector<2x8x8xf32>
    %141 = arith.subf %137, %140 : vector<2x8x8xf32>
    %142 = math.exp %141 : vector<2x8x8xf32>
    %cst_113 = arith.constant dense<0.000000e+00> : vector<2x8xf32>
    %143 = vector.multi_reduction <add>, %142, %cst_113 [2] : vector<2x8x8xf32> to vector<2x8xf32>
    %144 = vector.shape_cast %143 : vector<2x8xf32> to vector<2x8x1xf32>
    %145 = tpu.reciprocal %144 {approx = true} : vector<2x8x1xf32> -> vector<2x8x1xf32>
    %146 = vector.broadcast %145 : vector<2x8x1xf32> to vector<2x8x8xf32>
    %147 = arith.mulf %142, %146 : vector<2x8x8xf32>
    %cst_114 = arith.constant dense<0.000000e+00> : vector<2x8x4xf32>
    %148 = tpu.matmul %147, %136, %cst_114 {dimension_numbers = #tpu.dot_dimension_numbers<[2], [1], [1], [2], [0, 0, 0, 1, 1, 2], [0], [0]>} : vector<2x8x8xf32>, vector<2x8x4xf32>, vector<2x8x4xf32> -> vector<2x8x4xf32>
    %c0_115 = arith.constant 0 : index
    %c0_116 = arith.constant 0 : index
    %c16_117 = arith.constant 16 : index
    %149 = vector.load %arg28[%c0_115, %c0_116, %c16_117] : memref<2x8x32xf32, #tpu.memory_space<vmem>>, vector<2x8x4xf32>
    tpu.vector_store %arg28[%c0_115, %c0_116, %c16_117], %148 {strides = array<i32>} : memref<2x8x32xf32, #tpu.memory_space<vmem>>, vector<2x8x4xf32>,
    %c0_118 = arith.constant 0 : index
    %c0_119 = arith.constant 0 : index
    %c20 = arith.constant 20 : index
    %150 = vector.load %arg25[%c0_118, %c0_119, %c20] : memref<2x8x32xf32, #tpu.memory_space<vmem>>, vector<2x8x4xf32>
    %c0_120 = arith.constant 0 : index
    %c0_121 = arith.constant 0 : index
    %c20_122 = arith.constant 20 : index
    %151 = vector.load %arg26[%c0_120, %c0_121, %c20_122] : memref<2x8x32xf32, #tpu.memory_space<vmem>>, vector<2x8x4xf32>
    %c0_123 = arith.constant 0 : index
    %c0_124 = arith.constant 0 : index
    %c20_125 = arith.constant 20 : index
    %152 = vector.load %arg27[%c0_123, %c0_124, %c20_125] : memref<2x8x32xf32, #tpu.memory_space<vmem>>, vector<2x8x4xf32>
    %cst_126 = arith.constant dense<0.000000e+00> : vector<2x8x8xf32>
    %153 = tpu.matmul %150, %151, %cst_126 {dimension_numbers = #tpu.dot_dimension_numbers<[2], [2], [1], [1], [0, 0, 0, 1, 1, 1], [0], [0]>} : vector<2x8x4xf32>, vector<2x8x4xf32>, vector<2x8x8xf32> -> vector<2x8x8xf32>
    %cst_127 = arith.constant dense<0xFF800000> : vector<2x8xf32>
    %154 = vector.multi_reduction <maximumf>, %153, %cst_127 [2] : vector<2x8x8xf32> to vector<2x8xf32>
    %155 = vector.shape_cast %154 : vector<2x8xf32> to vector<2x8x1xf32>
    %156 = vector.broadcast %155 : vector<2x8x1xf32> to vector<2x8x8xf32>
    %157 = arith.subf %153, %156 : vector<2x8x8xf32>
    %158 = math.exp %157 : vector<2x8x8xf32>
    %cst_128 = arith.constant dense<0.000000e+00> : vector<2x8xf32>
    %159 = vector.multi_reduction <add>, %158, %cst_128 [2] : vector<2x8x8xf32> to vector<2x8xf32>
    %160 = vector.shape_cast %159 : vector<2x8xf32> to vector<2x8x1xf32>
    %161 = tpu.reciprocal %160 {approx = true} : vector<2x8x1xf32> -> vector<2x8x1xf32>
    %162 = vector.broadcast %161 : vector<2x8x1xf32> to vector<2x8x8xf32>
    %163 = arith.mulf %158, %162 : vector<2x8x8xf32>
    %cst_129 = arith.constant dense<0.000000e+00> : vector<2x8x4xf32>
    %164 = tpu.matmul %163, %152, %cst_129 {dimension_numbers = #tpu.dot_dimension_numbers<[2], [1], [1], [2], [0, 0, 0, 1, 1, 2], [0], [0]>} : vector<2x8x8xf32>, vector<2x8x4xf32>, vector<2x8x4xf32> -> vector<2x8x4xf32>
    %c0_130 = arith.constant 0 : index
    %c0_131 = arith.constant 0 : index
    %c20_132 = arith.constant 20 : index
    %165 = vector.load %arg28[%c0_130, %c0_131, %c20_132] : memref<2x8x32xf32, #tpu.memory_space<vmem>>, vector<2x8x4xf32>
    tpu.vector_store %arg28[%c0_130, %c0_131, %c20_132], %164 {strides = array<i32>} : memref<2x8x32xf32, #tpu.memory_space<vmem>>, vector<2x8x4xf32>,
    %c0_133 = arith.constant 0 : index
    %c0_134 = arith.constant 0 : index
    %c24 = arith.constant 24 : index
    %166 = vector.load %arg25[%c0_133, %c0_134, %c24] : memref<2x8x32xf32, #tpu.memory_space<vmem>>, vector<2x8x4xf32>
    %c0_135 = arith.constant 0 : index
    %c0_136 = arith.constant 0 : index
    %c24_137 = arith.constant 24 : index
    %167 = vector.load %arg26[%c0_135, %c0_136, %c24_137] : memref<2x8x32xf32, #tpu.memory_space<vmem>>, vector<2x8x4xf32>
    %c0_138 = arith.constant 0 : index
    %c0_139 = arith.constant 0 : index
    %c24_140 = arith.constant 24 : index
    %168 = vector.load %arg27[%c0_138, %c0_139, %c24_140] : memref<2x8x32xf32, #tpu.memory_space<vmem>>, vector<2x8x4xf32>
    %cst_141 = arith.constant dense<0.000000e+00> : vector<2x8x8xf32>
    %169 = tpu.matmul %166, %167, %cst_141 {dimension_numbers = #tpu.dot_dimension_numbers<[2], [2], [1], [1], [0, 0, 0, 1, 1, 1], [0], [0]>} : vector<2x8x4xf32>, vector<2x8x4xf32>, vector<2x8x8xf32> -> vector<2x8x8xf32>
    %cst_142 = arith.constant dense<0xFF800000> : vector<2x8xf32>
    %170 = vector.multi_reduction <maximumf>, %169, %cst_142 [2] : vector<2x8x8xf32> to vector<2x8xf32>
    %171 = vector.shape_cast %170 : vector<2x8xf32> to vector<2x8x1xf32>
    %172 = vector.broadcast %171 : vector<2x8x1xf32> to vector<2x8x8xf32>
    %173 = arith.subf %169, %172 : vector<2x8x8xf32>
    %174 = math.exp %173 : vector<2x8x8xf32>
    %cst_143 = arith.constant dense<0.000000e+00> : vector<2x8xf32>
    %175 = vector.multi_reduction <add>, %174, %cst_143 [2] : vector<2x8x8xf32> to vector<2x8xf32>
    %176 = vector.shape_cast %175 : vector<2x8xf32> to vector<2x8x1xf32>
    %177 = tpu.reciprocal %176 {approx = true} : vector<2x8x1xf32> -> vector<2x8x1xf32>
    %178 = vector.broadcast %177 : vector<2x8x1xf32> to vector<2x8x8xf32>
    %179 = arith.mulf %174, %178 : vector<2x8x8xf32>
    %cst_144 = arith.constant dense<0.000000e+00> : vector<2x8x4xf32>
    %180 = tpu.matmul %179, %168, %cst_144 {dimension_numbers = #tpu.dot_dimension_numbers<[2], [1], [1], [2], [0, 0, 0, 1, 1, 2], [0], [0]>} : vector<2x8x8xf32>, vector<2x8x4xf32>, vector<2x8x4xf32> -> vector<2x8x4xf32>
    %c0_145 = arith.constant 0 : index
    %c0_146 = arith.constant 0 : index
    %c24_147 = arith.constant 24 : index
    %181 = vector.load %arg28[%c0_145, %c0_146, %c24_147] : memref<2x8x32xf32, #tpu.memory_space<vmem>>, vector<2x8x4xf32>
    tpu.vector_store %arg28[%c0_145, %c0_146, %c24_147], %180 {strides = array<i32>} : memref<2x8x32xf32, #tpu.memory_space<vmem>>, vector<2x8x4xf32>,
    %c0_148 = arith.constant 0 : index
    %c0_149 = arith.constant 0 : index
    %c28 = arith.constant 28 : index
    %182 = vector.load %arg25[%c0_148, %c0_149, %c28] : memref<2x8x32xf32, #tpu.memory_space<vmem>>, vector<2x8x4xf32>
    %c0_150 = arith.constant 0 : index
    %c0_151 = arith.constant 0 : index
    %c28_152 = arith.constant 28 : index
    %183 = vector.load %arg26[%c0_150, %c0_151, %c28_152] : memref<2x8x32xf32, #tpu.memory_space<vmem>>, vector<2x8x4xf32>
    %c0_153 = arith.constant 0 : index
    %c0_154 = arith.constant 0 : index
    %c28_155 = arith.constant 28 : index
    %184 = vector.load %arg27[%c0_153, %c0_154, %c28_155] : memref<2x8x32xf32, #tpu.memory_space<vmem>>, vector<2x8x4xf32>
    %cst_156 = arith.constant dense<0.000000e+00> : vector<2x8x8xf32>
    %185 = tpu.matmul %182, %183, %cst_156 {dimension_numbers = #tpu.dot_dimension_numbers<[2], [2], [1], [1], [0, 0, 0, 1, 1, 1], [0], [0]>} : vector<2x8x4xf32>, vector<2x8x4xf32>, vector<2x8x8xf32> -> vector<2x8x8xf32>
    %cst_157 = arith.constant dense<0xFF800000> : vector<2x8xf32>
    %186 = vector.multi_reduction <maximumf>, %185, %cst_157 [2] : vector<2x8x8xf32> to vector<2x8xf32>
    %187 = vector.shape_cast %186 : vector<2x8xf32> to vector<2x8x1xf32>
    %188 = vector.broadcast %187 : vector<2x8x1xf32> to vector<2x8x8xf32>
    %189 = arith.subf %185, %188 : vector<2x8x8xf32>
    %190 = math.exp %189 : vector<2x8x8xf32>
    %cst_158 = arith.constant dense<0.000000e+00> : vector<2x8xf32>
    %191 = vector.multi_reduction <add>, %190, %cst_158 [2] : vector<2x8x8xf32> to vector<2x8xf32>
    %192 = vector.shape_cast %191 : vector<2x8xf32> to vector<2x8x1xf32>
    %193 = tpu.reciprocal %192 {approx = true} : vector<2x8x1xf32> -> vector<2x8x1xf32>
    %194 = vector.broadcast %193 : vector<2x8x1xf32> to vector<2x8x8xf32>
    %195 = arith.mulf %190, %194 : vector<2x8x8xf32>
    %cst_159 = arith.constant dense<0.000000e+00> : vector<2x8x4xf32>
    %196 = tpu.matmul %195, %184, %cst_159 {dimension_numbers = #tpu.dot_dimension_numbers<[2], [1], [1], [2], [0, 0, 0, 1, 1, 2], [0], [0]>} : vector<2x8x8xf32>, vector<2x8x4xf32>, vector<2x8x4xf32> -> vector<2x8x4xf32>
    %c0_160 = arith.constant 0 : index
    %c0_161 = arith.constant 0 : index
    %c28_162 = arith.constant 28 : index
    %197 = vector.load %arg28[%c0_160, %c0_161, %c28_162] : memref<2x8x32xf32, #tpu.memory_space<vmem>>, vector<2x8x4xf32>
    tpu.vector_store %arg28[%c0_160, %c0_161, %c28_162], %196 {strides = array<i32>} : memref<2x8x32xf32, #tpu.memory_space<vmem>>, vector<2x8x4xf32>,
    %c0_163 = arith.constant 0 : index
    %c0_164 = arith.constant 0 : index
    %c0_165 = arith.constant 0 : index
    %198 = vector.load %arg28[%c0_163, %c0_164, %c0_165] : memref<2x8x32xf32, #tpu.memory_space<vmem>>, vector<2x8x32xf32>
    %199 = vector.shape_cast %198 : vector<2x8x32xf32> to vector<16x32xf32>
    %200 = arith.truncf %199 : vector<16x32xf32> to vector<16x32xbf16>
    %c0_166 = arith.constant 0 : index
    %c0_167 = arith.constant 0 : index
    %201 = vector.load %arg10[%c0_166, %c0_167] : memref<32x32xbf16, #tpu.memory_space<vmem>>, vector<32x32xbf16>
    %cst_168 = arith.constant dense<0.000000e+00> : vector<16x32xf32>
    %202 = tpu.matmul %200, %201, %cst_168 {dimension_numbers = #tpu.dot_dimension_numbers<[1], [0], [0], [1], [0, 0, 1, 1], [], []>} : vector<16x32xbf16>, vector<32x32xbf16>, vector<16x32xf32> -> vector<16x32xf32>
    %c0_169 = arith.constant 0 : index
    %c0_170 = arith.constant 0 : index
    %203 = vector.load %arg11[%c0_169, %c0_170] : memref<1x32xf32, #tpu.memory_space<vmem>>, vector<1x32xf32>
    %204 = vector.broadcast %203 : vector<1x32xf32> to vector<16x32xf32>
    %205 = arith.addf %202, %204 : vector<16x32xf32>
    %206 = vector.extract_strided_slice %205 {offsets = [0, 0], sizes = [8, 32], strides = [1, 1]} : vector<16x32xf32> to vector<8x32xf32>
    %c0_171 = arith.constant 0 : index
    %c0_172 = arith.constant 0 : index
    %c0_173 = arith.constant 0 : index
    %207 = vector.load %arg1[%c0_171, %c0_172, %c0_173] : memref<1x8x32xf32, #tpu.memory_space<vmem>>, vector<1x8x32xf32>
    %208 = vector.shape_cast %207 : vector<1x8x32xf32> to vector<8x32xf32>
    %209 = arith.addf %206, %208 : vector<8x32xf32>
    %210 = vector.extract_strided_slice %205 {offsets = [8, 0], sizes = [8, 32], strides = [1, 1]} : vector<16x32xf32> to vector<8x32xf32>
    %c0_174 = arith.constant 0 : index
    %c0_175 = arith.constant 0 : index
    %c0_176 = arith.constant 0 : index
    %211 = vector.load %arg2[%c0_174, %c0_175, %c0_176] : memref<1x8x32xf32, #tpu.memory_space<vmem>>, vector<1x8x32xf32>
    %212 = vector.shape_cast %211 : vector<1x8x32xf32> to vector<8x32xf32>
    %213 = arith.addf %210, %212 : vector<8x32xf32>
    %c0_177 = arith.constant 0 : index
    %c0_178 = arith.constant 0 : index
    %214 = vector.load %arg12[%c0_177, %c0_178] : memref<1x32xf32, #tpu.memory_space<vmem>>, vector<1x32xf32>
    %c0_179 = arith.constant 0 : index
    %c0_180 = arith.constant 0 : index
    %215 = vector.load %arg13[%c0_179, %c0_180] : memref<1x32xf32, #tpu.memory_space<vmem>>, vector<1x32xf32>
    %c0_181 = arith.constant 0 : index
    %c0_182 = arith.constant 0 : index
    %216 = vector.load %arg14[%c0_181, %c0_182] : memref<32x16xbf16, #tpu.memory_space<vmem>>, vector<32x16xbf16>
    %c0_183 = arith.constant 0 : index
    %c0_184 = arith.constant 0 : index
    %217 = vector.load %arg15[%c0_183, %c0_184] : memref<1x16xf32, #tpu.memory_space<vmem>>, vector<1x16xf32>
    %c0_185 = arith.constant 0 : index
    %c0_186 = arith.constant 0 : index
    %218 = vector.load %arg16[%c0_185, %c0_186] : memref<16x32xbf16, #tpu.memory_space<vmem>>, vector<16x32xbf16>
    %c0_187 = arith.constant 0 : index
    %c0_188 = arith.constant 0 : index
    %219 = vector.load %arg17[%c0_187, %c0_188] : memref<1x32xf32, #tpu.memory_space<vmem>>, vector<1x32xf32>
    %cst_189 = arith.constant dense<0.000000e+00> : vector<8xf32>
    %220 = vector.multi_reduction <add>, %209, %cst_189 [1] : vector<8x32xf32> to vector<8xf32>
    %221 = vector.shape_cast %220 : vector<8xf32> to vector<8x1xf32>
    %cst_190 = arith.constant 3.200000e+01 : f32
    %222 = vector.broadcast %cst_190 : f32 to vector<8x1xf32>
    %223 = arith.divf %221, %222 : vector<8x1xf32>
    %224 = vector.broadcast %223 : vector<8x1xf32> to vector<8x32xf32>
    %225 = arith.subf %209, %224 : vector<8x32xf32>
    %226 = arith.mulf %225, %225 : vector<8x32xf32>
    %cst_191 = arith.constant dense<0.000000e+00> : vector<8xf32>
    %227 = vector.multi_reduction <add>, %226, %cst_191 [1] : vector<8x32xf32> to vector<8xf32>
    %228 = vector.shape_cast %227 : vector<8xf32> to vector<8x1xf32>
    %cst_192 = arith.constant 3.200000e+01 : f32
    %229 = vector.broadcast %cst_192 : f32 to vector<8x1xf32>
    %230 = arith.divf %228, %229 : vector<8x1xf32>
    %231 = vector.broadcast %223 : vector<8x1xf32> to vector<8x32xf32>
    %232 = arith.subf %209, %231 : vector<8x32xf32>
    %cst_193 = arith.constant 9.99999974E-6 : f32
    %233 = vector.broadcast %cst_193 : f32 to vector<8x1xf32>
    %234 = arith.addf %230, %233 : vector<8x1xf32>
    %235 = math.rsqrt %234 : vector<8x1xf32>
    %236 = vector.broadcast %235 : vector<8x1xf32> to vector<8x32xf32>
    %237 = arith.mulf %232, %236 : vector<8x32xf32>
    %238 = vector.broadcast %214 : vector<1x32xf32> to vector<8x32xf32>
    %239 = arith.mulf %237, %238 : vector<8x32xf32>
    %240 = vector.broadcast %215 : vector<1x32xf32> to vector<8x32xf32>
    %241 = arith.addf %239, %240 : vector<8x32xf32>
    %242 = arith.truncf %241 : vector<8x32xf32> to vector<8x32xbf16>
    %cst_194 = arith.constant dense<0.000000e+00> : vector<8x16xf32>
    %243 = tpu.matmul %242, %216, %cst_194 {dimension_numbers = #tpu.dot_dimension_numbers<[1], [0], [0], [1], [0, 0, 1, 1], [], []>} : vector<8x32xbf16>, vector<32x16xbf16>, vector<8x16xf32> -> vector<8x16xf32>
    %244 = vector.broadcast %217 : vector<1x16xf32> to vector<8x16xf32>
    %245 = arith.addf %243, %244 : vector<8x16xf32>
    %cst_195 = arith.constant 5.000000e-01 : f32
    %246 = vector.broadcast %cst_195 : f32 to vector<8x16xf32>
    %247 = arith.mulf %246, %245 : vector<8x16xf32>
    %cst_196 = arith.constant 0.707106769 : f32
    %248 = vector.broadcast %cst_196 : f32 to vector<8x16xf32>
    %249 = arith.mulf %245, %248 : vector<8x16xf32>
    %250 = math.erf %249 : vector<8x16xf32>
    %cst_197 = arith.constant 1.000000e+00 : f32
    %251 = vector.broadcast %cst_197 : f32 to vector<8x16xf32>
    %252 = arith.addf %251, %250 : vector<8x16xf32>
    %253 = arith.mulf %247, %252 : vector<8x16xf32>
    %254 = arith.truncf %253 : vector<8x16xf32> to vector<8x16xbf16>
    %cst_198 = arith.constant dense<0.000000e+00> : vector<8x32xf32>
    %255 = tpu.matmul %254, %218, %cst_198 {dimension_numbers = #tpu.dot_dimension_numbers<[1], [0], [0], [1], [0, 0, 1, 1], [], []>} : vector<8x16xbf16>, vector<16x32xbf16>, vector<8x32xf32> -> vector<8x32xf32>
    %256 = vector.broadcast %219 : vector<1x32xf32> to vector<8x32xf32>
    %257 = arith.addf %255, %256 : vector<8x32xf32>
    %258 = arith.addf %209, %257 : vector<8x32xf32>
    %c0_199 = arith.constant 0 : index
    %c0_200 = arith.constant 0 : index
    %259 = vector.load %arg18[%c0_199, %c0_200] : memref<1x32xf32, #tpu.memory_space<vmem>>, vector<1x32xf32>
    %c0_201 = arith.constant 0 : index
    %c0_202 = arith.constant 0 : index
    %260 = vector.load %arg19[%c0_201, %c0_202] : memref<1x32xf32, #tpu.memory_space<vmem>>, vector<1x32xf32>
    %c0_203 = arith.constant 0 : index
    %c0_204 = arith.constant 0 : index
    %261 = vector.load %arg20[%c0_203, %c0_204] : memref<32x16xbf16, #tpu.memory_space<vmem>>, vector<32x16xbf16>
    %c0_205 = arith.constant 0 : index
    %c0_206 = arith.constant 0 : index
    %262 = vector.load %arg21[%c0_205, %c0_206] : memref<1x16xf32, #tpu.memory_space<vmem>>, vector<1x16xf32>
    %c0_207 = arith.constant 0 : index
    %c0_208 = arith.constant 0 : index
    %263 = vector.load %arg22[%c0_207, %c0_208] : memref<16x32xbf16, #tpu.memory_space<vmem>>, vector<16x32xbf16>
    %c0_209 = arith.constant 0 : index
    %c0_210 = arith.constant 0 : index
    %264 = vector.load %arg23[%c0_209, %c0_210] : memref<1x32xf32, #tpu.memory_space<vmem>>, vector<1x32xf32>
    %cst_211 = arith.constant dense<0.000000e+00> : vector<8xf32>
    %265 = vector.multi_reduction <add>, %213, %cst_211 [1] : vector<8x32xf32> to vector<8xf32>
    %266 = vector.shape_cast %265 : vector<8xf32> to vector<8x1xf32>
    %cst_212 = arith.constant 3.200000e+01 : f32
    %267 = vector.broadcast %cst_212 : f32 to vector<8x1xf32>
    %268 = arith.divf %266, %267 : vector<8x1xf32>
    %269 = vector.broadcast %268 : vector<8x1xf32> to vector<8x32xf32>
    %270 = arith.subf %213, %269 : vector<8x32xf32>
    %271 = arith.mulf %270, %270 : vector<8x32xf32>
    %cst_213 = arith.constant dense<0.000000e+00> : vector<8xf32>
    %272 = vector.multi_reduction <add>, %271, %cst_213 [1] : vector<8x32xf32> to vector<8xf32>
    %273 = vector.shape_cast %272 : vector<8xf32> to vector<8x1xf32>
    %cst_214 = arith.constant 3.200000e+01 : f32
    %274 = vector.broadcast %cst_214 : f32 to vector<8x1xf32>
    %275 = arith.divf %273, %274 : vector<8x1xf32>
    %276 = vector.broadcast %268 : vector<8x1xf32> to vector<8x32xf32>
    %277 = arith.subf %213, %276 : vector<8x32xf32>
    %cst_215 = arith.constant 9.99999974E-6 : f32
    %278 = vector.broadcast %cst_215 : f32 to vector<8x1xf32>
    %279 = arith.addf %275, %278 : vector<8x1xf32>
    %280 = math.rsqrt %279 : vector<8x1xf32>
    %281 = vector.broadcast %280 : vector<8x1xf32> to vector<8x32xf32>
    %282 = arith.mulf %277, %281 : vector<8x32xf32>
    %283 = vector.broadcast %259 : vector<1x32xf32> to vector<8x32xf32>
    %284 = arith.mulf %282, %283 : vector<8x32xf32>
    %285 = vector.broadcast %260 : vector<1x32xf32> to vector<8x32xf32>
    %286 = arith.addf %284, %285 : vector<8x32xf32>
    %287 = arith.truncf %286 : vector<8x32xf32> to vector<8x32xbf16>
    %cst_216 = arith.constant dense<0.000000e+00> : vector<8x16xf32>
    %288 = tpu.matmul %287, %261, %cst_216 {dimension_numbers = #tpu.dot_dimension_numbers<[1], [0], [0], [1], [0, 0, 1, 1], [], []>} : vector<8x32xbf16>, vector<32x16xbf16>, vector<8x16xf32> -> vector<8x16xf32>
    %289 = vector.broadcast %262 : vector<1x16xf32> to vector<8x16xf32>
    %290 = arith.addf %288, %289 : vector<8x16xf32>
    %cst_217 = arith.constant 5.000000e-01 : f32
    %291 = vector.broadcast %cst_217 : f32 to vector<8x16xf32>
    %292 = arith.mulf %291, %290 : vector<8x16xf32>
    %cst_218 = arith.constant 0.707106769 : f32
    %293 = vector.broadcast %cst_218 : f32 to vector<8x16xf32>
    %294 = arith.mulf %290, %293 : vector<8x16xf32>
    %295 = math.erf %294 : vector<8x16xf32>
    %cst_219 = arith.constant 1.000000e+00 : f32
    %296 = vector.broadcast %cst_219 : f32 to vector<8x16xf32>
    %297 = arith.addf %296, %295 : vector<8x16xf32>
    %298 = arith.mulf %292, %297 : vector<8x16xf32>
    %299 = arith.truncf %298 : vector<8x16xf32> to vector<8x16xbf16>
    %cst_220 = arith.constant dense<0.000000e+00> : vector<8x32xf32>
    %300 = tpu.matmul %299, %263, %cst_220 {dimension_numbers = #tpu.dot_dimension_numbers<[1], [0], [0], [1], [0, 0, 1, 1], [], []>} : vector<8x16xbf16>, vector<16x32xbf16>, vector<8x32xf32> -> vector<8x32xf32>
    %301 = vector.broadcast %264 : vector<1x32xf32> to vector<8x32xf32>
    %302 = arith.addf %300, %301 : vector<8x32xf32>
    %303 = arith.addf %213, %302 : vector<8x32xf32>
    %304 = tpu.concatenate %258, %303 in 1 : vector<8x32xf32>, vector<8x32xf32> -> vector<8x64xf32>
    %c0_221 = arith.constant 0 : index
    %c0_222 = arith.constant 0 : index
    %305 = vector.load %arg24[%c0_221, %c0_222] : memref<8x64xf32, #tpu.memory_space<vmem>>, vector<8x64xf32>
    tpu.vector_store %arg24[%c0_221, %c0_222], %304 {strides = array<i32>} : memref<8x64xf32, #tpu.memory_space<vmem>>, vector<8x64xf32>,
    return
  }
  func.func @transform_0(%arg0: i32) -> (i32, i32, i32) {
    %c0_i32 = arith.constant 0 : i32
    %c0_i32_0 = arith.constant 0 : i32
    %c0_i32_1 = arith.constant 0 : i32
    return %arg0, %c0_i32, %c0_i32_0 : i32, i32, i32
  }
  func.func @transform_1(%arg0: i32) -> (i32, i32, i32) {
    %c0_i32 = arith.constant 0 : i32
    %c0_i32_0 = arith.constant 0 : i32
    %c0_i32_1 = arith.constant 0 : i32
    return %arg0, %c0_i32, %c0_i32_0 : i32, i32, i32
  }
  func.func @transform_2(%arg0: i32) -> (i32, i32) {
    %c0_i32 = arith.constant 0 : i32
    %c0_i32_0 = arith.constant 0 : i32
    %c0_i32_1 = arith.constant 0 : i32
    return %c0_i32, %c0_i32_0 : i32, i32
  }
  func.func @transform_3(%arg0: i32) -> (i32, i32) {
    %c0_i32 = arith.constant 0 : i32
    %c0_i32_0 = arith.constant 0 : i32
    %c0_i32_1 = arith.constant 0 : i32
    return %c0_i32, %c0_i32_0 : i32, i32
  }
  func.func @transform_4(%arg0: i32) -> (i32, i32) {
    %c0_i32 = arith.constant 0 : i32
    %c0_i32_0 = arith.constant 0 : i32
    %c0_i32_1 = arith.constant 0 : i32
    return %c0_i32, %c0_i32_0 : i32, i32
  }
  func.func @transform_5(%arg0: i32) -> (i32, i32) {
    %c0_i32 = arith.constant 0 : i32
    %c0_i32_0 = arith.constant 0 : i32
    %c0_i32_1 = arith.constant 0 : i32
    return %c0_i32, %c0_i32_0 : i32, i32
  }
  func.func @transform_6(%arg0: i32) -> (i32, i32) {
    %c0_i32 = arith.constant 0 : i32
    %c0_i32_0 = arith.constant 0 : i32
    %c0_i32_1 = arith.constant 0 : i32
    return %c0_i32, %c0_i32_0 : i32, i32
  }
  func.func @transform_7(%arg0: i32) -> (i32, i32) {
    %c0_i32 = arith.constant 0 : i32
    %c0_i32_0 = arith.constant 0 : i32
    %c0_i32_1 = arith.constant 0 : i32
    return %c0_i32, %c0_i32_0 : i32, i32
  }
  func.func @transform_8(%arg0: i32) -> (i32, i32) {
    %c0_i32 = arith.constant 0 : i32
    %c0_i32_0 = arith.constant 0 : i32
    %c0_i32_1 = arith.constant 0 : i32
    return %c0_i32, %c0_i32_0 : i32, i32
  }
  func.func @transform_9(%arg0: i32) -> (i32, i32) {
    %c0_i32 = arith.constant 0 : i32
    %c0_i32_0 = arith.constant 0 : i32
    %c0_i32_1 = arith.constant 0 : i32
    return %c0_i32, %c0_i32_0 : i32, i32
  }
  func.func @transform_10(%arg0: i32) -> (i32, i32) {
    %c0_i32 = arith.constant 0 : i32
    %c0_i32_0 = arith.constant 0 : i32
    %c0_i32_1 = arith.constant 0 : i32
    return %c0_i32, %c0_i32_0 : i32, i32
  }
  func.func @transform_11(%arg0: i32) -> (i32, i32) {
    %c0_i32 = arith.constant 0 : i32
    %c0_i32_0 = arith.constant 0 : i32
    %c0_i32_1 = arith.constant 0 : i32
    return %c0_i32, %c0_i32_0 : i32, i32
  }
  func.func @transform_12(%arg0: i32) -> (i32, i32) {
    %c0_i32 = arith.constant 0 : i32
    %c0_i32_0 = arith.constant 0 : i32
    %c0_i32_1 = arith.constant 0 : i32
    return %c0_i32, %c0_i32_0 : i32, i32
  }
  func.func @transform_13(%arg0: i32) -> (i32, i32) {
    %c0_i32 = arith.constant 0 : i32
    %c0_i32_0 = arith.constant 0 : i32
    %c0_i32_1 = arith.constant 0 : i32
    return %c0_i32, %c0_i32_0 : i32, i32
  }
  func.func @transform_14(%arg0: i32) -> (i32, i32) {
    %c0_i32 = arith.constant 0 : i32
    %c0_i32_0 = arith.constant 0 : i32
    %c0_i32_1 = arith.constant 0 : i32
    return %c0_i32, %c0_i32_0 : i32, i32
  }
  func.func @transform_15(%arg0: i32) -> (i32, i32) {
    %c0_i32 = arith.constant 0 : i32
    %c0_i32_0 = arith.constant 0 : i32
    %c0_i32_1 = arith.constant 0 : i32
    return %c0_i32, %c0_i32_0 : i32, i32
  }
  func.func @transform_16(%arg0: i32) -> (i32, i32) {
    %c0_i32 = arith.constant 0 : i32
    %c0_i32_0 = arith.constant 0 : i32
    %c0_i32_1 = arith.constant 0 : i32
    return %c0_i32, %c0_i32_0 : i32, i32
  }
  func.func @transform_17(%arg0: i32) -> (i32, i32) {
    %c0_i32 = arith.constant 0 : i32
    %c0_i32_0 = arith.constant 0 : i32
    %c0_i32_1 = arith.constant 0 : i32
    return %c0_i32, %c0_i32_0 : i32, i32
  }
  func.func @transform_18(%arg0: i32) -> (i32, i32) {
    %c0_i32 = arith.constant 0 : i32
    %c0_i32_0 = arith.constant 0 : i32
    %c0_i32_1 = arith.constant 0 : i32
    return %c0_i32, %c0_i32_0 : i32, i32
  }
  func.func @transform_19(%arg0: i32) -> (i32, i32) {
    %c0_i32 = arith.constant 0 : i32
    %c0_i32_0 = arith.constant 0 : i32
    %c0_i32_1 = arith.constant 0 : i32
    return %c0_i32, %c0_i32_0 : i32, i32
  }
  func.func @transform_20(%arg0: i32) -> (i32, i32) {
    %c0_i32 = arith.constant 0 : i32
    %c0_i32_0 = arith.constant 0 : i32
    %c0_i32_1 = arith.constant 0 : i32
    return %c0_i32, %c0_i32_0 : i32, i32
  }
  func.func @transform_21(%arg0: i32) -> (i32, i32) {
    %c0_i32 = arith.constant 0 : i32
    %c0_i32_0 = arith.constant 0 : i32
    %c0_i32_1 = arith.constant 0 : i32
    return %c0_i32, %c0_i32_0 : i32, i32
  }
  func.func @transform_22(%arg0: i32) -> (i32, i32) {
    %c0_i32 = arith.constant 0 : i32
    %c0_i32_0 = arith.constant 0 : i32
    %c0_i32_1 = arith.constant 0 : i32
    return %c0_i32, %c0_i32_0 : i32, i32
  }
  func.func @transform_23(%arg0: i32) -> (i32, i32) {
    %c0_i32 = arith.constant 0 : i32
    %c0_i32_0 = arith.constant 0 : i32
    return %arg0, %c0_i32 : i32, i32
  }
}

module attributes {stable_mosaic.version = 11 : i64} {
  func.func @_cablock_kernel(%arg0: i32, %arg1: memref<1x8x32xf32, #tpu.memory_space<vmem>>, %arg2: memref<1x8x32xf32, #tpu.memory_space<vmem>>, %arg3: memref<1x32xf32, #tpu.memory_space<vmem>>, %arg4: memref<1x32xf32, #tpu.memory_space<vmem>>, %arg5: memref<1x32xf32, #tpu.memory_space<vmem>>, %arg6: memref<1x32xf32, #tpu.memory_space<vmem>>, %arg7: memref<32x32xbf16, #tpu.memory_space<vmem>>, %arg8: memref<32x32xbf16, #tpu.memory_space<vmem>>, %arg9: memref<32x32xbf16, #tpu.memory_space<vmem>>, %arg10: memref<32x32xbf16, #tpu.memory_space<vmem>>, %arg11: memref<1x32xf32, #tpu.memory_space<vmem>>, %arg12: memref<1x32xf32, #tpu.memory_space<vmem>>, %arg13: memref<1x32xf32, #tpu.memory_space<vmem>>, %arg14: memref<32x16xbf16, #tpu.memory_space<vmem>>, %arg15: memref<1x16xf32, #tpu.memory_space<vmem>>, %arg16: memref<16x32xbf16, #tpu.memory_space<vmem>>, %arg17: memref<1x32xf32, #tpu.memory_space<vmem>>, %arg18: memref<1x32xf32, #tpu.memory_space<vmem>>, %arg19: memref<1x32xf32, #tpu.memory_space<vmem>>, %arg20: memref<32x16xbf16, #tpu.memory_space<vmem>>, %arg21: memref<1x16xf32, #tpu.memory_space<vmem>>, %arg22: memref<16x32xbf16, #tpu.memory_space<vmem>>, %arg23: memref<1x32xf32, #tpu.memory_space<vmem>>, %arg24: memref<8x64xf32, #tpu.memory_space<vmem>>, %arg25: memref<2x8x32xf32, #tpu.memory_space<vmem>>, %arg26: memref<2x8x32xf32, #tpu.memory_space<vmem>>, %arg27: memref<2x8x32xf32, #tpu.memory_space<vmem>>, %arg28: memref<2x8x32xf32, #tpu.memory_space<vmem>>) attributes {dimension_semantics = [#tpu.dimension_semantics<parallel>], iteration_bounds = array<i64: 2>, scalar_prefetch = 0 : i64, scratch_operands = 4 : i64, tpu.core_type = #tpu.core_type<tc>, window_params = [{transform_indices = @transform_0, window_bounds = array<i64: 1, 8, 32>}, {transform_indices = @transform_1, window_bounds = array<i64: 1, 8, 32>}, {pipeline_mode = #tpu.pipeline_mode<synchronous>, transform_indices = @transform_2, window_bounds = array<i64: 1, 32>}, {pipeline_mode = #tpu.pipeline_mode<synchronous>, transform_indices = @transform_3, window_bounds = array<i64: 1, 32>}, {pipeline_mode = #tpu.pipeline_mode<synchronous>, transform_indices = @transform_4, window_bounds = array<i64: 1, 32>}, {pipeline_mode = #tpu.pipeline_mode<synchronous>, transform_indices = @transform_5, window_bounds = array<i64: 1, 32>}, {pipeline_mode = #tpu.pipeline_mode<synchronous>, transform_indices = @transform_6, window_bounds = array<i64: 32, 32>}, {pipeline_mode = #tpu.pipeline_mode<synchronous>, transform_indices = @transform_7, window_bounds = array<i64: 32, 32>}, {pipeline_mode = #tpu.pipeline_mode<synchronous>, transform_indices = @transform_8, window_bounds = array<i64: 32, 32>}, {pipeline_mode = #tpu.pipeline_mode<synchronous>, transform_indices = @transform_9, window_bounds = array<i64: 32, 32>}, {pipeline_mode = #tpu.pipeline_mode<synchronous>, transform_indices = @transform_10, window_bounds = array<i64: 1, 32>}, {pipeline_mode = #tpu.pipeline_mode<synchronous>, transform_indices = @transform_11, window_bounds = array<i64: 1, 32>}, {pipeline_mode = #tpu.pipeline_mode<synchronous>, transform_indices = @transform_12, window_bounds = array<i64: 1, 32>}, {pipeline_mode = #tpu.pipeline_mode<synchronous>, transform_indices = @transform_13, window_bounds = array<i64: 32, 16>}, {pipeline_mode = #tpu.pipeline_mode<synchronous>, transform_indices = @transform_14, window_bounds = array<i64: 1, 16>}, {pipeline_mode = #tpu.pipeline_mode<synchronous>, transform_indices = @transform_15, window_bounds = array<i64: 16, 32>}, {pipeline_mode = #tpu.pipeline_mode<synchronous>, transform_indices = @transform_16, window_bounds = array<i64: 1, 32>}, {pipeline_mode = #tpu.pipeline_mode<synchronous>, transform_indices = @transform_17, window_bounds = array<i64: 1, 32>}, {pipeline_mode = #tpu.pipeline_mode<synchronous>, transform_indices = @transform_18, window_bounds = array<i64: 1, 32>}, {pipeline_mode = #tpu.pipeline_mode<synchronous>, transform_indices = @transform_19, window_bounds = array<i64: 32, 16>}, {pipeline_mode = #tpu.pipeline_mode<synchronous>, transform_indices = @transform_20, window_bounds = array<i64: 1, 16>}, {pipeline_mode = #tpu.pipeline_mode<synchronous>, transform_indices = @transform_21, window_bounds = array<i64: 16, 32>}, {pipeline_mode = #tpu.pipeline_mode<synchronous>, transform_indices = @transform_22, window_bounds = array<i64: 1, 32>}, {transform_indices = @transform_23, window_bounds = array<i64: 8, 64>}]} {
    %c0 = arith.constant 0 : index
    %c0_0 = arith.constant 0 : index
    %c0_1 = arith.constant 0 : index
    %0 = vector.load %arg1[%c0, %c0_0, %c0_1] : memref<1x8x32xf32, #tpu.memory_space<vmem>>, vector<1x8x32xf32>
    %1 = vector.shape_cast %0 : vector<1x8x32xf32> to vector<8x32xf32>
    %c0_2 = arith.constant 0 : index
    %c0_3 = arith.constant 0 : index
    %2 = vector.load %arg3[%c0_2, %c0_3] : memref<1x32xf32, #tpu.memory_space<vmem>>, vector<1x32xf32>
    %c0_4 = arith.constant 0 : index
    %c0_5 = arith.constant 0 : index
    %3 = vector.load %arg4[%c0_4, %c0_5] : memref<1x32xf32, #tpu.memory_space<vmem>>, vector<1x32xf32>
    %cst = arith.constant dense<0.000000e+00> : vector<8xf32>
    %4 = vector.multi_reduction <add>, %1, %cst [1] : vector<8x32xf32> to vector<8xf32>
    %5 = vector.shape_cast %4 : vector<8xf32> to vector<8x1xf32>
    %cst_6 = arith.constant 3.200000e+01 : f32
    %6 = vector.broadcast %cst_6 : f32 to vector<8x1xf32>
    %7 = arith.divf %5, %6 : vector<8x1xf32>
    %8 = vector.broadcast %7 : vector<8x1xf32> to vector<8x32xf32>
    %9 = arith.subf %1, %8 : vector<8x32xf32>
    %10 = arith.mulf %9, %9 : vector<8x32xf32>
    %cst_7 = arith.constant dense<0.000000e+00> : vector<8xf32>
    %11 = vector.multi_reduction <add>, %10, %cst_7 [1] : vector<8x32xf32> to vector<8xf32>
    %12 = vector.shape_cast %11 : vector<8xf32> to vector<8x1xf32>
    %cst_8 = arith.constant 3.200000e+01 : f32
    %13 = vector.broadcast %cst_8 : f32 to vector<8x1xf32>
    %14 = arith.divf %12, %13 : vector<8x1xf32>
    %15 = vector.broadcast %7 : vector<8x1xf32> to vector<8x32xf32>
    %16 = arith.subf %1, %15 : vector<8x32xf32>
    %cst_9 = arith.constant 9.99999974E-6 : f32
    %17 = vector.broadcast %cst_9 : f32 to vector<8x1xf32>
    %18 = arith.addf %14, %17 : vector<8x1xf32>
    %19 = math.rsqrt %18 : vector<8x1xf32>
    %20 = vector.broadcast %19 : vector<8x1xf32> to vector<8x32xf32>
    %21 = arith.mulf %16, %20 : vector<8x32xf32>
    %22 = vector.broadcast %2 : vector<1x32xf32> to vector<8x32xf32>
    %23 = arith.mulf %21, %22 : vector<8x32xf32>
    %24 = vector.broadcast %3 : vector<1x32xf32> to vector<8x32xf32>
    %25 = arith.addf %23, %24 : vector<8x32xf32>
    %c0_10 = arith.constant 0 : index
    %c0_11 = arith.constant 0 : index
    %c0_12 = arith.constant 0 : index
    %26 = vector.load %arg2[%c0_10, %c0_11, %c0_12] : memref<1x8x32xf32, #tpu.memory_space<vmem>>, vector<1x8x32xf32>
    %27 = vector.shape_cast %26 : vector<1x8x32xf32> to vector<8x32xf32>
    %c0_13 = arith.constant 0 : index
    %c0_14 = arith.constant 0 : index
    %28 = vector.load %arg5[%c0_13, %c0_14] : memref<1x32xf32, #tpu.memory_space<vmem>>, vector<1x32xf32>
    %c0_15 = arith.constant 0 : index
    %c0_16 = arith.constant 0 : index
    %29 = vector.load %arg6[%c0_15, %c0_16] : memref<1x32xf32, #tpu.memory_space<vmem>>, vector<1x32xf32>
    %cst_17 = arith.constant dense<0.000000e+00> : vector<8xf32>
    %30 = vector.multi_reduction <add>, %27, %cst_17 [1] : vector<8x32xf32> to vector<8xf32>
    %31 = vector.shape_cast %30 : vector<8xf32> to vector<8x1xf32>
    %cst_18 = arith.constant 3.200000e+01 : f32
    %32 = vector.broadcast %cst_18 : f32 to vector<8x1xf32>
    %33 = arith.divf %31, %32 : vector<8x1xf32>
    %34 = vector.broadcast %33 : vector<8x1xf32> to vector<8x32xf32>
    %35 = arith.subf %27, %34 : vector<8x32xf32>
    %36 = arith.mulf %35, %35 : vector<8x32xf32>
    %cst_19 = arith.constant dense<0.000000e+00> : vector<8xf32>
    %37 = vector.multi_reduction <add>, %36, %cst_19 [1] : vector<8x32xf32> to vector<8xf32>
    %38 = vector.shape_cast %37 : vector<8xf32> to vector<8x1xf32>
    %cst_20 = arith.constant 3.200000e+01 : f32
    %39 = vector.broadcast %cst_20 : f32 to vector<8x1xf32>
    %40 = arith.divf %38, %39 : vector<8x1xf32>
    %41 = vector.broadcast %33 : vector<8x1xf32> to vector<8x32xf32>
    %42 = arith.subf %27, %41 : vector<8x32xf32>
    %cst_21 = arith.constant 9.99999974E-6 : f32
    %43 = vector.broadcast %cst_21 : f32 to vector<8x1xf32>
    %44 = arith.addf %40, %43 : vector<8x1xf32>
    %45 = math.rsqrt %44 : vector<8x1xf32>
    %46 = vector.broadcast %45 : vector<8x1xf32> to vector<8x32xf32>
    %47 = arith.mulf %42, %46 : vector<8x32xf32>
    %48 = vector.broadcast %28 : vector<1x32xf32> to vector<8x32xf32>
    %49 = arith.mulf %47, %48 : vector<8x32xf32>
    %50 = vector.broadcast %29 : vector<1x32xf32> to vector<8x32xf32>
    %51 = arith.addf %49, %50 : vector<8x32xf32>
    %52 = tpu.concatenate %25, %51 in 0 : vector<8x32xf32>, vector<8x32xf32> -> vector<16x32xf32>
    %53 = arith.truncf %52 : vector<16x32xf32> to vector<16x32xbf16>
    %c0_22 = arith.constant 0 : index
    %c0_23 = arith.constant 0 : index
    %54 = vector.load %arg7[%c0_22, %c0_23] : memref<32x32xbf16, #tpu.memory_space<vmem>>, vector<32x32xbf16>
    %cst_24 = arith.constant dense<0.000000e+00> : vector<16x32xf32>
    %55 = tpu.matmul %53, %54, %cst_24 {dimension_numbers = #tpu.dot_dimension_numbers<[1], [0], [0], [1], [0, 0, 1, 1], [], []>} : vector<16x32xbf16>, vector<32x32xbf16>, vector<16x32xf32> -> vector<16x32xf32>
    %56 = vector.extract_strided_slice %55 {offsets = [8, 0], sizes = [8, 32], strides = [1, 1]} : vector<16x32xf32> to vector<8x32xf32>
    %57 = vector.shape_cast %56 : vector<8x32xf32> to vector<1x8x32xf32>
    %c0_25 = arith.constant 0 : index
    %c0_26 = arith.constant 0 : index
    %c0_27 = arith.constant 0 : index
    %58 = vector.load %arg25[%c0_25, %c0_26, %c0_27] : memref<2x8x32xf32, #tpu.memory_space<vmem>>, vector<1x8x32xf32>
    tpu.vector_store %arg25[%c0_25, %c0_26, %c0_27], %57 {strides = array<i32>} : memref<2x8x32xf32, #tpu.memory_space<vmem>>, vector<1x8x32xf32>,
    %59 = vector.extract_strided_slice %55 {offsets = [0, 0], sizes = [8, 32], strides = [1, 1]} : vector<16x32xf32> to vector<8x32xf32>
    %60 = vector.shape_cast %59 : vector<8x32xf32> to vector<1x8x32xf32>
    %c1 = arith.constant 1 : index
    %c0_28 = arith.constant 0 : index
    %c0_29 = arith.constant 0 : index
    %61 = vector.load %arg25[%c1, %c0_28, %c0_29] : memref<2x8x32xf32, #tpu.memory_space<vmem>>, vector<1x8x32xf32>
    tpu.vector_store %arg25[%c1, %c0_28, %c0_29], %60 {strides = array<i32>} : memref<2x8x32xf32, #tpu.memory_space<vmem>>, vector<1x8x32xf32>,
    %c0_30 = arith.constant 0 : index
    %c0_31 = arith.constant 0 : index
    %62 = vector.load %arg8[%c0_30, %c0_31] : memref<32x32xbf16, #tpu.memory_space<vmem>>, vector<32x32xbf16>
    %cst_32 = arith.constant dense<0.000000e+00> : vector<16x32xf32>
    %63 = tpu.matmul %53, %62, %cst_32 {dimension_numbers = #tpu.dot_dimension_numbers<[1], [0], [0], [1], [0, 0, 1, 1], [], []>} : vector<16x32xbf16>, vector<32x32xbf16>, vector<16x32xf32> -> vector<16x32xf32>
    %64 = vector.shape_cast %63 : vector<16x32xf32> to vector<2x8x32xf32>
    %c0_33 = arith.constant 0 : index
    %c0_34 = arith.constant 0 : index
    %c0_35 = arith.constant 0 : index
    %65 = vector.load %arg26[%c0_33, %c0_34, %c0_35] : memref<2x8x32xf32, #tpu.memory_space<vmem>>, vector<2x8x32xf32>
    tpu.vector_store %arg26[%c0_33, %c0_34, %c0_35], %64 {strides = array<i32>} : memref<2x8x32xf32, #tpu.memory_space<vmem>>, vector<2x8x32xf32>,
    %c0_36 = arith.constant 0 : index
    %c0_37 = arith.constant 0 : index
    %66 = vector.load %arg9[%c0_36, %c0_37] : memref<32x32xbf16, #tpu.memory_space<vmem>>, vector<32x32xbf16>
    %cst_38 = arith.constant dense<0.000000e+00> : vector<16x32xf32>
    %67 = tpu.matmul %53, %66, %cst_38 {dimension_numbers = #tpu.dot_dimension_numbers<[1], [0], [0], [1], [0, 0, 1, 1], [], []>} : vector<16x32xbf16>, vector<32x32xbf16>, vector<16x32xf32> -> vector<16x32xf32>
    %68 = vector.shape_cast %67 : vector<16x32xf32> to vector<2x8x32xf32>
    %c0_39 = arith.constant 0 : index
    %c0_40 = arith.constant 0 : index
    %c0_41 = arith.constant 0 : index
    %69 = vector.load %arg27[%c0_39, %c0_40, %c0_41] : memref<2x8x32xf32, #tpu.memory_space<vmem>>, vector<2x8x32xf32>
    tpu.vector_store %arg27[%c0_39, %c0_40, %c0_41], %68 {strides = array<i32>} : memref<2x8x32xf32, #tpu.memory_space<vmem>>, vector<2x8x32xf32>,
    %c0_42 = arith.constant 0 : index
    %c0_43 = arith.constant 0 : index
    %c0_44 = arith.constant 0 : index
    %70 = vector.load %arg25[%c0_42, %c0_43, %c0_44] : memref<2x8x32xf32, #tpu.memory_space<vmem>>, vector<2x8x4xf32>
    %c0_45 = arith.constant 0 : index
    %c0_46 = arith.constant 0 : index
    %c0_47 = arith.constant 0 : index
    %71 = vector.load %arg26[%c0_45, %c0_46, %c0_47] : memref<2x8x32xf32, #tpu.memory_space<vmem>>, vector<2x8x4xf32>
    %c0_48 = arith.constant 0 : index
    %c0_49 = arith.constant 0 : index
    %c0_50 = arith.constant 0 : index
    %72 = vector.load %arg27[%c0_48, %c0_49, %c0_50] : memref<2x8x32xf32, #tpu.memory_space<vmem>>, vector<2x8x4xf32>
    %cst_51 = arith.constant dense<0.000000e+00> : vector<2x8x8xf32>
    %73 = tpu.matmul %70, %71, %cst_51 {dimension_numbers = #tpu.dot_dimension_numbers<[2], [2], [1], [1], [0, 0, 0, 1, 1, 1], [0], [0]>} : vector<2x8x4xf32>, vector<2x8x4xf32>, vector<2x8x8xf32> -> vector<2x8x8xf32>
    %cst_52 = arith.constant dense<0xFF800000> : vector<2x8xf32>
    %74 = vector.multi_reduction <maximumf>, %73, %cst_52 [2] : vector<2x8x8xf32> to vector<2x8xf32>
    %75 = vector.shape_cast %74 : vector<2x8xf32> to vector<2x8x1xf32>
    %76 = vector.broadcast %75 : vector<2x8x1xf32> to vector<2x8x8xf32>
    %77 = arith.subf %73, %76 : vector<2x8x8xf32>
    %78 = math.exp %77 : vector<2x8x8xf32>
    %cst_53 = arith.constant dense<0.000000e+00> : vector<2x8xf32>
    %79 = vector.multi_reduction <add>, %78, %cst_53 [2] : vector<2x8x8xf32> to vector<2x8xf32>
    %80 = vector.shape_cast %79 : vector<2x8xf32> to vector<2x8x1xf32>
    %81 = tpu.reciprocal %80 {approx = true} : vector<2x8x1xf32> -> vector<2x8x1xf32>
    %82 = vector.broadcast %81 : vector<2x8x1xf32> to vector<2x8x8xf32>
    %83 = arith.mulf %78, %82 : vector<2x8x8xf32>
    %cst_54 = arith.constant dense<0.000000e+00> : vector<2x8x4xf32>
    %84 = tpu.matmul %83, %72, %cst_54 {dimension_numbers = #tpu.dot_dimension_numbers<[2], [1], [1], [2], [0, 0, 0, 1, 1, 2], [0], [0]>} : vector<2x8x8xf32>, vector<2x8x4xf32>, vector<2x8x4xf32> -> vector<2x8x4xf32>
    %c0_55 = arith.constant 0 : index
    %c0_56 = arith.constant 0 : index
    %c0_57 = arith.constant 0 : index
    %85 = vector.load %arg28[%c0_55, %c0_56, %c0_57] : memref<2x8x32xf32, #tpu.memory_space<vmem>>, vector<2x8x4xf32>
    tpu.vector_store %arg28[%c0_55, %c0_56, %c0_57], %84 {strides = array<i32>} : memref<2x8x32xf32, #tpu.memory_space<vmem>>, vector<2x8x4xf32>,
    %c0_58 = arith.constant 0 : index
    %c0_59 = arith.constant 0 : index
    %c4 = arith.constant 4 : index
    %86 = vector.load %arg25[%c0_58, %c0_59, %c4] : memref<2x8x32xf32, #tpu.memory_space<vmem>>, vector<2x8x4xf32>
    %c0_60 = arith.constant 0 : index
    %c0_61 = arith.constant 0 : index
    %c4_62 = arith.constant 4 : index
    %87 = vector.load %arg26[%c0_60, %c0_61, %c4_62] : memref<2x8x32xf32, #tpu.memory_space<vmem>>, vector<2x8x4xf32>
    %c0_63 = arith.constant 0 : index
    %c0_64 = arith.constant 0 : index
    %c4_65 = arith.constant 4 : index
    %88 = vector.load %arg27[%c0_63, %c0_64, %c4_65] : memref<2x8x32xf32, #tpu.memory_space<vmem>>, vector<2x8x4xf32>
    %cst_66 = arith.constant dense<0.000000e+00> : vector<2x8x8xf32>
    %89 = tpu.matmul %86, %87, %cst_66 {dimension_numbers = #tpu.dot_dimension_numbers<[2], [2], [1], [1], [0, 0, 0, 1, 1, 1], [0], [0]>} : vector<2x8x4xf32>, vector<2x8x4xf32>, vector<2x8x8xf32> -> vector<2x8x8xf32>
    %cst_67 = arith.constant dense<0xFF800000> : vector<2x8xf32>
    %90 = vector.multi_reduction <maximumf>, %89, %cst_67 [2] : vector<2x8x8xf32> to vector<2x8xf32>
    %91 = vector.shape_cast %90 : vector<2x8xf32> to vector<2x8x1xf32>
    %92 = vector.broadcast %91 : vector<2x8x1xf32> to vector<2x8x8xf32>
    %93 = arith.subf %89, %92 : vector<2x8x8xf32>
    %94 = math.exp %93 : vector<2x8x8xf32>
    %cst_68 = arith.constant dense<0.000000e+00> : vector<2x8xf32>
    %95 = vector.multi_reduction <add>, %94, %cst_68 [2] : vector<2x8x8xf32> to vector<2x8xf32>
    %96 = vector.shape_cast %95 : vector<2x8xf32> to vector<2x8x1xf32>
    %97 = tpu.reciprocal %96 {approx = true} : vector<2x8x1xf32> -> vector<2x8x1xf32>
    %98 = vector.broadcast %97 : vector<2x8x1xf32> to vector<2x8x8xf32>
    %99 = arith.mulf %94, %98 : vector<2x8x8xf32>
    %cst_69 = arith.constant dense<0.000000e+00> : vector<2x8x4xf32>
    %100 = tpu.matmul %99, %88, %cst_69 {dimension_numbers = #tpu.dot_dimension_numbers<[2], [1], [1], [2], [0, 0, 0, 1, 1, 2], [0], [0]>} : vector<2x8x8xf32>, vector<2x8x4xf32>, vector<2x8x4xf32> -> vector<2x8x4xf32>
    %c0_70 = arith.constant 0 : index
    %c0_71 = arith.constant 0 : index
    %c4_72 = arith.constant 4 : index
    %101 = vector.load %arg28[%c0_70, %c0_71, %c4_72] : memref<2x8x32xf32, #tpu.memory_space<vmem>>, vector<2x8x4xf32>
    tpu.vector_store %arg28[%c0_70, %c0_71, %c4_72], %100 {strides = array<i32>} : memref<2x8x32xf32, #tpu.memory_space<vmem>>, vector<2x8x4xf32>,
    %c0_73 = arith.constant 0 : index
    %c0_74 = arith.constant 0 : index
    %c8 = arith.constant 8 : index
    %102 = vector.load %arg25[%c0_73, %c0_74, %c8] : memref<2x8x32xf32, #tpu.memory_space<vmem>>, vector<2x8x4xf32>
    %c0_75 = arith.constant 0 : index
    %c0_76 = arith.constant 0 : index
    %c8_77 = arith.constant 8 : index
    %103 = vector.load %arg26[%c0_75, %c0_76, %c8_77] : memref<2x8x32xf32, #tpu.memory_space<vmem>>, vector<2x8x4xf32>
    %c0_78 = arith.constant 0 : index
    %c0_79 = arith.constant 0 : index
    %c8_80 = arith.constant 8 : index
    %104 = vector.load %arg27[%c0_78, %c0_79, %c8_80] : memref<2x8x32xf32, #tpu.memory_space<vmem>>, vector<2x8x4xf32>
    %cst_81 = arith.constant dense<0.000000e+00> : vector<2x8x8xf32>
    %105 = tpu.matmul %102, %103, %cst_81 {dimension_numbers = #tpu.dot_dimension_numbers<[2], [2], [1], [1], [0, 0, 0, 1, 1, 1], [0], [0]>} : vector<2x8x4xf32>, vector<2x8x4xf32>, vector<2x8x8xf32> -> vector<2x8x8xf32>
    %cst_82 = arith.constant dense<0xFF800000> : vector<2x8xf32>
    %106 = vector.multi_reduction <maximumf>, %105, %cst_82 [2] : vector<2x8x8xf32> to vector<2x8xf32>
    %107 = vector.shape_cast %106 : vector<2x8xf32> to vector<2x8x1xf32>
    %108 = vector.broadcast %107 : vector<2x8x1xf32> to vector<2x8x8xf32>
    %109 = arith.subf %105, %108 : vector<2x8x8xf32>
    %110 = math.exp %109 : vector<2x8x8xf32>
    %cst_83 = arith.constant dense<0.000000e+00> : vector<2x8xf32>
    %111 = vector.multi_reduction <add>, %110, %cst_83 [2] : vector<2x8x8xf32> to vector<2x8xf32>
    %112 = vector.shape_cast %111 : vector<2x8xf32> to vector<2x8x1xf32>
    %113 = tpu.reciprocal %112 {approx = true} : vector<2x8x1xf32> -> vector<2x8x1xf32>
    %114 = vector.broadcast %113 : vector<2x8x1xf32> to vector<2x8x8xf32>
    %115 = arith.mulf %110, %114 : vector<2x8x8xf32>
    %cst_84 = arith.constant dense<0.000000e+00> : vector<2x8x4xf32>
    %116 = tpu.matmul %115, %104, %cst_84 {dimension_numbers = #tpu.dot_dimension_numbers<[2], [1], [1], [2], [0, 0, 0, 1, 1, 2], [0], [0]>} : vector<2x8x8xf32>, vector<2x8x4xf32>, vector<2x8x4xf32> -> vector<2x8x4xf32>
    %c0_85 = arith.constant 0 : index
    %c0_86 = arith.constant 0 : index
    %c8_87 = arith.constant 8 : index
    %117 = vector.load %arg28[%c0_85, %c0_86, %c8_87] : memref<2x8x32xf32, #tpu.memory_space<vmem>>, vector<2x8x4xf32>
    tpu.vector_store %arg28[%c0_85, %c0_86, %c8_87], %116 {strides = array<i32>} : memref<2x8x32xf32, #tpu.memory_space<vmem>>, vector<2x8x4xf32>,
    %c0_88 = arith.constant 0 : index
    %c0_89 = arith.constant 0 : index
    %c12 = arith.constant 12 : index
    %118 = vector.load %arg25[%c0_88, %c0_89, %c12] : memref<2x8x32xf32, #tpu.memory_space<vmem>>, vector<2x8x4xf32>
    %c0_90 = arith.constant 0 : index
    %c0_91 = arith.constant 0 : index
    %c12_92 = arith.constant 12 : index
    %119 = vector.load %arg26[%c0_90, %c0_91, %c12_92] : memref<2x8x32xf32, #tpu.memory_space<vmem>>, vector<2x8x4xf32>
    %c0_93 = arith.constant 0 : index
    %c0_94 = arith.constant 0 : index
    %c12_95 = arith.constant 12 : index
    %120 = vector.load %arg27[%c0_93, %c0_94, %c12_95] : memref<2x8x32xf32, #tpu.memory_space<vmem>>, vector<2x8x4xf32>
    %cst_96 = arith.constant dense<0.000000e+00> : vector<2x8x8xf32>
    %121 = tpu.matmul %118, %119, %cst_96 {dimension_numbers = #tpu.dot_dimension_numbers<[2], [2], [1], [1], [0, 0, 0, 1, 1, 1], [0], [0]>} : vector<2x8x4xf32>, vector<2x8x4xf32>, vector<2x8x8xf32> -> vector<2x8x8xf32>
    %cst_97 = arith.constant dense<0xFF800000> : vector<2x8xf32>
    %122 = vector.multi_reduction <maximumf>, %121, %cst_97 [2] : vector<2x8x8xf32> to vector<2x8xf32>
    %123 = vector.shape_cast %122 : vector<2x8xf32> to vector<2x8x1xf32>
    %124 = vector.broadcast %123 : vector<2x8x1xf32> to vector<2x8x8xf32>
    %125 = arith.subf %121, %124 : vector<2x8x8xf32>
    %126 = math.exp %125 : vector<2x8x8xf32>
    %cst_98 = arith.constant dense<0.000000e+00> : vector<2x8xf32>
    %127 = vector.multi_reduction <add>, %126, %cst_98 [2] : vector<2x8x8xf32> to vector<2x8xf32>
    %128 = vector.shape_cast %127 : vector<2x8xf32> to vector<2x8x1xf32>
    %129 = tpu.reciprocal %128 {approx = true} : vector<2x8x1xf32> -> vector<2x8x1xf32>
    %130 = vector.broadcast %129 : vector<2x8x1xf32> to vector<2x8x8xf32>
    %131 = arith.mulf %126, %130 : vector<2x8x8xf32>
    %cst_99 = arith.constant dense<0.000000e+00> : vector<2x8x4xf32>
    %132 = tpu.matmul %131, %120, %cst_99 {dimension_numbers = #tpu.dot_dimension_numbers<[2], [1], [1], [2], [0, 0, 0, 1, 1, 2], [0], [0]>} : vector<2x8x8xf32>, vector<2x8x4xf32>, vector<2x8x4xf32> -> vector<2x8x4xf32>
    %c0_100 = arith.constant 0 : index
    %c0_101 = arith.constant 0 : index
    %c12_102 = arith.constant 12 : index
    %133 = vector.load %arg28[%c0_100, %c0_101, %c12_102] : memref<2x8x32xf32, #tpu.memory_space<vmem>>, vector<2x8x4xf32>
    tpu.vector_store %arg28[%c0_100, %c0_101, %c12_102], %132 {strides = array<i32>} : memref<2x8x32xf32, #tpu.memory_space<vmem>>, vector<2x8x4xf32>,
    %c0_103 = arith.constant 0 : index
    %c0_104 = arith.constant 0 : index
    %c16 = arith.constant 16 : index
    %134 = vector.load %arg25[%c0_103, %c0_104, %c16] : memref<2x8x32xf32, #tpu.memory_space<vmem>>, vector<2x8x4xf32>
    %c0_105 = arith.constant 0 : index
    %c0_106 = arith.constant 0 : index
    %c16_107 = arith.constant 16 : index
    %135 = vector.load %arg26[%c0_105, %c0_106, %c16_107] : memref<2x8x32xf32, #tpu.memory_space<vmem>>, vector<2x8x4xf32>
    %c0_108 = arith.constant 0 : index
    %c0_109 = arith.constant 0 : index
    %c16_110 = arith.constant 16 : index
    %136 = vector.load %arg27[%c0_108, %c0_109, %c16_110] : memref<2x8x32xf32, #tpu.memory_space<vmem>>, vector<2x8x4xf32>
    %cst_111 = arith.constant dense<0.000000e+00> : vector<2x8x8xf32>
    %137 = tpu.matmul %134, %135, %cst_111 {dimension_numbers = #tpu.dot_dimension_numbers<[2], [2], [1], [1], [0, 0, 0, 1, 1, 1], [0], [0]>} : vector<2x8x4xf32>, vector<2x8x4xf32>, vector<2x8x8xf32> -> vector<2x8x8xf32>
    %cst_112 = arith.constant dense<0xFF800000> : vector<2x8xf32>
    %138 = vector.multi_reduction <maximumf>, %137, %cst_112 [2] : vector<2x8x8xf32> to vector<2x8xf32>
    %139 = vector.shape_cast %138 : vector<2x8xf32> to vector<2x8x1xf32>
    %140 = vector.broadcast %139 : vector<2x8x1xf32> to vector<2x8x8xf32>
    %141 = arith.subf %137, %140 : vector<2x8x8xf32>
    %142 = math.exp %141 : vector<2x8x8xf32>
    %cst_113 = arith.constant dense<0.000000e+00> : vector<2x8xf32>
    %143 = vector.multi_reduction <add>, %142, %cst_113 [2] : vector<2x8x8xf32> to vector<2x8xf32>
    %144 = vector.shape_cast %143 : vector<2x8xf32> to vector<2x8x1xf32>
    %145 = tpu.reciprocal %144 {approx = true} : vector<2x8x1xf32> -> vector<2x8x1xf32>
    %146 = vector.broadcast %145 : vector<2x8x1xf32> to vector<2x8x8xf32>
    %147 = arith.mulf %142, %146 : vector<2x8x8xf32>
    %cst_114 = arith.constant dense<0.000000e+00> : vector<2x8x4xf32>
    %148 = tpu.matmul %147, %136, %cst_114 {dimension_numbers = #tpu.dot_dimension_numbers<[2], [1], [1], [2], [0, 0, 0, 1, 1, 2], [0], [0]>} : vector<2x8x8xf32>, vector<2x8x4xf32>, vector<2x8x4xf32> -> vector<2x8x4xf32>
    %c0_115 = arith.constant 0 : index
    %c0_116 = arith.constant 0 : index
    %c16_117 = arith.constant 16 : index
    %149 = vector.load %arg28[%c0_115, %c0_116, %c16_117] : memref<2x8x32xf32, #tpu.memory_space<vmem>>, vector<2x8x4xf32>
    tpu.vector_store %arg28[%c0_115, %c0_116, %c16_117], %148 {strides = array<i32>} : memref<2x8x32xf32, #tpu.memory_space<vmem>>, vector<2x8x4xf32>,
    %c0_118 = arith.constant 0 : index
    %c0_119 = arith.constant 0 : index
    %c20 = arith.constant 20 : index
    %150 = vector.load %arg25[%c0_118, %c0_119, %c20] : memref<2x8x32xf32, #tpu.memory_space<vmem>>, vector<2x8x4xf32>
    %c0_120 = arith.constant 0 : index
    %c0_121 = arith.constant 0 : index
    %c20_122 = arith.constant 20 : index
    %151 = vector.load %arg26[%c0_120, %c0_121, %c20_122] : memref<2x8x32xf32, #tpu.memory_space<vmem>>, vector<2x8x4xf32>
    %c0_123 = arith.constant 0 : index
    %c0_124 = arith.constant 0 : index
    %c20_125 = arith.constant 20 : index
    %152 = vector.load %arg27[%c0_123, %c0_124, %c20_125] : memref<2x8x32xf32, #tpu.memory_space<vmem>>, vector<2x8x4xf32>
    %cst_126 = arith.constant dense<0.000000e+00> : vector<2x8x8xf32>
    %153 = tpu.matmul %150, %151, %cst_126 {dimension_numbers = #tpu.dot_dimension_numbers<[2], [2], [1], [1], [0, 0, 0, 1, 1, 1], [0], [0]>} : vector<2x8x4xf32>, vector<2x8x4xf32>, vector<2x8x8xf32> -> vector<2x8x8xf32>
    %cst_127 = arith.constant dense<0xFF800000> : vector<2x8xf32>
    %154 = vector.multi_reduction <maximumf>, %153, %cst_127 [2] : vector<2x8x8xf32> to vector<2x8xf32>
    %155 = vector.shape_cast %154 : vector<2x8xf32> to vector<2x8x1xf32>
    %156 = vector.broadcast %155 : vector<2x8x1xf32> to vector<2x8x8xf32>
    %157 = arith.subf %153, %156 : vector<2x8x8xf32>
    %158 = math.exp %157 : vector<2x8x8xf32>
    %cst_128 = arith.constant dense<0.000000e+00> : vector<2x8xf32>
    %159 = vector.multi_reduction <add>, %158, %cst_128 [2] : vector<2x8x8xf32> to vector<2x8xf32>
    %160 = vector.shape_cast %159 : vector<2x8xf32> to vector<2x8x1xf32>
    %161 = tpu.reciprocal %160 {approx = true} : vector<2x8x1xf32> -> vector<2x8x1xf32>
    %162 = vector.broadcast %161 : vector<2x8x1xf32> to vector<2x8x8xf32>
    %163 = arith.mulf %158, %162 : vector<2x8x8xf32>
    %cst_129 = arith.constant dense<0.000000e+00> : vector<2x8x4xf32>
    %164 = tpu.matmul %163, %152, %cst_129 {dimension_numbers = #tpu.dot_dimension_numbers<[2], [1], [1], [2], [0, 0, 0, 1, 1, 2], [0], [0]>} : vector<2x8x8xf32>, vector<2x8x4xf32>, vector<2x8x4xf32> -> vector<2x8x4xf32>
    %c0_130 = arith.constant 0 : index
    %c0_131 = arith.constant 0 : index
    %c20_132 = arith.constant 20 : index
    %165 = vector.load %arg28[%c0_130, %c0_131, %c20_132] : memref<2x8x32xf32, #tpu.memory_space<vmem>>, vector<2x8x4xf32>
    tpu.vector_store %arg28[%c0_130, %c0_131, %c20_132], %164 {strides = array<i32>} : memref<2x8x32xf32, #tpu.memory_space<vmem>>, vector<2x8x4xf32>,
    %c0_133 = arith.constant 0 : index
    %c0_134 = arith.constant 0 : index
    %c24 = arith.constant 24 : index
    %166 = vector.load %arg25[%c0_133, %c0_134, %c24] : memref<2x8x32xf32, #tpu.memory_space<vmem>>, vector<2x8x4xf32>
    %c0_135 = arith.constant 0 : index
    %c0_136 = arith.constant 0 : index
    %c24_137 = arith.constant 24 : index
    %167 = vector.load %arg26[%c0_135, %c0_136, %c24_137] : memref<2x8x32xf32, #tpu.memory_space<vmem>>, vector<2x8x4xf32>
    %c0_138 = arith.constant 0 : index
    %c0_139 = arith.constant 0 : index
    %c24_140 = arith.constant 24 : index
    %168 = vector.load %arg27[%c0_138, %c0_139, %c24_140] : memref<2x8x32xf32, #tpu.memory_space<vmem>>, vector<2x8x4xf32>
    %cst_141 = arith.constant dense<0.000000e+00> : vector<2x8x8xf32>
    %169 = tpu.matmul %166, %167, %cst_141 {dimension_numbers = #tpu.dot_dimension_numbers<[2], [2], [1], [1], [0, 0, 0, 1, 1, 1], [0], [0]>} : vector<2x8x4xf32>, vector<2x8x4xf32>, vector<2x8x8xf32> -> vector<2x8x8xf32>
    %cst_142 = arith.constant dense<0xFF800000> : vector<2x8xf32>
    %170 = vector.multi_reduction <maximumf>, %169, %cst_142 [2] : vector<2x8x8xf32> to vector<2x8xf32>
    %171 = vector.shape_cast %170 : vector<2x8xf32> to vector<2x8x1xf32>
    %172 = vector.broadcast %171 : vector<2x8x1xf32> to vector<2x8x8xf32>
    %173 = arith.subf %169, %172 : vector<2x8x8xf32>
    %174 = math.exp %173 : vector<2x8x8xf32>
    %cst_143 = arith.constant dense<0.000000e+00> : vector<2x8xf32>
    %175 = vector.multi_reduction <add>, %174, %cst_143 [2] : vector<2x8x8xf32> to vector<2x8xf32>
    %176 = vector.shape_cast %175 : vector<2x8xf32> to vector<2x8x1xf32>
    %177 = tpu.reciprocal %176 {approx = true} : vector<2x8x1xf32> -> vector<2x8x1xf32>
    %178 = vector.broadcast %177 : vector<2x8x1xf32> to vector<2x8x8xf32>
    %179 = arith.mulf %174, %178 : vector<2x8x8xf32>
    %cst_144 = arith.constant dense<0.000000e+00> : vector<2x8x4xf32>
    %180 = tpu.matmul %179, %168, %cst_144 {dimension_numbers = #tpu.dot_dimension_numbers<[2], [1], [1], [2], [0, 0, 0, 1, 1, 2], [0], [0]>} : vector<2x8x8xf32>, vector<2x8x4xf32>, vector<2x8x4xf32> -> vector<2x8x4xf32>
    %c0_145 = arith.constant 0 : index
    %c0_146 = arith.constant 0 : index
    %c24_147 = arith.constant 24 : index
    %181 = vector.load %arg28[%c0_145, %c0_146, %c24_147] : memref<2x8x32xf32, #tpu.memory_space<vmem>>, vector<2x8x4xf32>
    tpu.vector_store %arg28[%c0_145, %c0_146, %c24_147], %180 {strides = array<i32>} : memref<2x8x32xf32, #tpu.memory_space<vmem>>, vector<2x8x4xf32>,
    %c0_148 = arith.constant 0 : index
    %c0_149 = arith.constant 0 : index
    %c28 = arith.constant 28 : index
    %182 = vector.load %arg25[%c0_148, %c0_149, %c28] : memref<2x8x32xf32, #tpu.memory_space<vmem>>, vector<2x8x4xf32>
    %c0_150 = arith.constant 0 : index
    %c0_151 = arith.constant 0 : index
    %c28_152 = arith.constant 28 : index
    %183 = vector.load %arg26[%c0_150, %c0_151, %c28_152] : memref<2x8x32xf32, #tpu.memory_space<vmem>>, vector<2x8x4xf32>
    %c0_153 = arith.constant 0 : index
    %c0_154 = arith.constant 0 : index
    %c28_155 = arith.constant 28 : index
    %184 = vector.load %arg27[%c0_153, %c0_154, %c28_155] : memref<2x8x32xf32, #tpu.memory_space<vmem>>, vector<2x8x4xf32>
    %cst_156 = arith.constant dense<0.000000e+00> : vector<2x8x8xf32>
    %185 = tpu.matmul %182, %183, %cst_156 {dimension_numbers = #tpu.dot_dimension_numbers<[2], [2], [1], [1], [0, 0, 0, 1, 1, 1], [0], [0]>} : vector<2x8x4xf32>, vector<2x8x4xf32>, vector<2x8x8xf32> -> vector<2x8x8xf32>
    %cst_157 = arith.constant dense<0xFF800000> : vector<2x8xf32>
    %186 = vector.multi_reduction <maximumf>, %185, %cst_157 [2] : vector<2x8x8xf32> to vector<2x8xf32>
    %187 = vector.shape_cast %186 : vector<2x8xf32> to vector<2x8x1xf32>
    %188 = vector.broadcast %187 : vector<2x8x1xf32> to vector<2x8x8xf32>
    %189 = arith.subf %185, %188 : vector<2x8x8xf32>
    %190 = math.exp %189 : vector<2x8x8xf32>
    %cst_158 = arith.constant dense<0.000000e+00> : vector<2x8xf32>
    %191 = vector.multi_reduction <add>, %190, %cst_158 [2] : vector<2x8x8xf32> to vector<2x8xf32>
    %192 = vector.shape_cast %191 : vector<2x8xf32> to vector<2x8x1xf32>
    %193 = tpu.reciprocal %192 {approx = true} : vector<2x8x1xf32> -> vector<2x8x1xf32>
    %194 = vector.broadcast %193 : vector<2x8x1xf32> to vector<2x8x8xf32>
    %195 = arith.mulf %190, %194 : vector<2x8x8xf32>
    %cst_159 = arith.constant dense<0.000000e+00> : vector<2x8x4xf32>
    %196 = tpu.matmul %195, %184, %cst_159 {dimension_numbers = #tpu.dot_dimension_numbers<[2], [1], [1], [2], [0, 0, 0, 1, 1, 2], [0], [0]>} : vector<2x8x8xf32>, vector<2x8x4xf32>, vector<2x8x4xf32> -> vector<2x8x4xf32>
    %c0_160 = arith.constant 0 : index
    %c0_161 = arith.constant 0 : index
    %c28_162 = arith.constant 28 : index
    %197 = vector.load %arg28[%c0_160, %c0_161, %c28_162] : memref<2x8x32xf32, #tpu.memory_space<vmem>>, vector<2x8x4xf32>
    tpu.vector_store %arg28[%c0_160, %c0_161, %c28_162], %196 {strides = array<i32>} : memref<2x8x32xf32, #tpu.memory_space<vmem>>, vector<2x8x4xf32>,
    %c0_163 = arith.constant 0 : index
    %c0_164 = arith.constant 0 : index
    %c0_165 = arith.constant 0 : index
    %198 = vector.load %arg28[%c0_163, %c0_164, %c0_165] : memref<2x8x32xf32, #tpu.memory_space<vmem>>, vector<2x8x32xf32>
    %199 = vector.shape_cast %198 : vector<2x8x32xf32> to vector<16x32xf32>
    %200 = arith.truncf %199 : vector<16x32xf32> to vector<16x32xbf16>
    %c0_166 = arith.constant 0 : index
    %c0_167 = arith.constant 0 : index
    %201 = vector.load %arg10[%c0_166, %c0_167] : memref<32x32xbf16, #tpu.memory_space<vmem>>, vector<32x32xbf16>
    %cst_168 = arith.constant dense<0.000000e+00> : vector<16x32xf32>
    %202 = tpu.matmul %200, %201, %cst_168 {dimension_numbers = #tpu.dot_dimension_numbers<[1], [0], [0], [1], [0, 0, 1, 1], [], []>} : vector<16x32xbf16>, vector<32x32xbf16>, vector<16x32xf32> -> vector<16x32xf32>
    %c0_169 = arith.constant 0 : index
    %c0_170 = arith.constant 0 : index
    %203 = vector.load %arg11[%c0_169, %c0_170] : memref<1x32xf32, #tpu.memory_space<vmem>>, vector<1x32xf32>
    %204 = vector.broadcast %203 : vector<1x32xf32> to vector<16x32xf32>
    %205 = arith.addf %202, %204 : vector<16x32xf32>
    %206 = vector.extract_strided_slice %205 {offsets = [0, 0], sizes = [8, 32], strides = [1, 1]} : vector<16x32xf32> to vector<8x32xf32>
    %c0_171 = arith.constant 0 : index
    %c0_172 = arith.constant 0 : index
    %c0_173 = arith.constant 0 : index
    %207 = vector.load %arg1[%c0_171, %c0_172, %c0_173] : memref<1x8x32xf32, #tpu.memory_space<vmem>>, vector<1x8x32xf32>
    %208 = vector.shape_cast %207 : vector<1x8x32xf32> to vector<8x32xf32>
    %209 = arith.addf %206, %208 : vector<8x32xf32>
    %210 = vector.extract_strided_slice %205 {offsets = [8, 0], sizes = [8, 32], strides = [1, 1]} : vector<16x32xf32> to vector<8x32xf32>
    %c0_174 = arith.constant 0 : index
    %c0_175 = arith.constant 0 : index
    %c0_176 = arith.constant 0 : index
    %211 = vector.load %arg2[%c0_174, %c0_175, %c0_176] : memref<1x8x32xf32, #tpu.memory_space<vmem>>, vector<1x8x32xf32>
    %212 = vector.shape_cast %211 : vector<1x8x32xf32> to vector<8x32xf32>
    %213 = arith.addf %210, %212 : vector<8x32xf32>
    %c0_177 = arith.constant 0 : index
    %c0_178 = arith.constant 0 : index
    %214 = vector.load %arg12[%c0_177, %c0_178] : memref<1x32xf32, #tpu.memory_space<vmem>>, vector<1x32xf32>
    %c0_179 = arith.constant 0 : index
    %c0_180 = arith.constant 0 : index
    %215 = vector.load %arg13[%c0_179, %c0_180] : memref<1x32xf32, #tpu.memory_space<vmem>>, vector<1x32xf32>
    %c0_181 = arith.constant 0 : index
    %c0_182 = arith.constant 0 : index
    %216 = vector.load %arg14[%c0_181, %c0_182] : memref<32x16xbf16, #tpu.memory_space<vmem>>, vector<32x16xbf16>
    %c0_183 = arith.constant 0 : index
    %c0_184 = arith.constant 0 : index
    %217 = vector.load %arg15[%c0_183, %c0_184] : memref<1x16xf32, #tpu.memory_space<vmem>>, vector<1x16xf32>
    %c0_185 = arith.constant 0 : index
    %c0_186 = arith.constant 0 : index
    %218 = vector.load %arg16[%c0_185, %c0_186] : memref<16x32xbf16, #tpu.memory_space<vmem>>, vector<16x32xbf16>
    %c0_187 = arith.constant 0 : index
    %c0_188 = arith.constant 0 : index
    %219 = vector.load %arg17[%c0_187, %c0_188] : memref<1x32xf32, #tpu.memory_space<vmem>>, vector<1x32xf32>
    %cst_189 = arith.constant dense<0.000000e+00> : vector<8xf32>
    %220 = vector.multi_reduction <add>, %209, %cst_189 [1] : vector<8x32xf32> to vector<8xf32>
    %221 = vector.shape_cast %220 : vector<8xf32> to vector<8x1xf32>
    %cst_190 = arith.constant 3.200000e+01 : f32
    %222 = vector.broadcast %cst_190 : f32 to vector<8x1xf32>
    %223 = arith.divf %221, %222 : vector<8x1xf32>
    %224 = vector.broadcast %223 : vector<8x1xf32> to vector<8x32xf32>
    %225 = arith.subf %209, %224 : vector<8x32xf32>
    %226 = arith.mulf %225, %225 : vector<8x32xf32>
    %cst_191 = arith.constant dense<0.000000e+00> : vector<8xf32>
    %227 = vector.multi_reduction <add>, %226, %cst_191 [1] : vector<8x32xf32> to vector<8xf32>
    %228 = vector.shape_cast %227 : vector<8xf32> to vector<8x1xf32>
    %cst_192 = arith.constant 3.200000e+01 : f32
    %229 = vector.broadcast %cst_192 : f32 to vector<8x1xf32>
    %230 = arith.divf %228, %229 : vector<8x1xf32>
    %231 = vector.broadcast %223 : vector<8x1xf32> to vector<8x32xf32>
    %232 = arith.subf %209, %231 : vector<8x32xf32>
    %cst_193 = arith.constant 9.99999974E-6 : f32
    %233 = vector.broadcast %cst_193 : f32 to vector<8x1xf32>
    %234 = arith.addf %230, %233 : vector<8x1xf32>
    %235 = math.rsqrt %234 : vector<8x1xf32>
    %236 = vector.broadcast %235 : vector<8x1xf32> to vector<8x32xf32>
    %237 = arith.mulf %232, %236 : vector<8x32xf32>
    %238 = vector.broadcast %214 : vector<1x32xf32> to vector<8x32xf32>
    %239 = arith.mulf %237, %238 : vector<8x32xf32>
    %240 = vector.broadcast %215 : vector<1x32xf32> to vector<8x32xf32>
    %241 = arith.addf %239, %240 : vector<8x32xf32>
    %242 = arith.truncf %241 : vector<8x32xf32> to vector<8x32xbf16>
    %cst_194 = arith.constant dense<0.000000e+00> : vector<8x16xf32>
    %243 = tpu.matmul %242, %216, %cst_194 {dimension_numbers = #tpu.dot_dimension_numbers<[1], [0], [0], [1], [0, 0, 1, 1], [], []>} : vector<8x32xbf16>, vector<32x16xbf16>, vector<8x16xf32> -> vector<8x16xf32>
    %244 = vector.broadcast %217 : vector<1x16xf32> to vector<8x16xf32>
    %245 = arith.addf %243, %244 : vector<8x16xf32>
    %cst_195 = arith.constant 5.000000e-01 : f32
    %246 = vector.broadcast %cst_195 : f32 to vector<8x16xf32>
    %247 = arith.mulf %246, %245 : vector<8x16xf32>
    %cst_196 = arith.constant 0.707106769 : f32
    %248 = vector.broadcast %cst_196 : f32 to vector<8x16xf32>
    %249 = arith.mulf %245, %248 : vector<8x16xf32>
    %250 = math.erf %249 : vector<8x16xf32>
    %cst_197 = arith.constant 1.000000e+00 : f32
    %251 = vector.broadcast %cst_197 : f32 to vector<8x16xf32>
    %252 = arith.addf %251, %250 : vector<8x16xf32>
    %253 = arith.mulf %247, %252 : vector<8x16xf32>
    %254 = arith.truncf %253 : vector<8x16xf32> to vector<8x16xbf16>
    %cst_198 = arith.constant dense<0.000000e+00> : vector<8x32xf32>
    %255 = tpu.matmul %254, %218, %cst_198 {dimension_numbers = #tpu.dot_dimension_numbers<[1], [0], [0], [1], [0, 0, 1, 1], [], []>} : vector<8x16xbf16>, vector<16x32xbf16>, vector<8x32xf32> -> vector<8x32xf32>
    %256 = vector.broadcast %219 : vector<1x32xf32> to vector<8x32xf32>
    %257 = arith.addf %255, %256 : vector<8x32xf32>
    %258 = arith.addf %209, %257 : vector<8x32xf32>
    %c0_199 = arith.constant 0 : index
    %c0_200 = arith.constant 0 : index
    %259 = vector.load %arg18[%c0_199, %c0_200] : memref<1x32xf32, #tpu.memory_space<vmem>>, vector<1x32xf32>
    %c0_201 = arith.constant 0 : index
    %c0_202 = arith.constant 0 : index
    %260 = vector.load %arg19[%c0_201, %c0_202] : memref<1x32xf32, #tpu.memory_space<vmem>>, vector<1x32xf32>
    %c0_203 = arith.constant 0 : index
    %c0_204 = arith.constant 0 : index
    %261 = vector.load %arg20[%c0_203, %c0_204] : memref<32x16xbf16, #tpu.memory_space<vmem>>, vector<32x16xbf16>
    %c0_205 = arith.constant 0 : index
    %c0_206 = arith.constant 0 : index
    %262 = vector.load %arg21[%c0_205, %c0_206] : memref<1x16xf32, #tpu.memory_space<vmem>>, vector<1x16xf32>
    %c0_207 = arith.constant 0 : index
    %c0_208 = arith.constant 0 : index
    %263 = vector.load %arg22[%c0_207, %c0_208] : memref<16x32xbf16, #tpu.memory_space<vmem>>, vector<16x32xbf16>
    %c0_209 = arith.constant 0 : index
    %c0_210 = arith.constant 0 : index
    %264 = vector.load %arg23[%c0_209, %c0_210] : memref<1x32xf32, #tpu.memory_space<vmem>>, vector<1x32xf32>
    %cst_211 = arith.constant dense<0.000000e+00> : vector<8xf32>
    %265 = vector.multi_reduction <add>, %213, %cst_211 [1] : vector<8x32xf32> to vector<8xf32>
    %266 = vector.shape_cast %265 : vector<8xf32> to vector<8x1xf32>
    %cst_212 = arith.constant 3.200000e+01 : f32
    %267 = vector.broadcast %cst_212 : f32 to vector<8x1xf32>
    %268 = arith.divf %266, %267 : vector<8x1xf32>
    %269 = vector.broadcast %268 : vector<8x1xf32> to vector<8x32xf32>
    %270 = arith.subf %213, %269 : vector<8x32xf32>
    %271 = arith.mulf %270, %270 : vector<8x32xf32>
    %cst_213 = arith.constant dense<0.000000e+00> : vector<8xf32>
    %272 = vector.multi_reduction <add>, %271, %cst_213 [1] : vector<8x32xf32> to vector<8xf32>
    %273 = vector.shape_cast %272 : vector<8xf32> to vector<8x1xf32>
    %cst_214 = arith.constant 3.200000e+01 : f32
    %274 = vector.broadcast %cst_214 : f32 to vector<8x1xf32>
    %275 = arith.divf %273, %274 : vector<8x1xf32>
    %276 = vector.broadcast %268 : vector<8x1xf32> to vector<8x32xf32>
    %277 = arith.subf %213, %276 : vector<8x32xf32>
    %cst_215 = arith.constant 9.99999974E-6 : f32
    %278 = vector.broadcast %cst_215 : f32 to vector<8x1xf32>
    %279 = arith.addf %275, %278 : vector<8x1xf32>
    %280 = math.rsqrt %279 : vector<8x1xf32>
    %281 = vector.broadcast %280 : vector<8x1xf32> to vector<8x32xf32>
    %282 = arith.mulf %277, %281 : vector<8x32xf32>
    %283 = vector.broadcast %259 : vector<1x32xf32> to vector<8x32xf32>
    %284 = arith.mulf %282, %283 : vector<8x32xf32>
    %285 = vector.broadcast %260 : vector<1x32xf32> to vector<8x32xf32>
    %286 = arith.addf %284, %285 : vector<8x32xf32>
    %287 = arith.truncf %286 : vector<8x32xf32> to vector<8x32xbf16>
    %cst_216 = arith.constant dense<0.000000e+00> : vector<8x16xf32>
    %288 = tpu.matmul %287, %261, %cst_216 {dimension_numbers = #tpu.dot_dimension_numbers<[1], [0], [0], [1], [0, 0, 1, 1], [], []>} : vector<8x32xbf16>, vector<32x16xbf16>, vector<8x16xf32> -> vector<8x16xf32>
    %289 = vector.broadcast %262 : vector<1x16xf32> to vector<8x16xf32>
    %290 = arith.addf %288, %289 : vector<8x16xf32>
    %cst_217 = arith.constant 5.000000e-01 : f32
    %291 = vector.broadcast %cst_217 : f32 to vector<8x16xf32>
    %292 = arith.mulf %291, %290 : vector<8x16xf32>
    %cst_218 = arith.constant 0.707106769 : f32
    %293 = vector.broadcast %cst_218 : f32 to vector<8x16xf32>
    %294 = arith.mulf %290, %293 : vector<8x16xf32>
    %295 = math.erf %294 : vector<8x16xf32>
    %cst_219 = arith.constant 1.000000e+00 : f32
    %296 = vector.broadcast %cst_219 : f32 to vector<8x16xf32>
    %297 = arith.addf %296, %295 : vector<8x16xf32>
    %298 = arith.mulf %292, %297 : vector<8x16xf32>
    %299 = arith.truncf %298 : vector<8x16xf32> to vector<8x16xbf16>
    %cst_220 = arith.constant dense<0.000000e+00> : vector<8x32xf32>
    %300 = tpu.matmul %299, %263, %cst_220 {dimension_numbers = #tpu.dot_dimension_numbers<[1], [0], [0], [1], [0, 0, 1, 1], [], []>} : vector<8x16xbf16>, vector<16x32xbf16>, vector<8x32xf32> -> vector<8x32xf32>
    %301 = vector.broadcast %264 : vector<1x32xf32> to vector<8x32xf32>
    %302 = arith.addf %300, %301 : vector<8x32xf32>
    %303 = arith.addf %213, %302 : vector<8x32xf32>
    %304 = tpu.concatenate %258, %303 in 1 : vector<8x32xf32>, vector<8x32xf32> -> vector<8x64xf32>
    %c0_221 = arith.constant 0 : index
    %c0_222 = arith.constant 0 : index
    %305 = vector.load %arg24[%c0_221, %c0_222] : memref<8x64xf32, #tpu.memory_space<vmem>>, vector<8x64xf32>
    tpu.vector_store %arg24[%c0_221, %c0_222], %304 {strides = array<i32>} : memref<8x64xf32, #tpu.memory_space<vmem>>, vector<8x64xf32>,
    return
  }
  func.func @transform_0(%arg0: i32) -> (i32, i32, i32) {
    %c0_i32 = arith.constant 0 : i32
    %c0_i32_0 = arith.constant 0 : i32
    %c0_i32_1 = arith.constant 0 : i32
    return %arg0, %c0_i32, %c0_i32_0 : i32, i32, i32
  }
  func.func @transform_1(%arg0: i32) -> (i32, i32, i32) {
    %c0_i32 = arith.constant 0 : i32
    %c0_i32_0 = arith.constant 0 : i32
    %c0_i32_1 = arith.constant 0 : i32
    return %arg0, %c0_i32, %c0_i32_0 : i32, i32, i32
  }
  func.func @transform_2(%arg0: i32) -> (i32, i32) {
    %c0_i32 = arith.constant 0 : i32
    %c0_i32_0 = arith.constant 0 : i32
    %c0_i32_1 = arith.constant 0 : i32
    return %c0_i32, %c0_i32_0 : i32, i32
  }
  func.func @transform_3(%arg0: i32) -> (i32, i32) {
    %c0_i32 = arith.constant 0 : i32
    %c0_i32_0 = arith.constant 0 : i32
    %c0_i32_1 = arith.constant 0 : i32
    return %c0_i32, %c0_i32_0 : i32, i32
  }
  func.func @transform_4(%arg0: i32) -> (i32, i32) {
    %c0_i32 = arith.constant 0 : i32
    %c0_i32_0 = arith.constant 0 : i32
    %c0_i32_1 = arith.constant 0 : i32
    return %c0_i32, %c0_i32_0 : i32, i32
  }
  func.func @transform_5(%arg0: i32) -> (i32, i32) {
    %c0_i32 = arith.constant 0 : i32
    %c0_i32_0 = arith.constant 0 : i32
    %c0_i32_1 = arith.constant 0 : i32
    return %c0_i32, %c0_i32_0 : i32, i32
  }
  func.func @transform_6(%arg0: i32) -> (i32, i32) {
    %c0_i32 = arith.constant 0 : i32
    %c0_i32_0 = arith.constant 0 : i32
    %c0_i32_1 = arith.constant 0 : i32
    return %c0_i32, %c0_i32_0 : i32, i32
  }
  func.func @transform_7(%arg0: i32) -> (i32, i32) {
    %c0_i32 = arith.constant 0 : i32
    %c0_i32_0 = arith.constant 0 : i32
    %c0_i32_1 = arith.constant 0 : i32
    return %c0_i32, %c0_i32_0 : i32, i32
  }
  func.func @transform_8(%arg0: i32) -> (i32, i32) {
    %c0_i32 = arith.constant 0 : i32
    %c0_i32_0 = arith.constant 0 : i32
    %c0_i32_1 = arith.constant 0 : i32
    return %c0_i32, %c0_i32_0 : i32, i32
  }
  func.func @transform_9(%arg0: i32) -> (i32, i32) {
    %c0_i32 = arith.constant 0 : i32
    %c0_i32_0 = arith.constant 0 : i32
    %c0_i32_1 = arith.constant 0 : i32
    return %c0_i32, %c0_i32_0 : i32, i32
  }
  func.func @transform_10(%arg0: i32) -> (i32, i32) {
    %c0_i32 = arith.constant 0 : i32
    %c0_i32_0 = arith.constant 0 : i32
    %c0_i32_1 = arith.constant 0 : i32
    return %c0_i32, %c0_i32_0 : i32, i32
  }
  func.func @transform_11(%arg0: i32) -> (i32, i32) {
    %c0_i32 = arith.constant 0 : i32
    %c0_i32_0 = arith.constant 0 : i32
    %c0_i32_1 = arith.constant 0 : i32
    return %c0_i32, %c0_i32_0 : i32, i32
  }
  func.func @transform_12(%arg0: i32) -> (i32, i32) {
    %c0_i32 = arith.constant 0 : i32
    %c0_i32_0 = arith.constant 0 : i32
    %c0_i32_1 = arith.constant 0 : i32
    return %c0_i32, %c0_i32_0 : i32, i32
  }
  func.func @transform_13(%arg0: i32) -> (i32, i32) {
    %c0_i32 = arith.constant 0 : i32
    %c0_i32_0 = arith.constant 0 : i32
    %c0_i32_1 = arith.constant 0 : i32
    return %c0_i32, %c0_i32_0 : i32, i32
  }
  func.func @transform_14(%arg0: i32) -> (i32, i32) {
    %c0_i32 = arith.constant 0 : i32
    %c0_i32_0 = arith.constant 0 : i32
    %c0_i32_1 = arith.constant 0 : i32
    return %c0_i32, %c0_i32_0 : i32, i32
  }
  func.func @transform_15(%arg0: i32) -> (i32, i32) {
    %c0_i32 = arith.constant 0 : i32
    %c0_i32_0 = arith.constant 0 : i32
    %c0_i32_1 = arith.constant 0 : i32
    return %c0_i32, %c0_i32_0 : i32, i32
  }
  func.func @transform_16(%arg0: i32) -> (i32, i32) {
    %c0_i32 = arith.constant 0 : i32
    %c0_i32_0 = arith.constant 0 : i32
    %c0_i32_1 = arith.constant 0 : i32
    return %c0_i32, %c0_i32_0 : i32, i32
  }
  func.func @transform_17(%arg0: i32) -> (i32, i32) {
    %c0_i32 = arith.constant 0 : i32
    %c0_i32_0 = arith.constant 0 : i32
    %c0_i32_1 = arith.constant 0 : i32
    return %c0_i32, %c0_i32_0 : i32, i32
  }
  func.func @transform_18(%arg0: i32) -> (i32, i32) {
    %c0_i32 = arith.constant 0 : i32
    %c0_i32_0 = arith.constant 0 : i32
    %c0_i32_1 = arith.constant 0 : i32
    return %c0_i32, %c0_i32_0 : i32, i32
  }
  func.func @transform_19(%arg0: i32) -> (i32, i32) {
    %c0_i32 = arith.constant 0 : i32
    %c0_i32_0 = arith.constant 0 : i32
    %c0_i32_1 = arith.constant 0 : i32
    return %c0_i32, %c0_i32_0 : i32, i32
  }
  func.func @transform_20(%arg0: i32) -> (i32, i32) {
    %c0_i32 = arith.constant 0 : i32
    %c0_i32_0 = arith.constant 0 : i32
    %c0_i32_1 = arith.constant 0 : i32
    return %c0_i32, %c0_i32_0 : i32, i32
  }
  func.func @transform_21(%arg0: i32) -> (i32, i32) {
    %c0_i32 = arith.constant 0 : i32
    %c0_i32_0 = arith.constant 0 : i32
    %c0_i32_1 = arith.constant 0 : i32
    return %c0_i32, %c0_i32_0 : i32, i32
  }
  func.func @transform_22(%arg0: i32) -> (i32, i32) {
    %c0_i32 = arith.constant 0 : i32
    %c0_i32_0 = arith.constant 0 : i32
    %c0_i32_1 = arith.constant 0 : i32
    return %c0_i32, %c0_i32_0 : i32, i32
  }
  func.func @transform_23(%arg0: i32) -> (i32, i32) {
    %c0_i32 = arith.constant 0 : i32
    %c0_i32_0 = arith.constant 0 : i32
    return %arg0, %c0_i32 : i32, i32
  }
}

</mosaic_0001>

<llo_original>
// kernel: tpu_custom_call.1
$region0: #{tpu_custom_call.1}
  #allocation0 [shape = 'u32[]', space=smem, size = 0x4, offset = 0x4, fixed_abs, tag = 'smem constant byte address 0x4 - core index']
  #allocation1 [shape = 'u32[144,128]{1,0:T(1,128)}', space=vmem, size = 0x12000, scoped, tag = 'internal scratch']
  #allocation2 [shape = 'f32[2,8,32]{2,1,0:T(8,128)}', space=vmem, size = 0x2000, scoped, tag = 'scratch operand']
  #allocation3 [shape = 'f32[2,8,32]{2,1,0:T(8,128)}', space=vmem, size = 0x2000, scoped, tag = 'scratch operand']
  #allocation4 [shape = 'f32[2,8,32]{2,1,0:T(8,128)}', space=vmem, size = 0x2000, scoped, tag = 'scratch operand']
  #allocation5 [shape = 'f32[2,8,32]{2,1,0:T(8,128)}', space=vmem, size = 0x2000, scoped, tag = 'scratch operand']
  %s0 = inlined_call_operand.vmem [shape: f32[2,8,32], index: 0, kind: input, shape index: {}]
  %s1 = inlined_call_operand.vmem [shape: f32[2,8,32], index: 1, kind: input, shape index: {}]
  %s2 = inlined_call_operand.hbm [shape: f32[1,32], index: 2, kind: input, shape index: {}]
  %s3 = inlined_call_operand.hbm [shape: f32[1,32], index: 3, kind: input, shape index: {}]
  %s4 = inlined_call_operand.hbm [shape: f32[1,32], index: 4, kind: input, shape index: {}]
  %s5 = inlined_call_operand.hbm [shape: f32[1,32], index: 5, kind: input, shape index: {}]
  %s6 = inlined_call_operand.vmem [shape: bf16[32,32], index: 6, kind: input, shape index: {}]
  %s7 = inlined_call_operand.vmem [shape: bf16[32,32], index: 7, kind: input, shape index: {}]
  %s8 = inlined_call_operand.hbm [shape: bf16[32,32], index: 8, kind: input, shape index: {}]
  %s9 = inlined_call_operand.vmem [shape: bf16[32,32], index: 9, kind: input, shape index: {}]
  %s10 = inlined_call_operand.hbm [shape: f32[1,32], index: 10, kind: input, shape index: {}]
  %s11 = inlined_call_operand.hbm [shape: f32[1,32], index: 11, kind: input, shape index: {}]
  %s12 = inlined_call_operand.hbm [shape: f32[1,32], index: 12, kind: input, shape index: {}]
  %s13 = inlined_call_operand.vmem [shape: bf16[32,16], index: 13, kind: input, shape index: {}]
  %s14 = inlined_call_operand.hbm [shape: f32[1,16], index: 14, kind: input, shape index: {}]
  %s15 = inlined_call_operand.vmem [shape: bf16[16,32], index: 15, kind: input, shape index: {}]
  %s16 = inlined_call_operand.hbm [shape: f32[1,32], index: 16, kind: input, shape index: {}]
  %s17 = inlined_call_operand.hbm [shape: f32[1,32], index: 17, kind: input, shape index: {}]
  %s18 = inlined_call_operand.vmem [shape: f32[1,32], index: 18, kind: input, shape index: {}]
  %s19 = inlined_call_operand.vmem [shape: bf16[32,16], index: 19, kind: input, shape index: {}]
  %s20 = inlined_call_operand.vmem [shape: f32[1,16], index: 20, kind: input, shape index: {}]
  %s21 = inlined_call_operand.vmem [shape: bf16[16,32], index: 21, kind: input, shape index: {}]
  %s22 = inlined_call_operand.vmem [shape: f32[1,32], index: 22, kind: input, shape index: {}]
  %s23 = inlined_call_operand.hbm [shape: f32[16,64], index: 23, kind: output, shape index: {}]
  %s24 = sld [smem:[#allocation0]]
  $region169: #{tpu_custom_call.1} parent=0
    _
  %s26 = ssub.s32 1, %s24
  %s27 = scalar_select 0, %s26, %s24
  $region1: #{tpu_custom_call.1} parent=0
    #allocation6 [shape = 'u8[512]{0}', space=vmem, size = 0x400, scoped, tag = 'input window, operand 2, single buffered']
    #allocation7 [shape = 's32[2]{0}', space=sflag, size = 0x8, scoped, tag = 'scoped memory for tpu_custom_call.1']
    #allocation8 [shape = 's32[2]{0}', space=sflag, size = 0x8, scoped, tag = 'scoped memory for tpu_custom_call.1']
    #allocation9 [shape = 'u8[512]{0}', space=vmem, size = 0x400, scoped, tag = 'input window, operand 3, single buffered']
    #allocation10 [shape = 's32[1]{0}', space=sflag, size = 0x4, scoped, tag = 'scoped memory for tpu_custom_call.1']
    #allocation11 [shape = 'u8[512]{0}', space=vmem, size = 0x400, scoped, tag = 'input window, operand 4, single buffered']
    #allocation12 [shape = 'u8[512]{0}', space=vmem, size = 0x400, scoped, tag = 'input window, operand 5, single buffered']
    #allocation13 [shape = 's32[1]{0}', space=sflag, size = 0x4, scoped, tag = 'scoped memory for tpu_custom_call.1']
    #allocation14 [shape = 'u8[8192]{0}', space=vmem, size = 0x2000, scoped, tag = 'input window, operand 8, single buffered']
    #allocation15 [shape = 'u8[512]{0}', space=vmem, size = 0x400, scoped, tag = 'input window, operand 10, single buffered']
    #allocation16 [shape = 's32[1]{0}', space=sflag, size = 0x4, scoped, tag = 'scoped memory for tpu_custom_call.1']
    #allocation17 [shape = 'u8[512]{0}', space=vmem, size = 0x400, scoped, tag = 'input window, operand 11, single buffered']
    #allocation18 [shape = 'u8[512]{0}', space=vmem, size = 0x400, scoped, tag = 'input window, operand 12, single buffered']
    #allocation19 [shape = 's32[1]{0}', space=sflag, size = 0x4, scoped, tag = 'scoped memory for tpu_custom_call.1']
    #allocation20 [shape = 'u8[512]{0}', space=vmem, size = 0x400, scoped, tag = 'input window, operand 14, single buffered']
    #allocation21 [shape = 'u8[512]{0}', space=vmem, size = 0x400, scoped, tag = 'input window, operand 16, single buffered']
    #allocation22 [shape = 's32[1]{0}', space=sflag, size = 0x4, scoped, tag = 'scoped memory for tpu_custom_call.1']
    #allocation23 [shape = 'u8[512]{0}', space=vmem, size = 0x400, scoped, tag = 'input window, operand 17, single buffered']
    #allocation24 [shape = 'u8[8192]{0}', space=vmem, size = 0x2000, scoped, tag = 'output window, operand 0']
    %28 = vsyncpa [#allocation7], 0
    %29 = vsyncpa [#allocation10], 0
    %30 = vsyncpa [#allocation13], 0
    %31 = vsyncpa [#allocation16], 0
    %32 = vsyncpa [#allocation19], 0
    %33 = vsyncpa [#allocation22], 0
    %34 = vsyncpa [#allocation8], 0
    %s35 = scalar_lea.sflag [#allocation8], 1
    %36 = vsyncpa %s35, 0
    loop: start=0, step=1, limit=4
    $region2: #{tpu_custom_call.1} parent=1 // loop_pre_header
      _
    $region3: #{tpu_custom_call.1} parent=1 // loop_header
      %s38 = sphi 0, %s42
      %p39 = scmp.ge.s32.totalorder %s38, 4
      %s48 = sphi 0, %s50
      %s51 = sphi 0, %s48
      %s52 = sphi 0, %s51
      %s68 = sphi 0, %s52
      %s74 = sphi 0, %s76
      %s77 = sphi 0, %s74
      %s78 = sphi 0, %s77
      %s94 = sphi 0, %s78
      %s98 = sphi 0, %s98
      %s100 = sphi 0, %s98
      %s101 = sphi 0, %s100
      %s115 = sphi 0, %s101
      %s119 = sphi 0, %s119
      %s121 = sphi 0, %s119
      %s122 = sphi 0, %s121
      %s136 = sphi 0, %s122
      %s140 = sphi 0, %s140
      %s142 = sphi 0, %s140
      %s143 = sphi 0, %s142
      %s157 = sphi 0, %s143
      %s161 = sphi 0, %s161
      %s163 = sphi 0, %s161
      %s164 = sphi 0, %s163
      %s178 = sphi 0, %s164
      %s182 = sphi 0, %s182
      %s184 = sphi 0, %s182
      %s185 = sphi 0, %s184
      %s199 = sphi 0, %s185
      %s203 = sphi 0, %s203
      %s205 = sphi 0, %s203
      %s206 = sphi 0, %s205
      %s220 = sphi 0, %s206
      %s224 = sphi 0, %s224
      %s226 = sphi 0, %s224
      %s227 = sphi 0, %s226
      %s241 = sphi 0, %s227
      %s245 = sphi 0, %s245
      %s247 = sphi 0, %s245
      %s248 = sphi 0, %s247
      %s262 = sphi 0, %s248
      %s266 = sphi 0, %s266
      %s268 = sphi 0, %s266
      %s269 = sphi 0, %s268
      %s283 = sphi 0, %s269
      %s287 = sphi 0, %s287
      %s289 = sphi 0, %s287
      %s290 = sphi 0, %s289
      %s304 = sphi 0, %s290
      %s308 = sphi 0, %s308
      %s310 = sphi 0, %s308
      %s311 = sphi 0, %s310
      %s325 = sphi 0, %s311
      %s329 = sphi 0, %s329
      %s331 = sphi 0, %s329
      %s332 = sphi 0, %s331
      %s346 = sphi 0, %s332
      %s350 = sphi 0, %s350
      %s352 = sphi 0, %s350
      %s353 = sphi 0, %s352
      %s367 = sphi 0, %s353
      %s371 = sphi 0, %s371
      %s373 = sphi 0, %s371
      %s374 = sphi 0, %s373
      %s388 = sphi 0, %s374
      %s392 = sphi 0, %s392
      %s394 = sphi 0, %s392
      %s395 = sphi 0, %s394
      %s409 = sphi 0, %s395
      %s413 = sphi 0, %s413
      %s415 = sphi 0, %s413
      %s416 = sphi 0, %s415
      %s430 = sphi 0, %s416
      %s434 = sphi 0, %s434
      %s436 = sphi 0, %s434
      %s437 = sphi 0, %s436
      %s451 = sphi 0, %s437
      %s455 = sphi 0, %s455
      %s457 = sphi 0, %s455
      %s458 = sphi 0, %s457
      %s472 = sphi 0, %s458
      %s476 = sphi 0, %s476
      %s478 = sphi 0, %s476
      %s479 = sphi 0, %s478
      %s493 = sphi 0, %s479
      %s497 = sphi 0, %s497
      %s499 = sphi 0, %s497
      %s500 = sphi 0, %s499
      %s514 = sphi 0, %s500
      %s518 = sphi 0, %s518
      %s520 = sphi 0, %s518
      %s521 = sphi 0, %s520
      %s535 = sphi 0, %s521
      %s541 = sphi 0, %s543
      %s544 = sphi 0, %s541
      %s545 = sphi 0, %s544
      %s561 = sphi 0, %s545
    $region4: #{tpu_custom_call.1} parent=1 // loop_header_branch
      %41 = sbr.rel (%p39) target = $region8
    $region5: #{tpu_custom_call.1} parent=1 // loop_body
      %s43 = ssub.s32 %s38, 1
      %s44 = ssub.s32 %s38, 2
      %s45 = sadd.s32 %s38, 1
      %s46 = ssub.s32 %s38, %s45
      %p47 = scmp.eq.s32.totalorder %s46, 0
      %s49 = sadd.s32 %s48, 1
      %s50 = scalar_select %p47, %s48, %s49
      %p53 = pneg %p47
      %p54 = scmp.eq.s32.totalorder %s38, 1
      %p55 = por %p53, %p54
      %p56 = scmp.ne.s32.totalorder %s48, %s51
      %p57 = scmp.eq.s32.totalorder %s38, 0
      %p58 = por %p56, %p57
      %p59 = scmp.ne.s32.totalorder %s48, %s51
      %p60 = scmp.eq.s32.totalorder %s43, 1
      %p61 = por %p59, %p60
      %p62 = scmp.ne.s32.totalorder %s51, %s52
      %p63 = scmp.eq.s32.totalorder %s43, 0
      %p64 = por %p62, %p63
      %p65 = scmp.ne.s32.totalorder %s51, %s52
      %p66 = scmp.eq.s32.totalorder %s44, 1
      %p67 = por %p65, %p66
      %p69 = scmp.ne.s32.totalorder %s52, %s68
      %p70 = scmp.eq.s32.totalorder %s44, 0
      %p71 = por %p69, %p70
      %s72 = ssub.s32 %s38, %s45
      %p73 = scmp.eq.s32.totalorder %s72, 0
      %s75 = sadd.s32 %s74, 1
      %s76 = scalar_select %p73, %s74, %s75
      %p79 = pneg %p73
      %p80 = scmp.eq.s32.totalorder %s38, 1
      %p81 = por %p79, %p80
      %p82 = scmp.ne.s32.totalorder %s74, %s77
      %p83 = scmp.eq.s32.totalorder %s38, 0
      %p84 = por %p82, %p83
      %p85 = scmp.ne.s32.totalorder %s74, %s77
      %p86 = scmp.eq.s32.totalorder %s43, 1
      %p87 = por %p85, %p86
      %p88 = scmp.ne.s32.totalorder %s77, %s78
      %p89 = scmp.eq.s32.totalorder %s43, 0
      %p90 = por %p88, %p89
      %p91 = scmp.ne.s32.totalorder %s77, %s78
      %p92 = scmp.eq.s32.totalorder %s44, 1
      %p93 = por %p91, %p92
      %p95 = scmp.ne.s32.totalorder %s78, %s94
      %p96 = scmp.eq.s32.totalorder %s44, 0
      %p97 = por %p95, %p96
      %s99 = sadd.s32 %s98, 1
      %p102 = scmp.eq.s32.totalorder %s38, 1
      %p103 = scmp.ne.s32.totalorder %s98, %s100
      %p104 = scmp.eq.s32.totalorder %s38, 0
      %p105 = por %p103, %p104
      %p106 = scmp.ne.s32.totalorder %s98, %s100
      %p107 = scmp.eq.s32.totalorder %s43, 1
      %p108 = por %p106, %p107
      %p109 = scmp.ne.s32.totalorder %s100, %s101
      %p110 = scmp.eq.s32.totalorder %s43, 0
      %p111 = por %p109, %p110
      %p112 = scmp.ne.s32.totalorder %s100, %s101
      %p113 = scmp.eq.s32.totalorder %s44, 1
      %p114 = por %p112, %p113
      %p116 = scmp.ne.s32.totalorder %s101, %s115
      %p117 = scmp.eq.s32.totalorder %s44, 0
      %p118 = por %p116, %p117
      %s120 = sadd.s32 %s119, 1
      %p123 = scmp.eq.s32.totalorder %s38, 1
      %p124 = scmp.ne.s32.totalorder %s119, %s121
      %p125 = scmp.eq.s32.totalorder %s38, 0
      %p126 = por %p124, %p125
      %p127 = scmp.ne.s32.totalorder %s119, %s121
      %p128 = scmp.eq.s32.totalorder %s43, 1
      %p129 = por %p127, %p128
      %p130 = scmp.ne.s32.totalorder %s121, %s122
      %p131 = scmp.eq.s32.totalorder %s43, 0
      %p132 = por %p130, %p131
      %p133 = scmp.ne.s32.totalorder %s121, %s122
      %p134 = scmp.eq.s32.totalorder %s44, 1
      %p135 = por %p133, %p134
      %p137 = scmp.ne.s32.totalorder %s122, %s136
      %p138 = scmp.eq.s32.totalorder %s44, 0
      %p139 = por %p137, %p138
      %s141 = sadd.s32 %s140, 1
      %p144 = scmp.eq.s32.totalorder %s38, 1
      %p145 = scmp.ne.s32.totalorder %s140, %s142
      %p146 = scmp.eq.s32.totalorder %s38, 0
      %p147 = por %p145, %p146
      %p148 = scmp.ne.s32.totalorder %s140, %s142
      %p149 = scmp.eq.s32.totalorder %s43, 1
      %p150 = por %p148, %p149
      %p151 = scmp.ne.s32.totalorder %s142, %s143
      %p152 = scmp.eq.s32.totalorder %s43, 0
      %p153 = por %p151, %p152
      %p154 = scmp.ne.s32.totalorder %s142, %s143
      %p155 = scmp.eq.s32.totalorder %s44, 1
      %p156 = por %p154, %p155
      %p158 = scmp.ne.s32.totalorder %s143, %s157
      %p159 = scmp.eq.s32.totalorder %s44, 0
      %p160 = por %p158, %p159
      %s162 = sadd.s32 %s161, 1
      %p165 = scmp.eq.s32.totalorder %s38, 1
      %p166 = scmp.ne.s32.totalorder %s161, %s163
      %p167 = scmp.eq.s32.totalorder %s38, 0
      %p168 = por %p166, %p167
      %p169 = scmp.ne.s32.totalorder %s161, %s163
      %p170 = scmp.eq.s32.totalorder %s43, 1
      %p171 = por %p169, %p170
      %p172 = scmp.ne.s32.totalorder %s163, %s164
      %p173 = scmp.eq.s32.totalorder %s43, 0
      %p174 = por %p172, %p173
      %p175 = scmp.ne.s32.totalorder %s163, %s164
      %p176 = scmp.eq.s32.totalorder %s44, 1
      %p177 = por %p175, %p176
      %p179 = scmp.ne.s32.totalorder %s164, %s178
      %p180 = scmp.eq.s32.totalorder %s44, 0
      %p181 = por %p179, %p180
      %s183 = sadd.s32 %s182, 1
      %p186 = scmp.eq.s32.totalorder %s38, 1
      %p187 = scmp.ne.s32.totalorder %s182, %s184
      %p188 = scmp.eq.s32.totalorder %s38, 0
      %p189 = por %p187, %p188
      %p190 = scmp.ne.s32.totalorder %s182, %s184
      %p191 = scmp.eq.s32.totalorder %s43, 1
      %p192 = por %p190, %p191
      %p193 = scmp.ne.s32.totalorder %s184, %s185
      %p194 = scmp.eq.s32.totalorder %s43, 0
      %p195 = por %p193, %p194
      %p196 = scmp.ne.s32.totalorder %s184, %s185
      %p197 = scmp.eq.s32.totalorder %s44, 1
      %p198 = por %p196, %p197
      %p200 = scmp.ne.s32.totalorder %s185, %s199
      %p201 = scmp.eq.s32.totalorder %s44, 0
      %p202 = por %p200, %p201
      %s204 = sadd.s32 %s203, 1
      %p207 = scmp.eq.s32.totalorder %s38, 1
      %p208 = scmp.ne.s32.totalorder %s203, %s205
      %p209 = scmp.eq.s32.totalorder %s38, 0
      %p210 = por %p208, %p209
      %p211 = scmp.ne.s32.totalorder %s203, %s205
      %p212 = scmp.eq.s32.totalorder %s43, 1
      %p213 = por %p211, %p212
      %p214 = scmp.ne.s32.totalorder %s205, %s206
      %p215 = scmp.eq.s32.totalorder %s43, 0
      %p216 = por %p214, %p215
      %p217 = scmp.ne.s32.totalorder %s205, %s206
      %p218 = scmp.eq.s32.totalorder %s44, 1
      %p219 = por %p217, %p218
      %p221 = scmp.ne.s32.totalorder %s206, %s220
      %p222 = scmp.eq.s32.totalorder %s44, 0
      %p223 = por %p221, %p222
      %s225 = sadd.s32 %s224, 1
      %p228 = scmp.eq.s32.totalorder %s38, 1
      %p229 = scmp.ne.s32.totalorder %s224, %s226
      %p230 = scmp.eq.s32.totalorder %s38, 0
      %p231 = por %p229, %p230
      %p232 = scmp.ne.s32.totalorder %s224, %s226
      %p233 = scmp.eq.s32.totalorder %s43, 1
      %p234 = por %p232, %p233
      %p235 = scmp.ne.s32.totalorder %s226, %s227
      %p236 = scmp.eq.s32.totalorder %s43, 0
      %p237 = por %p235, %p236
      %p238 = scmp.ne.s32.totalorder %s226, %s227
      %p239 = scmp.eq.s32.totalorder %s44, 1
      %p240 = por %p238, %p239
      %p242 = scmp.ne.s32.totalorder %s227, %s241
      %p243 = scmp.eq.s32.totalorder %s44, 0
      %p244 = por %p242, %p243
      %s246 = sadd.s32 %s245, 1
      %p249 = scmp.eq.s32.totalorder %s38, 1
      %p250 = scmp.ne.s32.totalorder %s245, %s247
      %p251 = scmp.eq.s32.totalorder %s38, 0
      %p252 = por %p250, %p251
      %p253 = scmp.ne.s32.totalorder %s245, %s247
      %p254 = scmp.eq.s32.totalorder %s43, 1
      %p255 = por %p253, %p254
      %p256 = scmp.ne.s32.totalorder %s247, %s248
      %p257 = scmp.eq.s32.totalorder %s43, 0
      %p258 = por %p256, %p257
      %p259 = scmp.ne.s32.totalorder %s247, %s248
      %p260 = scmp.eq.s32.totalorder %s44, 1
      %p261 = por %p259, %p260
      %p263 = scmp.ne.s32.totalorder %s248, %s262
      %p264 = scmp.eq.s32.totalorder %s44, 0
      %p265 = por %p263, %p264
      %s267 = sadd.s32 %s266, 1
      %p270 = scmp.eq.s32.totalorder %s38, 1
      %p271 = scmp.ne.s32.totalorder %s266, %s268
      %p272 = scmp.eq.s32.totalorder %s38, 0
      %p273 = por %p271, %p272
      %p274 = scmp.ne.s32.totalorder %s266, %s268
      %p275 = scmp.eq.s32.totalorder %s43, 1
      %p276 = por %p274, %p275
      %p277 = scmp.ne.s32.totalorder %s268, %s269
      %p278 = scmp.eq.s32.totalorder %s43, 0
      %p279 = por %p277, %p278
      %p280 = scmp.ne.s32.totalorder %s268, %s269
      %p281 = scmp.eq.s32.totalorder %s44, 1
      %p282 = por %p280, %p281
      %p284 = scmp.ne.s32.totalorder %s269, %s283
      %p285 = scmp.eq.s32.totalorder %s44, 0
      %p286 = por %p284, %p285
      %s288 = sadd.s32 %s287, 1
      %p291 = scmp.eq.s32.totalorder %s38, 1
      %p292 = scmp.ne.s32.totalorder %s287, %s289
      %p293 = scmp.eq.s32.totalorder %s38, 0
      %p294 = por %p292, %p293
      %p295 = scmp.ne.s32.totalorder %s287, %s289
      %p296 = scmp.eq.s32.totalorder %s43, 1
      %p297 = por %p295, %p296
      %p298 = scmp.ne.s32.totalorder %s289, %s290
      %p299 = scmp.eq.s32.totalorder %s43, 0
      %p300 = por %p298, %p299
      %p301 = scmp.ne.s32.totalorder %s289, %s290
      %p302 = scmp.eq.s32.totalorder %s44, 1
      %p303 = por %p301, %p302
      %p305 = scmp.ne.s32.totalorder %s290, %s304
      %p306 = scmp.eq.s32.totalorder %s44, 0
      %p307 = por %p305, %p306
      %s309 = sadd.s32 %s308, 1
      %p312 = scmp.eq.s32.totalorder %s38, 1
      %p313 = scmp.ne.s32.totalorder %s308, %s310
      %p314 = scmp.eq.s32.totalorder %s38, 0
      %p315 = por %p313, %p314
      %p316 = scmp.ne.s32.totalorder %s308, %s310
      %p317 = scmp.eq.s32.totalorder %s43, 1
      %p318 = por %p316, %p317
      %p319 = scmp.ne.s32.totalorder %s310, %s311
      %p320 = scmp.eq.s32.totalorder %s43, 0
      %p321 = por %p319, %p320
      %p322 = scmp.ne.s32.totalorder %s310, %s311
      %p323 = scmp.eq.s32.totalorder %s44, 1
      %p324 = por %p322, %p323
      %p326 = scmp.ne.s32.totalorder %s311, %s325
      %p327 = scmp.eq.s32.totalorder %s44, 0
      %p328 = por %p326, %p327
      %s330 = sadd.s32 %s329, 1
      %p333 = scmp.eq.s32.totalorder %s38, 1
      %p334 = scmp.ne.s32.totalorder %s329, %s331
      %p335 = scmp.eq.s32.totalorder %s38, 0
      %p336 = por %p334, %p335
      %p337 = scmp.ne.s32.totalorder %s329, %s331
      %p338 = scmp.eq.s32.totalorder %s43, 1
      %p339 = por %p337, %p338
      %p340 = scmp.ne.s32.totalorder %s331, %s332
      %p341 = scmp.eq.s32.totalorder %s43, 0
      %p342 = por %p340, %p341
      %p343 = scmp.ne.s32.totalorder %s331, %s332
      %p344 = scmp.eq.s32.totalorder %s44, 1
      %p345 = por %p343, %p344
      %p347 = scmp.ne.s32.totalorder %s332, %s346
      %p348 = scmp.eq.s32.totalorder %s44, 0
      %p349 = por %p347, %p348
      %s351 = sadd.s32 %s350, 1
      %p354 = scmp.eq.s32.totalorder %s38, 1
      %p355 = scmp.ne.s32.totalorder %s350, %s352
      %p356 = scmp.eq.s32.totalorder %s38, 0
      %p357 = por %p355, %p356
      %p358 = scmp.ne.s32.totalorder %s350, %s352
      %p359 = scmp.eq.s32.totalorder %s43, 1
      %p360 = por %p358, %p359
      %p361 = scmp.ne.s32.totalorder %s352, %s353
      %p362 = scmp.eq.s32.totalorder %s43, 0
      %p363 = por %p361, %p362
      %p364 = scmp.ne.s32.totalorder %s352, %s353
      %p365 = scmp.eq.s32.totalorder %s44, 1
      %p366 = por %p364, %p365
      %p368 = scmp.ne.s32.totalorder %s353, %s367
      %p369 = scmp.eq.s32.totalorder %s44, 0
      %p370 = por %p368, %p369
      %s372 = sadd.s32 %s371, 1
      %p375 = scmp.eq.s32.totalorder %s38, 1
      %p376 = scmp.ne.s32.totalorder %s371, %s373
      %p377 = scmp.eq.s32.totalorder %s38, 0
      %p378 = por %p376, %p377
      %p379 = scmp.ne.s32.totalorder %s371, %s373
      %p380 = scmp.eq.s32.totalorder %s43, 1
      %p381 = por %p379, %p380
      %p382 = scmp.ne.s32.totalorder %s373, %s374
      %p383 = scmp.eq.s32.totalorder %s43, 0
      %p384 = por %p382, %p383
      %p385 = scmp.ne.s32.totalorder %s373, %s374
      %p386 = scmp.eq.s32.totalorder %s44, 1
      %p387 = por %p385, %p386
      %p389 = scmp.ne.s32.totalorder %s374, %s388
      %p390 = scmp.eq.s32.totalorder %s44, 0
      %p391 = por %p389, %p390
      %s393 = sadd.s32 %s392, 1
      %p396 = scmp.eq.s32.totalorder %s38, 1
      %p397 = scmp.ne.s32.totalorder %s392, %s394
      %p398 = scmp.eq.s32.totalorder %s38, 0
      %p399 = por %p397, %p398
      %p400 = scmp.ne.s32.totalorder %s392, %s394
      %p401 = scmp.eq.s32.totalorder %s43, 1
      %p402 = por %p400, %p401
      %p403 = scmp.ne.s32.totalorder %s394, %s395
      %p404 = scmp.eq.s32.totalorder %s43, 0
      %p405 = por %p403, %p404
      %p406 = scmp.ne.s32.totalorder %s394, %s395
      %p407 = scmp.eq.s32.totalorder %s44, 1
      %p408 = por %p406, %p407
      %p410 = scmp.ne.s32.totalorder %s395, %s409
      %p411 = scmp.eq.s32.totalorder %s44, 0
      %p412 = por %p410, %p411
      %s414 = sadd.s32 %s413, 1
      %p417 = scmp.eq.s32.totalorder %s38, 1
      %p418 = scmp.ne.s32.totalorder %s413, %s415
      %p419 = scmp.eq.s32.totalorder %s38, 0
      %p420 = por %p418, %p419
      %p421 = scmp.ne.s32.totalorder %s413, %s415
      %p422 = scmp.eq.s32.totalorder %s43, 1
      %p423 = por %p421, %p422
      %p424 = scmp.ne.s32.totalorder %s415, %s416
      %p425 = scmp.eq.s32.totalorder %s43, 0
      %p426 = por %p424, %p425
      %p427 = scmp.ne.s32.totalorder %s415, %s416
      %p428 = scmp.eq.s32.totalorder %s44, 1
      %p429 = por %p427, %p428
      %p431 = scmp.ne.s32.totalorder %s416, %s430
      %p432 = scmp.eq.s32.totalorder %s44, 0
      %p433 = por %p431, %p432
      %s435 = sadd.s32 %s434, 1
      %p438 = scmp.eq.s32.totalorder %s38, 1
      %p439 = scmp.ne.s32.totalorder %s434, %s436
      %p440 = scmp.eq.s32.totalorder %s38, 0
      %p441 = por %p439, %p440
      %p442 = scmp.ne.s32.totalorder %s434, %s436
      %p443 = scmp.eq.s32.totalorder %s43, 1
      %p444 = por %p442, %p443
      %p445 = scmp.ne.s32.totalorder %s436, %s437
      %p446 = scmp.eq.s32.totalorder %s43, 0
      %p447 = por %p445, %p446
      %p448 = scmp.ne.s32.totalorder %s436, %s437
      %p449 = scmp.eq.s32.totalorder %s44, 1
      %p450 = por %p448, %p449
      %p452 = scmp.ne.s32.totalorder %s437, %s451
      %p453 = scmp.eq.s32.totalorder %s44, 0
      %p454 = por %p452, %p453
      %s456 = sadd.s32 %s455, 1
      %p459 = scmp.eq.s32.totalorder %s38, 1
      %p460 = scmp.ne.s32.totalorder %s455, %s457
      %p461 = scmp.eq.s32.totalorder %s38, 0
      %p462 = por %p460, %p461
      %p463 = scmp.ne.s32.totalorder %s455, %s457
      %p464 = scmp.eq.s32.totalorder %s43, 1
      %p465 = por %p463, %p464
      %p466 = scmp.ne.s32.totalorder %s457, %s458
      %p467 = scmp.eq.s32.totalorder %s43, 0
      %p468 = por %p466, %p467
      %p469 = scmp.ne.s32.totalorder %s457, %s458
      %p470 = scmp.eq.s32.totalorder %s44, 1
      %p471 = por %p469, %p470
      %p473 = scmp.ne.s32.totalorder %s458, %s472
      %p474 = scmp.eq.s32.totalorder %s44, 0
      %p475 = por %p473, %p474
      %s477 = sadd.s32 %s476, 1
      %p480 = scmp.eq.s32.totalorder %s38, 1
      %p481 = scmp.ne.s32.totalorder %s476, %s478
      %p482 = scmp.eq.s32.totalorder %s38, 0
      %p483 = por %p481, %p482
      %p484 = scmp.ne.s32.totalorder %s476, %s478
      %p485 = scmp.eq.s32.totalorder %s43, 1
      %p486 = por %p484, %p485
      %p487 = scmp.ne.s32.totalorder %s478, %s479
      %p488 = scmp.eq.s32.totalorder %s43, 0
      %p489 = por %p487, %p488
      %p490 = scmp.ne.s32.totalorder %s478, %s479
      %p491 = scmp.eq.s32.totalorder %s44, 1
      %p492 = por %p490, %p491
      %p494 = scmp.ne.s32.totalorder %s479, %s493
      %p495 = scmp.eq.s32.totalorder %s44, 0
      %p496 = por %p494, %p495
      %s498 = sadd.s32 %s497, 1
      %p501 = scmp.eq.s32.totalorder %s38, 1
      %p502 = scmp.ne.s32.totalorder %s497, %s499
      %p503 = scmp.eq.s32.totalorder %s38, 0
      %p504 = por %p502, %p503
      %p505 = scmp.ne.s32.totalorder %s497, %s499
      %p506 = scmp.eq.s32.totalorder %s43, 1
      %p507 = por %p505, %p506
      %p508 = scmp.ne.s32.totalorder %s499, %s500
      %p509 = scmp.eq.s32.totalorder %s43, 0
      %p510 = por %p508, %p509
      %p511 = scmp.ne.s32.totalorder %s499, %s500
      %p512 = scmp.eq.s32.totalorder %s44, 1
      %p513 = por %p511, %p512
      %p515 = scmp.ne.s32.totalorder %s500, %s514
      %p516 = scmp.eq.s32.totalorder %s44, 0
      %p517 = por %p515, %p516
      %s519 = sadd.s32 %s518, 1
      %p522 = scmp.eq.s32.totalorder %s38, 1
      %p523 = scmp.ne.s32.totalorder %s518, %s520
      %p524 = scmp.eq.s32.totalorder %s38, 0
      %p525 = por %p523, %p524
      %p526 = scmp.ne.s32.totalorder %s518, %s520
      %p527 = scmp.eq.s32.totalorder %s43, 1
      %p528 = por %p526, %p527
      %p529 = scmp.ne.s32.totalorder %s520, %s521
      %p530 = scmp.eq.s32.totalorder %s43, 0
      %p531 = por %p529, %p530
      %p532 = scmp.ne.s32.totalorder %s520, %s521
      %p533 = scmp.eq.s32.totalorder %s44, 1
      %p534 = por %p532, %p533
      %p536 = scmp.ne.s32.totalorder %s521, %s535
      %p537 = scmp.eq.s32.totalorder %s44, 0
      %p538 = por %p536, %p537
      %s539 = ssub.s32 %s38, %s45
      %p540 = scmp.eq.s32.totalorder %s539, 0
      %s542 = sadd.s32 %s541, 1
      %s543 = scalar_select %p540, %s541, %s542
      %p546 = pneg %p540
      %p547 = scmp.eq.s32.totalorder %s38, 1
      %p548 = por %p546, %p547
      %p549 = scmp.ne.s32.totalorder %s541, %s544
      %p550 = scmp.eq.s32.totalorder %s38, 0
      %p551 = por %p549, %p550
      %p552 = scmp.ne.s32.totalorder %s541, %s544
      %p553 = scmp.eq.s32.totalorder %s43, 1
      %p554 = por %p552, %p553
      %p555 = scmp.ne.s32.totalorder %s544, %s545
      %p556 = scmp.eq.s32.totalorder %s43, 0
      %p557 = por %p555, %p556
      %p558 = scmp.ne.s32.totalorder %s544, %s545
      %p559 = scmp.eq.s32.totalorder %s44, 1
      %p560 = por %p558, %p559
      %p562 = scmp.ne.s32.totalorder %s545, %s561
      %p563 = scmp.eq.s32.totalorder %s44, 0
      %p564 = por %p562, %p563
      %p565 = scmp.le.s32.totalorder 1, %s38
      %p566 = scmp.lt.s32.totalorder %s38, 3
      %p567 = pnand %p565, %p566
      %p568 = pneg %p567
      // Predicated region
      $region9: #{tpu_custom_call.1} parent=5 // pred_check
        _
      $region10: #{tpu_custom_call.1} parent=5 // pred_check_branch
        %570 = sbr.rel (%p567) target = $region12
      $region11: #{tpu_custom_call.1} parent=5 // pred_region
        %s571 = ssub.s32 %s38, 1
        // Predicated region
        $region13: #{tpu_custom_call.1} parent=11 // pred_check
          %p572 = pneg %p111
        $region14: #{tpu_custom_call.1} parent=11 // pred_check_branch
          %574 = sbr.rel (%p572) target = $region16
        $region15: #{tpu_custom_call.1} parent=11 // pred_region
          %s576 = ssub.s32 16, 16
          %577 = vsyncadd [#allocation7], %s576
          %s579 = sshll.u32 [#allocation6], 4
          %s580 = int_to_ptr.vmem [resolvable:$true] %s579
          %582 = dma.hbm_to_vmem [thread:$0]  %s2, 16, %s580, [#allocation7]
        $region16: #{tpu_custom_call.1} parent=11 // pred_fallthru
          _
        // Predicated region
        $region17: #{tpu_custom_call.1} parent=11 // pred_check
          %p583 = pneg %p132
        $region18: #{tpu_custom_call.1} parent=11 // pred_check_branch
          %585 = sbr.rel (%p583) target = $region20
        $region19: #{tpu_custom_call.1} parent=11 // pred_region
          %s587 = ssub.s32 16, 16
          %588 = vsyncadd [#allocation10], %s587
          %s590 = sshll.u32 [#allocation9], 4
          %s591 = int_to_ptr.vmem [resolvable:$true] %s590
          %593 = dma.hbm_to_vmem [thread:$0]  %s3, 16, %s591, [#allocation10]
        $region20: #{tpu_custom_call.1} parent=11 // pred_fallthru
          _
        // Predicated region
        $region21: #{tpu_custom_call.1} parent=11 // pred_check
          %p594 = pneg %p153
        $region22: #{tpu_custom_call.1} parent=11 // pred_check_branch
          %596 = sbr.rel (%p594) target = $region24
        $region23: #{tpu_custom_call.1} parent=11 // pred_region
          %s598 = ssub.s32 16, 16
          %599 = vsyncadd [#allocation10], %s598
          %s601 = sshll.u32 [#allocation11], 4
          %s602 = int_to_ptr.vmem [resolvable:$true] %s601
          %604 = dma.hbm_to_vmem [thread:$0]  %s4, 16, %s602, [#allocation10]
        $region24: #{tpu_custom_call.1} parent=11 // pred_fallthru
          _
        // Predicated region
        $region25: #{tpu_custom_call.1} parent=11 // pred_check
          %p605 = pneg %p174
        $region26: #{tpu_custom_call.1} parent=11 // pred_check_branch
          %607 = sbr.rel (%p605) target = $region28
        $region27: #{tpu_custom_call.1} parent=11 // pred_region
          %s609 = ssub.s32 16, 16
          %610 = vsyncadd [#allocation13], %s609
          %s612 = sshll.u32 [#allocation12], 4
          %s613 = int_to_ptr.vmem [resolvable:$true] %s612
          %615 = dma.hbm_to_vmem [thread:$0]  %s5, 16, %s613, [#allocation13]
        $region28: #{tpu_custom_call.1} parent=11 // pred_fallthru
          _
        // Predicated region
        $region29: #{tpu_custom_call.1} parent=11 // pred_check
          %p616 = pneg %p195
        $region30: #{tpu_custom_call.1} parent=11 // pred_check_branch
          %618 = sbr.rel (%p616) target = $region32
        $region31: #{tpu_custom_call.1} parent=11 // pred_region
          _
        $region32: #{tpu_custom_call.1} parent=11 // pred_fallthru
          _
        // Predicated region
        $region33: #{tpu_custom_call.1} parent=11 // pred_check
          %p619 = pneg %p216
        $region34: #{tpu_custom_call.1} parent=11 // pred_check_branch
          %621 = sbr.rel (%p619) target = $region36
        $region35: #{tpu_custom_call.1} parent=11 // pred_region
          _
        $region36: #{tpu_custom_call.1} parent=11 // pred_fallthru
          _
        // Predicated region
        $region37: #{tpu_custom_call.1} parent=11 // pred_check
          %p622 = pneg %p237
        $region38: #{tpu_custom_call.1} parent=11 // pred_check_branch
          %624 = sbr.rel (%p622) target = $region40
        $region39: #{tpu_custom_call.1} parent=11 // pred_region
          %s626 = ssub.s32 256, 256
          %627 = vsyncadd [#allocation13], %s626
          %s628 = sshll.u32 [#allocation14], 4
          %s629 = int_to_ptr.vmem [resolvable:$true] %s628
          %634 = dma.hbm_to_vmem [thread:$0]  %s8, 256, %s629, [#allocation13], 64, 64, 4
        $region40: #{tpu_custom_call.1} parent=11 // pred_fallthru
          _
        // Predicated region
        $region41: #{tpu_custom_call.1} parent=11 // pred_check
          %p635 = pneg %p258
        $region42: #{tpu_custom_call.1} parent=11 // pred_check_branch
          %637 = sbr.rel (%p635) target = $region44
        $region43: #{tpu_custom_call.1} parent=11 // pred_region
          _
        $region44: #{tpu_custom_call.1} parent=11 // pred_fallthru
          _
        // Predicated region
        $region45: #{tpu_custom_call.1} parent=11 // pred_check
          %p638 = pneg %p279
        $region46: #{tpu_custom_call.1} parent=11 // pred_check_branch
          %640 = sbr.rel (%p638) target = $region48
        $region47: #{tpu_custom_call.1} parent=11 // pred_region
          %s642 = ssub.s32 16, 16
          %643 = vsyncadd [#allocation16], %s642
          %s645 = sshll.u32 [#allocation15], 4
          %s646 = int_to_ptr.vmem [resolvable:$true] %s645
          %648 = dma.hbm_to_vmem [thread:$0]  %s10, 16, %s646, [#allocation16]
        $region48: #{tpu_custom_call.1} parent=11 // pred_fallthru
          _
        // Predicated region
        $region49: #{tpu_custom_call.1} parent=11 // pred_check
          %p649 = pneg %p300
        $region50: #{tpu_custom_call.1} parent=11 // pred_check_branch
          %651 = sbr.rel (%p649) target = $region52
        $region51: #{tpu_custom_call.1} parent=11 // pred_region
          %s653 = ssub.s32 16, 16
          %654 = vsyncadd [#allocation16], %s653
          %s656 = sshll.u32 [#allocation17], 4
          %s657 = int_to_ptr.vmem [resolvable:$true] %s656
          %659 = dma.hbm_to_vmem [thread:$0]  %s11, 16, %s657, [#allocation16]
        $region52: #{tpu_custom_call.1} parent=11 // pred_fallthru
          _
        // Predicated region
        $region53: #{tpu_custom_call.1} parent=11 // pred_check
          %p660 = pneg %p321
        $region54: #{tpu_custom_call.1} parent=11 // pred_check_branch
          %662 = sbr.rel (%p660) target = $region56
        $region55: #{tpu_custom_call.1} parent=11 // pred_region
          %s664 = ssub.s32 16, 16
          %665 = vsyncadd [#allocation19], %s664
          %s667 = sshll.u32 [#allocation18], 4
          %s668 = int_to_ptr.vmem [resolvable:$true] %s667
          %670 = dma.hbm_to_vmem [thread:$0]  %s12, 16, %s668, [#allocation19]
        $region56: #{tpu_custom_call.1} parent=11 // pred_fallthru
          _
        // Predicated region
        $region57: #{tpu_custom_call.1} parent=11 // pred_check
          %p671 = pneg %p342
        $region58: #{tpu_custom_call.1} parent=11 // pred_check_branch
          %673 = sbr.rel (%p671) target = $region60
        $region59: #{tpu_custom_call.1} parent=11 // pred_region
          _
        $region60: #{tpu_custom_call.1} parent=11 // pred_fallthru
          _
        // Predicated region
        $region61: #{tpu_custom_call.1} parent=11 // pred_check
          %p674 = pneg %p363
        $region62: #{tpu_custom_call.1} parent=11 // pred_check_branch
          %676 = sbr.rel (%p674) target = $region64
        $region63: #{tpu_custom_call.1} parent=11 // pred_region
          %s678 = ssub.s32 16, 16
          %679 = vsyncadd [#allocation19], %s678
          %s681 = sshll.u32 [#allocation20], 4
          %s682 = int_to_ptr.vmem [resolvable:$true] %s681
          %684 = dma.hbm_to_vmem [thread:$0]  %s14, 16, %s682, [#allocation19]
        $region64: #{tpu_custom_call.1} parent=11 // pred_fallthru
          _
        // Predicated region
        $region65: #{tpu_custom_call.1} parent=11 // pred_check
          %p685 = pneg %p384
        $region66: #{tpu_custom_call.1} parent=11 // pred_check_branch
          %687 = sbr.rel (%p685) target = $region68
        $region67: #{tpu_custom_call.1} parent=11 // pred_region
          _
        $region68: #{tpu_custom_call.1} parent=11 // pred_fallthru
          _
        // Predicated region
        $region69: #{tpu_custom_call.1} parent=11 // pred_check
          %p688 = pneg %p405
        $region70: #{tpu_custom_call.1} parent=11 // pred_check_branch
          %690 = sbr.rel (%p688) target = $region72
        $region71: #{tpu_custom_call.1} parent=11 // pred_region
          %s692 = ssub.s32 16, 16
          %693 = vsyncadd [#allocation22], %s692
          %s695 = sshll.u32 [#allocation21], 4
          %s696 = int_to_ptr.vmem [resolvable:$true] %s695
          %698 = dma.hbm_to_vmem [thread:$0]  %s16, 16, %s696, [#allocation22]
        $region72: #{tpu_custom_call.1} parent=11 // pred_fallthru
          _
        // Predicated region
        $region73: #{tpu_custom_call.1} parent=11 // pred_check
          %p699 = pneg %p426
        $region74: #{tpu_custom_call.1} parent=11 // pred_check_branch
          %701 = sbr.rel (%p699) target = $region76
        $region75: #{tpu_custom_call.1} parent=11 // pred_region
          %s703 = ssub.s32 16, 16
          %704 = vsyncadd [#allocation22], %s703
          %s706 = sshll.u32 [#allocation23], 4
          %s707 = int_to_ptr.vmem [resolvable:$true] %s706
          %709 = dma.hbm_to_vmem [thread:$0]  %s17, 16, %s707, [#allocation22]
        $region76: #{tpu_custom_call.1} parent=11 // pred_fallthru
          _
        // Predicated region
        $region77: #{tpu_custom_call.1} parent=11 // pred_check
          %p710 = pneg %p447
        $region78: #{tpu_custom_call.1} parent=11 // pred_check_branch
          %712 = sbr.rel (%p710) target = $region80
        $region79: #{tpu_custom_call.1} parent=11 // pred_region
          _
        $region80: #{tpu_custom_call.1} parent=11 // pred_fallthru
          _
        // Predicated region
        $region81: #{tpu_custom_call.1} parent=11 // pred_check
          %p713 = pneg %p468
        $region82: #{tpu_custom_call.1} parent=11 // pred_check_branch
          %715 = sbr.rel (%p713) target = $region84
        $region83: #{tpu_custom_call.1} parent=11 // pred_region
          _
        $region84: #{tpu_custom_call.1} parent=11 // pred_fallthru
          _
        // Predicated region
        $region85: #{tpu_custom_call.1} parent=11 // pred_check
          %p716 = pneg %p489
        $region86: #{tpu_custom_call.1} parent=11 // pred_check_branch
          %718 = sbr.rel (%p716) target = $region88
        $region87: #{tpu_custom_call.1} parent=11 // pred_region
          _
        $region88: #{tpu_custom_call.1} parent=11 // pred_fallthru
          _
        // Predicated region
        $region89: #{tpu_custom_call.1} parent=11 // pred_check
          %p719 = pneg %p510
        $region90: #{tpu_custom_call.1} parent=11 // pred_check_branch
          %721 = sbr.rel (%p719) target = $region92
        $region91: #{tpu_custom_call.1} parent=11 // pred_region
          _
        $region92: #{tpu_custom_call.1} parent=11 // pred_fallthru
          _
        // Predicated region
        $region93: #{tpu_custom_call.1} parent=11 // pred_check
          %p722 = pneg %p531
        $region94: #{tpu_custom_call.1} parent=11 // pred_check_branch
          %724 = sbr.rel (%p722) target = $region96
        $region95: #{tpu_custom_call.1} parent=11 // pred_region
          _
        $region96: #{tpu_custom_call.1} parent=11 // pred_fallthru
          _
      $region12: #{tpu_custom_call.1} parent=5 // pred_fallthru
        _
      %p725 = scmp.lt.s32.totalorder %s38, 2
      // Predicated region
      $region97: #{tpu_custom_call.1} parent=5 // pred_check
        %p726 = pneg %p725
      $region98: #{tpu_custom_call.1} parent=5 // pred_check_branch
        %728 = sbr.rel (%p726) target = $region100
      $region99: #{tpu_custom_call.1} parent=5 // pred_region
        // Predicated region
        $region101: #{tpu_custom_call.1} parent=99 // pred_check
          %p729 = pneg %p58
        $region102: #{tpu_custom_call.1} parent=99 // pred_check_branch
          %731 = sbr.rel (%p729) target = $region104
        $region103: #{tpu_custom_call.1} parent=99 // pred_region
          %p732 = scmp.lt.s32.totalorder %s38, 1
          %s733 = scalar_select %p732, %s38, 1
          %s734 = smul.addr %s733, 8
          %s735 = scalar_lea.vmem %s0, %s734
        $region104: #{tpu_custom_call.1} parent=99 // pred_fallthru
          _
        // Predicated region
        $region105: #{tpu_custom_call.1} parent=99 // pred_check
          %p736 = pneg %p84
        $region106: #{tpu_custom_call.1} parent=99 // pred_check_branch
          %738 = sbr.rel (%p736) target = $region108
        $region107: #{tpu_custom_call.1} parent=99 // pred_region
          %p739 = scmp.lt.s32.totalorder %s38, 1
          %s740 = scalar_select %p739, %s38, 1
          %s741 = smul.addr %s740, 8
          %s742 = scalar_lea.vmem %s1, %s741
        $region108: #{tpu_custom_call.1} parent=99 // pred_fallthru
          _
      $region100: #{tpu_custom_call.1} parent=5 // pred_fallthru
        _
      %p743 = scmp.le.s32.totalorder 1, %s38
      %p744 = scmp.lt.s32.totalorder %s38, 3
      %p745 = pnand %p743, %p744
      %p746 = pneg %p745
      // Predicated region
      $region109: #{tpu_custom_call.1} parent=5 // pred_check
        _
      $region110: #{tpu_custom_call.1} parent=5 // pred_check_branch
        %748 = sbr.rel (%p745) target = $region112
      $region111: #{tpu_custom_call.1} parent=5 // pred_region
        %s749 = ssub.s32 %s38, 1
        // Predicated region
        $region113: #{tpu_custom_call.1} parent=111 // pred_check
          %p750 = pneg %p111
        $region114: #{tpu_custom_call.1} parent=111 // pred_check_branch
          %752 = sbr.rel (%p750) target = $region116
        $region115: #{tpu_custom_call.1} parent=111 // pred_region
          %753 = dma.done [#allocation7], 16
        $region116: #{tpu_custom_call.1} parent=111 // pred_fallthru
          _
        // Predicated region
        $region117: #{tpu_custom_call.1} parent=111 // pred_check
          %p754 = pneg %p132
        $region118: #{tpu_custom_call.1} parent=111 // pred_check_branch
          %756 = sbr.rel (%p754) target = $region120
        $region119: #{tpu_custom_call.1} parent=111 // pred_region
          %757 = dma.done [#allocation10], 16
        $region120: #{tpu_custom_call.1} parent=111 // pred_fallthru
          _
        // Predicated region
        $region121: #{tpu_custom_call.1} parent=111 // pred_check
          %p758 = pneg %p153
        $region122: #{tpu_custom_call.1} parent=111 // pred_check_branch
          %760 = sbr.rel (%p758) target = $region124
        $region123: #{tpu_custom_call.1} parent=111 // pred_region
          %761 = dma.done [#allocation10], 16
        $region124: #{tpu_custom_call.1} parent=111 // pred_fallthru
          _
        // Predicated region
        $region125: #{tpu_custom_call.1} parent=111 // pred_check
          %p762 = pneg %p174
        $region126: #{tpu_custom_call.1} parent=111 // pred_check_branch
          %764 = sbr.rel (%p762) target = $region128
        $region127: #{tpu_custom_call.1} parent=111 // pred_region
          %765 = dma.done [#allocation13], 16
        $region128: #{tpu_custom_call.1} parent=111 // pred_fallthru
          _
        // Predicated region
        $region129: #{tpu_custom_call.1} parent=111 // pred_check
          %p766 = pneg %p237
        $region130: #{tpu_custom_call.1} parent=111 // pred_check_branch
          %768 = sbr.rel (%p766) target = $region132
        $region131: #{tpu_custom_call.1} parent=111 // pred_region
          %769 = dma.done [#allocation13], 256
        $region132: #{tpu_custom_call.1} parent=111 // pred_fallthru
          _
        // Predicated region
        $region133: #{tpu_custom_call.1} parent=111 // pred_check
          %p770 = pneg %p279
        $region134: #{tpu_custom_call.1} parent=111 // pred_check_branch
          %772 = sbr.rel (%p770) target = $region136
        $region135: #{tpu_custom_call.1} parent=111 // pred_region
          %773 = dma.done [#allocation16], 16
        $region136: #{tpu_custom_call.1} parent=111 // pred_fallthru
          _
        // Predicated region
        $region137: #{tpu_custom_call.1} parent=111 // pred_check
          %p774 = pneg %p300
        $region138: #{tpu_custom_call.1} parent=111 // pred_check_branch
          %776 = sbr.rel (%p774) target = $region140
        $region139: #{tpu_custom_call.1} parent=111 // pred_region
          %777 = dma.done [#allocation16], 16
        $region140: #{tpu_custom_call.1} parent=111 // pred_fallthru
          _
        // Predicated region
        $region141: #{tpu_custom_call.1} parent=111 // pred_check
          %p778 = pneg %p321
        $region142: #{tpu_custom_call.1} parent=111 // pred_check_branch
          %780 = sbr.rel (%p778) target = $region144
        $region143: #{tpu_custom_call.1} parent=111 // pred_region
          %781 = dma.done [#allocation19], 16
        $region144: #{tpu_custom_call.1} parent=111 // pred_fallthru
          _
        // Predicated region
        $region145: #{tpu_custom_call.1} parent=111 // pred_check
          %p782 = pneg %p363
        $region146: #{tpu_custom_call.1} parent=111 // pred_check_branch
          %784 = sbr.rel (%p782) target = $region148
        $region147: #{tpu_custom_call.1} parent=111 // pred_region
          %785 = dma.done [#allocation19], 16
        $region148: #{tpu_custom_call.1} parent=111 // pred_fallthru
          _
        // Predicated region
        $region149: #{tpu_custom_call.1} parent=111 // pred_check
          %p786 = pneg %p405
        $region150: #{tpu_custom_call.1} parent=111 // pred_check_branch
          %788 = sbr.rel (%p786) target = $region152
        $region151: #{tpu_custom_call.1} parent=111 // pred_region
          %789 = dma.done [#allocation22], 16
        $region152: #{tpu_custom_call.1} parent=111 // pred_fallthru
          _
        // Predicated region
        $region153: #{tpu_custom_call.1} parent=111 // pred_check
          %p790 = pneg %p426
        $region154: #{tpu_custom_call.1} parent=111 // pred_check_branch
          %792 = sbr.rel (%p790) target = $region156
        $region155: #{tpu_custom_call.1} parent=111 // pred_region
          %793 = dma.done [#allocation22], 16
        $region156: #{tpu_custom_call.1} parent=111 // pred_fallthru
          _
        %p794 = scmp.lt.s32.totalorder %s43, 1
        %s795 = scalar_select %p794, %s43, 1
        %s796 = smul.addr %s795, 8
        %s797 = scalar_lea.vmem %s0, %s796
        %p798 = pneg %p64
        %p799 = pneg %p61
        %p800 = scmp.lt.s32.totalorder %s43, 1
        %s801 = scalar_select %p800, %s43, 1
        %s802 = smul.addr %s801, 8
        %s803 = scalar_lea.vmem %s1, %s802
        %p804 = pneg %p90
        %p805 = pneg %p87
        %p806 = pneg %p111
        %p807 = pneg %p108
        %p808 = pneg %p132
        %p809 = pneg %p129
        %p810 = pneg %p153
        %p811 = pneg %p150
        %p812 = pneg %p174
        %p813 = pneg %p171
        %p814 = pneg %p195
        %p815 = pneg %p192
        %p816 = pneg %p216
        %p817 = pneg %p213
        %p818 = pneg %p237
        %p819 = pneg %p234
        %p820 = pneg %p258
        %p821 = pneg %p255
        %p822 = pneg %p279
        %p823 = pneg %p276
        %p824 = pneg %p300
        %p825 = pneg %p297
        %p826 = pneg %p321
        %p827 = pneg %p318
        %p828 = pneg %p342
        %p829 = pneg %p339
        %p830 = pneg %p363
        %p831 = pneg %p360
        %p832 = pneg %p384
        %p833 = pneg %p381
        %p834 = pneg %p405
        %p835 = pneg %p402
        %p836 = pneg %p426
        %p837 = pneg %p423
        %p838 = pneg %p447
        %p839 = pneg %p444
        %p840 = pneg %p468
        %p841 = pneg %p465
        %p842 = pneg %p489
        %p843 = pneg %p486
        %p844 = pneg %p510
        %p845 = pneg %p507
        %p846 = pneg %p531
        %p847 = pneg %p528
        %p848 = pneg %p557
        %p849 = pneg %p554
        %s850 = sand.u32 %s544, 1
        %s851 = scalar_lea.sflag [#allocation8], %s850
        %s852 = sand.u32 %s544, 1
        %s853 = smul.addr %s852, 8
        %s854 = scalar_lea.vmem [#allocation24], %s853
        %p855 = scmp.lt.s32.totalorder %s43, 1
        %s856 = scalar_select %p855, %s43, 1
        %s857 = smul.addr %s856, 8
        %s858 = scalar_lea.vmem %s0, %s857
        %p859 = scmp.lt.s32.totalorder %s43, 1
        %s860 = scalar_select %p859, %s43, 1
        %s861 = smul.addr %s860, 8
        %s862 = scalar_lea.vmem %s1, %s861
        %v864 = vld [vmem:[%s858] sm:$0xff]
        %v865 = vld [vmem:[#allocation6] sm:$0x1]
        %v866 = vld [vmem:[#allocation9] sm:$0x1]
        %vm867 = vcmask 261120
        %v868 = vsel %vm867, %v864, 0.0
        %869 = vadd.xlane.f32.xlu0 %v868
        %v870 = vpop.xlane.xlu0 %869
        %v871 = vrcp.pop 32.0
        %v872 = vmul.f32 %v870, %v871
        %v873 = vsub.f32 %v864, %v872
        %v874 = vmul.f32 %v873, %v873
        %v875 = vsel %vm867, %v874, 0.0
        %876 = vadd.xlane.f32.xlu0 %v875
        %v877 = vpop.xlane.xlu0 %876
        %v878 = vmul.f32 %v877, %v871
        %v879 = vadd.f32 %v878, 1e-05
        %v880 = vrsqrt.pop %v879
        %v881 = vmul.f32 %v873, %v880
        %v883 = vlaneseq
        %v884 = vshrl.u32 %v883, 7
        %v885 = vsub.s32 0, %v884
        %v886 = vrot.slane %v865, %v885
        %v888 = vmul.f32 %v881, %v886
        %v890 = vlaneseq
        %v891 = vshrl.u32 %v890, 7
        %v892 = vsub.s32 0, %v891
        %v893 = vrot.slane %v866, %v892
        %v895 = vadd.f32 %v888, %v893
        %v896 = vld [vmem:[%s862] sm:$0xff]
        %v897 = vld [vmem:[#allocation11] sm:$0x1]
        %v898 = vld [vmem:[#allocation12] sm:$0x1]
        %v899 = vsel %vm867, %v896, 0.0
        %900 = vadd.xlane.f32.xlu0 %v899
        %v901 = vpop.xlane.xlu0 %900
        %v902 = vmul.f32 %v901, %v871
        %v903 = vsub.f32 %v896, %v902
        %v904 = vmul.f32 %v903, %v903
        %v905 = vsel %vm867, %v904, 0.0
        %906 = vadd.xlane.f32.xlu0 %v905
        %v907 = vpop.xlane.xlu0 %906
        %v908 = vmul.f32 %v907, %v871
        %v909 = vadd.f32 %v908, 1e-05
        %v910 = vrsqrt.pop %v909
        %v911 = vmul.f32 %v903, %v910
        %v913 = vlaneseq
        %v914 = vshrl.u32 %v913, 7
        %v915 = vsub.s32 0, %v914
        %v916 = vrot.slane %v897, %v915
        %v918 = vmul.f32 %v911, %v916
        %v920 = vlaneseq
        %v921 = vshrl.u32 %v920, 7
        %v922 = vsub.s32 0, %v921
        %v923 = vrot.slane %v898, %v922
        %v925 = vadd.f32 %v918, %v923
        %v926 = vpack.c.bf16 %v925, %v895
        %v927 = vld [vmem:[%s6] sm:$0xf]
        %v928 = vld [vmem:[%s6 + $0x4] sm:$0xf]
        %v929 = vld [vmem:[%s6 + $0x8] sm:$0xf]
        %v930 = vld [vmem:[%s6 + $0xc] sm:$0xf]
        %v935 = vunpack.c.l.b16 %v927
        %v936 = vunpack.c.l.b16 %v928
        %v937 = vunpack.c.l.b16 %v929
        %v938 = vunpack.c.l.b16 %v930
        %v939 = vpack.c.b16 %v936, %v935
        %v940 = vpack.c.b16 %v938, %v937
        %v944 = vsel %vm867, %v926, 0
        %946 = vmatprep.subr.bf16.mxu0 0
        %947 = vmatpush1.bf16.msra.mxu0 %v939
        %948 = vmatprep.subr.bf16.mxu0 0
        %949 = vmatpush1.bf16.msra.mxu0 %v940
        %950 = vmatprep.subr.bf16.mxu0 0
        %951 = vmatpush1.bf16.msra.mxu0 0
        %952 = vmatprep.subr.bf16.mxu0 0
        %953 = vmatpush1.bf16.msra.mxu0 0
        %954 = vmatprep.subr.bf16.mxu0 0
        %955 = vmatpush1.bf16.msra.mxu0 0
        %956 = vmatprep.subr.bf16.mxu0 0
        %957 = vmatpush1.bf16.msra.mxu0 0
        %958 = vmatprep.subr.bf16.mxu0 0
        %959 = vmatpush1.bf16.msra.mxu0 0
        %960 = vmatprep.subr.bf16.mxu0 0
        %961 = vmatpush1.bf16.msra.mxu0 0
        %962 = vmatprep.subr.bf16.mxu0 0
        %963 = vmatpush1.bf16.msra.mxu0 0
        %964 = vmatprep.subr.bf16.mxu0 0
        %965 = vmatpush1.bf16.msra.mxu0 0
        %966 = vmatprep.subr.bf16.mxu0 0
        %967 = vmatpush1.bf16.msra.mxu0 0
        %968 = vmatprep.subr.bf16.mxu0 0
        %969 = vmatpush1.bf16.msra.mxu0 0
        %970 = vmatprep.subr.bf16.mxu0 0
        %971 = vmatpush1.bf16.msra.mxu0 0
        %972 = vmatprep.subr.bf16.mxu0 0
        %973 = vmatpush1.bf16.msra.mxu0 0
        %974 = vmatprep.subr.bf16.mxu0 0
        %975 = vmatpush1.bf16.msra.mxu0 0
        %976 = vmatprep.subr.bf16.mxu0 0
        %977 = vmatpush1.bf16.msra.mxu0 0
        %978 = vmatprep.mubr.bf16.mxu0 0
        %979 = vmatmul.mubr.bf16.gmra.mrb[0].mxu0 %v944
        %v980 = vpop.f32.mrb[0].mxu0
        %v981 = vadd.f32 0.0, %v980
        %v982 = vpop.f32.mrb[0].mxu0
        %v983 = vpop.f32.mrb[0].mxu0
        %v984 = vadd.f32 0.0, %v983
        %v985 = vpop.f32.mrb[0].mxu0
        %986 = vdwg.mxu0
        %987 = vst.msk [vmem:[#allocation2] sm:$0xff] %vm867, %v984
        %s988 = scalar_lea.vmem [#allocation2], 8
        %989 = vst.msk [vmem:[%s988] sm:$0xff] %vm867, %v981
        %v990 = vld [vmem:[%s7] sm:$0xf]
        %v991 = vld [vmem:[%s7 + $0x4] sm:$0xf]
        %v992 = vld [vmem:[%s7 + $0x8] sm:$0xf]
        %v993 = vld [vmem:[%s7 + $0xc] sm:$0xf]
        %v998 = vunpack.c.l.b16 %v990
        %v999 = vunpack.c.l.b16 %v991
        %v1000 = vunpack.c.l.b16 %v992
        %v1001 = vunpack.c.l.b16 %v993
        %v1002 = vpack.c.b16 %v999, %v998
        %v1003 = vpack.c.b16 %v1001, %v1000
        %1006 = vmatprep.subr.bf16.mxu0 0
        %1007 = vmatpush1.bf16.msra.mxu0 %v1002
        %1008 = vmatprep.subr.bf16.mxu0 0
        %1009 = vmatpush1.bf16.msra.mxu0 %v1003
        %1010 = vmatprep.subr.bf16.mxu0 0
        %1011 = vmatpush1.bf16.msra.mxu0 0
        %1012 = vmatprep.subr.bf16.mxu0 0
        %1013 = vmatpush1.bf16.msra.mxu0 0
        %1014 = vmatprep.subr.bf16.mxu0 0
        %1015 = vmatpush1.bf16.msra.mxu0 0
        %1016 = vmatprep.subr.bf16.mxu0 0
        %1017 = vmatpush1.bf16.msra.mxu0 0
        %1018 = vmatprep.subr.bf16.mxu0 0
        %1019 = vmatpush1.bf16.msra.mxu0 0
        %1020 = vmatprep.subr.bf16.mxu0 0
        %1021 = vmatpush1.bf16.msra.mxu0 0
        %1022 = vmatprep.subr.bf16.mxu0 0
        %1023 = vmatpush1.bf16.msra.mxu0 0
        %1024 = vmatprep.subr.bf16.mxu0 0
        %1025 = vmatpush1.bf16.msra.mxu0 0
        %1026 = vmatprep.subr.bf16.mxu0 0
        %1027 = vmatpush1.bf16.msra.mxu0 0
        %1028 = vmatprep.subr.bf16.mxu0 0
        %1029 = vmatpush1.bf16.msra.mxu0 0
        %1030 = vmatprep.subr.bf16.mxu0 0
        %1031 = vmatpush1.bf16.msra.mxu0 0
        %1032 = vmatprep.subr.bf16.mxu0 0
        %1033 = vmatpush1.bf16.msra.mxu0 0
        %1034 = vmatprep.subr.bf16.mxu0 0
        %1035 = vmatpush1.bf16.msra.mxu0 0
        %1036 = vmatprep.subr.bf16.mxu0 0
        %1037 = vmatpush1.bf16.msra.mxu0 0
        %1038 = vmatprep.mubr.bf16.mxu0 0
        %1039 = vmatmul.mubr.bf16.gmra.mrb[0].mxu0 %v944
        %v1040 = vpop.f32.mrb[0].mxu0
        %v1041 = vadd.f32 0.0, %v1040
        %v1042 = vpop.f32.mrb[0].mxu0
        %v1043 = vpop.f32.mrb[0].mxu0
        %v1044 = vadd.f32 0.0, %v1043
        %v1045 = vpop.f32.mrb[0].mxu0
        %1046 = vdwg.mxu0
        %1047 = vst.msk [vmem:[#allocation3] sm:$0xff] %vm867, %v1041
        %1048 = vst.msk [vmem:[#allocation3 + $0x8] sm:$0xff] %vm867, %v1044
        %v1049 = vld [vmem:[#allocation14] sm:$0xf]
        %v1050 = vld [vmem:[#allocation14 + $0x4] sm:$0xf]
        %v1051 = vld [vmem:[#allocation14 + $0x8] sm:$0xf]
        %v1052 = vld [vmem:[#allocation14 + $0xc] sm:$0xf]
        %v1057 = vunpack.c.l.b16 %v1049
        %v1058 = vunpack.c.l.b16 %v1050
        %v1059 = vunpack.c.l.b16 %v1051
        %v1060 = vunpack.c.l.b16 %v1052
        %v1061 = vpack.c.b16 %v1058, %v1057
        %v1062 = vpack.c.b16 %v1060, %v1059
        %1065 = vmatprep.subr.bf16.mxu0 0
        %1066 = vmatpush1.bf16.msra.mxu0 %v1061
        %1067 = vmatprep.subr.bf16.mxu0 0
        %1068 = vmatpush1.bf16.msra.mxu0 %v1062
        %1069 = vmatprep.subr.bf16.mxu0 0
        %1070 = vmatpush1.bf16.msra.mxu0 0
        %1071 = vmatprep.subr.bf16.mxu0 0
        %1072 = vmatpush1.bf16.msra.mxu0 0
        %1073 = vmatprep.subr.bf16.mxu0 0
        %1074 = vmatpush1.bf16.msra.mxu0 0
        %1075 = vmatprep.subr.bf16.mxu0 0
        %1076 = vmatpush1.bf16.msra.mxu0 0
        %1077 = vmatprep.subr.bf16.mxu0 0
        %1078 = vmatpush1.bf16.msra.mxu0 0
        %1079 = vmatprep.subr.bf16.mxu0 0
        %1080 = vmatpush1.bf16.msra.mxu0 0
        %1081 = vmatprep.subr.bf16.mxu0 0
        %1082 = vmatpush1.bf16.msra.mxu0 0
        %1083 = vmatprep.subr.bf16.mxu0 0
        %1084 = vmatpush1.bf16.msra.mxu0 0
        %1085 = vmatprep.subr.bf16.mxu0 0
        %1086 = vmatpush1.bf16.msra.mxu0 0
        %1087 = vmatprep.subr.bf16.mxu0 0
        %1088 = vmatpush1.bf16.msra.mxu0 0
        %1089 = vmatprep.subr.bf16.mxu0 0
        %1090 = vmatpush1.bf16.msra.mxu0 0
        %1091 = vmatprep.subr.bf16.mxu0 0
        %1092 = vmatpush1.bf16.msra.mxu0 0
        %1093 = vmatprep.subr.bf16.mxu0 0
        %1094 = vmatpush1.bf16.msra.mxu0 0
        %1095 = vmatprep.subr.bf16.mxu0 0
        %1096 = vmatpush1.bf16.msra.mxu0 0
        %1097 = vmatprep.mubr.bf16.mxu0 0
        %1098 = vmatmul.mubr.bf16.gmra.mrb[0].mxu0 %v944
        %v1099 = vpop.f32.mrb[0].mxu0
        %v1100 = vadd.f32 0.0, %v1099
        %v1101 = vpop.f32.mrb[0].mxu0
        %v1102 = vpop.f32.mrb[0].mxu0
        %v1103 = vadd.f32 0.0, %v1102
        %v1104 = vpop.f32.mrb[0].mxu0
        %1105 = vdwg.mxu0
        %1106 = vst.msk [vmem:[#allocation4] sm:$0xff] %vm867, %v1100
        %1107 = vst.msk [vmem:[#allocation4 + $0x8] sm:$0xff] %vm867, %v1103
        %v1108 = vld [vmem:[#allocation2] sm:$0xff]
        %v1109 = vld [vmem:[#allocation2 + $0x8] sm:$0xff]
        %v1110 = vld [vmem:[#allocation3] sm:$0xff]
        %v1111 = vld [vmem:[#allocation3 + $0x8] sm:$0xff]
        %v1112 = vld [vmem:[#allocation4] sm:$0xff]
        %v1113 = vld [vmem:[#allocation4 + $0x8] sm:$0xff]
        %vm1114 = vcmask 31744
        %v1116 = vsel %vm1114, %v1108, 0
        %v1119 = vsel %vm1114, %v1110, 0
        %1121 = vmatprep.subr.mxu0 0.0
        %1122 = vmatpush1.xpose.msra.mxu0 %v1119
        %1123 = vmatprep.subr.mxu0 0.0
        %1124 = vmatpush1.xpose.msra.mxu0 0.0
        %1125 = vmatprep.subr.mxu0 0.0
        %1126 = vmatpush1.xpose.msra.mxu0 0.0
        %1127 = vmatprep.subr.mxu0 0.0
        %1128 = vmatpush1.xpose.msra.mxu0 0.0
        %1129 = vmatprep.subr.mxu0 0.0
        %1130 = vmatpush1.xpose.msra.mxu0 0.0
        %1131 = vmatprep.subr.mxu0 0.0
        %1132 = vmatpush1.xpose.msra.mxu0 0.0
        %1133 = vmatprep.subr.mxu0 0.0
        %1134 = vmatpush1.xpose.msra.mxu0 0.0
        %1135 = vmatprep.subr.mxu0 0.0
        %1136 = vmatpush1.xpose.msra.mxu0 0.0
        %1137 = vmatprep.subr.mxu0 0.0
        %1138 = vmatpush1.xpose.msra.mxu0 0.0
        %1139 = vmatprep.subr.mxu0 0.0
        %1140 = vmatpush1.xpose.msra.mxu0 0.0
        %1141 = vmatprep.subr.mxu0 0.0
        %1142 = vmatpush1.xpose.msra.mxu0 0.0
        %1143 = vmatprep.subr.mxu0 0.0
        %1144 = vmatpush1.xpose.msra.mxu0 0.0
        %1145 = vmatprep.subr.mxu0 0.0
        %1146 = vmatpush1.xpose.msra.mxu0 0.0
        %1147 = vmatprep.subr.mxu0 0.0
        %1148 = vmatpush1.xpose.msra.mxu0 0.0
        %1149 = vmatprep.subr.mxu0 0.0
        %1150 = vmatpush1.xpose.msra.mxu0 0.0
        %1151 = vmatprep.subr.mxu0 0.0
        %1152 = vmatpush1.xpose.msra.mxu0 0.0
        %1153 = vmatprep.subr.mxu0 0.0
        %1154 = vmatpush1.xpose.msra.mxu0 0.0
        %1155 = vmatprep.subr.mxu0 0.0
        %1156 = vmatpush1.xpose.msra.mxu0 0.0
        %1157 = vmatprep.subr.mxu0 0.0
        %1158 = vmatpush1.xpose.msra.mxu0 0.0
        %1159 = vmatprep.subr.mxu0 0.0
        %1160 = vmatpush1.xpose.msra.mxu0 0.0
        %1161 = vmatprep.subr.mxu0 0.0
        %1162 = vmatpush1.xpose.msra.mxu0 0.0
        %1163 = vmatprep.subr.mxu0 0.0
        %1164 = vmatpush1.xpose.msra.mxu0 0.0
        %1165 = vmatprep.subr.mxu0 0.0
        %1166 = vmatpush1.xpose.msra.mxu0 0.0
        %1167 = vmatprep.subr.mxu0 0.0
        %1168 = vmatpush1.xpose.msra.mxu0 0.0
        %1169 = vmatprep.subr.mxu0 0.0
        %1170 = vmatpush1.xpose.msra.mxu0 0.0
        %1171 = vmatprep.subr.mxu0 0.0
        %1172 = vmatpush1.xpose.msra.mxu0 0.0
        %1173 = vmatprep.subr.mxu0 0.0
        %1174 = vmatpush1.xpose.msra.mxu0 0.0
        %1175 = vmatprep.subr.mxu0 0.0
        %1176 = vmatpush1.xpose.msra.mxu0 0.0
        %1177 = vmatprep.subr.mxu0 0.0
        %1178 = vmatpush1.xpose.msra.mxu0 0.0
        %1179 = vmatprep.subr.mxu0 0.0
        %1180 = vmatpush1.xpose.msra.mxu0 0.0
        %1181 = vmatprep.subr.mxu0 0.0
        %1182 = vmatpush1.xpose.msra.mxu0 0.0
        %1183 = vmatprep.subr.mxu0 0.0
        %1184 = vmatpush1.xpose.msra.mxu0 0.0
        %1185 = vmatprep.mubr.f32.mxu0 0.0
        %1186 = vmatmul.mubr.f32.gmra.mrb[0].mxu0 %v1116
        %v1187 = vpop.f32.mrb[0].mxu0
        %v1188 = vadd.f32 0.0, %v1187
        %v1189 = vpop.f32.mrb[0].mxu0
        %1190 = vdwg.mxu0
        %v1192 = vsel %vm1114, %v1109, 0
        %v1195 = vsel %vm1114, %v1111, 0
        %1197 = vmatprep.subr.mxu0 0.0
        %1198 = vmatpush1.xpose.msra.mxu0 %v1195
        %1199 = vmatprep.subr.mxu0 0.0
        %1200 = vmatpush1.xpose.msra.mxu0 0.0
        %1201 = vmatprep.subr.mxu0 0.0
        %1202 = vmatpush1.xpose.msra.mxu0 0.0
        %1203 = vmatprep.subr.mxu0 0.0
        %1204 = vmatpush1.xpose.msra.mxu0 0.0
        %1205 = vmatprep.subr.mxu0 0.0
        %1206 = vmatpush1.xpose.msra.mxu0 0.0
        %1207 = vmatprep.subr.mxu0 0.0
        %1208 = vmatpush1.xpose.msra.mxu0 0.0
        %1209 = vmatprep.subr.mxu0 0.0
        %1210 = vmatpush1.xpose.msra.mxu0 0.0
        %1211 = vmatprep.subr.mxu0 0.0
        %1212 = vmatpush1.xpose.msra.mxu0 0.0
        %1213 = vmatprep.subr.mxu0 0.0
        %1214 = vmatpush1.xpose.msra.mxu0 0.0
        %1215 = vmatprep.subr.mxu0 0.0
        %1216 = vmatpush1.xpose.msra.mxu0 0.0
        %1217 = vmatprep.subr.mxu0 0.0
        %1218 = vmatpush1.xpose.msra.mxu0 0.0
        %1219 = vmatprep.subr.mxu0 0.0
        %1220 = vmatpush1.xpose.msra.mxu0 0.0
        %1221 = vmatprep.subr.mxu0 0.0
        %1222 = vmatpush1.xpose.msra.mxu0 0.0
        %1223 = vmatprep.subr.mxu0 0.0
        %1224 = vmatpush1.xpose.msra.mxu0 0.0
        %1225 = vmatprep.subr.mxu0 0.0
        %1226 = vmatpush1.xpose.msra.mxu0 0.0
        %1227 = vmatprep.subr.mxu0 0.0
        %1228 = vmatpush1.xpose.msra.mxu0 0.0
        %1229 = vmatprep.subr.mxu0 0.0
        %1230 = vmatpush1.xpose.msra.mxu0 0.0
        %1231 = vmatprep.subr.mxu0 0.0
        %1232 = vmatpush1.xpose.msra.mxu0 0.0
        %1233 = vmatprep.subr.mxu0 0.0
        %1234 = vmatpush1.xpose.msra.mxu0 0.0
        %1235 = vmatprep.subr.mxu0 0.0
        %1236 = vmatpush1.xpose.msra.mxu0 0.0
        %1237 = vmatprep.subr.mxu0 0.0
        %1238 = vmatpush1.xpose.msra.mxu0 0.0
        %1239 = vmatprep.subr.mxu0 0.0
        %1240 = vmatpush1.xpose.msra.mxu0 0.0
        %1241 = vmatprep.subr.mxu0 0.0
        %1242 = vmatpush1.xpose.msra.mxu0 0.0
        %1243 = vmatprep.subr.mxu0 0.0
        %1244 = vmatpush1.xpose.msra.mxu0 0.0
        %1245 = vmatprep.subr.mxu0 0.0
        %1246 = vmatpush1.xpose.msra.mxu0 0.0
        %1247 = vmatprep.subr.mxu0 0.0
        %1248 = vmatpush1.xpose.msra.mxu0 0.0
        %1249 = vmatprep.subr.mxu0 0.0
        %1250 = vmatpush1.xpose.msra.mxu0 0.0
        %1251 = vmatprep.subr.mxu0 0.0
        %1252 = vmatpush1.xpose.msra.mxu0 0.0
        %1253 = vmatprep.subr.mxu0 0.0
        %1254 = vmatpush1.xpose.msra.mxu0 0.0
        %1255 = vmatprep.subr.mxu0 0.0
        %1256 = vmatpush1.xpose.msra.mxu0 0.0
        %1257 = vmatprep.subr.mxu0 0.0
        %1258 = vmatpush1.xpose.msra.mxu0 0.0
        %1259 = vmatprep.subr.mxu0 0.0
        %1260 = vmatpush1.xpose.msra.mxu0 0.0
        %1261 = vmatprep.mubr.f32.mxu0 0.0
        %1262 = vmatmul.mubr.f32.gmra.mrb[0].mxu0 %v1192
        %v1263 = vpop.f32.mrb[0].mxu0
        %v1264 = vadd.f32 0.0, %v1263
        %v1265 = vpop.f32.mrb[0].mxu0
        %1266 = vdwg.mxu0
        %vm1267 = vcmask 64512
        %v1268 = vsel %vm1267, %v1188, -inf
        %1269 = vmax.xlane.f32.xlu0 %v1268
        %v1270 = vpop.xlane.xlu0 %1269
        %v1271 = vsel %vm1267, %v1264, -inf
        %1272 = vmax.xlane.f32.xlu0 %v1271
        %v1273 = vpop.xlane.xlu0 %1272
        %v1274 = vsub.f32 %v1188, %v1270
        %v1275 = vsub.f32 %v1264, %v1273
        %v1276 = vmul.f32 %v1274, 1.442695
        %v1277 = vpow.pop %v1276
        %v1278 = vmul.f32 %v1275, 1.442695
        %v1279 = vpow.pop %v1278
        %v1280 = vsel %vm1267, %v1277, 0.0
        %1281 = vadd.xlane.f32.xlu0 %v1280
        %v1282 = vpop.xlane.xlu0 %1281
        %v1283 = vsel %vm1267, %v1279, 0.0
        %1284 = vadd.xlane.f32.xlu0 %v1283
        %v1285 = vpop.xlane.xlu0 %1284
        %v1286 = vrcp.pop %v1282
        %v1287 = vrcp.pop %v1285
        %v1288 = vmul.f32 %v1277, %v1286
        %v1289 = vmul.f32 %v1279, %v1287
        %v1291 = vsel %vm1267, %v1288, 0
        %1293 = vmatprep.subr.mxu0 0.0
        %1294 = vmatpush1.msra.mxu0 %v1112
        %1295 = vmatprep.subr.mxu0 0.0
        %1296 = vmatpush1.msra.mxu0 0.0
        %1297 = vmatprep.subr.mxu0 0.0
        %1298 = vmatpush1.msra.mxu0 0.0
        %1299 = vmatprep.subr.mxu0 0.0
        %1300 = vmatpush1.msra.mxu0 0.0
        %1301 = vmatprep.subr.mxu0 0.0
        %1302 = vmatpush1.msra.mxu0 0.0
        %1303 = vmatprep.subr.mxu0 0.0
        %1304 = vmatpush1.msra.mxu0 0.0
        %1305 = vmatprep.subr.mxu0 0.0
        %1306 = vmatpush1.msra.mxu0 0.0
        %1307 = vmatprep.subr.mxu0 0.0
        %1308 = vmatpush1.msra.mxu0 0.0
        %1309 = vmatprep.subr.mxu0 0.0
        %1310 = vmatpush1.msra.mxu0 0.0
        %1311 = vmatprep.subr.mxu0 0.0
        %1312 = vmatpush1.msra.mxu0 0.0
        %1313 = vmatprep.subr.mxu0 0.0
        %1314 = vmatpush1.msra.mxu0 0.0
        %1315 = vmatprep.subr.mxu0 0.0
        %1316 = vmatpush1.msra.mxu0 0.0
        %1317 = vmatprep.subr.mxu0 0.0
        %1318 = vmatpush1.msra.mxu0 0.0
        %1319 = vmatprep.subr.mxu0 0.0
        %1320 = vmatpush1.msra.mxu0 0.0
        %1321 = vmatprep.subr.mxu0 0.0
        %1322 = vmatpush1.msra.mxu0 0.0
        %1323 = vmatprep.subr.mxu0 0.0
        %1324 = vmatpush1.msra.mxu0 0.0
        %1325 = vmatprep.subr.mxu0 0.0
        %1326 = vmatpush1.msra.mxu0 0.0
        %1327 = vmatprep.subr.mxu0 0.0
        %1328 = vmatpush1.msra.mxu0 0.0
        %1329 = vmatprep.subr.mxu0 0.0
        %1330 = vmatpush1.msra.mxu0 0.0
        %1331 = vmatprep.subr.mxu0 0.0
        %1332 = vmatpush1.msra.mxu0 0.0
        %1333 = vmatprep.subr.mxu0 0.0
        %1334 = vmatpush1.msra.mxu0 0.0
        %1335 = vmatprep.subr.mxu0 0.0
        %1336 = vmatpush1.msra.mxu0 0.0
        %1337 = vmatprep.subr.mxu0 0.0
        %1338 = vmatpush1.msra.mxu0 0.0
        %1339 = vmatprep.subr.mxu0 0.0
        %1340 = vmatpush1.msra.mxu0 0.0
        %1341 = vmatprep.subr.mxu0 0.0
        %1342 = vmatpush1.msra.mxu0 0.0
        %1343 = vmatprep.subr.mxu0 0.0
        %1344 = vmatpush1.msra.mxu0 0.0
        %1345 = vmatprep.subr.mxu0 0.0
        %1346 = vmatpush1.msra.mxu0 0.0
        %1347 = vmatprep.subr.mxu0 0.0
        %1348 = vmatpush1.msra.mxu0 0.0
        %1349 = vmatprep.subr.mxu0 0.0
        %1350 = vmatpush1.msra.mxu0 0.0
        %1351 = vmatprep.subr.mxu0 0.0
        %1352 = vmatpush1.msra.mxu0 0.0
        %1353 = vmatprep.subr.mxu0 0.0
        %1354 = vmatpush1.msra.mxu0 0.0
        %1355 = vmatprep.subr.mxu0 0.0
        %1356 = vmatpush1.msra.mxu0 0.0
        %1357 = vmatprep.mubr.f32.mxu0 0.0
        %1358 = vmatmul.mubr.f32.gmra.mrb[0].mxu0 %v1291
        %v1359 = vpop.f32.mrb[0].mxu0
        %v1360 = vadd.f32 0.0, %v1359
        %v1361 = vpop.f32.mrb[0].mxu0
        %1362 = vdwg.mxu0
        %v1364 = vsel %vm1267, %v1289, 0
        %1366 = vmatprep.subr.mxu0 0.0
        %1367 = vmatpush1.msra.mxu0 %v1113
        %1368 = vmatprep.subr.mxu0 0.0
        %1369 = vmatpush1.msra.mxu0 0.0
        %1370 = vmatprep.subr.mxu0 0.0
        %1371 = vmatpush1.msra.mxu0 0.0
        %1372 = vmatprep.subr.mxu0 0.0
        %1373 = vmatpush1.msra.mxu0 0.0
        %1374 = vmatprep.subr.mxu0 0.0
        %1375 = vmatpush1.msra.mxu0 0.0
        %1376 = vmatprep.subr.mxu0 0.0
        %1377 = vmatpush1.msra.mxu0 0.0
        %1378 = vmatprep.subr.mxu0 0.0
        %1379 = vmatpush1.msra.mxu0 0.0
        %1380 = vmatprep.subr.mxu0 0.0
        %1381 = vmatpush1.msra.mxu0 0.0
        %1382 = vmatprep.subr.mxu0 0.0
        %1383 = vmatpush1.msra.mxu0 0.0
        %1384 = vmatprep.subr.mxu0 0.0
        %1385 = vmatpush1.msra.mxu0 0.0
        %1386 = vmatprep.subr.mxu0 0.0
        %1387 = vmatpush1.msra.mxu0 0.0
        %1388 = vmatprep.subr.mxu0 0.0
        %1389 = vmatpush1.msra.mxu0 0.0
        %1390 = vmatprep.subr.mxu0 0.0
        %1391 = vmatpush1.msra.mxu0 0.0
        %1392 = vmatprep.subr.mxu0 0.0
        %1393 = vmatpush1.msra.mxu0 0.0
        %1394 = vmatprep.subr.mxu0 0.0
        %1395 = vmatpush1.msra.mxu0 0.0
        %1396 = vmatprep.subr.mxu0 0.0
        %1397 = vmatpush1.msra.mxu0 0.0
        %1398 = vmatprep.subr.mxu0 0.0
        %1399 = vmatpush1.msra.mxu0 0.0
        %1400 = vmatprep.subr.mxu0 0.0
        %1401 = vmatpush1.msra.mxu0 0.0
        %1402 = vmatprep.subr.mxu0 0.0
        %1403 = vmatpush1.msra.mxu0 0.0
        %1404 = vmatprep.subr.mxu0 0.0
        %1405 = vmatpush1.msra.mxu0 0.0
        %1406 = vmatprep.subr.mxu0 0.0
        %1407 = vmatpush1.msra.mxu0 0.0
        %1408 = vmatprep.subr.mxu0 0.0
        %1409 = vmatpush1.msra.mxu0 0.0
        %1410 = vmatprep.subr.mxu0 0.0
        %1411 = vmatpush1.msra.mxu0 0.0
        %1412 = vmatprep.subr.mxu0 0.0
        %1413 = vmatpush1.msra.mxu0 0.0
        %1414 = vmatprep.subr.mxu0 0.0
        %1415 = vmatpush1.msra.mxu0 0.0
        %1416 = vmatprep.subr.mxu0 0.0
        %1417 = vmatpush1.msra.mxu0 0.0
        %1418 = vmatprep.subr.mxu0 0.0
        %1419 = vmatpush1.msra.mxu0 0.0
        %1420 = vmatprep.subr.mxu0 0.0
        %1421 = vmatpush1.msra.mxu0 0.0
        %1422 = vmatprep.subr.mxu0 0.0
        %1423 = vmatpush1.msra.mxu0 0.0
        %1424 = vmatprep.subr.mxu0 0.0
        %1425 = vmatpush1.msra.mxu0 0.0
        %1426 = vmatprep.subr.mxu0 0.0
        %1427 = vmatpush1.msra.mxu0 0.0
        %1428 = vmatprep.subr.mxu0 0.0
        %1429 = vmatpush1.msra.mxu0 0.0
        %1430 = vmatprep.mubr.f32.mxu0 0.0
        %1431 = vmatmul.mubr.f32.gmra.mrb[0].mxu0 %v1364
        %v1432 = vpop.f32.mrb[0].mxu0
        %v1433 = vadd.f32 0.0, %v1432
        %v1434 = vpop.f32.mrb[0].mxu0
        %1435 = vdwg.mxu0
        %1436 = vst.msk [vmem:[#allocation5] sm:$0xff] %vm1114, %v1360
        %1437 = vst.msk [vmem:[#allocation5 + $0x8] sm:$0xff] %vm1114, %v1433
        %v1438 = vld [vmem:[#allocation2] sm:$0xff]
        %v1439 = vld [vmem:[#allocation2 + $0x8] sm:$0xff]
        %v1440 = vld [vmem:[#allocation3] sm:$0xff]
        %v1441 = vld [vmem:[#allocation3 + $0x8] sm:$0xff]
        %v1442 = vld [vmem:[#allocation4] sm:$0xff]
        %v1443 = vld [vmem:[#allocation4 + $0x8] sm:$0xff]
        %1445 = vrot.lane.b32.xlu0 %v1438, 124
        %v1446 = vpop.permute.xlu0 %1445
        %1448 = vrot.lane.b32.xlu0 %v1440, 124
        %v1449 = vpop.permute.xlu0 %1448
        %v1450 = vsel %vm1114, %v1446, 0
        %v1452 = vsel %vm1114, %v1449, 0
        %1454 = vmatprep.subr.mxu0 0.0
        %1455 = vmatpush1.xpose.msra.mxu0 %v1452
        %1456 = vmatprep.subr.mxu0 0.0
        %1457 = vmatpush1.xpose.msra.mxu0 0.0
        %1458 = vmatprep.subr.mxu0 0.0
        %1459 = vmatpush1.xpose.msra.mxu0 0.0
        %1460 = vmatprep.subr.mxu0 0.0
        %1461 = vmatpush1.xpose.msra.mxu0 0.0
        %1462 = vmatprep.subr.mxu0 0.0
        %1463 = vmatpush1.xpose.msra.mxu0 0.0
        %1464 = vmatprep.subr.mxu0 0.0
        %1465 = vmatpush1.xpose.msra.mxu0 0.0
        %1466 = vmatprep.subr.mxu0 0.0
        %1467 = vmatpush1.xpose.msra.mxu0 0.0
        %1468 = vmatprep.subr.mxu0 0.0
        %1469 = vmatpush1.xpose.msra.mxu0 0.0
        %1470 = vmatprep.subr.mxu0 0.0
        %1471 = vmatpush1.xpose.msra.mxu0 0.0
        %1472 = vmatprep.subr.mxu0 0.0
        %1473 = vmatpush1.xpose.msra.mxu0 0.0
        %1474 = vmatprep.subr.mxu0 0.0
        %1475 = vmatpush1.xpose.msra.mxu0 0.0
        %1476 = vmatprep.subr.mxu0 0.0
        %1477 = vmatpush1.xpose.msra.mxu0 0.0
        %1478 = vmatprep.subr.mxu0 0.0
        %1479 = vmatpush1.xpose.msra.mxu0 0.0
        %1480 = vmatprep.subr.mxu0 0.0
        %1481 = vmatpush1.xpose.msra.mxu0 0.0
        %1482 = vmatprep.subr.mxu0 0.0
        %1483 = vmatpush1.xpose.msra.mxu0 0.0
        %1484 = vmatprep.subr.mxu0 0.0
        %1485 = vmatpush1.xpose.msra.mxu0 0.0
        %1486 = vmatprep.subr.mxu0 0.0
        %1487 = vmatpush1.xpose.msra.mxu0 0.0
        %1488 = vmatprep.subr.mxu0 0.0
        %1489 = vmatpush1.xpose.msra.mxu0 0.0
        %1490 = vmatprep.subr.mxu0 0.0
        %1491 = vmatpush1.xpose.msra.mxu0 0.0
        %1492 = vmatprep.subr.mxu0 0.0
        %1493 = vmatpush1.xpose.msra.mxu0 0.0
        %1494 = vmatprep.subr.mxu0 0.0
        %1495 = vmatpush1.xpose.msra.mxu0 0.0
        %1496 = vmatprep.subr.mxu0 0.0
        %1497 = vmatpush1.xpose.msra.mxu0 0.0
        %1498 = vmatprep.subr.mxu0 0.0
        %1499 = vmatpush1.xpose.msra.mxu0 0.0
        %1500 = vmatprep.subr.mxu0 0.0
        %1501 = vmatpush1.xpose.msra.mxu0 0.0
        %1502 = vmatprep.subr.mxu0 0.0
        %1503 = vmatpush1.xpose.msra.mxu0 0.0
        %1504 = vmatprep.subr.mxu0 0.0
        %1505 = vmatpush1.xpose.msra.mxu0 0.0
        %1506 = vmatprep.subr.mxu0 0.0
        %1507 = vmatpush1.xpose.msra.mxu0 0.0
        %1508 = vmatprep.subr.mxu0 0.0
        %1509 = vmatpush1.xpose.msra.mxu0 0.0
        %1510 = vmatprep.subr.mxu0 0.0
        %1511 = vmatpush1.xpose.msra.mxu0 0.0
        %1512 = vmatprep.subr.mxu0 0.0
        %1513 = vmatpush1.xpose.msra.mxu0 0.0
        %1514 = vmatprep.subr.mxu0 0.0
        %1515 = vmatpush1.xpose.msra.mxu0 0.0
        %1516 = vmatprep.subr.mxu0 0.0
        %1517 = vmatpush1.xpose.msra.mxu0 0.0
        %1518 = vmatprep.mubr.f32.mxu0 0.0
        %1519 = vmatmul.mubr.f32.gmra.mrb[0].mxu0 %v1450
        %v1520 = vpop.f32.mrb[0].mxu0
        %v1521 = vadd.f32 0.0, %v1520
        %v1522 = vpop.f32.mrb[0].mxu0
        %1523 = vdwg.mxu0
        %1525 = vrot.lane.b32.xlu0 %v1439, 124
        %v1526 = vpop.permute.xlu0 %1525
        %1528 = vrot.lane.b32.xlu0 %v1441, 124
        %v1529 = vpop.permute.xlu0 %1528
        %v1530 = vsel %vm1114, %v1526, 0
        %v1532 = vsel %vm1114, %v1529, 0
        %1534 = vmatprep.subr.mxu0 0.0
        %1535 = vmatpush1.xpose.msra.mxu0 %v1532
        %1536 = vmatprep.subr.mxu0 0.0
        %1537 = vmatpush1.xpose.msra.mxu0 0.0
        %1538 = vmatprep.subr.mxu0 0.0
        %1539 = vmatpush1.xpose.msra.mxu0 0.0
        %1540 = vmatprep.subr.mxu0 0.0
        %1541 = vmatpush1.xpose.msra.mxu0 0.0
        %1542 = vmatprep.subr.mxu0 0.0
        %1543 = vmatpush1.xpose.msra.mxu0 0.0
        %1544 = vmatprep.subr.mxu0 0.0
        %1545 = vmatpush1.xpose.msra.mxu0 0.0
        %1546 = vmatprep.subr.mxu0 0.0
        %1547 = vmatpush1.xpose.msra.mxu0 0.0
        %1548 = vmatprep.subr.mxu0 0.0
        %1549 = vmatpush1.xpose.msra.mxu0 0.0
        %1550 = vmatprep.subr.mxu0 0.0
        %1551 = vmatpush1.xpose.msra.mxu0 0.0
        %1552 = vmatprep.subr.mxu0 0.0
        %1553 = vmatpush1.xpose.msra.mxu0 0.0
        %1554 = vmatprep.subr.mxu0 0.0
        %1555 = vmatpush1.xpose.msra.mxu0 0.0
        %1556 = vmatprep.subr.mxu0 0.0
        %1557 = vmatpush1.xpose.msra.mxu0 0.0
        %1558 = vmatprep.subr.mxu0 0.0
        %1559 = vmatpush1.xpose.msra.mxu0 0.0
        %1560 = vmatprep.subr.mxu0 0.0
        %1561 = vmatpush1.xpose.msra.mxu0 0.0
        %1562 = vmatprep.subr.mxu0 0.0
        %1563 = vmatpush1.xpose.msra.mxu0 0.0
        %1564 = vmatprep.subr.mxu0 0.0
        %1565 = vmatpush1.xpose.msra.mxu0 0.0
        %1566 = vmatprep.subr.mxu0 0.0
        %1567 = vmatpush1.xpose.msra.mxu0 0.0
        %1568 = vmatprep.subr.mxu0 0.0
        %1569 = vmatpush1.xpose.msra.mxu0 0.0
        %1570 = vmatprep.subr.mxu0 0.0
        %1571 = vmatpush1.xpose.msra.mxu0 0.0
        %1572 = vmatprep.subr.mxu0 0.0
        %1573 = vmatpush1.xpose.msra.mxu0 0.0
        %1574 = vmatprep.subr.mxu0 0.0
        %1575 = vmatpush1.xpose.msra.mxu0 0.0
        %1576 = vmatprep.subr.mxu0 0.0
        %1577 = vmatpush1.xpose.msra.mxu0 0.0
        %1578 = vmatprep.subr.mxu0 0.0
        %1579 = vmatpush1.xpose.msra.mxu0 0.0
        %1580 = vmatprep.subr.mxu0 0.0
        %1581 = vmatpush1.xpose.msra.mxu0 0.0
        %1582 = vmatprep.subr.mxu0 0.0
        %1583 = vmatpush1.xpose.msra.mxu0 0.0
        %1584 = vmatprep.subr.mxu0 0.0
        %1585 = vmatpush1.xpose.msra.mxu0 0.0
        %1586 = vmatprep.subr.mxu0 0.0
        %1587 = vmatpush1.xpose.msra.mxu0 0.0
        %1588 = vmatprep.subr.mxu0 0.0
        %1589 = vmatpush1.xpose.msra.mxu0 0.0
        %1590 = vmatprep.subr.mxu0 0.0
        %1591 = vmatpush1.xpose.msra.mxu0 0.0
        %1592 = vmatprep.subr.mxu0 0.0
        %1593 = vmatpush1.xpose.msra.mxu0 0.0
        %1594 = vmatprep.subr.mxu0 0.0
        %1595 = vmatpush1.xpose.msra.mxu0 0.0
        %1596 = vmatprep.subr.mxu0 0.0
        %1597 = vmatpush1.xpose.msra.mxu0 0.0
        %1598 = vmatprep.mubr.f32.mxu0 0.0
        %1599 = vmatmul.mubr.f32.gmra.mrb[0].mxu0 %v1530
        %v1600 = vpop.f32.mrb[0].mxu0
        %v1601 = vadd.f32 0.0, %v1600
        %v1602 = vpop.f32.mrb[0].mxu0
        %1603 = vdwg.mxu0
        %v1604 = vsel %vm1267, %v1521, -inf
        %1605 = vmax.xlane.f32.xlu0 %v1604
        %v1606 = vpop.xlane.xlu0 %1605
        %v1607 = vsel %vm1267, %v1601, -inf
        %1608 = vmax.xlane.f32.xlu0 %v1607
        %v1609 = vpop.xlane.xlu0 %1608
        %v1610 = vsub.f32 %v1521, %v1606
        %v1611 = vsub.f32 %v1601, %v1609
        %v1612 = vmul.f32 %v1610, 1.442695
        %v1613 = vpow.pop %v1612
        %v1614 = vmul.f32 %v1611, 1.442695
        %v1615 = vpow.pop %v1614
        %v1616 = vsel %vm1267, %v1613, 0.0
        %1617 = vadd.xlane.f32.xlu0 %v1616
        %v1618 = vpop.xlane.xlu0 %1617
        %v1619 = vsel %vm1267, %v1615, 0.0
        %1620 = vadd.xlane.f32.xlu0 %v1619
        %v1621 = vpop.xlane.xlu0 %1620
        %v1622 = vrcp.pop %v1618
        %v1623 = vrcp.pop %v1621
        %v1624 = vmul.f32 %v1613, %v1622
        %v1625 = vmul.f32 %v1615, %v1623
        %1627 = vrot.lane.b32.xlu0 %v1442, 124
        %v1628 = vpop.permute.xlu0 %1627
        %v1631 = vsel %vm1267, %v1624, 0
        %1633 = vmatprep.subr.mxu0 0.0
        %1634 = vmatpush1.msra.mxu0 %v1628
        %1635 = vmatprep.subr.mxu0 0.0
        %1636 = vmatpush1.msra.mxu0 0.0
        %1637 = vmatprep.subr.mxu0 0.0
        %1638 = vmatpush1.msra.mxu0 0.0
        %1639 = vmatprep.subr.mxu0 0.0
        %1640 = vmatpush1.msra.mxu0 0.0
        %1641 = vmatprep.subr.mxu0 0.0
        %1642 = vmatpush1.msra.mxu0 0.0
        %1643 = vmatprep.subr.mxu0 0.0
        %1644 = vmatpush1.msra.mxu0 0.0
        %1645 = vmatprep.subr.mxu0 0.0
        %1646 = vmatpush1.msra.mxu0 0.0
        %1647 = vmatprep.subr.mxu0 0.0
        %1648 = vmatpush1.msra.mxu0 0.0
        %1649 = vmatprep.subr.mxu0 0.0
        %1650 = vmatpush1.msra.mxu0 0.0
        %1651 = vmatprep.subr.mxu0 0.0
        %1652 = vmatpush1.msra.mxu0 0.0
        %1653 = vmatprep.subr.mxu0 0.0
        %1654 = vmatpush1.msra.mxu0 0.0
        %1655 = vmatprep.subr.mxu0 0.0
        %1656 = vmatpush1.msra.mxu0 0.0
        %1657 = vmatprep.subr.mxu0 0.0
        %1658 = vmatpush1.msra.mxu0 0.0
        %1659 = vmatprep.subr.mxu0 0.0
        %1660 = vmatpush1.msra.mxu0 0.0
        %1661 = vmatprep.subr.mxu0 0.0
        %1662 = vmatpush1.msra.mxu0 0.0
        %1663 = vmatprep.subr.mxu0 0.0
        %1664 = vmatpush1.msra.mxu0 0.0
        %1665 = vmatprep.subr.mxu0 0.0
        %1666 = vmatpush1.msra.mxu0 0.0
        %1667 = vmatprep.subr.mxu0 0.0
        %1668 = vmatpush1.msra.mxu0 0.0
        %1669 = vmatprep.subr.mxu0 0.0
        %1670 = vmatpush1.msra.mxu0 0.0
        %1671 = vmatprep.subr.mxu0 0.0
        %1672 = vmatpush1.msra.mxu0 0.0
        %1673 = vmatprep.subr.mxu0 0.0
        %1674 = vmatpush1.msra.mxu0 0.0
        %1675 = vmatprep.subr.mxu0 0.0
        %1676 = vmatpush1.msra.mxu0 0.0
        %1677 = vmatprep.subr.mxu0 0.0
        %1678 = vmatpush1.msra.mxu0 0.0
        %1679 = vmatprep.subr.mxu0 0.0
        %1680 = vmatpush1.msra.mxu0 0.0
        %1681 = vmatprep.subr.mxu0 0.0
        %1682 = vmatpush1.msra.mxu0 0.0
        %1683 = vmatprep.subr.mxu0 0.0
        %1684 = vmatpush1.msra.mxu0 0.0
        %1685 = vmatprep.subr.mxu0 0.0
        %1686 = vmatpush1.msra.mxu0 0.0
        %1687 = vmatprep.subr.mxu0 0.0
        %1688 = vmatpush1.msra.mxu0 0.0
        %1689 = vmatprep.subr.mxu0 0.0
        %1690 = vmatpush1.msra.mxu0 0.0
        %1691 = vmatprep.subr.mxu0 0.0
        %1692 = vmatpush1.msra.mxu0 0.0
        %1693 = vmatprep.subr.mxu0 0.0
        %1694 = vmatpush1.msra.mxu0 0.0
        %1695 = vmatprep.subr.mxu0 0.0
        %1696 = vmatpush1.msra.mxu0 0.0
        %1697 = vmatprep.mubr.f32.mxu0 0.0
        %1698 = vmatmul.mubr.f32.gmra.mrb[0].mxu0 %v1631
        %v1699 = vpop.f32.mrb[0].mxu0
        %v1700 = vadd.f32 0.0, %v1699
        %v1701 = vpop.f32.mrb[0].mxu0
        %1702 = vdwg.mxu0
        %1704 = vrot.lane.b32.xlu0 %v1443, 124
        %v1705 = vpop.permute.xlu0 %1704
        %v1708 = vsel %vm1267, %v1625, 0
        %1710 = vmatprep.subr.mxu0 0.0
        %1711 = vmatpush1.msra.mxu0 %v1705
        %1712 = vmatprep.subr.mxu0 0.0
        %1713 = vmatpush1.msra.mxu0 0.0
        %1714 = vmatprep.subr.mxu0 0.0
        %1715 = vmatpush1.msra.mxu0 0.0
        %1716 = vmatprep.subr.mxu0 0.0
        %1717 = vmatpush1.msra.mxu0 0.0
        %1718 = vmatprep.subr.mxu0 0.0
        %1719 = vmatpush1.msra.mxu0 0.0
        %1720 = vmatprep.subr.mxu0 0.0
        %1721 = vmatpush1.msra.mxu0 0.0
        %1722 = vmatprep.subr.mxu0 0.0
        %1723 = vmatpush1.msra.mxu0 0.0
        %1724 = vmatprep.subr.mxu0 0.0
        %1725 = vmatpush1.msra.mxu0 0.0
        %1726 = vmatprep.subr.mxu0 0.0
        %1727 = vmatpush1.msra.mxu0 0.0
        %1728 = vmatprep.subr.mxu0 0.0
        %1729 = vmatpush1.msra.mxu0 0.0
        %1730 = vmatprep.subr.mxu0 0.0
        %1731 = vmatpush1.msra.mxu0 0.0
        %1732 = vmatprep.subr.mxu0 0.0
        %1733 = vmatpush1.msra.mxu0 0.0
        %1734 = vmatprep.subr.mxu0 0.0
        %1735 = vmatpush1.msra.mxu0 0.0
        %1736 = vmatprep.subr.mxu0 0.0
        %1737 = vmatpush1.msra.mxu0 0.0
        %1738 = vmatprep.subr.mxu0 0.0
        %1739 = vmatpush1.msra.mxu0 0.0
        %1740 = vmatprep.subr.mxu0 0.0
        %1741 = vmatpush1.msra.mxu0 0.0
        %1742 = vmatprep.subr.mxu0 0.0
        %1743 = vmatpush1.msra.mxu0 0.0
        %1744 = vmatprep.subr.mxu0 0.0
        %1745 = vmatpush1.msra.mxu0 0.0
        %1746 = vmatprep.subr.mxu0 0.0
        %1747 = vmatpush1.msra.mxu0 0.0
        %1748 = vmatprep.subr.mxu0 0.0
        %1749 = vmatpush1.msra.mxu0 0.0
        %1750 = vmatprep.subr.mxu0 0.0
        %1751 = vmatpush1.msra.mxu0 0.0
        %1752 = vmatprep.subr.mxu0 0.0
        %1753 = vmatpush1.msra.mxu0 0.0
        %1754 = vmatprep.subr.mxu0 0.0
        %1755 = vmatpush1.msra.mxu0 0.0
        %1756 = vmatprep.subr.mxu0 0.0
        %1757 = vmatpush1.msra.mxu0 0.0
        %1758 = vmatprep.subr.mxu0 0.0
        %1759 = vmatpush1.msra.mxu0 0.0
        %1760 = vmatprep.subr.mxu0 0.0
        %1761 = vmatpush1.msra.mxu0 0.0
        %1762 = vmatprep.subr.mxu0 0.0
        %1763 = vmatpush1.msra.mxu0 0.0
        %1764 = vmatprep.subr.mxu0 0.0
        %1765 = vmatpush1.msra.mxu0 0.0
        %1766 = vmatprep.subr.mxu0 0.0
        %1767 = vmatpush1.msra.mxu0 0.0
        %1768 = vmatprep.subr.mxu0 0.0
        %1769 = vmatpush1.msra.mxu0 0.0
        %1770 = vmatprep.subr.mxu0 0.0
        %1771 = vmatpush1.msra.mxu0 0.0
        %1772 = vmatprep.subr.mxu0 0.0
        %1773 = vmatpush1.msra.mxu0 0.0
        %1774 = vmatprep.mubr.f32.mxu0 0.0
        %1775 = vmatmul.mubr.f32.gmra.mrb[0].mxu0 %v1708
        %v1776 = vpop.f32.mrb[0].mxu0
        %v1777 = vadd.f32 0.0, %v1776
        %v1778 = vpop.f32.mrb[0].mxu0
        %1779 = vdwg.mxu0
        %1782 = vrot.lane.b32.xlu0 %v1700, 4
        %v1783 = vpop.permute.xlu0 %1782
        %1784 = vrot.lane.b32.xlu0 %v1777, 4
        %v1785 = vpop.permute.xlu0 %1784
        %vm1788 = vcmask 64544
        %1789 = vst.msk [vmem:[#allocation5] sm:$0xff] %vm1788, %v1783
        %1790 = vst.msk [vmem:[#allocation5 + $0x8] sm:$0xff] %vm1788, %v1785
        %v1791 = vld [vmem:[#allocation2] sm:$0xff]
        %v1792 = vld [vmem:[#allocation2 + $0x8] sm:$0xff]
        %v1793 = vld [vmem:[#allocation3] sm:$0xff]
        %v1794 = vld [vmem:[#allocation3 + $0x8] sm:$0xff]
        %v1795 = vld [vmem:[#allocation4] sm:$0xff]
        %v1796 = vld [vmem:[#allocation4 + $0x8] sm:$0xff]
        %1798 = vrot.lane.b32.xlu0 %v1791, 120
        %v1799 = vpop.permute.xlu0 %1798
        %1801 = vrot.lane.b32.xlu0 %v1793, 120
        %v1802 = vpop.permute.xlu0 %1801
        %v1803 = vsel %vm1114, %v1799, 0
        %v1805 = vsel %vm1114, %v1802, 0
        %1807 = vmatprep.subr.mxu0 0.0
        %1808 = vmatpush1.xpose.msra.mxu0 %v1805
        %1809 = vmatprep.subr.mxu0 0.0
        %1810 = vmatpush1.xpose.msra.mxu0 0.0
        %1811 = vmatprep.subr.mxu0 0.0
        %1812 = vmatpush1.xpose.msra.mxu0 0.0
        %1813 = vmatprep.subr.mxu0 0.0
        %1814 = vmatpush1.xpose.msra.mxu0 0.0
        %1815 = vmatprep.subr.mxu0 0.0
        %1816 = vmatpush1.xpose.msra.mxu0 0.0
        %1817 = vmatprep.subr.mxu0 0.0
        %1818 = vmatpush1.xpose.msra.mxu0 0.0
        %1819 = vmatprep.subr.mxu0 0.0
        %1820 = vmatpush1.xpose.msra.mxu0 0.0
        %1821 = vmatprep.subr.mxu0 0.0
        %1822 = vmatpush1.xpose.msra.mxu0 0.0
        %1823 = vmatprep.subr.mxu0 0.0
        %1824 = vmatpush1.xpose.msra.mxu0 0.0
        %1825 = vmatprep.subr.mxu0 0.0
        %1826 = vmatpush1.xpose.msra.mxu0 0.0
        %1827 = vmatprep.subr.mxu0 0.0
        %1828 = vmatpush1.xpose.msra.mxu0 0.0
        %1829 = vmatprep.subr.mxu0 0.0
        %1830 = vmatpush1.xpose.msra.mxu0 0.0
        %1831 = vmatprep.subr.mxu0 0.0
        %1832 = vmatpush1.xpose.msra.mxu0 0.0
        %1833 = vmatprep.subr.mxu0 0.0
        %1834 = vmatpush1.xpose.msra.mxu0 0.0
        %1835 = vmatprep.subr.mxu0 0.0
        %1836 = vmatpush1.xpose.msra.mxu0 0.0
        %1837 = vmatprep.subr.mxu0 0.0
        %1838 = vmatpush1.xpose.msra.mxu0 0.0
        %1839 = vmatprep.subr.mxu0 0.0
        %1840 = vmatpush1.xpose.msra.mxu0 0.0
        %1841 = vmatprep.subr.mxu0 0.0
        %1842 = vmatpush1.xpose.msra.mxu0 0.0
        %1843 = vmatprep.subr.mxu0 0.0
        %1844 = vmatpush1.xpose.msra.mxu0 0.0
        %1845 = vmatprep.subr.mxu0 0.0
        %1846 = vmatpush1.xpose.msra.mxu0 0.0
        %1847 = vmatprep.subr.mxu0 0.0
        %1848 = vmatpush1.xpose.msra.mxu0 0.0
        %1849 = vmatprep.subr.mxu0 0.0
        %1850 = vmatpush1.xpose.msra.mxu0 0.0
        %1851 = vmatprep.subr.mxu0 0.0
        %1852 = vmatpush1.xpose.msra.mxu0 0.0
        %1853 = vmatprep.subr.mxu0 0.0
        %1854 = vmatpush1.xpose.msra.mxu0 0.0
        %1855 = vmatprep.subr.mxu0 0.0
        %1856 = vmatpush1.xpose.msra.mxu0 0.0
        %1857 = vmatprep.subr.mxu0 0.0
        %1858 = vmatpush1.xpose.msra.mxu0 0.0
        %1859 = vmatprep.subr.mxu0 0.0
        %1860 = vmatpush1.xpose.msra.mxu0 0.0
        %1861 = vmatprep.subr.mxu0 0.0
        %1862 = vmatpush1.xpose.msra.mxu0 0.0
        %1863 = vmatprep.subr.mxu0 0.0
        %1864 = vmatpush1.xpose.msra.mxu0 0.0
        %1865 = vmatprep.subr.mxu0 0.0
        %1866 = vmatpush1.xpose.msra.mxu0 0.0
        %1867 = vmatprep.subr.mxu0 0.0
        %1868 = vmatpush1.xpose.msra.mxu0 0.0
        %1869 = vmatprep.subr.mxu0 0.0
        %1870 = vmatpush1.xpose.msra.mxu0 0.0
        %1871 = vmatprep.mubr.f32.mxu0 0.0
        %1872 = vmatmul.mubr.f32.gmra.mrb[0].mxu0 %v1803
        %v1873 = vpop.f32.mrb[0].mxu0
        %v1874 = vadd.f32 0.0, %v1873
        %v1875 = vpop.f32.mrb[0].mxu0
        %1876 = vdwg.mxu0
        %1878 = vrot.lane.b32.xlu0 %v1792, 120
        %v1879 = vpop.permute.xlu0 %1878
        %1881 = vrot.lane.b32.xlu0 %v1794, 120
        %v1882 = vpop.permute.xlu0 %1881
        %v1883 = vsel %vm1114, %v1879, 0
        %v1885 = vsel %vm1114, %v1882, 0
        %1887 = vmatprep.subr.mxu0 0.0
        %1888 = vmatpush1.xpose.msra.mxu0 %v1885
        %1889 = vmatprep.subr.mxu0 0.0
        %1890 = vmatpush1.xpose.msra.mxu0 0.0
        %1891 = vmatprep.subr.mxu0 0.0
        %1892 = vmatpush1.xpose.msra.mxu0 0.0
        %1893 = vmatprep.subr.mxu0 0.0
        %1894 = vmatpush1.xpose.msra.mxu0 0.0
        %1895 = vmatprep.subr.mxu0 0.0
        %1896 = vmatpush1.xpose.msra.mxu0 0.0
        %1897 = vmatprep.subr.mxu0 0.0
        %1898 = vmatpush1.xpose.msra.mxu0 0.0
        %1899 = vmatprep.subr.mxu0 0.0
        %1900 = vmatpush1.xpose.msra.mxu0 0.0
        %1901 = vmatprep.subr.mxu0 0.0
        %1902 = vmatpush1.xpose.msra.mxu0 0.0
        %1903 = vmatprep.subr.mxu0 0.0
        %1904 = vmatpush1.xpose.msra.mxu0 0.0
        %1905 = vmatprep.subr.mxu0 0.0
        %1906 = vmatpush1.xpose.msra.mxu0 0.0
        %1907 = vmatprep.subr.mxu0 0.0
        %1908 = vmatpush1.xpose.msra.mxu0 0.0
        %1909 = vmatprep.subr.mxu0 0.0
        %1910 = vmatpush1.xpose.msra.mxu0 0.0
        %1911 = vmatprep.subr.mxu0 0.0
        %1912 = vmatpush1.xpose.msra.mxu0 0.0
        %1913 = vmatprep.subr.mxu0 0.0
        %1914 = vmatpush1.xpose.msra.mxu0 0.0
        %1915 = vmatprep.subr.mxu0 0.0
        %1916 = vmatpush1.xpose.msra.mxu0 0.0
        %1917 = vmatprep.subr.mxu0 0.0
        %1918 = vmatpush1.xpose.msra.mxu0 0.0
        %1919 = vmatprep.subr.mxu0 0.0
        %1920 = vmatpush1.xpose.msra.mxu0 0.0
        %1921 = vmatprep.subr.mxu0 0.0
        %1922 = vmatpush1.xpose.msra.mxu0 0.0
        %1923 = vmatprep.subr.mxu0 0.0
        %1924 = vmatpush1.xpose.msra.mxu0 0.0
        %1925 = vmatprep.subr.mxu0 0.0
        %1926 = vmatpush1.xpose.msra.mxu0 0.0
        %1927 = vmatprep.subr.mxu0 0.0
        %1928 = vmatpush1.xpose.msra.mxu0 0.0
        %1929 = vmatprep.subr.mxu0 0.0
        %1930 = vmatpush1.xpose.msra.mxu0 0.0
        %1931 = vmatprep.subr.mxu0 0.0
        %1932 = vmatpush1.xpose.msra.mxu0 0.0
        %1933 = vmatprep.subr.mxu0 0.0
        %1934 = vmatpush1.xpose.msra.mxu0 0.0
        %1935 = vmatprep.subr.mxu0 0.0
        %1936 = vmatpush1.xpose.msra.mxu0 0.0
        %1937 = vmatprep.subr.mxu0 0.0
        %1938 = vmatpush1.xpose.msra.mxu0 0.0
        %1939 = vmatprep.subr.mxu0 0.0
        %1940 = vmatpush1.xpose.msra.mxu0 0.0
        %1941 = vmatprep.subr.mxu0 0.0
        %1942 = vmatpush1.xpose.msra.mxu0 0.0
        %1943 = vmatprep.subr.mxu0 0.0
        %1944 = vmatpush1.xpose.msra.mxu0 0.0
        %1945 = vmatprep.subr.mxu0 0.0
        %1946 = vmatpush1.xpose.msra.mxu0 0.0
        %1947 = vmatprep.subr.mxu0 0.0
        %1948 = vmatpush1.xpose.msra.mxu0 0.0
        %1949 = vmatprep.subr.mxu0 0.0
        %1950 = vmatpush1.xpose.msra.mxu0 0.0
        %1951 = vmatprep.mubr.f32.mxu0 0.0
        %1952 = vmatmul.mubr.f32.gmra.mrb[0].mxu0 %v1883
        %v1953 = vpop.f32.mrb[0].mxu0
        %v1954 = vadd.f32 0.0, %v1953
        %v1955 = vpop.f32.mrb[0].mxu0
        %1956 = vdwg.mxu0
        %v1957 = vsel %vm1267, %v1874, -inf
        %1958 = vmax.xlane.f32.xlu0 %v1957
        %v1959 = vpop.xlane.xlu0 %1958
        %v1960 = vsel %vm1267, %v1954, -inf
        %1961 = vmax.xlane.f32.xlu0 %v1960
        %v1962 = vpop.xlane.xlu0 %1961
        %v1963 = vsub.f32 %v1874, %v1959
        %v1964 = vsub.f32 %v1954, %v1962
        %v1965 = vmul.f32 %v1963, 1.442695
        %v1966 = vpow.pop %v1965
        %v1967 = vmul.f32 %v1964, 1.442695
        %v1968 = vpow.pop %v1967
        %v1969 = vsel %vm1267, %v1966, 0.0
        %1970 = vadd.xlane.f32.xlu0 %v1969
        %v1971 = vpop.xlane.xlu0 %1970
        %v1972 = vsel %vm1267, %v1968, 0.0
        %1973 = vadd.xlane.f32.xlu0 %v1972
        %v1974 = vpop.xlane.xlu0 %1973
        %v1975 = vrcp.pop %v1971
        %v1976 = vrcp.pop %v1974
        %v1977 = vmul.f32 %v1966, %v1975
        %v1978 = vmul.f32 %v1968, %v1976
        %1980 = vrot.lane.b32.xlu0 %v1795, 120
        %v1981 = vpop.permute.xlu0 %1980
        %v1984 = vsel %vm1267, %v1977, 0
        %1986 = vmatprep.subr.mxu0 0.0
        %1987 = vmatpush1.msra.mxu0 %v1981
        %1988 = vmatprep.subr.mxu0 0.0
        %1989 = vmatpush1.msra.mxu0 0.0
        %1990 = vmatprep.subr.mxu0 0.0
        %1991 = vmatpush1.msra.mxu0 0.0
        %1992 = vmatprep.subr.mxu0 0.0
        %1993 = vmatpush1.msra.mxu0 0.0
        %1994 = vmatprep.subr.mxu0 0.0
        %1995 = vmatpush1.msra.mxu0 0.0
        %1996 = vmatprep.subr.mxu0 0.0
        %1997 = vmatpush1.msra.mxu0 0.0
        %1998 = vmatprep.subr.mxu0 0.0
        %1999 = vmatpush1.msra.mxu0 0.0
        %2000 = vmatprep.subr.mxu0 0.0
        %2001 = vmatpush1.msra.mxu0 0.0
        %2002 = vmatprep.subr.mxu0 0.0
        %2003 = vmatpush1.msra.mxu0 0.0
        %2004 = vmatprep.subr.mxu0 0.0
        %2005 = vmatpush1.msra.mxu0 0.0
        %2006 = vmatprep.subr.mxu0 0.0
        %2007 = vmatpush1.msra.mxu0 0.0
        %2008 = vmatprep.subr.mxu0 0.0
        %2009 = vmatpush1.msra.mxu0 0.0
        %2010 = vmatprep.subr.mxu0 0.0
        %2011 = vmatpush1.msra.mxu0 0.0
        %2012 = vmatprep.subr.mxu0 0.0
        %2013 = vmatpush1.msra.mxu0 0.0
        %2014 = vmatprep.subr.mxu0 0.0
        %2015 = vmatpush1.msra.mxu0 0.0
        %2016 = vmatprep.subr.mxu0 0.0
        %2017 = vmatpush1.msra.mxu0 0.0
        %2018 = vmatprep.subr.mxu0 0.0
        %2019 = vmatpush1.msra.mxu0 0.0
        %2020 = vmatprep.subr.mxu0 0.0
        %2021 = vmatpush1.msra.mxu0 0.0
        %2022 = vmatprep.subr.mxu0 0.0
        %2023 = vmatpush1.msra.mxu0 0.0
        %2024 = vmatprep.subr.mxu0 0.0
        %2025 = vmatpush1.msra.mxu0 0.0
        %2026 = vmatprep.subr.mxu0 0.0
        %2027 = vmatpush1.msra.mxu0 0.0
        %2028 = vmatprep.subr.mxu0 0.0
        %2029 = vmatpush1.msra.mxu0 0.0
        %2030 = vmatprep.subr.mxu0 0.0
        %2031 = vmatpush1.msra.mxu0 0.0
        %2032 = vmatprep.subr.mxu0 0.0
        %2033 = vmatpush1.msra.mxu0 0.0
        %2034 = vmatprep.subr.mxu0 0.0
        %2035 = vmatpush1.msra.mxu0 0.0
        %2036 = vmatprep.subr.mxu0 0.0
        %2037 = vmatpush1.msra.mxu0 0.0
        %2038 = vmatprep.subr.mxu0 0.0
        %2039 = vmatpush1.msra.mxu0 0.0
        %2040 = vmatprep.subr.mxu0 0.0
        %2041 = vmatpush1.msra.mxu0 0.0
        %2042 = vmatprep.subr.mxu0 0.0
        %2043 = vmatpush1.msra.mxu0 0.0
        %2044 = vmatprep.subr.mxu0 0.0
        %2045 = vmatpush1.msra.mxu0 0.0
        %2046 = vmatprep.subr.mxu0 0.0
        %2047 = vmatpush1.msra.mxu0 0.0
        %2048 = vmatprep.subr.mxu0 0.0
        %2049 = vmatpush1.msra.mxu0 0.0
        %2050 = vmatprep.mubr.f32.mxu0 0.0
        %2051 = vmatmul.mubr.f32.gmra.mrb[0].mxu0 %v1984
        %v2052 = vpop.f32.mrb[0].mxu0
        %v2053 = vadd.f32 0.0, %v2052
        %v2054 = vpop.f32.mrb[0].mxu0
        %2055 = vdwg.mxu0
        %2057 = vrot.lane.b32.xlu0 %v1796, 120
        %v2058 = vpop.permute.xlu0 %2057
        %v2061 = vsel %vm1267, %v1978, 0
        %2063 = vmatprep.subr.mxu0 0.0
        %2064 = vmatpush1.msra.mxu0 %v2058
        %2065 = vmatprep.subr.mxu0 0.0
        %2066 = vmatpush1.msra.mxu0 0.0
        %2067 = vmatprep.subr.mxu0 0.0
        %2068 = vmatpush1.msra.mxu0 0.0
        %2069 = vmatprep.subr.mxu0 0.0
        %2070 = vmatpush1.msra.mxu0 0.0
        %2071 = vmatprep.subr.mxu0 0.0
        %2072 = vmatpush1.msra.mxu0 0.0
        %2073 = vmatprep.subr.mxu0 0.0
        %2074 = vmatpush1.msra.mxu0 0.0
        %2075 = vmatprep.subr.mxu0 0.0
        %2076 = vmatpush1.msra.mxu0 0.0
        %2077 = vmatprep.subr.mxu0 0.0
        %2078 = vmatpush1.msra.mxu0 0.0
        %2079 = vmatprep.subr.mxu0 0.0
        %2080 = vmatpush1.msra.mxu0 0.0
        %2081 = vmatprep.subr.mxu0 0.0
        %2082 = vmatpush1.msra.mxu0 0.0
        %2083 = vmatprep.subr.mxu0 0.0
        %2084 = vmatpush1.msra.mxu0 0.0
        %2085 = vmatprep.subr.mxu0 0.0
        %2086 = vmatpush1.msra.mxu0 0.0
        %2087 = vmatprep.subr.mxu0 0.0
        %2088 = vmatpush1.msra.mxu0 0.0
        %2089 = vmatprep.subr.mxu0 0.0
        %2090 = vmatpush1.msra.mxu0 0.0
        %2091 = vmatprep.subr.mxu0 0.0
        %2092 = vmatpush1.msra.mxu0 0.0
        %2093 = vmatprep.subr.mxu0 0.0
        %2094 = vmatpush1.msra.mxu0 0.0
        %2095 = vmatprep.subr.mxu0 0.0
        %2096 = vmatpush1.msra.mxu0 0.0
        %2097 = vmatprep.subr.mxu0 0.0
        %2098 = vmatpush1.msra.mxu0 0.0
        %2099 = vmatprep.subr.mxu0 0.0
        %2100 = vmatpush1.msra.mxu0 0.0
        %2101 = vmatprep.subr.mxu0 0.0
        %2102 = vmatpush1.msra.mxu0 0.0
        %2103 = vmatprep.subr.mxu0 0.0
        %2104 = vmatpush1.msra.mxu0 0.0
        %2105 = vmatprep.subr.mxu0 0.0
        %2106 = vmatpush1.msra.mxu0 0.0
        %2107 = vmatprep.subr.mxu0 0.0
        %2108 = vmatpush1.msra.mxu0 0.0
        %2109 = vmatprep.subr.mxu0 0.0
        %2110 = vmatpush1.msra.mxu0 0.0
        %2111 = vmatprep.subr.mxu0 0.0
        %2112 = vmatpush1.msra.mxu0 0.0
        %2113 = vmatprep.subr.mxu0 0.0
        %2114 = vmatpush1.msra.mxu0 0.0
        %2115 = vmatprep.subr.mxu0 0.0
        %2116 = vmatpush1.msra.mxu0 0.0
        %2117 = vmatprep.subr.mxu0 0.0
        %2118 = vmatpush1.msra.mxu0 0.0
        %2119 = vmatprep.subr.mxu0 0.0
        %2120 = vmatpush1.msra.mxu0 0.0
        %2121 = vmatprep.subr.mxu0 0.0
        %2122 = vmatpush1.msra.mxu0 0.0
        %2123 = vmatprep.subr.mxu0 0.0
        %2124 = vmatpush1.msra.mxu0 0.0
        %2125 = vmatprep.subr.mxu0 0.0
        %2126 = vmatpush1.msra.mxu0 0.0
        %2127 = vmatprep.mubr.f32.mxu0 0.0
        %2128 = vmatmul.mubr.f32.gmra.mrb[0].mxu0 %v2061
        %v2129 = vpop.f32.mrb[0].mxu0
        %v2130 = vadd.f32 0.0, %v2129
        %v2131 = vpop.f32.mrb[0].mxu0
        %2132 = vdwg.mxu0
        %2135 = vrot.lane.b32.xlu0 %v2053, 8
        %v2136 = vpop.permute.xlu0 %2135
        %2137 = vrot.lane.b32.xlu0 %v2130, 8
        %v2138 = vpop.permute.xlu0 %2137
        %vm2141 = vcmask 97344
        %2142 = vst.msk [vmem:[#allocation5] sm:$0xff] %vm2141, %v2136
        %2143 = vst.msk [vmem:[#allocation5 + $0x8] sm:$0xff] %vm2141, %v2138
        %v2144 = vld [vmem:[#allocation2] sm:$0xff]
        %v2145 = vld [vmem:[#allocation2 + $0x8] sm:$0xff]
        %v2146 = vld [vmem:[#allocation3] sm:$0xff]
        %v2147 = vld [vmem:[#allocation3 + $0x8] sm:$0xff]
        %v2148 = vld [vmem:[#allocation4] sm:$0xff]
        %v2149 = vld [vmem:[#allocation4 + $0x8] sm:$0xff]
        %2151 = vrot.lane.b32.xlu0 %v2144, 116
        %v2152 = vpop.permute.xlu0 %2151
        %2154 = vrot.lane.b32.xlu0 %v2146, 116
        %v2155 = vpop.permute.xlu0 %2154
        %v2156 = vsel %vm1114, %v2152, 0
        %v2158 = vsel %vm1114, %v2155, 0
        %2160 = vmatprep.subr.mxu0 0.0
        %2161 = vmatpush1.xpose.msra.mxu0 %v2158
        %2162 = vmatprep.subr.mxu0 0.0
        %2163 = vmatpush1.xpose.msra.mxu0 0.0
        %2164 = vmatprep.subr.mxu0 0.0
        %2165 = vmatpush1.xpose.msra.mxu0 0.0
        %2166 = vmatprep.subr.mxu0 0.0
        %2167 = vmatpush1.xpose.msra.mxu0 0.0
        %2168 = vmatprep.subr.mxu0 0.0
        %2169 = vmatpush1.xpose.msra.mxu0 0.0
        %2170 = vmatprep.subr.mxu0 0.0
        %2171 = vmatpush1.xpose.msra.mxu0 0.0
        %2172 = vmatprep.subr.mxu0 0.0
        %2173 = vmatpush1.xpose.msra.mxu0 0.0
        %2174 = vmatprep.subr.mxu0 0.0
        %2175 = vmatpush1.xpose.msra.mxu0 0.0
        %2176 = vmatprep.subr.mxu0 0.0
        %2177 = vmatpush1.xpose.msra.mxu0 0.0
        %2178 = vmatprep.subr.mxu0 0.0
        %2179 = vmatpush1.xpose.msra.mxu0 0.0
        %2180 = vmatprep.subr.mxu0 0.0
        %2181 = vmatpush1.xpose.msra.mxu0 0.0
        %2182 = vmatprep.subr.mxu0 0.0
        %2183 = vmatpush1.xpose.msra.mxu0 0.0
        %2184 = vmatprep.subr.mxu0 0.0
        %2185 = vmatpush1.xpose.msra.mxu0 0.0
        %2186 = vmatprep.subr.mxu0 0.0
        %2187 = vmatpush1.xpose.msra.mxu0 0.0
        %2188 = vmatprep.subr.mxu0 0.0
        %2189 = vmatpush1.xpose.msra.mxu0 0.0
        %2190 = vmatprep.subr.mxu0 0.0
        %2191 = vmatpush1.xpose.msra.mxu0 0.0
        %2192 = vmatprep.subr.mxu0 0.0
        %2193 = vmatpush1.xpose.msra.mxu0 0.0
        %2194 = vmatprep.subr.mxu0 0.0
        %2195 = vmatpush1.xpose.msra.mxu0 0.0
        %2196 = vmatprep.subr.mxu0 0.0
        %2197 = vmatpush1.xpose.msra.mxu0 0.0
        %2198 = vmatprep.subr.mxu0 0.0
        %2199 = vmatpush1.xpose.msra.mxu0 0.0
        %2200 = vmatprep.subr.mxu0 0.0
        %2201 = vmatpush1.xpose.msra.mxu0 0.0
        %2202 = vmatprep.subr.mxu0 0.0
        %2203 = vmatpush1.xpose.msra.mxu0 0.0
        %2204 = vmatprep.subr.mxu0 0.0
        %2205 = vmatpush1.xpose.msra.mxu0 0.0
        %2206 = vmatprep.subr.mxu0 0.0
        %2207 = vmatpush1.xpose.msra.mxu0 0.0
        %2208 = vmatprep.subr.mxu0 0.0
        %2209 = vmatpush1.xpose.msra.mxu0 0.0
        %2210 = vmatprep.subr.mxu0 0.0
        %2211 = vmatpush1.xpose.msra.mxu0 0.0
        %2212 = vmatprep.subr.mxu0 0.0
        %2213 = vmatpush1.xpose.msra.mxu0 0.0
        %2214 = vmatprep.subr.mxu0 0.0
        %2215 = vmatpush1.xpose.msra.mxu0 0.0
        %2216 = vmatprep.subr.mxu0 0.0
        %2217 = vmatpush1.xpose.msra.mxu0 0.0
        %2218 = vmatprep.subr.mxu0 0.0
        %2219 = vmatpush1.xpose.msra.mxu0 0.0
        %2220 = vmatprep.subr.mxu0 0.0
        %2221 = vmatpush1.xpose.msra.mxu0 0.0
        %2222 = vmatprep.subr.mxu0 0.0
        %2223 = vmatpush1.xpose.msra.mxu0 0.0
        %2224 = vmatprep.mubr.f32.mxu0 0.0
        %2225 = vmatmul.mubr.f32.gmra.mrb[0].mxu0 %v2156
        %v2226 = vpop.f32.mrb[0].mxu0
        %v2227 = vadd.f32 0.0, %v2226
        %v2228 = vpop.f32.mrb[0].mxu0
        %2229 = vdwg.mxu0
        %2231 = vrot.lane.b32.xlu0 %v2145, 116
        %v2232 = vpop.permute.xlu0 %2231
        %2234 = vrot.lane.b32.xlu0 %v2147, 116
        %v2235 = vpop.permute.xlu0 %2234
        %v2236 = vsel %vm1114, %v2232, 0
        %v2238 = vsel %vm1114, %v2235, 0
        %2240 = vmatprep.subr.mxu0 0.0
        %2241 = vmatpush1.xpose.msra.mxu0 %v2238
        %2242 = vmatprep.subr.mxu0 0.0
        %2243 = vmatpush1.xpose.msra.mxu0 0.0
        %2244 = vmatprep.subr.mxu0 0.0
        %2245 = vmatpush1.xpose.msra.mxu0 0.0
        %2246 = vmatprep.subr.mxu0 0.0
        %2247 = vmatpush1.xpose.msra.mxu0 0.0
        %2248 = vmatprep.subr.mxu0 0.0
        %2249 = vmatpush1.xpose.msra.mxu0 0.0
        %2250 = vmatprep.subr.mxu0 0.0
        %2251 = vmatpush1.xpose.msra.mxu0 0.0
        %2252 = vmatprep.subr.mxu0 0.0
        %2253 = vmatpush1.xpose.msra.mxu0 0.0
        %2254 = vmatprep.subr.mxu0 0.0
        %2255 = vmatpush1.xpose.msra.mxu0 0.0
        %2256 = vmatprep.subr.mxu0 0.0
        %2257 = vmatpush1.xpose.msra.mxu0 0.0
        %2258 = vmatprep.subr.mxu0 0.0
        %2259 = vmatpush1.xpose.msra.mxu0 0.0
        %2260 = vmatprep.subr.mxu0 0.0
        %2261 = vmatpush1.xpose.msra.mxu0 0.0
        %2262 = vmatprep.subr.mxu0 0.0
        %2263 = vmatpush1.xpose.msra.mxu0 0.0
        %2264 = vmatprep.subr.mxu0 0.0
        %2265 = vmatpush1.xpose.msra.mxu0 0.0
        %2266 = vmatprep.subr.mxu0 0.0
        %2267 = vmatpush1.xpose.msra.mxu0 0.0
        %2268 = vmatprep.subr.mxu0 0.0
        %2269 = vmatpush1.xpose.msra.mxu0 0.0
        %2270 = vmatprep.subr.mxu0 0.0
        %2271 = vmatpush1.xpose.msra.mxu0 0.0
        %2272 = vmatprep.subr.mxu0 0.0
        %2273 = vmatpush1.xpose.msra.mxu0 0.0
        %2274 = vmatprep.subr.mxu0 0.0
        %2275 = vmatpush1.xpose.msra.mxu0 0.0
        %2276 = vmatprep.subr.mxu0 0.0
        %2277 = vmatpush1.xpose.msra.mxu0 0.0
        %2278 = vmatprep.subr.mxu0 0.0
        %2279 = vmatpush1.xpose.msra.mxu0 0.0
        %2280 = vmatprep.subr.mxu0 0.0
        %2281 = vmatpush1.xpose.msra.mxu0 0.0
        %2282 = vmatprep.subr.mxu0 0.0
        %2283 = vmatpush1.xpose.msra.mxu0 0.0
        %2284 = vmatprep.subr.mxu0 0.0
        %2285 = vmatpush1.xpose.msra.mxu0 0.0
        %2286 = vmatprep.subr.mxu0 0.0
        %2287 = vmatpush1.xpose.msra.mxu0 0.0
        %2288 = vmatprep.subr.mxu0 0.0
        %2289 = vmatpush1.xpose.msra.mxu0 0.0
        %2290 = vmatprep.subr.mxu0 0.0
        %2291 = vmatpush1.xpose.msra.mxu0 0.0
        %2292 = vmatprep.subr.mxu0 0.0
        %2293 = vmatpush1.xpose.msra.mxu0 0.0
        %2294 = vmatprep.subr.mxu0 0.0
        %2295 = vmatpush1.xpose.msra.mxu0 0.0
        %2296 = vmatprep.subr.mxu0 0.0
        %2297 = vmatpush1.xpose.msra.mxu0 0.0
        %2298 = vmatprep.subr.mxu0 0.0
        %2299 = vmatpush1.xpose.msra.mxu0 0.0
        %2300 = vmatprep.subr.mxu0 0.0
        %2301 = vmatpush1.xpose.msra.mxu0 0.0
        %2302 = vmatprep.subr.mxu0 0.0
        %2303 = vmatpush1.xpose.msra.mxu0 0.0
        %2304 = vmatprep.mubr.f32.mxu0 0.0
        %2305 = vmatmul.mubr.f32.gmra.mrb[0].mxu0 %v2236
        %v2306 = vpop.f32.mrb[0].mxu0
        %v2307 = vadd.f32 0.0, %v2306
        %v2308 = vpop.f32.mrb[0].mxu0
        %2309 = vdwg.mxu0
        %v2310 = vsel %vm1267, %v2227, -inf
        %2311 = vmax.xlane.f32.xlu0 %v2310
        %v2312 = vpop.xlane.xlu0 %2311
        %v2313 = vsel %vm1267, %v2307, -inf
        %2314 = vmax.xlane.f32.xlu0 %v2313
        %v2315 = vpop.xlane.xlu0 %2314
        %v2316 = vsub.f32 %v2227, %v2312
        %v2317 = vsub.f32 %v2307, %v2315
        %v2318 = vmul.f32 %v2316, 1.442695
        %v2319 = vpow.pop %v2318
        %v2320 = vmul.f32 %v2317, 1.442695
        %v2321 = vpow.pop %v2320
        %v2322 = vsel %vm1267, %v2319, 0.0
        %2323 = vadd.xlane.f32.xlu0 %v2322
        %v2324 = vpop.xlane.xlu0 %2323
        %v2325 = vsel %vm1267, %v2321, 0.0
        %2326 = vadd.xlane.f32.xlu0 %v2325
        %v2327 = vpop.xlane.xlu0 %2326
        %v2328 = vrcp.pop %v2324
        %v2329 = vrcp.pop %v2327
        %v2330 = vmul.f32 %v2319, %v2328
        %v2331 = vmul.f32 %v2321, %v2329
        %2333 = vrot.lane.b32.xlu0 %v2148, 116
        %v2334 = vpop.permute.xlu0 %2333
        %v2337 = vsel %vm1267, %v2330, 0
        %2339 = vmatprep.subr.mxu0 0.0
        %2340 = vmatpush1.msra.mxu0 %v2334
        %2341 = vmatprep.subr.mxu0 0.0
        %2342 = vmatpush1.msra.mxu0 0.0
        %2343 = vmatprep.subr.mxu0 0.0
        %2344 = vmatpush1.msra.mxu0 0.0
        %2345 = vmatprep.subr.mxu0 0.0
        %2346 = vmatpush1.msra.mxu0 0.0
        %2347 = vmatprep.subr.mxu0 0.0
        %2348 = vmatpush1.msra.mxu0 0.0
        %2349 = vmatprep.subr.mxu0 0.0
        %2350 = vmatpush1.msra.mxu0 0.0
        %2351 = vmatprep.subr.mxu0 0.0
        %2352 = vmatpush1.msra.mxu0 0.0
        %2353 = vmatprep.subr.mxu0 0.0
        %2354 = vmatpush1.msra.mxu0 0.0
        %2355 = vmatprep.subr.mxu0 0.0
        %2356 = vmatpush1.msra.mxu0 0.0
        %2357 = vmatprep.subr.mxu0 0.0
        %2358 = vmatpush1.msra.mxu0 0.0
        %2359 = vmatprep.subr.mxu0 0.0
        %2360 = vmatpush1.msra.mxu0 0.0
        %2361 = vmatprep.subr.mxu0 0.0
        %2362 = vmatpush1.msra.mxu0 0.0
        %2363 = vmatprep.subr.mxu0 0.0
        %2364 = vmatpush1.msra.mxu0 0.0
        %2365 = vmatprep.subr.mxu0 0.0
        %2366 = vmatpush1.msra.mxu0 0.0
        %2367 = vmatprep.subr.mxu0 0.0
        %2368 = vmatpush1.msra.mxu0 0.0
        %2369 = vmatprep.subr.mxu0 0.0
        %2370 = vmatpush1.msra.mxu0 0.0
        %2371 = vmatprep.subr.mxu0 0.0
        %2372 = vmatpush1.msra.mxu0 0.0
        %2373 = vmatprep.subr.mxu0 0.0
        %2374 = vmatpush1.msra.mxu0 0.0
        %2375 = vmatprep.subr.mxu0 0.0
        %2376 = vmatpush1.msra.mxu0 0.0
        %2377 = vmatprep.subr.mxu0 0.0
        %2378 = vmatpush1.msra.mxu0 0.0
        %2379 = vmatprep.subr.mxu0 0.0
        %2380 = vmatpush1.msra.mxu0 0.0
        %2381 = vmatprep.subr.mxu0 0.0
        %2382 = vmatpush1.msra.mxu0 0.0
        %2383 = vmatprep.subr.mxu0 0.0
        %2384 = vmatpush1.msra.mxu0 0.0
        %2385 = vmatprep.subr.mxu0 0.0
        %2386 = vmatpush1.msra.mxu0 0.0
        %2387 = vmatprep.subr.mxu0 0.0
        %2388 = vmatpush1.msra.mxu0 0.0
        %2389 = vmatprep.subr.mxu0 0.0
        %2390 = vmatpush1.msra.mxu0 0.0
        %2391 = vmatprep.subr.mxu0 0.0
        %2392 = vmatpush1.msra.mxu0 0.0
        %2393 = vmatprep.subr.mxu0 0.0
        %2394 = vmatpush1.msra.mxu0 0.0
        %2395 = vmatprep.subr.mxu0 0.0
        %2396 = vmatpush1.msra.mxu0 0.0
        %2397 = vmatprep.subr.mxu0 0.0
        %2398 = vmatpush1.msra.mxu0 0.0
        %2399 = vmatprep.subr.mxu0 0.0
        %2400 = vmatpush1.msra.mxu0 0.0
        %2401 = vmatprep.subr.mxu0 0.0
        %2402 = vmatpush1.msra.mxu0 0.0
        %2403 = vmatprep.mubr.f32.mxu0 0.0
        %2404 = vmatmul.mubr.f32.gmra.mrb[0].mxu0 %v2337
        %v2405 = vpop.f32.mrb[0].mxu0
        %v2406 = vadd.f32 0.0, %v2405
        %v2407 = vpop.f32.mrb[0].mxu0
        %2408 = vdwg.mxu0
        %2410 = vrot.lane.b32.xlu0 %v2149, 116
        %v2411 = vpop.permute.xlu0 %2410
        %v2414 = vsel %vm1267, %v2331, 0
        %2416 = vmatprep.subr.mxu0 0.0
        %2417 = vmatpush1.msra.mxu0 %v2411
        %2418 = vmatprep.subr.mxu0 0.0
        %2419 = vmatpush1.msra.mxu0 0.0
        %2420 = vmatprep.subr.mxu0 0.0
        %2421 = vmatpush1.msra.mxu0 0.0
        %2422 = vmatprep.subr.mxu0 0.0
        %2423 = vmatpush1.msra.mxu0 0.0
        %2424 = vmatprep.subr.mxu0 0.0
        %2425 = vmatpush1.msra.mxu0 0.0
        %2426 = vmatprep.subr.mxu0 0.0
        %2427 = vmatpush1.msra.mxu0 0.0
        %2428 = vmatprep.subr.mxu0 0.0
        %2429 = vmatpush1.msra.mxu0 0.0
        %2430 = vmatprep.subr.mxu0 0.0
        %2431 = vmatpush1.msra.mxu0 0.0
        %2432 = vmatprep.subr.mxu0 0.0
        %2433 = vmatpush1.msra.mxu0 0.0
        %2434 = vmatprep.subr.mxu0 0.0
        %2435 = vmatpush1.msra.mxu0 0.0
        %2436 = vmatprep.subr.mxu0 0.0
        %2437 = vmatpush1.msra.mxu0 0.0
        %2438 = vmatprep.subr.mxu0 0.0
        %2439 = vmatpush1.msra.mxu0 0.0
        %2440 = vmatprep.subr.mxu0 0.0
        %2441 = vmatpush1.msra.mxu0 0.0
        %2442 = vmatprep.subr.mxu0 0.0
        %2443 = vmatpush1.msra.mxu0 0.0
        %2444 = vmatprep.subr.mxu0 0.0
        %2445 = vmatpush1.msra.mxu0 0.0
        %2446 = vmatprep.subr.mxu0 0.0
        %2447 = vmatpush1.msra.mxu0 0.0
        %2448 = vmatprep.subr.mxu0 0.0
        %2449 = vmatpush1.msra.mxu0 0.0
        %2450 = vmatprep.subr.mxu0 0.0
        %2451 = vmatpush1.msra.mxu0 0.0
        %2452 = vmatprep.subr.mxu0 0.0
        %2453 = vmatpush1.msra.mxu0 0.0
        %2454 = vmatprep.subr.mxu0 0.0
        %2455 = vmatpush1.msra.mxu0 0.0
        %2456 = vmatprep.subr.mxu0 0.0
        %2457 = vmatpush1.msra.mxu0 0.0
        %2458 = vmatprep.subr.mxu0 0.0
        %2459 = vmatpush1.msra.mxu0 0.0
        %2460 = vmatprep.subr.mxu0 0.0
        %2461 = vmatpush1.msra.mxu0 0.0
        %2462 = vmatprep.subr.mxu0 0.0
        %2463 = vmatpush1.msra.mxu0 0.0
        %2464 = vmatprep.subr.mxu0 0.0
        %2465 = vmatpush1.msra.mxu0 0.0
        %2466 = vmatprep.subr.mxu0 0.0
        %2467 = vmatpush1.msra.mxu0 0.0
        %2468 = vmatprep.subr.mxu0 0.0
        %2469 = vmatpush1.msra.mxu0 0.0
        %2470 = vmatprep.subr.mxu0 0.0
        %2471 = vmatpush1.msra.mxu0 0.0
        %2472 = vmatprep.subr.mxu0 0.0
        %2473 = vmatpush1.msra.mxu0 0.0
        %2474 = vmatprep.subr.mxu0 0.0
        %2475 = vmatpush1.msra.mxu0 0.0
        %2476 = vmatprep.subr.mxu0 0.0
        %2477 = vmatpush1.msra.mxu0 0.0
        %2478 = vmatprep.subr.mxu0 0.0
        %2479 = vmatpush1.msra.mxu0 0.0
        %2480 = vmatprep.mubr.f32.mxu0 0.0
        %2481 = vmatmul.mubr.f32.gmra.mrb[0].mxu0 %v2414
        %v2482 = vpop.f32.mrb[0].mxu0
        %v2483 = vadd.f32 0.0, %v2482
        %v2484 = vpop.f32.mrb[0].mxu0
        %2485 = vdwg.mxu0
        %2488 = vrot.lane.b32.xlu0 %v2406, 12
        %v2489 = vpop.permute.xlu0 %2488
        %2490 = vrot.lane.b32.xlu0 %v2483, 12
        %v2491 = vpop.permute.xlu0 %2490
        %vm2494 = vcmask 130144
        %2495 = vst.msk [vmem:[#allocation5] sm:$0xff] %vm2494, %v2489
        %2496 = vst.msk [vmem:[#allocation5 + $0x8] sm:$0xff] %vm2494, %v2491
        %v2497 = vld [vmem:[#allocation2] sm:$0xff]
        %v2498 = vld [vmem:[#allocation2 + $0x8] sm:$0xff]
        %v2499 = vld [vmem:[#allocation3] sm:$0xff]
        %v2500 = vld [vmem:[#allocation3 + $0x8] sm:$0xff]
        %v2501 = vld [vmem:[#allocation4] sm:$0xff]
        %v2502 = vld [vmem:[#allocation4 + $0x8] sm:$0xff]
        %2504 = vrot.lane.b32.xlu0 %v2497, 112
        %v2505 = vpop.permute.xlu0 %2504
        %2507 = vrot.lane.b32.xlu0 %v2499, 112
        %v2508 = vpop.permute.xlu0 %2507
        %v2509 = vsel %vm1114, %v2505, 0
        %v2511 = vsel %vm1114, %v2508, 0
        %2513 = vmatprep.subr.mxu0 0.0
        %2514 = vmatpush1.xpose.msra.mxu0 %v2511
        %2515 = vmatprep.subr.mxu0 0.0
        %2516 = vmatpush1.xpose.msra.mxu0 0.0
        %2517 = vmatprep.subr.mxu0 0.0
        %2518 = vmatpush1.xpose.msra.mxu0 0.0
        %2519 = vmatprep.subr.mxu0 0.0
        %2520 = vmatpush1.xpose.msra.mxu0 0.0
        %2521 = vmatprep.subr.mxu0 0.0
        %2522 = vmatpush1.xpose.msra.mxu0 0.0
        %2523 = vmatprep.subr.mxu0 0.0
        %2524 = vmatpush1.xpose.msra.mxu0 0.0
        %2525 = vmatprep.subr.mxu0 0.0
        %2526 = vmatpush1.xpose.msra.mxu0 0.0
        %2527 = vmatprep.subr.mxu0 0.0
        %2528 = vmatpush1.xpose.msra.mxu0 0.0
        %2529 = vmatprep.subr.mxu0 0.0
        %2530 = vmatpush1.xpose.msra.mxu0 0.0
        %2531 = vmatprep.subr.mxu0 0.0
        %2532 = vmatpush1.xpose.msra.mxu0 0.0
        %2533 = vmatprep.subr.mxu0 0.0
        %2534 = vmatpush1.xpose.msra.mxu0 0.0
        %2535 = vmatprep.subr.mxu0 0.0
        %2536 = vmatpush1.xpose.msra.mxu0 0.0
        %2537 = vmatprep.subr.mxu0 0.0
        %2538 = vmatpush1.xpose.msra.mxu0 0.0
        %2539 = vmatprep.subr.mxu0 0.0
        %2540 = vmatpush1.xpose.msra.mxu0 0.0
        %2541 = vmatprep.subr.mxu0 0.0
        %2542 = vmatpush1.xpose.msra.mxu0 0.0
        %2543 = vmatprep.subr.mxu0 0.0
        %2544 = vmatpush1.xpose.msra.mxu0 0.0
        %2545 = vmatprep.subr.mxu0 0.0
        %2546 = vmatpush1.xpose.msra.mxu0 0.0
        %2547 = vmatprep.subr.mxu0 0.0
        %2548 = vmatpush1.xpose.msra.mxu0 0.0
        %2549 = vmatprep.subr.mxu0 0.0
        %2550 = vmatpush1.xpose.msra.mxu0 0.0
        %2551 = vmatprep.subr.mxu0 0.0
        %2552 = vmatpush1.xpose.msra.mxu0 0.0
        %2553 = vmatprep.subr.mxu0 0.0
        %2554 = vmatpush1.xpose.msra.mxu0 0.0
        %2555 = vmatprep.subr.mxu0 0.0
        %2556 = vmatpush1.xpose.msra.mxu0 0.0
        %2557 = vmatprep.subr.mxu0 0.0
        %2558 = vmatpush1.xpose.msra.mxu0 0.0
        %2559 = vmatprep.subr.mxu0 0.0
        %2560 = vmatpush1.xpose.msra.mxu0 0.0
        %2561 = vmatprep.subr.mxu0 0.0
        %2562 = vmatpush1.xpose.msra.mxu0 0.0
        %2563 = vmatprep.subr.mxu0 0.0
        %2564 = vmatpush1.xpose.msra.mxu0 0.0
        %2565 = vmatprep.subr.mxu0 0.0
        %2566 = vmatpush1.xpose.msra.mxu0 0.0
        %2567 = vmatprep.subr.mxu0 0.0
        %2568 = vmatpush1.xpose.msra.mxu0 0.0
        %2569 = vmatprep.subr.mxu0 0.0
        %2570 = vmatpush1.xpose.msra.mxu0 0.0
        %2571 = vmatprep.subr.mxu0 0.0
        %2572 = vmatpush1.xpose.msra.mxu0 0.0
        %2573 = vmatprep.subr.mxu0 0.0
        %2574 = vmatpush1.xpose.msra.mxu0 0.0
        %2575 = vmatprep.subr.mxu0 0.0
        %2576 = vmatpush1.xpose.msra.mxu0 0.0
        %2577 = vmatprep.mubr.f32.mxu0 0.0
        %2578 = vmatmul.mubr.f32.gmra.mrb[0].mxu0 %v2509
        %v2579 = vpop.f32.mrb[0].mxu0
        %v2580 = vadd.f32 0.0, %v2579
        %v2581 = vpop.f32.mrb[0].mxu0
        %2582 = vdwg.mxu0
        %2584 = vrot.lane.b32.xlu0 %v2498, 112
        %v2585 = vpop.permute.xlu0 %2584
        %2587 = vrot.lane.b32.xlu0 %v2500, 112
        %v2588 = vpop.permute.xlu0 %2587
        %v2589 = vsel %vm1114, %v2585, 0
        %v2591 = vsel %vm1114, %v2588, 0
        %2593 = vmatprep.subr.mxu0 0.0
        %2594 = vmatpush1.xpose.msra.mxu0 %v2591
        %2595 = vmatprep.subr.mxu0 0.0
        %2596 = vmatpush1.xpose.msra.mxu0 0.0
        %2597 = vmatprep.subr.mxu0 0.0
        %2598 = vmatpush1.xpose.msra.mxu0 0.0
        %2599 = vmatprep.subr.mxu0 0.0
        %2600 = vmatpush1.xpose.msra.mxu0 0.0
        %2601 = vmatprep.subr.mxu0 0.0
        %2602 = vmatpush1.xpose.msra.mxu0 0.0
        %2603 = vmatprep.subr.mxu0 0.0
        %2604 = vmatpush1.xpose.msra.mxu0 0.0
        %2605 = vmatprep.subr.mxu0 0.0
        %2606 = vmatpush1.xpose.msra.mxu0 0.0
        %2607 = vmatprep.subr.mxu0 0.0
        %2608 = vmatpush1.xpose.msra.mxu0 0.0
        %2609 = vmatprep.subr.mxu0 0.0
        %2610 = vmatpush1.xpose.msra.mxu0 0.0
        %2611 = vmatprep.subr.mxu0 0.0
        %2612 = vmatpush1.xpose.msra.mxu0 0.0
        %2613 = vmatprep.subr.mxu0 0.0
        %2614 = vmatpush1.xpose.msra.mxu0 0.0
        %2615 = vmatprep.subr.mxu0 0.0
        %2616 = vmatpush1.xpose.msra.mxu0 0.0
        %2617 = vmatprep.subr.mxu0 0.0
        %2618 = vmatpush1.xpose.msra.mxu0 0.0
        %2619 = vmatprep.subr.mxu0 0.0
        %2620 = vmatpush1.xpose.msra.mxu0 0.0
        %2621 = vmatprep.subr.mxu0 0.0
        %2622 = vmatpush1.xpose.msra.mxu0 0.0
        %2623 = vmatprep.subr.mxu0 0.0
        %2624 = vmatpush1.xpose.msra.mxu0 0.0
        %2625 = vmatprep.subr.mxu0 0.0
        %2626 = vmatpush1.xpose.msra.mxu0 0.0
        %2627 = vmatprep.subr.mxu0 0.0
        %2628 = vmatpush1.xpose.msra.mxu0 0.0
        %2629 = vmatprep.subr.mxu0 0.0
        %2630 = vmatpush1.xpose.msra.mxu0 0.0
        %2631 = vmatprep.subr.mxu0 0.0
        %2632 = vmatpush1.xpose.msra.mxu0 0.0
        %2633 = vmatprep.subr.mxu0 0.0
        %2634 = vmatpush1.xpose.msra.mxu0 0.0
        %2635 = vmatprep.subr.mxu0 0.0
        %2636 = vmatpush1.xpose.msra.mxu0 0.0
        %2637 = vmatprep.subr.mxu0 0.0
        %2638 = vmatpush1.xpose.msra.mxu0 0.0
        %2639 = vmatprep.subr.mxu0 0.0
        %2640 = vmatpush1.xpose.msra.mxu0 0.0
        %2641 = vmatprep.subr.mxu0 0.0
        %2642 = vmatpush1.xpose.msra.mxu0 0.0
        %2643 = vmatprep.subr.mxu0 0.0
        %2644 = vmatpush1.xpose.msra.mxu0 0.0
        %2645 = vmatprep.subr.mxu0 0.0
        %2646 = vmatpush1.xpose.msra.mxu0 0.0
        %2647 = vmatprep.subr.mxu0 0.0
        %2648 = vmatpush1.xpose.msra.mxu0 0.0
        %2649 = vmatprep.subr.mxu0 0.0
        %2650 = vmatpush1.xpose.msra.mxu0 0.0
        %2651 = vmatprep.subr.mxu0 0.0
        %2652 = vmatpush1.xpose.msra.mxu0 0.0
        %2653 = vmatprep.subr.mxu0 0.0
        %2654 = vmatpush1.xpose.msra.mxu0 0.0
        %2655 = vmatprep.subr.mxu0 0.0
        %2656 = vmatpush1.xpose.msra.mxu0 0.0
        %2657 = vmatprep.mubr.f32.mxu0 0.0
        %2658 = vmatmul.mubr.f32.gmra.mrb[0].mxu0 %v2589
        %v2659 = vpop.f32.mrb[0].mxu0
        %v2660 = vadd.f32 0.0, %v2659
        %v2661 = vpop.f32.mrb[0].mxu0
        %2662 = vdwg.mxu0
        %v2663 = vsel %vm1267, %v2580, -inf
        %2664 = vmax.xlane.f32.xlu0 %v2663
        %v2665 = vpop.xlane.xlu0 %2664
        %v2666 = vsel %vm1267, %v2660, -inf
        %2667 = vmax.xlane.f32.xlu0 %v2666
        %v2668 = vpop.xlane.xlu0 %2667
        %v2669 = vsub.f32 %v2580, %v2665
        %v2670 = vsub.f32 %v2660, %v2668
        %v2671 = vmul.f32 %v2669, 1.442695
        %v2672 = vpow.pop %v2671
        %v2673 = vmul.f32 %v2670, 1.442695
        %v2674 = vpow.pop %v2673
        %v2675 = vsel %vm1267, %v2672, 0.0
        %2676 = vadd.xlane.f32.xlu0 %v2675
        %v2677 = vpop.xlane.xlu0 %2676
        %v2678 = vsel %vm1267, %v2674, 0.0
        %2679 = vadd.xlane.f32.xlu0 %v2678
        %v2680 = vpop.xlane.xlu0 %2679
        %v2681 = vrcp.pop %v2677
        %v2682 = vrcp.pop %v2680
        %v2683 = vmul.f32 %v2672, %v2681
        %v2684 = vmul.f32 %v2674, %v2682
        %2686 = vrot.lane.b32.xlu0 %v2501, 112
        %v2687 = vpop.permute.xlu0 %2686
        %v2690 = vsel %vm1267, %v2683, 0
        %2692 = vmatprep.subr.mxu0 0.0
        %2693 = vmatpush1.msra.mxu0 %v2687
        %2694 = vmatprep.subr.mxu0 0.0
        %2695 = vmatpush1.msra.mxu0 0.0
        %2696 = vmatprep.subr.mxu0 0.0
        %2697 = vmatpush1.msra.mxu0 0.0
        %2698 = vmatprep.subr.mxu0 0.0
        %2699 = vmatpush1.msra.mxu0 0.0
        %2700 = vmatprep.subr.mxu0 0.0
        %2701 = vmatpush1.msra.mxu0 0.0
        %2702 = vmatprep.subr.mxu0 0.0
        %2703 = vmatpush1.msra.mxu0 0.0
        %2704 = vmatprep.subr.mxu0 0.0
        %2705 = vmatpush1.msra.mxu0 0.0
        %2706 = vmatprep.subr.mxu0 0.0
        %2707 = vmatpush1.msra.mxu0 0.0
        %2708 = vmatprep.subr.mxu0 0.0
        %2709 = vmatpush1.msra.mxu0 0.0
        %2710 = vmatprep.subr.mxu0 0.0
        %2711 = vmatpush1.msra.mxu0 0.0
        %2712 = vmatprep.subr.mxu0 0.0
        %2713 = vmatpush1.msra.mxu0 0.0
        %2714 = vmatprep.subr.mxu0 0.0
        %2715 = vmatpush1.msra.mxu0 0.0
        %2716 = vmatprep.subr.mxu0 0.0
        %2717 = vmatpush1.msra.mxu0 0.0
        %2718 = vmatprep.subr.mxu0 0.0
        %2719 = vmatpush1.msra.mxu0 0.0
        %2720 = vmatprep.subr.mxu0 0.0
        %2721 = vmatpush1.msra.mxu0 0.0
        %2722 = vmatprep.subr.mxu0 0.0
        %2723 = vmatpush1.msra.mxu0 0.0
        %2724 = vmatprep.subr.mxu0 0.0
        %2725 = vmatpush1.msra.mxu0 0.0
        %2726 = vmatprep.subr.mxu0 0.0
        %2727 = vmatpush1.msra.mxu0 0.0
        %2728 = vmatprep.subr.mxu0 0.0
        %2729 = vmatpush1.msra.mxu0 0.0
        %2730 = vmatprep.subr.mxu0 0.0
        %2731 = vmatpush1.msra.mxu0 0.0
        %2732 = vmatprep.subr.mxu0 0.0
        %2733 = vmatpush1.msra.mxu0 0.0
        %2734 = vmatprep.subr.mxu0 0.0
        %2735 = vmatpush1.msra.mxu0 0.0
        %2736 = vmatprep.subr.mxu0 0.0
        %2737 = vmatpush1.msra.mxu0 0.0
        %2738 = vmatprep.subr.mxu0 0.0
        %2739 = vmatpush1.msra.mxu0 0.0
        %2740 = vmatprep.subr.mxu0 0.0
        %2741 = vmatpush1.msra.mxu0 0.0
        %2742 = vmatprep.subr.mxu0 0.0
        %2743 = vmatpush1.msra.mxu0 0.0
        %2744 = vmatprep.subr.mxu0 0.0
        %2745 = vmatpush1.msra.mxu0 0.0
        %2746 = vmatprep.subr.mxu0 0.0
        %2747 = vmatpush1.msra.mxu0 0.0
        %2748 = vmatprep.subr.mxu0 0.0
        %2749 = vmatpush1.msra.mxu0 0.0
        %2750 = vmatprep.subr.mxu0 0.0
        %2751 = vmatpush1.msra.mxu0 0.0
        %2752 = vmatprep.subr.mxu0 0.0
        %2753 = vmatpush1.msra.mxu0 0.0
        %2754 = vmatprep.subr.mxu0 0.0
        %2755 = vmatpush1.msra.mxu0 0.0
        %2756 = vmatprep.mubr.f32.mxu0 0.0
        %2757 = vmatmul.mubr.f32.gmra.mrb[0].mxu0 %v2690
        %v2758 = vpop.f32.mrb[0].mxu0
        %v2759 = vadd.f32 0.0, %v2758
        %v2760 = vpop.f32.mrb[0].mxu0
        %2761 = vdwg.mxu0
        %2763 = vrot.lane.b32.xlu0 %v2502, 112
        %v2764 = vpop.permute.xlu0 %2763
        %v2767 = vsel %vm1267, %v2684, 0
        %2769 = vmatprep.subr.mxu0 0.0
        %2770 = vmatpush1.msra.mxu0 %v2764
        %2771 = vmatprep.subr.mxu0 0.0
        %2772 = vmatpush1.msra.mxu0 0.0
        %2773 = vmatprep.subr.mxu0 0.0
        %2774 = vmatpush1.msra.mxu0 0.0
        %2775 = vmatprep.subr.mxu0 0.0
        %2776 = vmatpush1.msra.mxu0 0.0
        %2777 = vmatprep.subr.mxu0 0.0
        %2778 = vmatpush1.msra.mxu0 0.0
        %2779 = vmatprep.subr.mxu0 0.0
        %2780 = vmatpush1.msra.mxu0 0.0
        %2781 = vmatprep.subr.mxu0 0.0
        %2782 = vmatpush1.msra.mxu0 0.0
        %2783 = vmatprep.subr.mxu0 0.0
        %2784 = vmatpush1.msra.mxu0 0.0
        %2785 = vmatprep.subr.mxu0 0.0
        %2786 = vmatpush1.msra.mxu0 0.0
        %2787 = vmatprep.subr.mxu0 0.0
        %2788 = vmatpush1.msra.mxu0 0.0
        %2789 = vmatprep.subr.mxu0 0.0
        %2790 = vmatpush1.msra.mxu0 0.0
        %2791 = vmatprep.subr.mxu0 0.0
        %2792 = vmatpush1.msra.mxu0 0.0
        %2793 = vmatprep.subr.mxu0 0.0
        %2794 = vmatpush1.msra.mxu0 0.0
        %2795 = vmatprep.subr.mxu0 0.0
        %2796 = vmatpush1.msra.mxu0 0.0
        %2797 = vmatprep.subr.mxu0 0.0
        %2798 = vmatpush1.msra.mxu0 0.0
        %2799 = vmatprep.subr.mxu0 0.0
        %2800 = vmatpush1.msra.mxu0 0.0
        %2801 = vmatprep.subr.mxu0 0.0
        %2802 = vmatpush1.msra.mxu0 0.0
        %2803 = vmatprep.subr.mxu0 0.0
        %2804 = vmatpush1.msra.mxu0 0.0
        %2805 = vmatprep.subr.mxu0 0.0
        %2806 = vmatpush1.msra.mxu0 0.0
        %2807 = vmatprep.subr.mxu0 0.0
        %2808 = vmatpush1.msra.mxu0 0.0
        %2809 = vmatprep.subr.mxu0 0.0
        %2810 = vmatpush1.msra.mxu0 0.0
        %2811 = vmatprep.subr.mxu0 0.0
        %2812 = vmatpush1.msra.mxu0 0.0
        %2813 = vmatprep.subr.mxu0 0.0
        %2814 = vmatpush1.msra.mxu0 0.0
        %2815 = vmatprep.subr.mxu0 0.0
        %2816 = vmatpush1.msra.mxu0 0.0
        %2817 = vmatprep.subr.mxu0 0.0
        %2818 = vmatpush1.msra.mxu0 0.0
        %2819 = vmatprep.subr.mxu0 0.0
        %2820 = vmatpush1.msra.mxu0 0.0
        %2821 = vmatprep.subr.mxu0 0.0
        %2822 = vmatpush1.msra.mxu0 0.0
        %2823 = vmatprep.subr.mxu0 0.0
        %2824 = vmatpush1.msra.mxu0 0.0
        %2825 = vmatprep.subr.mxu0 0.0
        %2826 = vmatpush1.msra.mxu0 0.0
        %2827 = vmatprep.subr.mxu0 0.0
        %2828 = vmatpush1.msra.mxu0 0.0
        %2829 = vmatprep.subr.mxu0 0.0
        %2830 = vmatpush1.msra.mxu0 0.0
        %2831 = vmatprep.subr.mxu0 0.0
        %2832 = vmatpush1.msra.mxu0 0.0
        %2833 = vmatprep.mubr.f32.mxu0 0.0
        %2834 = vmatmul.mubr.f32.gmra.mrb[0].mxu0 %v2767
        %v2835 = vpop.f32.mrb[0].mxu0
        %v2836 = vadd.f32 0.0, %v2835
        %v2837 = vpop.f32.mrb[0].mxu0
        %2838 = vdwg.mxu0
        %2841 = vrot.lane.b32.xlu0 %v2759, 16
        %v2842 = vpop.permute.xlu0 %2841
        %2843 = vrot.lane.b32.xlu0 %v2836, 16
        %v2844 = vpop.permute.xlu0 %2843
        %vm2847 = vcmask 162944
        %2848 = vst.msk [vmem:[#allocation5] sm:$0xff] %vm2847, %v2842
        %2849 = vst.msk [vmem:[#allocation5 + $0x8] sm:$0xff] %vm2847, %v2844
        %v2850 = vld [vmem:[#allocation2] sm:$0xff]
        %v2851 = vld [vmem:[#allocation2 + $0x8] sm:$0xff]
        %v2852 = vld [vmem:[#allocation3] sm:$0xff]
        %v2853 = vld [vmem:[#allocation3 + $0x8] sm:$0xff]
        %v2854 = vld [vmem:[#allocation4] sm:$0xff]
        %v2855 = vld [vmem:[#allocation4 + $0x8] sm:$0xff]
        %2857 = vrot.lane.b32.xlu0 %v2850, 108
        %v2858 = vpop.permute.xlu0 %2857
        %2860 = vrot.lane.b32.xlu0 %v2852, 108
        %v2861 = vpop.permute.xlu0 %2860
        %v2862 = vsel %vm1114, %v2858, 0
        %v2864 = vsel %vm1114, %v2861, 0
        %2866 = vmatprep.subr.mxu0 0.0
        %2867 = vmatpush1.xpose.msra.mxu0 %v2864
        %2868 = vmatprep.subr.mxu0 0.0
        %2869 = vmatpush1.xpose.msra.mxu0 0.0
        %2870 = vmatprep.subr.mxu0 0.0
        %2871 = vmatpush1.xpose.msra.mxu0 0.0
        %2872 = vmatprep.subr.mxu0 0.0
        %2873 = vmatpush1.xpose.msra.mxu0 0.0
        %2874 = vmatprep.subr.mxu0 0.0
        %2875 = vmatpush1.xpose.msra.mxu0 0.0
        %2876 = vmatprep.subr.mxu0 0.0
        %2877 = vmatpush1.xpose.msra.mxu0 0.0
        %2878 = vmatprep.subr.mxu0 0.0
        %2879 = vmatpush1.xpose.msra.mxu0 0.0
        %2880 = vmatprep.subr.mxu0 0.0
        %2881 = vmatpush1.xpose.msra.mxu0 0.0
        %2882 = vmatprep.subr.mxu0 0.0
        %2883 = vmatpush1.xpose.msra.mxu0 0.0
        %2884 = vmatprep.subr.mxu0 0.0
        %2885 = vmatpush1.xpose.msra.mxu0 0.0
        %2886 = vmatprep.subr.mxu0 0.0
        %2887 = vmatpush1.xpose.msra.mxu0 0.0
        %2888 = vmatprep.subr.mxu0 0.0
        %2889 = vmatpush1.xpose.msra.mxu0 0.0
        %2890 = vmatprep.subr.mxu0 0.0
        %2891 = vmatpush1.xpose.msra.mxu0 0.0
        %2892 = vmatprep.subr.mxu0 0.0
        %2893 = vmatpush1.xpose.msra.mxu0 0.0
        %2894 = vmatprep.subr.mxu0 0.0
        %2895 = vmatpush1.xpose.msra.mxu0 0.0
        %2896 = vmatprep.subr.mxu0 0.0
        %2897 = vmatpush1.xpose.msra.mxu0 0.0
        %2898 = vmatprep.subr.mxu0 0.0
        %2899 = vmatpush1.xpose.msra.mxu0 0.0
        %2900 = vmatprep.subr.mxu0 0.0
        %2901 = vmatpush1.xpose.msra.mxu0 0.0
        %2902 = vmatprep.subr.mxu0 0.0
        %2903 = vmatpush1.xpose.msra.mxu0 0.0
        %2904 = vmatprep.subr.mxu0 0.0
        %2905 = vmatpush1.xpose.msra.mxu0 0.0
        %2906 = vmatprep.subr.mxu0 0.0
        %2907 = vmatpush1.xpose.msra.mxu0 0.0
        %2908 = vmatprep.subr.mxu0 0.0
        %2909 = vmatpush1.xpose.msra.mxu0 0.0
        %2910 = vmatprep.subr.mxu0 0.0
        %2911 = vmatpush1.xpose.msra.mxu0 0.0
        %2912 = vmatprep.subr.mxu0 0.0
        %2913 = vmatpush1.xpose.msra.mxu0 0.0
        %2914 = vmatprep.subr.mxu0 0.0
        %2915 = vmatpush1.xpose.msra.mxu0 0.0
        %2916 = vmatprep.subr.mxu0 0.0
        %2917 = vmatpush1.xpose.msra.mxu0 0.0
        %2918 = vmatprep.subr.mxu0 0.0
        %2919 = vmatpush1.xpose.msra.mxu0 0.0
        %2920 = vmatprep.subr.mxu0 0.0
        %2921 = vmatpush1.xpose.msra.mxu0 0.0
        %2922 = vmatprep.subr.mxu0 0.0
        %2923 = vmatpush1.xpose.msra.mxu0 0.0
        %2924 = vmatprep.subr.mxu0 0.0
        %2925 = vmatpush1.xpose.msra.mxu0 0.0
        %2926 = vmatprep.subr.mxu0 0.0
        %2927 = vmatpush1.xpose.msra.mxu0 0.0
        %2928 = vmatprep.subr.mxu0 0.0
        %2929 = vmatpush1.xpose.msra.mxu0 0.0
        %2930 = vmatprep.mubr.f32.mxu0 0.0
        %2931 = vmatmul.mubr.f32.gmra.mrb[0].mxu0 %v2862
        %v2932 = vpop.f32.mrb[0].mxu0
        %v2933 = vadd.f32 0.0, %v2932
        %v2934 = vpop.f32.mrb[0].mxu0
        %2935 = vdwg.mxu0
        %2937 = vrot.lane.b32.xlu0 %v2851, 108
        %v2938 = vpop.permute.xlu0 %2937
        %2940 = vrot.lane.b32.xlu0 %v2853, 108
        %v2941 = vpop.permute.xlu0 %2940
        %v2942 = vsel %vm1114, %v2938, 0
        %v2944 = vsel %vm1114, %v2941, 0
        %2946 = vmatprep.subr.mxu0 0.0
        %2947 = vmatpush1.xpose.msra.mxu0 %v2944
        %2948 = vmatprep.subr.mxu0 0.0
        %2949 = vmatpush1.xpose.msra.mxu0 0.0
        %2950 = vmatprep.subr.mxu0 0.0
        %2951 = vmatpush1.xpose.msra.mxu0 0.0
        %2952 = vmatprep.subr.mxu0 0.0
        %2953 = vmatpush1.xpose.msra.mxu0 0.0
        %2954 = vmatprep.subr.mxu0 0.0
        %2955 = vmatpush1.xpose.msra.mxu0 0.0
        %2956 = vmatprep.subr.mxu0 0.0
        %2957 = vmatpush1.xpose.msra.mxu0 0.0
        %2958 = vmatprep.subr.mxu0 0.0
        %2959 = vmatpush1.xpose.msra.mxu0 0.0
        %2960 = vmatprep.subr.mxu0 0.0
        %2961 = vmatpush1.xpose.msra.mxu0 0.0
        %2962 = vmatprep.subr.mxu0 0.0
        %2963 = vmatpush1.xpose.msra.mxu0 0.0
        %2964 = vmatprep.subr.mxu0 0.0
        %2965 = vmatpush1.xpose.msra.mxu0 0.0
        %2966 = vmatprep.subr.mxu0 0.0
        %2967 = vmatpush1.xpose.msra.mxu0 0.0
        %2968 = vmatprep.subr.mxu0 0.0
        %2969 = vmatpush1.xpose.msra.mxu0 0.0
        %2970 = vmatprep.subr.mxu0 0.0
        %2971 = vmatpush1.xpose.msra.mxu0 0.0
        %2972 = vmatprep.subr.mxu0 0.0
        %2973 = vmatpush1.xpose.msra.mxu0 0.0
        %2974 = vmatprep.subr.mxu0 0.0
        %2975 = vmatpush1.xpose.msra.mxu0 0.0
        %2976 = vmatprep.subr.mxu0 0.0
        %2977 = vmatpush1.xpose.msra.mxu0 0.0
        %2978 = vmatprep.subr.mxu0 0.0
        %2979 = vmatpush1.xpose.msra.mxu0 0.0
        %2980 = vmatprep.subr.mxu0 0.0
        %2981 = vmatpush1.xpose.msra.mxu0 0.0
        %2982 = vmatprep.subr.mxu0 0.0
        %2983 = vmatpush1.xpose.msra.mxu0 0.0
        %2984 = vmatprep.subr.mxu0 0.0
        %2985 = vmatpush1.xpose.msra.mxu0 0.0
        %2986 = vmatprep.subr.mxu0 0.0
        %2987 = vmatpush1.xpose.msra.mxu0 0.0
        %2988 = vmatprep.subr.mxu0 0.0
        %2989 = vmatpush1.xpose.msra.mxu0 0.0
        %2990 = vmatprep.subr.mxu0 0.0
        %2991 = vmatpush1.xpose.msra.mxu0 0.0
        %2992 = vmatprep.subr.mxu0 0.0
        %2993 = vmatpush1.xpose.msra.mxu0 0.0
        %2994 = vmatprep.subr.mxu0 0.0
        %2995 = vmatpush1.xpose.msra.mxu0 0.0
        %2996 = vmatprep.subr.mxu0 0.0
        %2997 = vmatpush1.xpose.msra.mxu0 0.0
        %2998 = vmatprep.subr.mxu0 0.0
        %2999 = vmatpush1.xpose.msra.mxu0 0.0
        %3000 = vmatprep.subr.mxu0 0.0
        %3001 = vmatpush1.xpose.msra.mxu0 0.0
        %3002 = vmatprep.subr.mxu0 0.0
        %3003 = vmatpush1.xpose.msra.mxu0 0.0
        %3004 = vmatprep.subr.mxu0 0.0
        %3005 = vmatpush1.xpose.msra.mxu0 0.0
        %3006 = vmatprep.subr.mxu0 0.0
        %3007 = vmatpush1.xpose.msra.mxu0 0.0
        %3008 = vmatprep.subr.mxu0 0.0
        %3009 = vmatpush1.xpose.msra.mxu0 0.0
        %3010 = vmatprep.mubr.f32.mxu0 0.0
        %3011 = vmatmul.mubr.f32.gmra.mrb[0].mxu0 %v2942
        %v3012 = vpop.f32.mrb[0].mxu0
        %v3013 = vadd.f32 0.0, %v3012
        %v3014 = vpop.f32.mrb[0].mxu0
        %3015 = vdwg.mxu0
        %v3016 = vsel %vm1267, %v2933, -inf
        %3017 = vmax.xlane.f32.xlu0 %v3016
        %v3018 = vpop.xlane.xlu0 %3017
        %v3019 = vsel %vm1267, %v3013, -inf
        %3020 = vmax.xlane.f32.xlu0 %v3019
        %v3021 = vpop.xlane.xlu0 %3020
        %v3022 = vsub.f32 %v2933, %v3018
        %v3023 = vsub.f32 %v3013, %v3021
        %v3024 = vmul.f32 %v3022, 1.442695
        %v3025 = vpow.pop %v3024
        %v3026 = vmul.f32 %v3023, 1.442695
        %v3027 = vpow.pop %v3026
        %v3028 = vsel %vm1267, %v3025, 0.0
        %3029 = vadd.xlane.f32.xlu0 %v3028
        %v3030 = vpop.xlane.xlu0 %3029
        %v3031 = vsel %vm1267, %v3027, 0.0
        %3032 = vadd.xlane.f32.xlu0 %v3031
        %v3033 = vpop.xlane.xlu0 %3032
        %v3034 = vrcp.pop %v3030
        %v3035 = vrcp.pop %v3033
        %v3036 = vmul.f32 %v3025, %v3034
        %v3037 = vmul.f32 %v3027, %v3035
        %3039 = vrot.lane.b32.xlu0 %v2854, 108
        %v3040 = vpop.permute.xlu0 %3039
        %v3043 = vsel %vm1267, %v3036, 0
        %3045 = vmatprep.subr.mxu0 0.0
        %3046 = vmatpush1.msra.mxu0 %v3040
        %3047 = vmatprep.subr.mxu0 0.0
        %3048 = vmatpush1.msra.mxu0 0.0
        %3049 = vmatprep.subr.mxu0 0.0
        %3050 = vmatpush1.msra.mxu0 0.0
        %3051 = vmatprep.subr.mxu0 0.0
        %3052 = vmatpush1.msra.mxu0 0.0
        %3053 = vmatprep.subr.mxu0 0.0
        %3054 = vmatpush1.msra.mxu0 0.0
        %3055 = vmatprep.subr.mxu0 0.0
        %3056 = vmatpush1.msra.mxu0 0.0
        %3057 = vmatprep.subr.mxu0 0.0
        %3058 = vmatpush1.msra.mxu0 0.0
        %3059 = vmatprep.subr.mxu0 0.0
        %3060 = vmatpush1.msra.mxu0 0.0
        %3061 = vmatprep.subr.mxu0 0.0
        %3062 = vmatpush1.msra.mxu0 0.0
        %3063 = vmatprep.subr.mxu0 0.0
        %3064 = vmatpush1.msra.mxu0 0.0
        %3065 = vmatprep.subr.mxu0 0.0
        %3066 = vmatpush1.msra.mxu0 0.0
        %3067 = vmatprep.subr.mxu0 0.0
        %3068 = vmatpush1.msra.mxu0 0.0
        %3069 = vmatprep.subr.mxu0 0.0
        %3070 = vmatpush1.msra.mxu0 0.0
        %3071 = vmatprep.subr.mxu0 0.0
        %3072 = vmatpush1.msra.mxu0 0.0
        %3073 = vmatprep.subr.mxu0 0.0
        %3074 = vmatpush1.msra.mxu0 0.0
        %3075 = vmatprep.subr.mxu0 0.0
        %3076 = vmatpush1.msra.mxu0 0.0
        %3077 = vmatprep.subr.mxu0 0.0
        %3078 = vmatpush1.msra.mxu0 0.0
        %3079 = vmatprep.subr.mxu0 0.0
        %3080 = vmatpush1.msra.mxu0 0.0
        %3081 = vmatprep.subr.mxu0 0.0
        %3082 = vmatpush1.msra.mxu0 0.0
        %3083 = vmatprep.subr.mxu0 0.0
        %3084 = vmatpush1.msra.mxu0 0.0
        %3085 = vmatprep.subr.mxu0 0.0
        %3086 = vmatpush1.msra.mxu0 0.0
        %3087 = vmatprep.subr.mxu0 0.0
        %3088 = vmatpush1.msra.mxu0 0.0
        %3089 = vmatprep.subr.mxu0 0.0
        %3090 = vmatpush1.msra.mxu0 0.0
        %3091 = vmatprep.subr.mxu0 0.0
        %3092 = vmatpush1.msra.mxu0 0.0
        %3093 = vmatprep.subr.mxu0 0.0
        %3094 = vmatpush1.msra.mxu0 0.0
        %3095 = vmatprep.subr.mxu0 0.0
        %3096 = vmatpush1.msra.mxu0 0.0
        %3097 = vmatprep.subr.mxu0 0.0
        %3098 = vmatpush1.msra.mxu0 0.0
        %3099 = vmatprep.subr.mxu0 0.0
        %3100 = vmatpush1.msra.mxu0 0.0
        %3101 = vmatprep.subr.mxu0 0.0
        %3102 = vmatpush1.msra.mxu0 0.0
        %3103 = vmatprep.subr.mxu0 0.0
        %3104 = vmatpush1.msra.mxu0 0.0
        %3105 = vmatprep.subr.mxu0 0.0
        %3106 = vmatpush1.msra.mxu0 0.0
        %3107 = vmatprep.subr.mxu0 0.0
        %3108 = vmatpush1.msra.mxu0 0.0
        %3109 = vmatprep.mubr.f32.mxu0 0.0
        %3110 = vmatmul.mubr.f32.gmra.mrb[0].mxu0 %v3043
        %v3111 = vpop.f32.mrb[0].mxu0
        %v3112 = vadd.f32 0.0, %v3111
        %v3113 = vpop.f32.mrb[0].mxu0
        %3114 = vdwg.mxu0
        %3116 = vrot.lane.b32.xlu0 %v2855, 108
        %v3117 = vpop.permute.xlu0 %3116
        %v3120 = vsel %vm1267, %v3037, 0
        %3122 = vmatprep.subr.mxu0 0.0
        %3123 = vmatpush1.msra.mxu0 %v3117
        %3124 = vmatprep.subr.mxu0 0.0
        %3125 = vmatpush1.msra.mxu0 0.0
        %3126 = vmatprep.subr.mxu0 0.0
        %3127 = vmatpush1.msra.mxu0 0.0
        %3128 = vmatprep.subr.mxu0 0.0
        %3129 = vmatpush1.msra.mxu0 0.0
        %3130 = vmatprep.subr.mxu0 0.0
        %3131 = vmatpush1.msra.mxu0 0.0
        %3132 = vmatprep.subr.mxu0 0.0
        %3133 = vmatpush1.msra.mxu0 0.0
        %3134 = vmatprep.subr.mxu0 0.0
        %3135 = vmatpush1.msra.mxu0 0.0
        %3136 = vmatprep.subr.mxu0 0.0
        %3137 = vmatpush1.msra.mxu0 0.0
        %3138 = vmatprep.subr.mxu0 0.0
        %3139 = vmatpush1.msra.mxu0 0.0
        %3140 = vmatprep.subr.mxu0 0.0
        %3141 = vmatpush1.msra.mxu0 0.0
        %3142 = vmatprep.subr.mxu0 0.0
        %3143 = vmatpush1.msra.mxu0 0.0
        %3144 = vmatprep.subr.mxu0 0.0
        %3145 = vmatpush1.msra.mxu0 0.0
        %3146 = vmatprep.subr.mxu0 0.0
        %3147 = vmatpush1.msra.mxu0 0.0
        %3148 = vmatprep.subr.mxu0 0.0
        %3149 = vmatpush1.msra.mxu0 0.0
        %3150 = vmatprep.subr.mxu0 0.0
        %3151 = vmatpush1.msra.mxu0 0.0
        %3152 = vmatprep.subr.mxu0 0.0
        %3153 = vmatpush1.msra.mxu0 0.0
        %3154 = vmatprep.subr.mxu0 0.0
        %3155 = vmatpush1.msra.mxu0 0.0
        %3156 = vmatprep.subr.mxu0 0.0
        %3157 = vmatpush1.msra.mxu0 0.0
        %3158 = vmatprep.subr.mxu0 0.0
        %3159 = vmatpush1.msra.mxu0 0.0
        %3160 = vmatprep.subr.mxu0 0.0
        %3161 = vmatpush1.msra.mxu0 0.0
        %3162 = vmatprep.subr.mxu0 0.0
        %3163 = vmatpush1.msra.mxu0 0.0
        %3164 = vmatprep.subr.mxu0 0.0
        %3165 = vmatpush1.msra.mxu0 0.0
        %3166 = vmatprep.subr.mxu0 0.0
        %3167 = vmatpush1.msra.mxu0 0.0
        %3168 = vmatprep.subr.mxu0 0.0
        %3169 = vmatpush1.msra.mxu0 0.0
        %3170 = vmatprep.subr.mxu0 0.0
        %3171 = vmatpush1.msra.mxu0 0.0
        %3172 = vmatprep.subr.mxu0 0.0
        %3173 = vmatpush1.msra.mxu0 0.0
        %3174 = vmatprep.subr.mxu0 0.0
        %3175 = vmatpush1.msra.mxu0 0.0
        %3176 = vmatprep.subr.mxu0 0.0
        %3177 = vmatpush1.msra.mxu0 0.0
        %3178 = vmatprep.subr.mxu0 0.0
        %3179 = vmatpush1.msra.mxu0 0.0
        %3180 = vmatprep.subr.mxu0 0.0
        %3181 = vmatpush1.msra.mxu0 0.0
        %3182 = vmatprep.subr.mxu0 0.0
        %3183 = vmatpush1.msra.mxu0 0.0
        %3184 = vmatprep.subr.mxu0 0.0
        %3185 = vmatpush1.msra.mxu0 0.0
        %3186 = vmatprep.mubr.f32.mxu0 0.0
        %3187 = vmatmul.mubr.f32.gmra.mrb[0].mxu0 %v3120
        %v3188 = vpop.f32.mrb[0].mxu0
        %v3189 = vadd.f32 0.0, %v3188
        %v3190 = vpop.f32.mrb[0].mxu0
        %3191 = vdwg.mxu0
        %3194 = vrot.lane.b32.xlu0 %v3112, 20
        %v3195 = vpop.permute.xlu0 %3194
        %3196 = vrot.lane.b32.xlu0 %v3189, 20
        %v3197 = vpop.permute.xlu0 %3196
        %vm3200 = vcmask 195744
        %3201 = vst.msk [vmem:[#allocation5] sm:$0xff] %vm3200, %v3195
        %3202 = vst.msk [vmem:[#allocation5 + $0x8] sm:$0xff] %vm3200, %v3197
        %v3203 = vld [vmem:[#allocation2] sm:$0xff]
        %v3204 = vld [vmem:[#allocation2 + $0x8] sm:$0xff]
        %v3205 = vld [vmem:[#allocation3] sm:$0xff]
        %v3206 = vld [vmem:[#allocation3 + $0x8] sm:$0xff]
        %v3207 = vld [vmem:[#allocation4] sm:$0xff]
        %v3208 = vld [vmem:[#allocation4 + $0x8] sm:$0xff]
        %3210 = vrot.lane.b32.xlu0 %v3203, 104
        %v3211 = vpop.permute.xlu0 %3210
        %3213 = vrot.lane.b32.xlu0 %v3205, 104
        %v3214 = vpop.permute.xlu0 %3213
        %v3215 = vsel %vm1114, %v3211, 0
        %v3217 = vsel %vm1114, %v3214, 0
        %3219 = vmatprep.subr.mxu0 0.0
        %3220 = vmatpush1.xpose.msra.mxu0 %v3217
        %3221 = vmatprep.subr.mxu0 0.0
        %3222 = vmatpush1.xpose.msra.mxu0 0.0
        %3223 = vmatprep.subr.mxu0 0.0
        %3224 = vmatpush1.xpose.msra.mxu0 0.0
        %3225 = vmatprep.subr.mxu0 0.0
        %3226 = vmatpush1.xpose.msra.mxu0 0.0
        %3227 = vmatprep.subr.mxu0 0.0
        %3228 = vmatpush1.xpose.msra.mxu0 0.0
        %3229 = vmatprep.subr.mxu0 0.0
        %3230 = vmatpush1.xpose.msra.mxu0 0.0
        %3231 = vmatprep.subr.mxu0 0.0
        %3232 = vmatpush1.xpose.msra.mxu0 0.0
        %3233 = vmatprep.subr.mxu0 0.0
        %3234 = vmatpush1.xpose.msra.mxu0 0.0
        %3235 = vmatprep.subr.mxu0 0.0
        %3236 = vmatpush1.xpose.msra.mxu0 0.0
        %3237 = vmatprep.subr.mxu0 0.0
        %3238 = vmatpush1.xpose.msra.mxu0 0.0
        %3239 = vmatprep.subr.mxu0 0.0
        %3240 = vmatpush1.xpose.msra.mxu0 0.0
        %3241 = vmatprep.subr.mxu0 0.0
        %3242 = vmatpush1.xpose.msra.mxu0 0.0
        %3243 = vmatprep.subr.mxu0 0.0
        %3244 = vmatpush1.xpose.msra.mxu0 0.0
        %3245 = vmatprep.subr.mxu0 0.0
        %3246 = vmatpush1.xpose.msra.mxu0 0.0
        %3247 = vmatprep.subr.mxu0 0.0
        %3248 = vmatpush1.xpose.msra.mxu0 0.0
        %3249 = vmatprep.subr.mxu0 0.0
        %3250 = vmatpush1.xpose.msra.mxu0 0.0
        %3251 = vmatprep.subr.mxu0 0.0
        %3252 = vmatpush1.xpose.msra.mxu0 0.0
        %3253 = vmatprep.subr.mxu0 0.0
        %3254 = vmatpush1.xpose.msra.mxu0 0.0
        %3255 = vmatprep.subr.mxu0 0.0
        %3256 = vmatpush1.xpose.msra.mxu0 0.0
        %3257 = vmatprep.subr.mxu0 0.0
        %3258 = vmatpush1.xpose.msra.mxu0 0.0
        %3259 = vmatprep.subr.mxu0 0.0
        %3260 = vmatpush1.xpose.msra.mxu0 0.0
        %3261 = vmatprep.subr.mxu0 0.0
        %3262 = vmatpush1.xpose.msra.mxu0 0.0
        %3263 = vmatprep.subr.mxu0 0.0
        %3264 = vmatpush1.xpose.msra.mxu0 0.0
        %3265 = vmatprep.subr.mxu0 0.0
        %3266 = vmatpush1.xpose.msra.mxu0 0.0
        %3267 = vmatprep.subr.mxu0 0.0
        %3268 = vmatpush1.xpose.msra.mxu0 0.0
        %3269 = vmatprep.subr.mxu0 0.0
        %3270 = vmatpush1.xpose.msra.mxu0 0.0
        %3271 = vmatprep.subr.mxu0 0.0
        %3272 = vmatpush1.xpose.msra.mxu0 0.0
        %3273 = vmatprep.subr.mxu0 0.0
        %3274 = vmatpush1.xpose.msra.mxu0 0.0
        %3275 = vmatprep.subr.mxu0 0.0
        %3276 = vmatpush1.xpose.msra.mxu0 0.0
        %3277 = vmatprep.subr.mxu0 0.0
        %3278 = vmatpush1.xpose.msra.mxu0 0.0
        %3279 = vmatprep.subr.mxu0 0.0
        %3280 = vmatpush1.xpose.msra.mxu0 0.0
        %3281 = vmatprep.subr.mxu0 0.0
        %3282 = vmatpush1.xpose.msra.mxu0 0.0
        %3283 = vmatprep.mubr.f32.mxu0 0.0
        %3284 = vmatmul.mubr.f32.gmra.mrb[0].mxu0 %v3215
        %v3285 = vpop.f32.mrb[0].mxu0
        %v3286 = vadd.f32 0.0, %v3285
        %v3287 = vpop.f32.mrb[0].mxu0
        %3288 = vdwg.mxu0
        %3290 = vrot.lane.b32.xlu0 %v3204, 104
        %v3291 = vpop.permute.xlu0 %3290
        %3293 = vrot.lane.b32.xlu0 %v3206, 104
        %v3294 = vpop.permute.xlu0 %3293
        %v3295 = vsel %vm1114, %v3291, 0
        %v3297 = vsel %vm1114, %v3294, 0
        %3299 = vmatprep.subr.mxu0 0.0
        %3300 = vmatpush1.xpose.msra.mxu0 %v3297
        %3301 = vmatprep.subr.mxu0 0.0
        %3302 = vmatpush1.xpose.msra.mxu0 0.0
        %3303 = vmatprep.subr.mxu0 0.0
        %3304 = vmatpush1.xpose.msra.mxu0 0.0
        %3305 = vmatprep.subr.mxu0 0.0
        %3306 = vmatpush1.xpose.msra.mxu0 0.0
        %3307 = vmatprep.subr.mxu0 0.0
        %3308 = vmatpush1.xpose.msra.mxu0 0.0
        %3309 = vmatprep.subr.mxu0 0.0
        %3310 = vmatpush1.xpose.msra.mxu0 0.0
        %3311 = vmatprep.subr.mxu0 0.0
        %3312 = vmatpush1.xpose.msra.mxu0 0.0
        %3313 = vmatprep.subr.mxu0 0.0
        %3314 = vmatpush1.xpose.msra.mxu0 0.0
        %3315 = vmatprep.subr.mxu0 0.0
        %3316 = vmatpush1.xpose.msra.mxu0 0.0
        %3317 = vmatprep.subr.mxu0 0.0
        %3318 = vmatpush1.xpose.msra.mxu0 0.0
        %3319 = vmatprep.subr.mxu0 0.0
        %3320 = vmatpush1.xpose.msra.mxu0 0.0
        %3321 = vmatprep.subr.mxu0 0.0
        %3322 = vmatpush1.xpose.msra.mxu0 0.0
        %3323 = vmatprep.subr.mxu0 0.0
        %3324 = vmatpush1.xpose.msra.mxu0 0.0
        %3325 = vmatprep.subr.mxu0 0.0
        %3326 = vmatpush1.xpose.msra.mxu0 0.0
        %3327 = vmatprep.subr.mxu0 0.0
        %3328 = vmatpush1.xpose.msra.mxu0 0.0
        %3329 = vmatprep.subr.mxu0 0.0
        %3330 = vmatpush1.xpose.msra.mxu0 0.0
        %3331 = vmatprep.subr.mxu0 0.0
        %3332 = vmatpush1.xpose.msra.mxu0 0.0
        %3333 = vmatprep.subr.mxu0 0.0
        %3334 = vmatpush1.xpose.msra.mxu0 0.0
        %3335 = vmatprep.subr.mxu0 0.0
        %3336 = vmatpush1.xpose.msra.mxu0 0.0
        %3337 = vmatprep.subr.mxu0 0.0
        %3338 = vmatpush1.xpose.msra.mxu0 0.0
        %3339 = vmatprep.subr.mxu0 0.0
        %3340 = vmatpush1.xpose.msra.mxu0 0.0
        %3341 = vmatprep.subr.mxu0 0.0
        %3342 = vmatpush1.xpose.msra.mxu0 0.0
        %3343 = vmatprep.subr.mxu0 0.0
        %3344 = vmatpush1.xpose.msra.mxu0 0.0
        %3345 = vmatprep.subr.mxu0 0.0
        %3346 = vmatpush1.xpose.msra.mxu0 0.0
        %3347 = vmatprep.subr.mxu0 0.0
        %3348 = vmatpush1.xpose.msra.mxu0 0.0
        %3349 = vmatprep.subr.mxu0 0.0
        %3350 = vmatpush1.xpose.msra.mxu0 0.0
        %3351 = vmatprep.subr.mxu0 0.0
        %3352 = vmatpush1.xpose.msra.mxu0 0.0
        %3353 = vmatprep.subr.mxu0 0.0
        %3354 = vmatpush1.xpose.msra.mxu0 0.0
        %3355 = vmatprep.subr.mxu0 0.0
        %3356 = vmatpush1.xpose.msra.mxu0 0.0
        %3357 = vmatprep.subr.mxu0 0.0
        %3358 = vmatpush1.xpose.msra.mxu0 0.0
        %3359 = vmatprep.subr.mxu0 0.0
        %3360 = vmatpush1.xpose.msra.mxu0 0.0
        %3361 = vmatprep.subr.mxu0 0.0
        %3362 = vmatpush1.xpose.msra.mxu0 0.0
        %3363 = vmatprep.mubr.f32.mxu0 0.0
        %3364 = vmatmul.mubr.f32.gmra.mrb[0].mxu0 %v3295
        %v3365 = vpop.f32.mrb[0].mxu0
        %v3366 = vadd.f32 0.0, %v3365
        %v3367 = vpop.f32.mrb[0].mxu0
        %3368 = vdwg.mxu0
        %v3369 = vsel %vm1267, %v3286, -inf
        %3370 = vmax.xlane.f32.xlu0 %v3369
        %v3371 = vpop.xlane.xlu0 %3370
        %v3372 = vsel %vm1267, %v3366, -inf
        %3373 = vmax.xlane.f32.xlu0 %v3372
        %v3374 = vpop.xlane.xlu0 %3373
        %v3375 = vsub.f32 %v3286, %v3371
        %v3376 = vsub.f32 %v3366, %v3374
        %v3377 = vmul.f32 %v3375, 1.442695
        %v3378 = vpow.pop %v3377
        %v3379 = vmul.f32 %v3376, 1.442695
        %v3380 = vpow.pop %v3379
        %v3381 = vsel %vm1267, %v3378, 0.0
        %3382 = vadd.xlane.f32.xlu0 %v3381
        %v3383 = vpop.xlane.xlu0 %3382
        %v3384 = vsel %vm1267, %v3380, 0.0
        %3385 = vadd.xlane.f32.xlu0 %v3384
        %v3386 = vpop.xlane.xlu0 %3385
        %v3387 = vrcp.pop %v3383
        %v3388 = vrcp.pop %v3386
        %v3389 = vmul.f32 %v3378, %v3387
        %v3390 = vmul.f32 %v3380, %v3388
        %3392 = vrot.lane.b32.xlu0 %v3207, 104
        %v3393 = vpop.permute.xlu0 %3392
        %v3396 = vsel %vm1267, %v3389, 0
        %3398 = vmatprep.subr.mxu0 0.0
        %3399 = vmatpush1.msra.mxu0 %v3393
        %3400 = vmatprep.subr.mxu0 0.0
        %3401 = vmatpush1.msra.mxu0 0.0
        %3402 = vmatprep.subr.mxu0 0.0
        %3403 = vmatpush1.msra.mxu0 0.0
        %3404 = vmatprep.subr.mxu0 0.0
        %3405 = vmatpush1.msra.mxu0 0.0
        %3406 = vmatprep.subr.mxu0 0.0
        %3407 = vmatpush1.msra.mxu0 0.0
        %3408 = vmatprep.subr.mxu0 0.0
        %3409 = vmatpush1.msra.mxu0 0.0
        %3410 = vmatprep.subr.mxu0 0.0
        %3411 = vmatpush1.msra.mxu0 0.0
        %3412 = vmatprep.subr.mxu0 0.0
        %3413 = vmatpush1.msra.mxu0 0.0
        %3414 = vmatprep.subr.mxu0 0.0
        %3415 = vmatpush1.msra.mxu0 0.0
        %3416 = vmatprep.subr.mxu0 0.0
        %3417 = vmatpush1.msra.mxu0 0.0
        %3418 = vmatprep.subr.mxu0 0.0
        %3419 = vmatpush1.msra.mxu0 0.0
        %3420 = vmatprep.subr.mxu0 0.0
        %3421 = vmatpush1.msra.mxu0 0.0
        %3422 = vmatprep.subr.mxu0 0.0
        %3423 = vmatpush1.msra.mxu0 0.0
        %3424 = vmatprep.subr.mxu0 0.0
        %3425 = vmatpush1.msra.mxu0 0.0
        %3426 = vmatprep.subr.mxu0 0.0
        %3427 = vmatpush1.msra.mxu0 0.0
        %3428 = vmatprep.subr.mxu0 0.0
        %3429 = vmatpush1.msra.mxu0 0.0
        %3430 = vmatprep.subr.mxu0 0.0
        %3431 = vmatpush1.msra.mxu0 0.0
        %3432 = vmatprep.subr.mxu0 0.0
        %3433 = vmatpush1.msra.mxu0 0.0
        %3434 = vmatprep.subr.mxu0 0.0
        %3435 = vmatpush1.msra.mxu0 0.0
        %3436 = vmatprep.subr.mxu0 0.0
        %3437 = vmatpush1.msra.mxu0 0.0
        %3438 = vmatprep.subr.mxu0 0.0
        %3439 = vmatpush1.msra.mxu0 0.0
        %3440 = vmatprep.subr.mxu0 0.0
        %3441 = vmatpush1.msra.mxu0 0.0
        %3442 = vmatprep.subr.mxu0 0.0
        %3443 = vmatpush1.msra.mxu0 0.0
        %3444 = vmatprep.subr.mxu0 0.0
        %3445 = vmatpush1.msra.mxu0 0.0
        %3446 = vmatprep.subr.mxu0 0.0
        %3447 = vmatpush1.msra.mxu0 0.0
        %3448 = vmatprep.subr.mxu0 0.0
        %3449 = vmatpush1.msra.mxu0 0.0
        %3450 = vmatprep.subr.mxu0 0.0
        %3451 = vmatpush1.msra.mxu0 0.0
        %3452 = vmatprep.subr.mxu0 0.0
        %3453 = vmatpush1.msra.mxu0 0.0
        %3454 = vmatprep.subr.mxu0 0.0
        %3455 = vmatpush1.msra.mxu0 0.0
        %3456 = vmatprep.subr.mxu0 0.0
        %3457 = vmatpush1.msra.mxu0 0.0
        %3458 = vmatprep.subr.mxu0 0.0
        %3459 = vmatpush1.msra.mxu0 0.0
        %3460 = vmatprep.subr.mxu0 0.0
        %3461 = vmatpush1.msra.mxu0 0.0
        %3462 = vmatprep.mubr.f32.mxu0 0.0
        %3463 = vmatmul.mubr.f32.gmra.mrb[0].mxu0 %v3396
        %v3464 = vpop.f32.mrb[0].mxu0
        %v3465 = vadd.f32 0.0, %v3464
        %v3466 = vpop.f32.mrb[0].mxu0
        %3467 = vdwg.mxu0
        %3469 = vrot.lane.b32.xlu0 %v3208, 104
        %v3470 = vpop.permute.xlu0 %3469
        %v3473 = vsel %vm1267, %v3390, 0
        %3475 = vmatprep.subr.mxu0 0.0
        %3476 = vmatpush1.msra.mxu0 %v3470
        %3477 = vmatprep.subr.mxu0 0.0
        %3478 = vmatpush1.msra.mxu0 0.0
        %3479 = vmatprep.subr.mxu0 0.0
        %3480 = vmatpush1.msra.mxu0 0.0
        %3481 = vmatprep.subr.mxu0 0.0
        %3482 = vmatpush1.msra.mxu0 0.0
        %3483 = vmatprep.subr.mxu0 0.0
        %3484 = vmatpush1.msra.mxu0 0.0
        %3485 = vmatprep.subr.mxu0 0.0
        %3486 = vmatpush1.msra.mxu0 0.0
        %3487 = vmatprep.subr.mxu0 0.0
        %3488 = vmatpush1.msra.mxu0 0.0
        %3489 = vmatprep.subr.mxu0 0.0
        %3490 = vmatpush1.msra.mxu0 0.0
        %3491 = vmatprep.subr.mxu0 0.0
        %3492 = vmatpush1.msra.mxu0 0.0
        %3493 = vmatprep.subr.mxu0 0.0
        %3494 = vmatpush1.msra.mxu0 0.0
        %3495 = vmatprep.subr.mxu0 0.0
        %3496 = vmatpush1.msra.mxu0 0.0
        %3497 = vmatprep.subr.mxu0 0.0
        %3498 = vmatpush1.msra.mxu0 0.0
        %3499 = vmatprep.subr.mxu0 0.0
        %3500 = vmatpush1.msra.mxu0 0.0
        %3501 = vmatprep.subr.mxu0 0.0
        %3502 = vmatpush1.msra.mxu0 0.0
        %3503 = vmatprep.subr.mxu0 0.0
        %3504 = vmatpush1.msra.mxu0 0.0
        %3505 = vmatprep.subr.mxu0 0.0
        %3506 = vmatpush1.msra.mxu0 0.0
        %3507 = vmatprep.subr.mxu0 0.0
        %3508 = vmatpush1.msra.mxu0 0.0
        %3509 = vmatprep.subr.mxu0 0.0
        %3510 = vmatpush1.msra.mxu0 0.0
        %3511 = vmatprep.subr.mxu0 0.0
        %3512 = vmatpush1.msra.mxu0 0.0
        %3513 = vmatprep.subr.mxu0 0.0
        %3514 = vmatpush1.msra.mxu0 0.0
        %3515 = vmatprep.subr.mxu0 0.0
        %3516 = vmatpush1.msra.mxu0 0.0
        %3517 = vmatprep.subr.mxu0 0.0
        %3518 = vmatpush1.msra.mxu0 0.0
        %3519 = vmatprep.subr.mxu0 0.0
        %3520 = vmatpush1.msra.mxu0 0.0
        %3521 = vmatprep.subr.mxu0 0.0
        %3522 = vmatpush1.msra.mxu0 0.0
        %3523 = vmatprep.subr.mxu0 0.0
        %3524 = vmatpush1.msra.mxu0 0.0
        %3525 = vmatprep.subr.mxu0 0.0
        %3526 = vmatpush1.msra.mxu0 0.0
        %3527 = vmatprep.subr.mxu0 0.0
        %3528 = vmatpush1.msra.mxu0 0.0
        %3529 = vmatprep.subr.mxu0 0.0
        %3530 = vmatpush1.msra.mxu0 0.0
        %3531 = vmatprep.subr.mxu0 0.0
        %3532 = vmatpush1.msra.mxu0 0.0
        %3533 = vmatprep.subr.mxu0 0.0
        %3534 = vmatpush1.msra.mxu0 0.0
        %3535 = vmatprep.subr.mxu0 0.0
        %3536 = vmatpush1.msra.mxu0 0.0
        %3537 = vmatprep.subr.mxu0 0.0
        %3538 = vmatpush1.msra.mxu0 0.0
        %3539 = vmatprep.mubr.f32.mxu0 0.0
        %3540 = vmatmul.mubr.f32.gmra.mrb[0].mxu0 %v3473
        %v3541 = vpop.f32.mrb[0].mxu0
        %v3542 = vadd.f32 0.0, %v3541
        %v3543 = vpop.f32.mrb[0].mxu0
        %3544 = vdwg.mxu0
        %3547 = vrot.lane.b32.xlu0 %v3465, 24
        %v3548 = vpop.permute.xlu0 %3547
        %3549 = vrot.lane.b32.xlu0 %v3542, 24
        %v3550 = vpop.permute.xlu0 %3549
        %vm3553 = vcmask 228544
        %3554 = vst.msk [vmem:[#allocation5] sm:$0xff] %vm3553, %v3548
        %3555 = vst.msk [vmem:[#allocation5 + $0x8] sm:$0xff] %vm3553, %v3550
        %v3556 = vld [vmem:[#allocation2] sm:$0xff]
        %v3557 = vld [vmem:[#allocation2 + $0x8] sm:$0xff]
        %v3558 = vld [vmem:[#allocation3] sm:$0xff]
        %v3559 = vld [vmem:[#allocation3 + $0x8] sm:$0xff]
        %v3560 = vld [vmem:[#allocation4] sm:$0xff]
        %v3561 = vld [vmem:[#allocation4 + $0x8] sm:$0xff]
        %3563 = vrot.lane.b32.xlu0 %v3556, 100
        %v3564 = vpop.permute.xlu0 %3563
        %3566 = vrot.lane.b32.xlu0 %v3558, 100
        %v3567 = vpop.permute.xlu0 %3566
        %v3568 = vsel %vm1114, %v3564, 0
        %v3570 = vsel %vm1114, %v3567, 0
        %3572 = vmatprep.subr.mxu0 0.0
        %3573 = vmatpush1.xpose.msra.mxu0 %v3570
        %3574 = vmatprep.subr.mxu0 0.0
        %3575 = vmatpush1.xpose.msra.mxu0 0.0
        %3576 = vmatprep.subr.mxu0 0.0
        %3577 = vmatpush1.xpose.msra.mxu0 0.0
        %3578 = vmatprep.subr.mxu0 0.0
        %3579 = vmatpush1.xpose.msra.mxu0 0.0
        %3580 = vmatprep.subr.mxu0 0.0
        %3581 = vmatpush1.xpose.msra.mxu0 0.0
        %3582 = vmatprep.subr.mxu0 0.0
        %3583 = vmatpush1.xpose.msra.mxu0 0.0
        %3584 = vmatprep.subr.mxu0 0.0
        %3585 = vmatpush1.xpose.msra.mxu0 0.0
        %3586 = vmatprep.subr.mxu0 0.0
        %3587 = vmatpush1.xpose.msra.mxu0 0.0
        %3588 = vmatprep.subr.mxu0 0.0
        %3589 = vmatpush1.xpose.msra.mxu0 0.0
        %3590 = vmatprep.subr.mxu0 0.0
        %3591 = vmatpush1.xpose.msra.mxu0 0.0
        %3592 = vmatprep.subr.mxu0 0.0
        %3593 = vmatpush1.xpose.msra.mxu0 0.0
        %3594 = vmatprep.subr.mxu0 0.0
        %3595 = vmatpush1.xpose.msra.mxu0 0.0
        %3596 = vmatprep.subr.mxu0 0.0
        %3597 = vmatpush1.xpose.msra.mxu0 0.0
        %3598 = vmatprep.subr.mxu0 0.0
        %3599 = vmatpush1.xpose.msra.mxu0 0.0
        %3600 = vmatprep.subr.mxu0 0.0
        %3601 = vmatpush1.xpose.msra.mxu0 0.0
        %3602 = vmatprep.subr.mxu0 0.0
        %3603 = vmatpush1.xpose.msra.mxu0 0.0
        %3604 = vmatprep.subr.mxu0 0.0
        %3605 = vmatpush1.xpose.msra.mxu0 0.0
        %3606 = vmatprep.subr.mxu0 0.0
        %3607 = vmatpush1.xpose.msra.mxu0 0.0
        %3608 = vmatprep.subr.mxu0 0.0
        %3609 = vmatpush1.xpose.msra.mxu0 0.0
        %3610 = vmatprep.subr.mxu0 0.0
        %3611 = vmatpush1.xpose.msra.mxu0 0.0
        %3612 = vmatprep.subr.mxu0 0.0
        %3613 = vmatpush1.xpose.msra.mxu0 0.0
        %3614 = vmatprep.subr.mxu0 0.0
        %3615 = vmatpush1.xpose.msra.mxu0 0.0
        %3616 = vmatprep.subr.mxu0 0.0
        %3617 = vmatpush1.xpose.msra.mxu0 0.0
        %3618 = vmatprep.subr.mxu0 0.0
        %3619 = vmatpush1.xpose.msra.mxu0 0.0
        %3620 = vmatprep.subr.mxu0 0.0
        %3621 = vmatpush1.xpose.msra.mxu0 0.0
        %3622 = vmatprep.subr.mxu0 0.0
        %3623 = vmatpush1.xpose.msra.mxu0 0.0
        %3624 = vmatprep.subr.mxu0 0.0
        %3625 = vmatpush1.xpose.msra.mxu0 0.0
        %3626 = vmatprep.subr.mxu0 0.0
        %3627 = vmatpush1.xpose.msra.mxu0 0.0
        %3628 = vmatprep.subr.mxu0 0.0
        %3629 = vmatpush1.xpose.msra.mxu0 0.0
        %3630 = vmatprep.subr.mxu0 0.0
        %3631 = vmatpush1.xpose.msra.mxu0 0.0
        %3632 = vmatprep.subr.mxu0 0.0
        %3633 = vmatpush1.xpose.msra.mxu0 0.0
        %3634 = vmatprep.subr.mxu0 0.0
        %3635 = vmatpush1.xpose.msra.mxu0 0.0
        %3636 = vmatprep.mubr.f32.mxu0 0.0
        %3637 = vmatmul.mubr.f32.gmra.mrb[0].mxu0 %v3568
        %v3638 = vpop.f32.mrb[0].mxu0
        %v3639 = vadd.f32 0.0, %v3638
        %v3640 = vpop.f32.mrb[0].mxu0
        %3641 = vdwg.mxu0
        %3643 = vrot.lane.b32.xlu0 %v3557, 100
        %v3644 = vpop.permute.xlu0 %3643
        %3646 = vrot.lane.b32.xlu0 %v3559, 100
        %v3647 = vpop.permute.xlu0 %3646
        %v3648 = vsel %vm1114, %v3644, 0
        %v3650 = vsel %vm1114, %v3647, 0
        %3652 = vmatprep.subr.mxu0 0.0
        %3653 = vmatpush1.xpose.msra.mxu0 %v3650
        %3654 = vmatprep.subr.mxu0 0.0
        %3655 = vmatpush1.xpose.msra.mxu0 0.0
        %3656 = vmatprep.subr.mxu0 0.0
        %3657 = vmatpush1.xpose.msra.mxu0 0.0
        %3658 = vmatprep.subr.mxu0 0.0
        %3659 = vmatpush1.xpose.msra.mxu0 0.0
        %3660 = vmatprep.subr.mxu0 0.0
        %3661 = vmatpush1.xpose.msra.mxu0 0.0
        %3662 = vmatprep.subr.mxu0 0.0
        %3663 = vmatpush1.xpose.msra.mxu0 0.0
        %3664 = vmatprep.subr.mxu0 0.0
        %3665 = vmatpush1.xpose.msra.mxu0 0.0
        %3666 = vmatprep.subr.mxu0 0.0
        %3667 = vmatpush1.xpose.msra.mxu0 0.0
        %3668 = vmatprep.subr.mxu0 0.0
        %3669 = vmatpush1.xpose.msra.mxu0 0.0
        %3670 = vmatprep.subr.mxu0 0.0
        %3671 = vmatpush1.xpose.msra.mxu0 0.0
        %3672 = vmatprep.subr.mxu0 0.0
        %3673 = vmatpush1.xpose.msra.mxu0 0.0
        %3674 = vmatprep.subr.mxu0 0.0
        %3675 = vmatpush1.xpose.msra.mxu0 0.0
        %3676 = vmatprep.subr.mxu0 0.0
        %3677 = vmatpush1.xpose.msra.mxu0 0.0
        %3678 = vmatprep.subr.mxu0 0.0
        %3679 = vmatpush1.xpose.msra.mxu0 0.0
        %3680 = vmatprep.subr.mxu0 0.0
        %3681 = vmatpush1.xpose.msra.mxu0 0.0
        %3682 = vmatprep.subr.mxu0 0.0
        %3683 = vmatpush1.xpose.msra.mxu0 0.0
        %3684 = vmatprep.subr.mxu0 0.0
        %3685 = vmatpush1.xpose.msra.mxu0 0.0
        %3686 = vmatprep.subr.mxu0 0.0
        %3687 = vmatpush1.xpose.msra.mxu0 0.0
        %3688 = vmatprep.subr.mxu0 0.0
        %3689 = vmatpush1.xpose.msra.mxu0 0.0
        %3690 = vmatprep.subr.mxu0 0.0
        %3691 = vmatpush1.xpose.msra.mxu0 0.0
        %3692 = vmatprep.subr.mxu0 0.0
        %3693 = vmatpush1.xpose.msra.mxu0 0.0
        %3694 = vmatprep.subr.mxu0 0.0
        %3695 = vmatpush1.xpose.msra.mxu0 0.0
        %3696 = vmatprep.subr.mxu0 0.0
        %3697 = vmatpush1.xpose.msra.mxu0 0.0
        %3698 = vmatprep.subr.mxu0 0.0
        %3699 = vmatpush1.xpose.msra.mxu0 0.0
        %3700 = vmatprep.subr.mxu0 0.0
        %3701 = vmatpush1.xpose.msra.mxu0 0.0
        %3702 = vmatprep.subr.mxu0 0.0
        %3703 = vmatpush1.xpose.msra.mxu0 0.0
        %3704 = vmatprep.subr.mxu0 0.0
        %3705 = vmatpush1.xpose.msra.mxu0 0.0
        %3706 = vmatprep.subr.mxu0 0.0
        %3707 = vmatpush1.xpose.msra.mxu0 0.0
        %3708 = vmatprep.subr.mxu0 0.0
        %3709 = vmatpush1.xpose.msra.mxu0 0.0
        %3710 = vmatprep.subr.mxu0 0.0
        %3711 = vmatpush1.xpose.msra.mxu0 0.0
        %3712 = vmatprep.subr.mxu0 0.0
        %3713 = vmatpush1.xpose.msra.mxu0 0.0
        %3714 = vmatprep.subr.mxu0 0.0
        %3715 = vmatpush1.xpose.msra.mxu0 0.0
        %3716 = vmatprep.mubr.f32.mxu0 0.0
        %3717 = vmatmul.mubr.f32.gmra.mrb[0].mxu0 %v3648
        %v3718 = vpop.f32.mrb[0].mxu0
        %v3719 = vadd.f32 0.0, %v3718
        %v3720 = vpop.f32.mrb[0].mxu0
        %3721 = vdwg.mxu0
        %v3722 = vsel %vm1267, %v3639, -inf
        %3723 = vmax.xlane.f32.xlu0 %v3722
        %v3724 = vpop.xlane.xlu0 %3723
        %v3725 = vsel %vm1267, %v3719, -inf
        %3726 = vmax.xlane.f32.xlu0 %v3725
        %v3727 = vpop.xlane.xlu0 %3726
        %v3728 = vsub.f32 %v3639, %v3724
        %v3729 = vsub.f32 %v3719, %v3727
        %v3730 = vmul.f32 %v3728, 1.442695
        %v3731 = vpow.pop %v3730
        %v3732 = vmul.f32 %v3729, 1.442695
        %v3733 = vpow.pop %v3732
        %v3734 = vsel %vm1267, %v3731, 0.0
        %3735 = vadd.xlane.f32.xlu0 %v3734
        %v3736 = vpop.xlane.xlu0 %3735
        %v3737 = vsel %vm1267, %v3733, 0.0
        %3738 = vadd.xlane.f32.xlu0 %v3737
        %v3739 = vpop.xlane.xlu0 %3738
        %v3740 = vrcp.pop %v3736
        %v3741 = vrcp.pop %v3739
        %v3742 = vmul.f32 %v3731, %v3740
        %v3743 = vmul.f32 %v3733, %v3741
        %3745 = vrot.lane.b32.xlu0 %v3560, 100
        %v3746 = vpop.permute.xlu0 %3745
        %v3749 = vsel %vm1267, %v3742, 0
        %3751 = vmatprep.subr.mxu0 0.0
        %3752 = vmatpush1.msra.mxu0 %v3746
        %3753 = vmatprep.subr.mxu0 0.0
        %3754 = vmatpush1.msra.mxu0 0.0
        %3755 = vmatprep.subr.mxu0 0.0
        %3756 = vmatpush1.msra.mxu0 0.0
        %3757 = vmatprep.subr.mxu0 0.0
        %3758 = vmatpush1.msra.mxu0 0.0
        %3759 = vmatprep.subr.mxu0 0.0
        %3760 = vmatpush1.msra.mxu0 0.0
        %3761 = vmatprep.subr.mxu0 0.0
        %3762 = vmatpush1.msra.mxu0 0.0
        %3763 = vmatprep.subr.mxu0 0.0
        %3764 = vmatpush1.msra.mxu0 0.0
        %3765 = vmatprep.subr.mxu0 0.0
        %3766 = vmatpush1.msra.mxu0 0.0
        %3767 = vmatprep.subr.mxu0 0.0
        %3768 = vmatpush1.msra.mxu0 0.0
        %3769 = vmatprep.subr.mxu0 0.0
        %3770 = vmatpush1.msra.mxu0 0.0
        %3771 = vmatprep.subr.mxu0 0.0
        %3772 = vmatpush1.msra.mxu0 0.0
        %3773 = vmatprep.subr.mxu0 0.0
        %3774 = vmatpush1.msra.mxu0 0.0
        %3775 = vmatprep.subr.mxu0 0.0
        %3776 = vmatpush1.msra.mxu0 0.0
        %3777 = vmatprep.subr.mxu0 0.0
        %3778 = vmatpush1.msra.mxu0 0.0
        %3779 = vmatprep.subr.mxu0 0.0
        %3780 = vmatpush1.msra.mxu0 0.0
        %3781 = vmatprep.subr.mxu0 0.0
        %3782 = vmatpush1.msra.mxu0 0.0
        %3783 = vmatprep.subr.mxu0 0.0
        %3784 = vmatpush1.msra.mxu0 0.0
        %3785 = vmatprep.subr.mxu0 0.0
        %3786 = vmatpush1.msra.mxu0 0.0
        %3787 = vmatprep.subr.mxu0 0.0
        %3788 = vmatpush1.msra.mxu0 0.0
        %3789 = vmatprep.subr.mxu0 0.0
        %3790 = vmatpush1.msra.mxu0 0.0
        %3791 = vmatprep.subr.mxu0 0.0
        %3792 = vmatpush1.msra.mxu0 0.0
        %3793 = vmatprep.subr.mxu0 0.0
        %3794 = vmatpush1.msra.mxu0 0.0
        %3795 = vmatprep.subr.mxu0 0.0
        %3796 = vmatpush1.msra.mxu0 0.0
        %3797 = vmatprep.subr.mxu0 0.0
        %3798 = vmatpush1.msra.mxu0 0.0
        %3799 = vmatprep.subr.mxu0 0.0
        %3800 = vmatpush1.msra.mxu0 0.0
        %3801 = vmatprep.subr.mxu0 0.0
        %3802 = vmatpush1.msra.mxu0 0.0
        %3803 = vmatprep.subr.mxu0 0.0
        %3804 = vmatpush1.msra.mxu0 0.0
        %3805 = vmatprep.subr.mxu0 0.0
        %3806 = vmatpush1.msra.mxu0 0.0
        %3807 = vmatprep.subr.mxu0 0.0
        %3808 = vmatpush1.msra.mxu0 0.0
        %3809 = vmatprep.subr.mxu0 0.0
        %3810 = vmatpush1.msra.mxu0 0.0
        %3811 = vmatprep.subr.mxu0 0.0
        %3812 = vmatpush1.msra.mxu0 0.0
        %3813 = vmatprep.subr.mxu0 0.0
        %3814 = vmatpush1.msra.mxu0 0.0
        %3815 = vmatprep.mubr.f32.mxu0 0.0
        %3816 = vmatmul.mubr.f32.gmra.mrb[0].mxu0 %v3749
        %v3817 = vpop.f32.mrb[0].mxu0
        %v3818 = vadd.f32 0.0, %v3817
        %v3819 = vpop.f32.mrb[0].mxu0
        %3820 = vdwg.mxu0
        %3822 = vrot.lane.b32.xlu0 %v3561, 100
        %v3823 = vpop.permute.xlu0 %3822
        %v3826 = vsel %vm1267, %v3743, 0
        %3828 = vmatprep.subr.mxu0 0.0
        %3829 = vmatpush1.msra.mxu0 %v3823
        %3830 = vmatprep.subr.mxu0 0.0
        %3831 = vmatpush1.msra.mxu0 0.0
        %3832 = vmatprep.subr.mxu0 0.0
        %3833 = vmatpush1.msra.mxu0 0.0
        %3834 = vmatprep.subr.mxu0 0.0
        %3835 = vmatpush1.msra.mxu0 0.0
        %3836 = vmatprep.subr.mxu0 0.0
        %3837 = vmatpush1.msra.mxu0 0.0
        %3838 = vmatprep.subr.mxu0 0.0
        %3839 = vmatpush1.msra.mxu0 0.0
        %3840 = vmatprep.subr.mxu0 0.0
        %3841 = vmatpush1.msra.mxu0 0.0
        %3842 = vmatprep.subr.mxu0 0.0
        %3843 = vmatpush1.msra.mxu0 0.0
        %3844 = vmatprep.subr.mxu0 0.0
        %3845 = vmatpush1.msra.mxu0 0.0
        %3846 = vmatprep.subr.mxu0 0.0
        %3847 = vmatpush1.msra.mxu0 0.0
        %3848 = vmatprep.subr.mxu0 0.0
        %3849 = vmatpush1.msra.mxu0 0.0
        %3850 = vmatprep.subr.mxu0 0.0
        %3851 = vmatpush1.msra.mxu0 0.0
        %3852 = vmatprep.subr.mxu0 0.0
        %3853 = vmatpush1.msra.mxu0 0.0
        %3854 = vmatprep.subr.mxu0 0.0
        %3855 = vmatpush1.msra.mxu0 0.0
        %3856 = vmatprep.subr.mxu0 0.0
        %3857 = vmatpush1.msra.mxu0 0.0
        %3858 = vmatprep.subr.mxu0 0.0
        %3859 = vmatpush1.msra.mxu0 0.0
        %3860 = vmatprep.subr.mxu0 0.0
        %3861 = vmatpush1.msra.mxu0 0.0
        %3862 = vmatprep.subr.mxu0 0.0
        %3863 = vmatpush1.msra.mxu0 0.0
        %3864 = vmatprep.subr.mxu0 0.0
        %3865 = vmatpush1.msra.mxu0 0.0
        %3866 = vmatprep.subr.mxu0 0.0
        %3867 = vmatpush1.msra.mxu0 0.0
        %3868 = vmatprep.subr.mxu0 0.0
        %3869 = vmatpush1.msra.mxu0 0.0
        %3870 = vmatprep.subr.mxu0 0.0
        %3871 = vmatpush1.msra.mxu0 0.0
        %3872 = vmatprep.subr.mxu0 0.0
        %3873 = vmatpush1.msra.mxu0 0.0
        %3874 = vmatprep.subr.mxu0 0.0
        %3875 = vmatpush1.msra.mxu0 0.0
        %3876 = vmatprep.subr.mxu0 0.0
        %3877 = vmatpush1.msra.mxu0 0.0
        %3878 = vmatprep.subr.mxu0 0.0
        %3879 = vmatpush1.msra.mxu0 0.0
        %3880 = vmatprep.subr.mxu0 0.0
        %3881 = vmatpush1.msra.mxu0 0.0
        %3882 = vmatprep.subr.mxu0 0.0
        %3883 = vmatpush1.msra.mxu0 0.0
        %3884 = vmatprep.subr.mxu0 0.0
        %3885 = vmatpush1.msra.mxu0 0.0
        %3886 = vmatprep.subr.mxu0 0.0
        %3887 = vmatpush1.msra.mxu0 0.0
        %3888 = vmatprep.subr.mxu0 0.0
        %3889 = vmatpush1.msra.mxu0 0.0
        %3890 = vmatprep.subr.mxu0 0.0
        %3891 = vmatpush1.msra.mxu0 0.0
        %3892 = vmatprep.mubr.f32.mxu0 0.0
        %3893 = vmatmul.mubr.f32.gmra.mrb[0].mxu0 %v3826
        %v3894 = vpop.f32.mrb[0].mxu0
        %v3895 = vadd.f32 0.0, %v3894
        %v3896 = vpop.f32.mrb[0].mxu0
        %3897 = vdwg.mxu0
        %3900 = vrot.lane.b32.xlu0 %v3818, 28
        %v3901 = vpop.permute.xlu0 %3900
        %3902 = vrot.lane.b32.xlu0 %v3895, 28
        %v3903 = vpop.permute.xlu0 %3902
        %vm3906 = vcmask 261344
        %3907 = vst.msk [vmem:[#allocation5] sm:$0xff] %vm3906, %v3901
        %3908 = vst.msk [vmem:[#allocation5 + $0x8] sm:$0xff] %vm3906, %v3903
        %v3909 = vld [vmem:[#allocation5] sm:$0xff]
        %v3910 = vld [vmem:[#allocation5 + $0x8] sm:$0xff]
        %v3911 = vpack.c.bf16 %v3910, %v3909
        %v3912 = vld [vmem:[%s9] sm:$0xf]
        %v3913 = vld [vmem:[%s9 + $0x4] sm:$0xf]
        %v3914 = vld [vmem:[%s9 + $0x8] sm:$0xf]
        %v3915 = vld [vmem:[%s9 + $0xc] sm:$0xf]
        %v3916 = vld [vmem:[#allocation15] sm:$0x1]
        %v3918 = vlaneseq
        %v3919 = vshrl.u32 %v3918, 7
        %v3920 = vsub.s32 0, %v3919
        %v3921 = vrot.slane %v3916, %v3920
        %v3927 = vunpack.c.l.b16 %v3912
        %v3928 = vunpack.c.l.b16 %v3913
        %v3929 = vunpack.c.l.b16 %v3914
        %v3930 = vunpack.c.l.b16 %v3915
        %v3931 = vpack.c.b16 %v3928, %v3927
        %v3932 = vpack.c.b16 %v3930, %v3929
        %v3936 = vsel %vm867, %v3911, 0
        %3938 = vmatprep.subr.bf16.mxu0 0
        %3939 = vmatpush1.bf16.msra.mxu0 %v3931
        %3940 = vmatprep.subr.bf16.mxu0 0
        %3941 = vmatpush1.bf16.msra.mxu0 %v3932
        %3942 = vmatprep.subr.bf16.mxu0 0
        %3943 = vmatpush1.bf16.msra.mxu0 0
        %3944 = vmatprep.subr.bf16.mxu0 0
        %3945 = vmatpush1.bf16.msra.mxu0 0
        %3946 = vmatprep.subr.bf16.mxu0 0
        %3947 = vmatpush1.bf16.msra.mxu0 0
        %3948 = vmatprep.subr.bf16.mxu0 0
        %3949 = vmatpush1.bf16.msra.mxu0 0
        %3950 = vmatprep.subr.bf16.mxu0 0
        %3951 = vmatpush1.bf16.msra.mxu0 0
        %3952 = vmatprep.subr.bf16.mxu0 0
        %3953 = vmatpush1.bf16.msra.mxu0 0
        %3954 = vmatprep.subr.bf16.mxu0 0
        %3955 = vmatpush1.bf16.msra.mxu0 0
        %3956 = vmatprep.subr.bf16.mxu0 0
        %3957 = vmatpush1.bf16.msra.mxu0 0
        %3958 = vmatprep.subr.bf16.mxu0 0
        %3959 = vmatpush1.bf16.msra.mxu0 0
        %3960 = vmatprep.subr.bf16.mxu0 0
        %3961 = vmatpush1.bf16.msra.mxu0 0
        %3962 = vmatprep.subr.bf16.mxu0 0
        %3963 = vmatpush1.bf16.msra.mxu0 0
        %3964 = vmatprep.subr.bf16.mxu0 0
        %3965 = vmatpush1.bf16.msra.mxu0 0
        %3966 = vmatprep.subr.bf16.mxu0 0
        %3967 = vmatpush1.bf16.msra.mxu0 0
        %3968 = vmatprep.subr.bf16.mxu0 0
        %3969 = vmatpush1.bf16.msra.mxu0 0
        %3970 = vmatprep.mubr.bf16.mxu0 0
        %3971 = vmatmul.mubr.bf16.gmra.mrb[0].mxu0 %v3936
        %v3972 = vpop.f32.mrb[0].mxu0
        %v3973 = vadd.f32 %v3921, %v3972
        %v3974 = vpop.f32.mrb[0].mxu0
        %v3975 = vpop.f32.mrb[0].mxu0
        %v3976 = vadd.f32 %v3921, %v3975
        %v3977 = vpop.f32.mrb[0].mxu0
        %3978 = vdwg.mxu0
        %v3979 = vld [vmem:[%s858] sm:$0xff]
        %v3980 = vadd.f32 %v3973, %v3979
        %v3981 = vld [vmem:[%s862] sm:$0xff]
        %v3982 = vadd.f32 %v3976, %v3981
        %v3983 = vld [vmem:[#allocation17] sm:$0x1]
        %v3984 = vld [vmem:[#allocation18] sm:$0x1]
        %v3985 = vld [vmem:[%s13] sm:$0xf]
        %v3986 = vld [vmem:[%s13 + $0x4] sm:$0xf]
        %v3987 = vld [vmem:[%s13 + $0x8] sm:$0xf]
        %v3988 = vld [vmem:[%s13 + $0xc] sm:$0xf]
        %v3989 = vld [vmem:[#allocation20] sm:$0x1]
        %v3990 = vld [vmem:[%s15] sm:$0xf]
        %v3991 = vld [vmem:[%s15 + $0x4] sm:$0xf]
        %v3992 = vld [vmem:[#allocation21] sm:$0x1]
        %v3993 = vsel %vm867, %v3980, 0.0
        %3994 = vadd.xlane.f32.xlu0 %v3993
        %v3995 = vpop.xlane.xlu0 %3994
        %v3996 = vmul.f32 %v3995, %v871
        %v3997 = vsub.f32 %v3980, %v3996
        %v3998 = vmul.f32 %v3997, %v3997
        %v3999 = vsel %vm867, %v3998, 0.0
        %4000 = vadd.xlane.f32.xlu0 %v3999
        %v4001 = vpop.xlane.xlu0 %4000
        %v4002 = vmul.f32 %v4001, %v871
        %v4003 = vadd.f32 %v4002, 1e-05
        %v4004 = vrsqrt.pop %v4003
        %v4005 = vmul.f32 %v3997, %v4004
        %v4007 = vlaneseq
        %v4008 = vshrl.u32 %v4007, 7
        %v4009 = vsub.s32 0, %v4008
        %v4010 = vrot.slane %v3983, %v4009
        %v4012 = vmul.f32 %v4005, %v4010
        %v4014 = vlaneseq
        %v4015 = vshrl.u32 %v4014, 7
        %v4016 = vsub.s32 0, %v4015
        %v4017 = vrot.slane %v3984, %v4016
        %v4019 = vadd.f32 %v4012, %v4017
        %v4020 = vpack.c.bf16 %v4019, %v4019
        %v4022 = vlaneseq
        %v4023 = vshrl.u32 %v4022, 7
        %v4024 = vsub.s32 0, %v4023
        %v4025 = vrot.slane %v3989, %v4024
        %v4031 = vunpack.c.l.b16 %v3985
        %v4032 = vunpack.c.l.b16 %v3986
        %v4033 = vunpack.c.l.b16 %v3987
        %v4034 = vunpack.c.l.b16 %v3988
        %v4035 = vpack.c.b16 %v4032, %v4031
        %v4036 = vpack.c.b16 %v4034, %v4033
        %v4040 = vsel %vm867, %v4020, 0
        %4042 = vmatprep.subr.bf16.mxu0 0
        %4043 = vmatpush1.bf16.msra.mxu0 %v4035
        %4044 = vmatprep.subr.bf16.mxu0 0
        %4045 = vmatpush1.bf16.msra.mxu0 %v4036
        %4046 = vmatprep.subr.bf16.mxu0 0
        %4047 = vmatpush1.bf16.msra.mxu0 0
        %4048 = vmatprep.subr.bf16.mxu0 0
        %4049 = vmatpush1.bf16.msra.mxu0 0
        %4050 = vmatprep.subr.bf16.mxu0 0
        %4051 = vmatpush1.bf16.msra.mxu0 0
        %4052 = vmatprep.subr.bf16.mxu0 0
        %4053 = vmatpush1.bf16.msra.mxu0 0
        %4054 = vmatprep.subr.bf16.mxu0 0
        %4055 = vmatpush1.bf16.msra.mxu0 0
        %4056 = vmatprep.subr.bf16.mxu0 0
        %4057 = vmatpush1.bf16.msra.mxu0 0
        %4058 = vmatprep.subr.bf16.mxu0 0
        %4059 = vmatpush1.bf16.msra.mxu0 0
        %4060 = vmatprep.subr.bf16.mxu0 0
        %4061 = vmatpush1.bf16.msra.mxu0 0
        %4062 = vmatprep.subr.bf16.mxu0 0
        %4063 = vmatpush1.bf16.msra.mxu0 0
        %4064 = vmatprep.subr.bf16.mxu0 0
        %4065 = vmatpush1.bf16.msra.mxu0 0
        %4066 = vmatprep.subr.bf16.mxu0 0
        %4067 = vmatpush1.bf16.msra.mxu0 0
        %4068 = vmatprep.subr.bf16.mxu0 0
        %4069 = vmatpush1.bf16.msra.mxu0 0
        %4070 = vmatprep.subr.bf16.mxu0 0
        %4071 = vmatpush1.bf16.msra.mxu0 0
        %4072 = vmatprep.subr.bf16.mxu0 0
        %4073 = vmatpush1.bf16.msra.mxu0 0
        %4074 = vmatprep.mubr.bf16.mxu0 0
        %4075 = vmatmul.mubr.bf16.gmra.mrb[0].mxu0 %v4040
        %v4076 = vpop.f32.mrb[0].mxu0
        %v4077 = vadd.f32 %v4025, %v4076
        %v4078 = vpop.f32.mrb[0].mxu0
        %v4079 = vpop.f32.mrb[0].mxu0
        %v4080 = vpop.f32.mrb[0].mxu0
        %4081 = vdwg.mxu0
        %v4082 = vmul.f32 %v4077, 0.5
        %v4083 = vmul.f32 %v4077, 0.70710677
        %v4084 = verf.f32.pop %v4083
        %v4085 = vadd.f32 %v4084, 1.0
        %v4086 = vmul.f32 %v4082, %v4085
        %v4087 = vpack.c.bf16 %v4086, %v4086
        %v4089 = vlaneseq
        %v4090 = vshrl.u32 %v4089, 7
        %v4091 = vsub.s32 0, %v4090
        %v4092 = vrot.slane %v3992, %v4091
        %v4096 = vunpack.c.l.b16 %v3990
        %v4097 = vunpack.c.l.b16 %v3991
        %v4098 = vpack.c.b16 %v4097, %v4096
        %vm4100 = vcmask 130048
        %v4102 = vsel %vm4100, %v4087, 0
        %4104 = vmatprep.subr.bf16.mxu0 0
        %4105 = vmatpush1.bf16.msra.mxu0 %v4098
        %4106 = vmatprep.subr.bf16.mxu0 0
        %4107 = vmatpush1.bf16.msra.mxu0 0
        %4108 = vmatprep.subr.bf16.mxu0 0
        %4109 = vmatpush1.bf16.msra.mxu0 0
        %4110 = vmatprep.subr.bf16.mxu0 0
        %4111 = vmatpush1.bf16.msra.mxu0 0
        %4112 = vmatprep.subr.bf16.mxu0 0
        %4113 = vmatpush1.bf16.msra.mxu0 0
        %4114 = vmatprep.subr.bf16.mxu0 0
        %4115 = vmatpush1.bf16.msra.mxu0 0
        %4116 = vmatprep.subr.bf16.mxu0 0
        %4117 = vmatpush1.bf16.msra.mxu0 0
        %4118 = vmatprep.subr.bf16.mxu0 0
        %4119 = vmatpush1.bf16.msra.mxu0 0
        %4120 = vmatprep.subr.bf16.mxu0 0
        %4121 = vmatpush1.bf16.msra.mxu0 0
        %4122 = vmatprep.subr.bf16.mxu0 0
        %4123 = vmatpush1.bf16.msra.mxu0 0
        %4124 = vmatprep.subr.bf16.mxu0 0
        %4125 = vmatpush1.bf16.msra.mxu0 0
        %4126 = vmatprep.subr.bf16.mxu0 0
        %4127 = vmatpush1.bf16.msra.mxu0 0
        %4128 = vmatprep.subr.bf16.mxu0 0
        %4129 = vmatpush1.bf16.msra.mxu0 0
        %4130 = vmatprep.subr.bf16.mxu0 0
        %4131 = vmatpush1.bf16.msra.mxu0 0
        %4132 = vmatprep.subr.bf16.mxu0 0
        %4133 = vmatpush1.bf16.msra.mxu0 0
        %4134 = vmatprep.subr.bf16.mxu0 0
        %4135 = vmatpush1.bf16.msra.mxu0 0
        %4136 = vmatprep.mubr.bf16.mxu0 0
        %4137 = vmatmul.mubr.bf16.gmra.mrb[0].mxu0 %v4102
        %v4138 = vpop.f32.mrb[0].mxu0
        %v4139 = vadd.f32 %v4092, %v4138
        %v4140 = vpop.f32.mrb[0].mxu0
        %v4141 = vpop.f32.mrb[0].mxu0
        %v4142 = vpop.f32.mrb[0].mxu0
        %4143 = vdwg.mxu0
        %v4144 = vadd.f32 %v3980, %v4139
        %v4145 = vld [vmem:[#allocation23] sm:$0x1]
        %v4146 = vld [vmem:[%s18] sm:$0x1]
        %v4147 = vld [vmem:[%s19] sm:$0xf]
        %v4148 = vld [vmem:[%s19 + $0x4] sm:$0xf]
        %v4149 = vld [vmem:[%s19 + $0x8] sm:$0xf]
        %v4150 = vld [vmem:[%s19 + $0xc] sm:$0xf]
        %v4151 = vld [vmem:[%s20] sm:$0x1]
        %v4152 = vld [vmem:[%s21] sm:$0xf]
        %v4153 = vld [vmem:[%s21 + $0x4] sm:$0xf]
        %v4154 = vld [vmem:[%s22] sm:$0x1]
        %v4155 = vsel %vm867, %v3982, 0.0
        %4156 = vadd.xlane.f32.xlu0 %v4155
        %v4157 = vpop.xlane.xlu0 %4156
        %v4158 = vmul.f32 %v4157, %v871
        %v4159 = vsub.f32 %v3982, %v4158
        %v4160 = vmul.f32 %v4159, %v4159
        %v4161 = vsel %vm867, %v4160, 0.0
        %4162 = vadd.xlane.f32.xlu0 %v4161
        %v4163 = vpop.xlane.xlu0 %4162
        %v4164 = vmul.f32 %v4163, %v871
        %v4165 = vadd.f32 %v4164, 1e-05
        %v4166 = vrsqrt.pop %v4165
        %v4167 = vmul.f32 %v4159, %v4166
        %v4169 = vlaneseq
        %v4170 = vshrl.u32 %v4169, 7
        %v4171 = vsub.s32 0, %v4170
        %v4172 = vrot.slane %v4145, %v4171
        %v4174 = vmul.f32 %v4167, %v4172
        %v4176 = vlaneseq
        %v4177 = vshrl.u32 %v4176, 7
        %v4178 = vsub.s32 0, %v4177
        %v4179 = vrot.slane %v4146, %v4178
        %v4181 = vadd.f32 %v4174, %v4179
        %v4182 = vpack.c.bf16 %v4181, %v4181
        %v4184 = vlaneseq
        %v4185 = vshrl.u32 %v4184, 7
        %v4186 = vsub.s32 0, %v4185
        %v4187 = vrot.slane %v4151, %v4186
        %v4193 = vunpack.c.l.b16 %v4147
        %v4194 = vunpack.c.l.b16 %v4148
        %v4195 = vunpack.c.l.b16 %v4149
        %v4196 = vunpack.c.l.b16 %v4150
        %v4197 = vpack.c.b16 %v4194, %v4193
        %v4198 = vpack.c.b16 %v4196, %v4195
        %v4202 = vsel %vm867, %v4182, 0
        %4204 = vmatprep.subr.bf16.mxu0 0
        %4205 = vmatpush1.bf16.msra.mxu0 %v4197
        %4206 = vmatprep.subr.bf16.mxu0 0
        %4207 = vmatpush1.bf16.msra.mxu0 %v4198
        %4208 = vmatprep.subr.bf16.mxu0 0
        %4209 = vmatpush1.bf16.msra.mxu0 0
        %4210 = vmatprep.subr.bf16.mxu0 0
        %4211 = vmatpush1.bf16.msra.mxu0 0
        %4212 = vmatprep.subr.bf16.mxu0 0
        %4213 = vmatpush1.bf16.msra.mxu0 0
        %4214 = vmatprep.subr.bf16.mxu0 0
        %4215 = vmatpush1.bf16.msra.mxu0 0
        %4216 = vmatprep.subr.bf16.mxu0 0
        %4217 = vmatpush1.bf16.msra.mxu0 0
        %4218 = vmatprep.subr.bf16.mxu0 0
        %4219 = vmatpush1.bf16.msra.mxu0 0
        %4220 = vmatprep.subr.bf16.mxu0 0
        %4221 = vmatpush1.bf16.msra.mxu0 0
        %4222 = vmatprep.subr.bf16.mxu0 0
        %4223 = vmatpush1.bf16.msra.mxu0 0
        %4224 = vmatprep.subr.bf16.mxu0 0
        %4225 = vmatpush1.bf16.msra.mxu0 0
        %4226 = vmatprep.subr.bf16.mxu0 0
        %4227 = vmatpush1.bf16.msra.mxu0 0
        %4228 = vmatprep.subr.bf16.mxu0 0
        %4229 = vmatpush1.bf16.msra.mxu0 0
        %4230 = vmatprep.subr.bf16.mxu0 0
        %4231 = vmatpush1.bf16.msra.mxu0 0
        %4232 = vmatprep.subr.bf16.mxu0 0
        %4233 = vmatpush1.bf16.msra.mxu0 0
        %4234 = vmatprep.subr.bf16.mxu0 0
        %4235 = vmatpush1.bf16.msra.mxu0 0
        %4236 = vmatprep.mubr.bf16.mxu0 0
        %4237 = vmatmul.mubr.bf16.gmra.mrb[0].mxu0 %v4202
        %v4238 = vpop.f32.mrb[0].mxu0
        %v4239 = vadd.f32 %v4187, %v4238
        %v4240 = vpop.f32.mrb[0].mxu0
        %v4241 = vpop.f32.mrb[0].mxu0
        %v4242 = vpop.f32.mrb[0].mxu0
        %4243 = vdwg.mxu0
        %v4244 = vmul.f32 %v4239, 0.5
        %v4245 = vmul.f32 %v4239, 0.70710677
        %v4246 = verf.f32.pop %v4245
        %v4247 = vadd.f32 %v4246, 1.0
        %v4248 = vmul.f32 %v4244, %v4247
        %v4249 = vpack.c.bf16 %v4248, %v4248
        %v4251 = vlaneseq
        %v4252 = vshrl.u32 %v4251, 7
        %v4253 = vsub.s32 0, %v4252
        %v4254 = vrot.slane %v4154, %v4253
        %v4258 = vunpack.c.l.b16 %v4152
        %v4259 = vunpack.c.l.b16 %v4153
        %v4260 = vpack.c.b16 %v4259, %v4258
        %v4263 = vsel %vm4100, %v4249, 0
        %4265 = vmatprep.subr.bf16.mxu0 0
        %4266 = vmatpush1.bf16.msra.mxu0 %v4260
        %4267 = vmatprep.subr.bf16.mxu0 0
        %4268 = vmatpush1.bf16.msra.mxu0 0
        %4269 = vmatprep.subr.bf16.mxu0 0
        %4270 = vmatpush1.bf16.msra.mxu0 0
        %4271 = vmatprep.subr.bf16.mxu0 0
        %4272 = vmatpush1.bf16.msra.mxu0 0
        %4273 = vmatprep.subr.bf16.mxu0 0
        %4274 = vmatpush1.bf16.msra.mxu0 0
        %4275 = vmatprep.subr.bf16.mxu0 0
        %4276 = vmatpush1.bf16.msra.mxu0 0
        %4277 = vmatprep.subr.bf16.mxu0 0
        %4278 = vmatpush1.bf16.msra.mxu0 0
        %4279 = vmatprep.subr.bf16.mxu0 0
        %4280 = vmatpush1.bf16.msra.mxu0 0
        %4281 = vmatprep.subr.bf16.mxu0 0
        %4282 = vmatpush1.bf16.msra.mxu0 0
        %4283 = vmatprep.subr.bf16.mxu0 0
        %4284 = vmatpush1.bf16.msra.mxu0 0
        %4285 = vmatprep.subr.bf16.mxu0 0
        %4286 = vmatpush1.bf16.msra.mxu0 0
        %4287 = vmatprep.subr.bf16.mxu0 0
        %4288 = vmatpush1.bf16.msra.mxu0 0
        %4289 = vmatprep.subr.bf16.mxu0 0
        %4290 = vmatpush1.bf16.msra.mxu0 0
        %4291 = vmatprep.subr.bf16.mxu0 0
        %4292 = vmatpush1.bf16.msra.mxu0 0
        %4293 = vmatprep.subr.bf16.mxu0 0
        %4294 = vmatpush1.bf16.msra.mxu0 0
        %4295 = vmatprep.subr.bf16.mxu0 0
        %4296 = vmatpush1.bf16.msra.mxu0 0
        %4297 = vmatprep.mubr.bf16.mxu0 0
        %4298 = vmatmul.mubr.bf16.gmra.mrb[0].mxu0 %v4263
        %v4299 = vpop.f32.mrb[0].mxu0
        %v4300 = vadd.f32 %v4254, %v4299
        %v4301 = vpop.f32.mrb[0].mxu0
        %v4302 = vpop.f32.mrb[0].mxu0
        %v4303 = vpop.f32.mrb[0].mxu0
        %4304 = vdwg.mxu0
        %v4305 = vadd.f32 %v3982, %v4300
        %4307 = vrot.lane.b32.xlu0 %v4305, 32
        %v4308 = vpop.permute.xlu0 %4307
        %v4310 = vsel %vm867, %v4144, %v4308
        %vm4311 = vcmask 523264
        %4312 = vst.msk [vmem:[%s854] sm:$0xff] %vm4311, %v4310
        %s4313 = sand.u32 %s544, 1
        %s4314 = scalar_lea.sflag [#allocation8], %s4313
        %s4315 = sand.u32 %s544, 1
        %s4316 = smul.addr %s4315, 8
        %s4317 = scalar_lea.vmem [#allocation24], %s4316
        // Predicated region
        $region157: #{tpu_custom_call.1} parent=111 // pred_check
          %p4318 = pneg %p554
        $region158: #{tpu_custom_call.1} parent=111 // pred_check_branch
          %4320 = sbr.rel (%p4318) target = $region160
        $region159: #{tpu_custom_call.1} parent=111 // pred_region
          %s4322 = ssub.s32 128, 128
          %4323 = vsyncadd %s4314, %s4322
          %s4324 = smul.addr %s43, 128
          %s4325 = scalar_lea.hbm %s23, %s4324
          %s4327 = sshll.u32 %s4317, 4
          %s4328 = int_to_ptr.vmem [resolvable:$true] %s4327
          %4330 = dma.vmem_to_hbm [thread:$0]  %s4328, 128, %s4325, %s4314
        $region160: #{tpu_custom_call.1} parent=111 // pred_fallthru
          _
      $region112: #{tpu_custom_call.1} parent=5 // pred_fallthru
        _
      %p4331 = scmp.le.s32.totalorder 2, %s38
      // Predicated region
      $region161: #{tpu_custom_call.1} parent=5 // pred_check
        %p4332 = pneg %p4331
      $region162: #{tpu_custom_call.1} parent=5 // pred_check_branch
        %4334 = sbr.rel (%p4332) target = $region164
      $region163: #{tpu_custom_call.1} parent=5 // pred_region
        %s4335 = ssub.s32 %s38, 2
        // Predicated region
        $region165: #{tpu_custom_call.1} parent=163 // pred_check
          %p4336 = pneg %p560
        $region166: #{tpu_custom_call.1} parent=163 // pred_check_branch
          %4338 = sbr.rel (%p4336) target = $region168
        $region167: #{tpu_custom_call.1} parent=163 // pred_region
          %s4339 = sand.u32 %s545, 1
          %s4340 = scalar_lea.sflag [#allocation8], %s4339
          %s4341 = sand.u32 %s545, 1
          %s4342 = smul.addr %s4341, 8
          %s4343 = scalar_lea.vmem [#allocation24], %s4342
          %4344 = dma.done %s4340, 128
        $region168: #{tpu_custom_call.1} parent=163 // pred_fallthru
          _
      $region164: #{tpu_custom_call.1} parent=5 // pred_fallthru
        _
    $region6: #{tpu_custom_call.1} parent=1 // loop_footer
      %s42 = sadd.s32 1, %s38
    $region7: #{tpu_custom_call.1} parent=1 // loop_footer_branch
      %37 = sbr.rel target = $region3
    $region8: #{tpu_custom_call.1} parent=1 // loop_exit
      _
    %4345 = vsyncpa [#allocation7], 1
    %s4346 = scalar_lea.sflag [#allocation7], 1
    %4347 = vsyncpa %s4346, 1
    %4348 = vsyncpa [#allocation10], 1
    %4349 = vsyncpa [#allocation13], 1
    %4350 = vsyncpa [#allocation16], 1
    %4351 = vsyncpa [#allocation19], 1
    %4352 = vsyncpa [#allocation22], 1
    %4353 = vsyncpa [#allocation8], 1
    %s4354 = scalar_lea.sflag [#allocation8], 1
    %4355 = vsyncpa %s4354, 1

// kernel: tpu_custom_call.1
$region0: #{tpu_custom_call.1}
  #allocation0 [shape = 'u32[]', space=smem, size = 0x4, offset = 0x4, fixed_abs, tag = 'smem constant byte address 0x4 - core index']
  #allocation1 [shape = 'u32[144,128]{1,0:T(1,128)}', space=vmem, size = 0x12000, scoped, tag = 'internal scratch']
  #allocation2 [shape = 'f32[2,8,32]{2,1,0:T(8,128)}', space=vmem, size = 0x2000, scoped, tag = 'scratch operand']
  #allocation3 [shape = 'f32[2,8,32]{2,1,0:T(8,128)}', space=vmem, size = 0x2000, scoped, tag = 'scratch operand']
  #allocation4 [shape = 'f32[2,8,32]{2,1,0:T(8,128)}', space=vmem, size = 0x2000, scoped, tag = 'scratch operand']
  #allocation5 [shape = 'f32[2,8,32]{2,1,0:T(8,128)}', space=vmem, size = 0x2000, scoped, tag = 'scratch operand']
  %s0 = inlined_call_operand.vmem [shape: f32[2,8,32], index: 0, kind: input, shape index: {}]
  %s1 = inlined_call_operand.vmem [shape: f32[2,8,32], index: 1, kind: input, shape index: {}]
  %s2 = inlined_call_operand.hbm [shape: f32[1,32], index: 2, kind: input, shape index: {}]
  %s3 = inlined_call_operand.hbm [shape: f32[1,32], index: 3, kind: input, shape index: {}]
  %s4 = inlined_call_operand.hbm [shape: f32[1,32], index: 4, kind: input, shape index: {}]
  %s5 = inlined_call_operand.hbm [shape: f32[1,32], index: 5, kind: input, shape index: {}]
  %s6 = inlined_call_operand.vmem [shape: bf16[32,32], index: 6, kind: input, shape index: {}]
  %s7 = inlined_call_operand.vmem [shape: bf16[32,32], index: 7, kind: input, shape index: {}]
  %s8 = inlined_call_operand.hbm [shape: bf16[32,32], index: 8, kind: input, shape index: {}]
  %s9 = inlined_call_operand.vmem [shape: bf16[32,32], index: 9, kind: input, shape index: {}]
  %s10 = inlined_call_operand.hbm [shape: f32[1,32], index: 10, kind: input, shape index: {}]
  %s11 = inlined_call_operand.hbm [shape: f32[1,32], index: 11, kind: input, shape index: {}]
  %s12 = inlined_call_operand.hbm [shape: f32[1,32], index: 12, kind: input, shape index: {}]
  %s13 = inlined_call_operand.vmem [shape: bf16[32,16], index: 13, kind: input, shape index: {}]
  %s14 = inlined_call_operand.hbm [shape: f32[1,16], index: 14, kind: input, shape index: {}]
  %s15 = inlined_call_operand.vmem [shape: bf16[16,32], index: 15, kind: input, shape index: {}]
  %s16 = inlined_call_operand.hbm [shape: f32[1,32], index: 16, kind: input, shape index: {}]
  %s17 = inlined_call_operand.hbm [shape: f32[1,32], index: 17, kind: input, shape index: {}]
  %s18 = inlined_call_operand.vmem [shape: f32[1,32], index: 18, kind: input, shape index: {}]
  %s19 = inlined_call_operand.vmem [shape: bf16[32,16], index: 19, kind: input, shape index: {}]
  %s20 = inlined_call_operand.vmem [shape: f32[1,16], index: 20, kind: input, shape index: {}]
  %s21 = inlined_call_operand.vmem [shape: bf16[16,32], index: 21, kind: input, shape index: {}]
  %s22 = inlined_call_operand.vmem [shape: f32[1,32], index: 22, kind: input, shape index: {}]
  %s23 = inlined_call_operand.hbm [shape: f32[16,64], index: 23, kind: output, shape index: {}]
  %s24 = sld [smem:[#allocation0]]
  $region169: #{tpu_custom_call.1} parent=0
    _
  %s26 = ssub.s32 1, %s24
  %s27 = scalar_select 0, %s26, %s24
  $region1: #{tpu_custom_call.1} parent=0
    #allocation6 [shape = 'u8[512]{0}', space=vmem, size = 0x400, scoped, tag = 'input window, operand 2, single buffered']
    #allocation7 [shape = 's32[2]{0}', space=sflag, size = 0x8, scoped, tag = 'scoped memory for tpu_custom_call.1']
    #allocation8 [shape = 's32[2]{0}', space=sflag, size = 0x8, scoped, tag = 'scoped memory for tpu_custom_call.1']
    #allocation9 [shape = 'u8[512]{0}', space=vmem, size = 0x400, scoped, tag = 'input window, operand 3, single buffered']
    #allocation10 [shape = 's32[1]{0}', space=sflag, size = 0x4, scoped, tag = 'scoped memory for tpu_custom_call.1']
    #allocation11 [shape = 'u8[512]{0}', space=vmem, size = 0x400, scoped, tag = 'input window, operand 4, single buffered']
    #allocation12 [shape = 'u8[512]{0}', space=vmem, size = 0x400, scoped, tag = 'input window, operand 5, single buffered']
    #allocation13 [shape = 's32[1]{0}', space=sflag, size = 0x4, scoped, tag = 'scoped memory for tpu_custom_call.1']
    #allocation14 [shape = 'u8[8192]{0}', space=vmem, size = 0x2000, scoped, tag = 'input window, operand 8, single buffered']
    #allocation15 [shape = 'u8[512]{0}', space=vmem, size = 0x400, scoped, tag = 'input window, operand 10, single buffered']
    #allocation16 [shape = 's32[1]{0}', space=sflag, size = 0x4, scoped, tag = 'scoped memory for tpu_custom_call.1']
    #allocation17 [shape = 'u8[512]{0}', space=vmem, size = 0x400, scoped, tag = 'input window, operand 11, single buffered']
    #allocation18 [shape = 'u8[512]{0}', space=vmem, size = 0x400, scoped, tag = 'input window, operand 12, single buffered']
    #allocation19 [shape = 's32[1]{0}', space=sflag, size = 0x4, scoped, tag = 'scoped memory for tpu_custom_call.1']
    #allocation20 [shape = 'u8[512]{0}', space=vmem, size = 0x400, scoped, tag = 'input window, operand 14, single buffered']
    #allocation21 [shape = 'u8[512]{0}', space=vmem, size = 0x400, scoped, tag = 'input window, operand 16, single buffered']
    #allocation22 [shape = 's32[1]{0}', space=sflag, size = 0x4, scoped, tag = 'scoped memory for tpu_custom_call.1']
    #allocation23 [shape = 'u8[512]{0}', space=vmem, size = 0x400, scoped, tag = 'input window, operand 17, single buffered']
    #allocation24 [shape = 'u8[8192]{0}', space=vmem, size = 0x2000, scoped, tag = 'output window, operand 0']
    %28 = vsyncpa [#allocation7], 0
    %29 = vsyncpa [#allocation10], 0
    %30 = vsyncpa [#allocation13], 0
    %31 = vsyncpa [#allocation16], 0
    %32 = vsyncpa [#allocation19], 0
    %33 = vsyncpa [#allocation22], 0
    %34 = vsyncpa [#allocation8], 0
    %s35 = scalar_lea.sflag [#allocation8], 1
    %36 = vsyncpa %s35, 0
    loop: start=0, step=1, limit=4
    $region2: #{tpu_custom_call.1} parent=1 // loop_pre_header
      _
    $region3: #{tpu_custom_call.1} parent=1 // loop_header
      %s38 = sphi 0, %s42
      %p39 = scmp.ge.s32.totalorder %s38, 4
      %s48 = sphi 0, %s50
      %s51 = sphi 0, %s48
      %s52 = sphi 0, %s51
      %s68 = sphi 0, %s52
      %s74 = sphi 0, %s76
      %s77 = sphi 0, %s74
      %s78 = sphi 0, %s77
      %s94 = sphi 0, %s78
      %s98 = sphi 0, %s98
      %s100 = sphi 0, %s98
      %s101 = sphi 0, %s100
      %s115 = sphi 0, %s101
      %s119 = sphi 0, %s119
      %s121 = sphi 0, %s119
      %s122 = sphi 0, %s121
      %s136 = sphi 0, %s122
      %s140 = sphi 0, %s140
      %s142 = sphi 0, %s140
      %s143 = sphi 0, %s142
      %s157 = sphi 0, %s143
      %s161 = sphi 0, %s161
      %s163 = sphi 0, %s161
      %s164 = sphi 0, %s163
      %s178 = sphi 0, %s164
      %s182 = sphi 0, %s182
      %s184 = sphi 0, %s182
      %s185 = sphi 0, %s184
      %s199 = sphi 0, %s185
      %s203 = sphi 0, %s203
      %s205 = sphi 0, %s203
      %s206 = sphi 0, %s205
      %s220 = sphi 0, %s206
      %s224 = sphi 0, %s224
      %s226 = sphi 0, %s224
      %s227 = sphi 0, %s226
      %s241 = sphi 0, %s227
      %s245 = sphi 0, %s245
      %s247 = sphi 0, %s245
      %s248 = sphi 0, %s247
      %s262 = sphi 0, %s248
      %s266 = sphi 0, %s266
      %s268 = sphi 0, %s266
      %s269 = sphi 0, %s268
      %s283 = sphi 0, %s269
      %s287 = sphi 0, %s287
      %s289 = sphi 0, %s287
      %s290 = sphi 0, %s289
      %s304 = sphi 0, %s290
      %s308 = sphi 0, %s308
      %s310 = sphi 0, %s308
      %s311 = sphi 0, %s310
      %s325 = sphi 0, %s311
      %s329 = sphi 0, %s329
      %s331 = sphi 0, %s329
      %s332 = sphi 0, %s331
      %s346 = sphi 0, %s332
      %s350 = sphi 0, %s350
      %s352 = sphi 0, %s350
      %s353 = sphi 0, %s352
      %s367 = sphi 0, %s353
      %s371 = sphi 0, %s371
      %s373 = sphi 0, %s371
      %s374 = sphi 0, %s373
      %s388 = sphi 0, %s374
      %s392 = sphi 0, %s392
      %s394 = sphi 0, %s392
      %s395 = sphi 0, %s394
      %s409 = sphi 0, %s395
      %s413 = sphi 0, %s413
      %s415 = sphi 0, %s413
      %s416 = sphi 0, %s415
      %s430 = sphi 0, %s416
      %s434 = sphi 0, %s434
      %s436 = sphi 0, %s434
      %s437 = sphi 0, %s436
      %s451 = sphi 0, %s437
      %s455 = sphi 0, %s455
      %s457 = sphi 0, %s455
      %s458 = sphi 0, %s457
      %s472 = sphi 0, %s458
      %s476 = sphi 0, %s476
      %s478 = sphi 0, %s476
      %s479 = sphi 0, %s478
      %s493 = sphi 0, %s479
      %s497 = sphi 0, %s497
      %s499 = sphi 0, %s497
      %s500 = sphi 0, %s499
      %s514 = sphi 0, %s500
      %s518 = sphi 0, %s518
      %s520 = sphi 0, %s518
      %s521 = sphi 0, %s520
      %s535 = sphi 0, %s521
      %s541 = sphi 0, %s543
      %s544 = sphi 0, %s541
      %s545 = sphi 0, %s544
      %s561 = sphi 0, %s545
    $region4: #{tpu_custom_call.1} parent=1 // loop_header_branch
      %41 = sbr.rel (%p39) target = $region8
    $region5: #{tpu_custom_call.1} parent=1 // loop_body
      %s43 = ssub.s32 %s38, 1
      %s44 = ssub.s32 %s38, 2
      %s45 = sadd.s32 %s38, 1
      %s46 = ssub.s32 %s38, %s45
      %p47 = scmp.eq.s32.totalorder %s46, 0
      %s49 = sadd.s32 %s48, 1
      %s50 = scalar_select %p47, %s48, %s49
      %p53 = pneg %p47
      %p54 = scmp.eq.s32.totalorder %s38, 1
      %p55 = por %p53, %p54
      %p56 = scmp.ne.s32.totalorder %s48, %s51
      %p57 = scmp.eq.s32.totalorder %s38, 0
      %p58 = por %p56, %p57
      %p59 = scmp.ne.s32.totalorder %s48, %s51
      %p60 = scmp.eq.s32.totalorder %s43, 1
      %p61 = por %p59, %p60
      %p62 = scmp.ne.s32.totalorder %s51, %s52
      %p63 = scmp.eq.s32.totalorder %s43, 0
      %p64 = por %p62, %p63
      %p65 = scmp.ne.s32.totalorder %s51, %s52
      %p66 = scmp.eq.s32.totalorder %s44, 1
      %p67 = por %p65, %p66
      %p69 = scmp.ne.s32.totalorder %s52, %s68
      %p70 = scmp.eq.s32.totalorder %s44, 0
      %p71 = por %p69, %p70
      %s72 = ssub.s32 %s38, %s45
      %p73 = scmp.eq.s32.totalorder %s72, 0
      %s75 = sadd.s32 %s74, 1
      %s76 = scalar_select %p73, %s74, %s75
      %p79 = pneg %p73
      %p80 = scmp.eq.s32.totalorder %s38, 1
      %p81 = por %p79, %p80
      %p82 = scmp.ne.s32.totalorder %s74, %s77
      %p83 = scmp.eq.s32.totalorder %s38, 0
      %p84 = por %p82, %p83
      %p85 = scmp.ne.s32.totalorder %s74, %s77
      %p86 = scmp.eq.s32.totalorder %s43, 1
      %p87 = por %p85, %p86
      %p88 = scmp.ne.s32.totalorder %s77, %s78
      %p89 = scmp.eq.s32.totalorder %s43, 0
      %p90 = por %p88, %p89
      %p91 = scmp.ne.s32.totalorder %s77, %s78
      %p92 = scmp.eq.s32.totalorder %s44, 1
      %p93 = por %p91, %p92
      %p95 = scmp.ne.s32.totalorder %s78, %s94
      %p96 = scmp.eq.s32.totalorder %s44, 0
      %p97 = por %p95, %p96
      %s99 = sadd.s32 %s98, 1
      %p102 = scmp.eq.s32.totalorder %s38, 1
      %p103 = scmp.ne.s32.totalorder %s98, %s100
      %p104 = scmp.eq.s32.totalorder %s38, 0
      %p105 = por %p103, %p104
      %p106 = scmp.ne.s32.totalorder %s98, %s100
      %p107 = scmp.eq.s32.totalorder %s43, 1
      %p108 = por %p106, %p107
      %p109 = scmp.ne.s32.totalorder %s100, %s101
      %p110 = scmp.eq.s32.totalorder %s43, 0
      %p111 = por %p109, %p110
      %p112 = scmp.ne.s32.totalorder %s100, %s101
      %p113 = scmp.eq.s32.totalorder %s44, 1
      %p114 = por %p112, %p113
      %p116 = scmp.ne.s32.totalorder %s101, %s115
      %p117 = scmp.eq.s32.totalorder %s44, 0
      %p118 = por %p116, %p117
      %s120 = sadd.s32 %s119, 1
      %p123 = scmp.eq.s32.totalorder %s38, 1
      %p124 = scmp.ne.s32.totalorder %s119, %s121
      %p125 = scmp.eq.s32.totalorder %s38, 0
      %p126 = por %p124, %p125
      %p127 = scmp.ne.s32.totalorder %s119, %s121
      %p128 = scmp.eq.s32.totalorder %s43, 1
      %p129 = por %p127, %p128
      %p130 = scmp.ne.s32.totalorder %s121, %s122
      %p131 = scmp.eq.s32.totalorder %s43, 0
      %p132 = por %p130, %p131
      %p133 = scmp.ne.s32.totalorder %s121, %s122
      %p134 = scmp.eq.s32.totalorder %s44, 1
      %p135 = por %p133, %p134
      %p137 = scmp.ne.s32.totalorder %s122, %s136
      %p138 = scmp.eq.s32.totalorder %s44, 0
      %p139 = por %p137, %p138
      %s141 = sadd.s32 %s140, 1
      %p144 = scmp.eq.s32.totalorder %s38, 1
      %p145 = scmp.ne.s32.totalorder %s140, %s142
      %p146 = scmp.eq.s32.totalorder %s38, 0
      %p147 = por %p145, %p146
      %p148 = scmp.ne.s32.totalorder %s140, %s142
      %p149 = scmp.eq.s32.totalorder %s43, 1
      %p150 = por %p148, %p149
      %p151 = scmp.ne.s32.totalorder %s142, %s143
      %p152 = scmp.eq.s32.totalorder %s43, 0
      %p153 = por %p151, %p152
      %p154 = scmp.ne.s32.totalorder %s142, %s143
      %p155 = scmp.eq.s32.totalorder %s44, 1
      %p156 = por %p154, %p155
      %p158 = scmp.ne.s32.totalorder %s143, %s157
      %p159 = scmp.eq.s32.totalorder %s44, 0
      %p160 = por %p158, %p159
      %s162 = sadd.s32 %s161, 1
      %p165 = scmp.eq.s32.totalorder %s38, 1
      %p166 = scmp.ne.s32.totalorder %s161, %s163
      %p167 = scmp.eq.s32.totalorder %s38, 0
      %p168 = por %p166, %p167
      %p169 = scmp.ne.s32.totalorder %s161, %s163
      %p170 = scmp.eq.s32.totalorder %s43, 1
      %p171 = por %p169, %p170
      %p172 = scmp.ne.s32.totalorder %s163, %s164
      %p173 = scmp.eq.s32.totalorder %s43, 0
      %p174 = por %p172, %p173
      %p175 = scmp.ne.s32.totalorder %s163, %s164
      %p176 = scmp.eq.s32.totalorder %s44, 1
      %p177 = por %p175, %p176
      %p179 = scmp.ne.s32.totalorder %s164, %s178
      %p180 = scmp.eq.s32.totalorder %s44, 0
      %p181 = por %p179, %p180
      %s183 = sadd.s32 %s182, 1
      %p186 = scmp.eq.s32.totalorder %s38, 1
      %p187 = scmp.ne.s32.totalorder %s182, %s184
      %p188 = scmp.eq.s32.totalorder %s38, 0
      %p189 = por %p187, %p188
      %p190 = scmp.ne.s32.totalorder %s182, %s184
      %p191 = scmp.eq.s32.totalorder %s43, 1
      %p192 = por %p190, %p191
      %p193 = scmp.ne.s32.totalorder %s184, %s185
      %p194 = scmp.eq.s32.totalorder %s43, 0
      %p195 = por %p193, %p194
      %p196 = scmp.ne.s32.totalorder %s184, %s185
      %p197 = scmp.eq.s32.totalorder %s44, 1
      %p198 = por %p196, %p197
      %p200 = scmp.ne.s32.totalorder %s185, %s199
      %p201 = scmp.eq.s32.totalorder %s44, 0
      %p202 = por %p200, %p201
      %s204 = sadd.s32 %s203, 1
      %p207 = scmp.eq.s32.totalorder %s38, 1
      %p208 = scmp.ne.s32.totalorder %s203, %s205
      %p209 = scmp.eq.s32.totalorder %s38, 0
      %p210 = por %p208, %p209
      %p211 = scmp.ne.s32.totalorder %s203, %s205
      %p212 = scmp.eq.s32.totalorder %s43, 1
      %p213 = por %p211, %p212
      %p214 = scmp.ne.s32.totalorder %s205, %s206
      %p215 = scmp.eq.s32.totalorder %s43, 0
      %p216 = por %p214, %p215
      %p217 = scmp.ne.s32.totalorder %s205, %s206
      %p218 = scmp.eq.s32.totalorder %s44, 1
      %p219 = por %p217, %p218
      %p221 = scmp.ne.s32.totalorder %s206, %s220
      %p222 = scmp.eq.s32.totalorder %s44, 0
      %p223 = por %p221, %p222
      %s225 = sadd.s32 %s224, 1
      %p228 = scmp.eq.s32.totalorder %s38, 1
      %p229 = scmp.ne.s32.totalorder %s224, %s226
      %p230 = scmp.eq.s32.totalorder %s38, 0
      %p231 = por %p229, %p230
      %p232 = scmp.ne.s32.totalorder %s224, %s226
      %p233 = scmp.eq.s32.totalorder %s43, 1
      %p234 = por %p232, %p233
      %p235 = scmp.ne.s32.totalorder %s226, %s227
      %p236 = scmp.eq.s32.totalorder %s43, 0
      %p237 = por %p235, %p236
      %p238 = scmp.ne.s32.totalorder %s226, %s227
      %p239 = scmp.eq.s32.totalorder %s44, 1
      %p240 = por %p238, %p239
      %p242 = scmp.ne.s32.totalorder %s227, %s241
      %p243 = scmp.eq.s32.totalorder %s44, 0
      %p244 = por %p242, %p243
      %s246 = sadd.s32 %s245, 1
      %p249 = scmp.eq.s32.totalorder %s38, 1
      %p250 = scmp.ne.s32.totalorder %s245, %s247
      %p251 = scmp.eq.s32.totalorder %s38, 0
      %p252 = por %p250, %p251
      %p253 = scmp.ne.s32.totalorder %s245, %s247
      %p254 = scmp.eq.s32.totalorder %s43, 1
      %p255 = por %p253, %p254
      %p256 = scmp.ne.s32.totalorder %s247, %s248
      %p257 = scmp.eq.s32.totalorder %s43, 0
      %p258 = por %p256, %p257
      %p259 = scmp.ne.s32.totalorder %s247, %s248
      %p260 = scmp.eq.s32.totalorder %s44, 1
      %p261 = por %p259, %p260
      %p263 = scmp.ne.s32.totalorder %s248, %s262
      %p264 = scmp.eq.s32.totalorder %s44, 0
      %p265 = por %p263, %p264
      %s267 = sadd.s32 %s266, 1
      %p270 = scmp.eq.s32.totalorder %s38, 1
      %p271 = scmp.ne.s32.totalorder %s266, %s268
      %p272 = scmp.eq.s32.totalorder %s38, 0
      %p273 = por %p271, %p272
      %p274 = scmp.ne.s32.totalorder %s266, %s268
      %p275 = scmp.eq.s32.totalorder %s43, 1
      %p276 = por %p274, %p275
      %p277 = scmp.ne.s32.totalorder %s268, %s269
      %p278 = scmp.eq.s32.totalorder %s43, 0
      %p279 = por %p277, %p278
      %p280 = scmp.ne.s32.totalorder %s268, %s269
      %p281 = scmp.eq.s32.totalorder %s44, 1
      %p282 = por %p280, %p281
      %p284 = scmp.ne.s32.totalorder %s269, %s283
      %p285 = scmp.eq.s32.totalorder %s44, 0
      %p286 = por %p284, %p285
      %s288 = sadd.s32 %s287, 1
      %p291 = scmp.eq.s32.totalorder %s38, 1
      %p292 = scmp.ne.s32.totalorder %s287, %s289
      %p293 = scmp.eq.s32.totalorder %s38, 0
      %p294 = por %p292, %p293
      %p295 = scmp.ne.s32.totalorder %s287, %s289
      %p296 = scmp.eq.s32.totalorder %s43, 1
      %p297 = por %p295, %p296
      %p298 = scmp.ne.s32.totalorder %s289, %s290
      %p299 = scmp.eq.s32.totalorder %s43, 0
      %p300 = por %p298, %p299
      %p301 = scmp.ne.s32.totalorder %s289, %s290
      %p302 = scmp.eq.s32.totalorder %s44, 1
      %p303 = por %p301, %p302
      %p305 = scmp.ne.s32.totalorder %s290, %s304
      %p306 = scmp.eq.s32.totalorder %s44, 0
      %p307 = por %p305, %p306
      %s309 = sadd.s32 %s308, 1
      %p312 = scmp.eq.s32.totalorder %s38, 1
      %p313 = scmp.ne.s32.totalorder %s308, %s310
      %p314 = scmp.eq.s32.totalorder %s38, 0
      %p315 = por %p313, %p314
      %p316 = scmp.ne.s32.totalorder %s308, %s310
      %p317 = scmp.eq.s32.totalorder %s43, 1
      %p318 = por %p316, %p317
      %p319 = scmp.ne.s32.totalorder %s310, %s311
      %p320 = scmp.eq.s32.totalorder %s43, 0
      %p321 = por %p319, %p320
      %p322 = scmp.ne.s32.totalorder %s310, %s311
      %p323 = scmp.eq.s32.totalorder %s44, 1
      %p324 = por %p322, %p323
      %p326 = scmp.ne.s32.totalorder %s311, %s325
      %p327 = scmp.eq.s32.totalorder %s44, 0
      %p328 = por %p326, %p327
      %s330 = sadd.s32 %s329, 1
      %p333 = scmp.eq.s32.totalorder %s38, 1
      %p334 = scmp.ne.s32.totalorder %s329, %s331
      %p335 = scmp.eq.s32.totalorder %s38, 0
      %p336 = por %p334, %p335
      %p337 = scmp.ne.s32.totalorder %s329, %s331
      %p338 = scmp.eq.s32.totalorder %s43, 1
      %p339 = por %p337, %p338
      %p340 = scmp.ne.s32.totalorder %s331, %s332
      %p341 = scmp.eq.s32.totalorder %s43, 0
      %p342 = por %p340, %p341
      %p343 = scmp.ne.s32.totalorder %s331, %s332
      %p344 = scmp.eq.s32.totalorder %s44, 1
      %p345 = por %p343, %p344
      %p347 = scmp.ne.s32.totalorder %s332, %s346
      %p348 = scmp.eq.s32.totalorder %s44, 0
      %p349 = por %p347, %p348
      %s351 = sadd.s32 %s350, 1
      %p354 = scmp.eq.s32.totalorder %s38, 1
      %p355 = scmp.ne.s32.totalorder %s350, %s352
      %p356 = scmp.eq.s32.totalorder %s38, 0
      %p357 = por %p355, %p356
      %p358 = scmp.ne.s32.totalorder %s350, %s352
      %p359 = scmp.eq.s32.totalorder %s43, 1
      %p360 = por %p358, %p359
      %p361 = scmp.ne.s32.totalorder %s352, %s353
      %p362 = scmp.eq.s32.totalorder %s43, 0
      %p363 = por %p361, %p362
      %p364 = scmp.ne.s32.totalorder %s352, %s353
      %p365 = scmp.eq.s32.totalorder %s44, 1
      %p366 = por %p364, %p365
      %p368 = scmp.ne.s32.totalorder %s353, %s367
      %p369 = scmp.eq.s32.totalorder %s44, 0
      %p370 = por %p368, %p369
      %s372 = sadd.s32 %s371, 1
      %p375 = scmp.eq.s32.totalorder %s38, 1
      %p376 = scmp.ne.s32.totalorder %s371, %s373
      %p377 = scmp.eq.s32.totalorder %s38, 0
      %p378 = por %p376, %p377
      %p379 = scmp.ne.s32.totalorder %s371, %s373
      %p380 = scmp.eq.s32.totalorder %s43, 1
      %p381 = por %p379, %p380
      %p382 = scmp.ne.s32.totalorder %s373, %s374
      %p383 = scmp.eq.s32.totalorder %s43, 0
      %p384 = por %p382, %p383
      %p385 = scmp.ne.s32.totalorder %s373, %s374
      %p386 = scmp.eq.s32.totalorder %s44, 1
      %p387 = por %p385, %p386
      %p389 = scmp.ne.s32.totalorder %s374, %s388
      %p390 = scmp.eq.s32.totalorder %s44, 0
      %p391 = por %p389, %p390
      %s393 = sadd.s32 %s392, 1
      %p396 = scmp.eq.s32.totalorder %s38, 1
      %p397 = scmp.ne.s32.totalorder %s392, %s394
      %p398 = scmp.eq.s32.totalorder %s38, 0
      %p399 = por %p397, %p398
      %p400 = scmp.ne.s32.totalorder %s392, %s394
      %p401 = scmp.eq.s32.totalorder %s43, 1
      %p402 = por %p400, %p401
      %p403 = scmp.ne.s32.totalorder %s394, %s395
      %p404 = scmp.eq.s32.totalorder %s43, 0
      %p405 = por %p403, %p404
      %p406 = scmp.ne.s32.totalorder %s394, %s395
      %p407 = scmp.eq.s32.totalorder %s44, 1
      %p408 = por %p406, %p407
      %p410 = scmp.ne.s32.totalorder %s395, %s409
      %p411 = scmp.eq.s32.totalorder %s44, 0
      %p412 = por %p410, %p411
      %s414 = sadd.s32 %s413, 1
      %p417 = scmp.eq.s32.totalorder %s38, 1
      %p418 = scmp.ne.s32.totalorder %s413, %s415
      %p419 = scmp.eq.s32.totalorder %s38, 0
      %p420 = por %p418, %p419
      %p421 = scmp.ne.s32.totalorder %s413, %s415
      %p422 = scmp.eq.s32.totalorder %s43, 1
      %p423 = por %p421, %p422
      %p424 = scmp.ne.s32.totalorder %s415, %s416
      %p425 = scmp.eq.s32.totalorder %s43, 0
      %p426 = por %p424, %p425
      %p427 = scmp.ne.s32.totalorder %s415, %s416
      %p428 = scmp.eq.s32.totalorder %s44, 1
      %p429 = por %p427, %p428
      %p431 = scmp.ne.s32.totalorder %s416, %s430
      %p432 = scmp.eq.s32.totalorder %s44, 0
      %p433 = por %p431, %p432
      %s435 = sadd.s32 %s434, 1
      %p438 = scmp.eq.s32.totalorder %s38, 1
      %p439 = scmp.ne.s32.totalorder %s434, %s436
      %p440 = scmp.eq.s32.totalorder %s38, 0
      %p441 = por %p439, %p440
      %p442 = scmp.ne.s32.totalorder %s434, %s436
      %p443 = scmp.eq.s32.totalorder %s43, 1
      %p444 = por %p442, %p443
      %p445 = scmp.ne.s32.totalorder %s436, %s437
      %p446 = scmp.eq.s32.totalorder %s43, 0
      %p447 = por %p445, %p446
      %p448 = scmp.ne.s32.totalorder %s436, %s437
      %p449 = scmp.eq.s32.totalorder %s44, 1
      %p450 = por %p448, %p449
      %p452 = scmp.ne.s32.totalorder %s437, %s451
      %p453 = scmp.eq.s32.totalorder %s44, 0
      %p454 = por %p452, %p453
      %s456 = sadd.s32 %s455, 1
      %p459 = scmp.eq.s32.totalorder %s38, 1
      %p460 = scmp.ne.s32.totalorder %s455, %s457
      %p461 = scmp.eq.s32.totalorder %s38, 0
      %p462 = por %p460, %p461
      %p463 = scmp.ne.s32.totalorder %s455, %s457
      %p464 = scmp.eq.s32.totalorder %s43, 1
      %p465 = por %p463, %p464
      %p466 = scmp.ne.s32.totalorder %s457, %s458
      %p467 = scmp.eq.s32.totalorder %s43, 0
      %p468 = por %p466, %p467
      %p469 = scmp.ne.s32.totalorder %s457, %s458
      %p470 = scmp.eq.s32.totalorder %s44, 1
      %p471 = por %p469, %p470
      %p473 = scmp.ne.s32.totalorder %s458, %s472
      %p474 = scmp.eq.s32.totalorder %s44, 0
      %p475 = por %p473, %p474
      %s477 = sadd.s32 %s476, 1
      %p480 = scmp.eq.s32.totalorder %s38, 1
      %p481 = scmp.ne.s32.totalorder %s476, %s478
      %p482 = scmp.eq.s32.totalorder %s38, 0
      %p483 = por %p481, %p482
      %p484 = scmp.ne.s32.totalorder %s476, %s478
      %p485 = scmp.eq.s32.totalorder %s43, 1
      %p486 = por %p484, %p485
      %p487 = scmp.ne.s32.totalorder %s478, %s479
      %p488 = scmp.eq.s32.totalorder %s43, 0
      %p489 = por %p487, %p488
      %p490 = scmp.ne.s32.totalorder %s478, %s479
      %p491 = scmp.eq.s32.totalorder %s44, 1
      %p492 = por %p490, %p491
      %p494 = scmp.ne.s32.totalorder %s479, %s493
      %p495 = scmp.eq.s32.totalorder %s44, 0
      %p496 = por %p494, %p495
      %s498 = sadd.s32 %s497, 1
      %p501 = scmp.eq.s32.totalorder %s38, 1
      %p502 = scmp.ne.s32.totalorder %s497, %s499
      %p503 = scmp.eq.s32.totalorder %s38, 0
      %p504 = por %p502, %p503
      %p505 = scmp.ne.s32.totalorder %s497, %s499
      %p506 = scmp.eq.s32.totalorder %s43, 1
      %p507 = por %p505, %p506
      %p508 = scmp.ne.s32.totalorder %s499, %s500
      %p509 = scmp.eq.s32.totalorder %s43, 0
      %p510 = por %p508, %p509
      %p511 = scmp.ne.s32.totalorder %s499, %s500
      %p512 = scmp.eq.s32.totalorder %s44, 1
      %p513 = por %p511, %p512
      %p515 = scmp.ne.s32.totalorder %s500, %s514
      %p516 = scmp.eq.s32.totalorder %s44, 0
      %p517 = por %p515, %p516
      %s519 = sadd.s32 %s518, 1
      %p522 = scmp.eq.s32.totalorder %s38, 1
      %p523 = scmp.ne.s32.totalorder %s518, %s520
      %p524 = scmp.eq.s32.totalorder %s38, 0
      %p525 = por %p523, %p524
      %p526 = scmp.ne.s32.totalorder %s518, %s520
      %p527 = scmp.eq.s32.totalorder %s43, 1
      %p528 = por %p526, %p527
      %p529 = scmp.ne.s32.totalorder %s520, %s521
      %p530 = scmp.eq.s32.totalorder %s43, 0
      %p531 = por %p529, %p530
      %p532 = scmp.ne.s32.totalorder %s520, %s521
      %p533 = scmp.eq.s32.totalorder %s44, 1
      %p534 = por %p532, %p533
      %p536 = scmp.ne.s32.totalorder %s521, %s535
      %p537 = scmp.eq.s32.totalorder %s44, 0
      %p538 = por %p536, %p537
      %s539 = ssub.s32 %s38, %s45
      %p540 = scmp.eq.s32.totalorder %s539, 0
      %s542 = sadd.s32 %s541, 1
      %s543 = scalar_select %p540, %s541, %s542
      %p546 = pneg %p540
      %p547 = scmp.eq.s32.totalorder %s38, 1
      %p548 = por %p546, %p547
      %p549 = scmp.ne.s32.totalorder %s541, %s544
      %p550 = scmp.eq.s32.totalorder %s38, 0
      %p551 = por %p549, %p550
      %p552 = scmp.ne.s32.totalorder %s541, %s544
      %p553 = scmp.eq.s32.totalorder %s43, 1
      %p554 = por %p552, %p553
      %p555 = scmp.ne.s32.totalorder %s544, %s545
      %p556 = scmp.eq.s32.totalorder %s43, 0
      %p557 = por %p555, %p556
      %p558 = scmp.ne.s32.totalorder %s544, %s545
      %p559 = scmp.eq.s32.totalorder %s44, 1
      %p560 = por %p558, %p559
      %p562 = scmp.ne.s32.totalorder %s545, %s561
      %p563 = scmp.eq.s32.totalorder %s44, 0
      %p564 = por %p562, %p563
      %p565 = scmp.le.s32.totalorder 1, %s38
      %p566 = scmp.lt.s32.totalorder %s38, 3
      %p567 = pnand %p565, %p566
      %p568 = pneg %p567
      // Predicated region
      $region9: #{tpu_custom_call.1} parent=5 // pred_check
        _
      $region10: #{tpu_custom_call.1} parent=5 // pred_check_branch
        %570 = sbr.rel (%p567) target = $region12
      $region11: #{tpu_custom_call.1} parent=5 // pred_region
        %s571 = ssub.s32 %s38, 1
        // Predicated region
        $region13: #{tpu_custom_call.1} parent=11 // pred_check
          %p572 = pneg %p111
        $region14: #{tpu_custom_call.1} parent=11 // pred_check_branch
          %574 = sbr.rel (%p572) target = $region16
        $region15: #{tpu_custom_call.1} parent=11 // pred_region
          %s576 = ssub.s32 16, 16
          %577 = vsyncadd [#allocation7], %s576
          %s579 = sshll.u32 [#allocation6], 4
          %s580 = int_to_ptr.vmem [resolvable:$true] %s579
          %582 = dma.hbm_to_vmem [thread:$0]  %s2, 16, %s580, [#allocation7]
        $region16: #{tpu_custom_call.1} parent=11 // pred_fallthru
          _
        // Predicated region
        $region17: #{tpu_custom_call.1} parent=11 // pred_check
          %p583 = pneg %p132
        $region18: #{tpu_custom_call.1} parent=11 // pred_check_branch
          %585 = sbr.rel (%p583) target = $region20
        $region19: #{tpu_custom_call.1} parent=11 // pred_region
          %s587 = ssub.s32 16, 16
          %588 = vsyncadd [#allocation10], %s587
          %s590 = sshll.u32 [#allocation9], 4
          %s591 = int_to_ptr.vmem [resolvable:$true] %s590
          %593 = dma.hbm_to_vmem [thread:$0]  %s3, 16, %s591, [#allocation10]
        $region20: #{tpu_custom_call.1} parent=11 // pred_fallthru
          _
        // Predicated region
        $region21: #{tpu_custom_call.1} parent=11 // pred_check
          %p594 = pneg %p153
        $region22: #{tpu_custom_call.1} parent=11 // pred_check_branch
          %596 = sbr.rel (%p594) target = $region24
        $region23: #{tpu_custom_call.1} parent=11 // pred_region
          %s598 = ssub.s32 16, 16
          %599 = vsyncadd [#allocation10], %s598
          %s601 = sshll.u32 [#allocation11], 4
          %s602 = int_to_ptr.vmem [resolvable:$true] %s601
          %604 = dma.hbm_to_vmem [thread:$0]  %s4, 16, %s602, [#allocation10]
        $region24: #{tpu_custom_call.1} parent=11 // pred_fallthru
          _
        // Predicated region
        $region25: #{tpu_custom_call.1} parent=11 // pred_check
          %p605 = pneg %p174
        $region26: #{tpu_custom_call.1} parent=11 // pred_check_branch
          %607 = sbr.rel (%p605) target = $region28
        $region27: #{tpu_custom_call.1} parent=11 // pred_region
          %s609 = ssub.s32 16, 16
          %610 = vsyncadd [#allocation13], %s609
          %s612 = sshll.u32 [#allocation12], 4
          %s613 = int_to_ptr.vmem [resolvable:$true] %s612
          %615 = dma.hbm_to_vmem [thread:$0]  %s5, 16, %s613, [#allocation13]
        $region28: #{tpu_custom_call.1} parent=11 // pred_fallthru
          _
        // Predicated region
        $region29: #{tpu_custom_call.1} parent=11 // pred_check
          %p616 = pneg %p195
        $region30: #{tpu_custom_call.1} parent=11 // pred_check_branch
          %618 = sbr.rel (%p616) target = $region32
        $region31: #{tpu_custom_call.1} parent=11 // pred_region
          _
        $region32: #{tpu_custom_call.1} parent=11 // pred_fallthru
          _
        // Predicated region
        $region33: #{tpu_custom_call.1} parent=11 // pred_check
          %p619 = pneg %p216
        $region34: #{tpu_custom_call.1} parent=11 // pred_check_branch
          %621 = sbr.rel (%p619) target = $region36
        $region35: #{tpu_custom_call.1} parent=11 // pred_region
          _
        $region36: #{tpu_custom_call.1} parent=11 // pred_fallthru
          _
        // Predicated region
        $region37: #{tpu_custom_call.1} parent=11 // pred_check
          %p622 = pneg %p237
        $region38: #{tpu_custom_call.1} parent=11 // pred_check_branch
          %624 = sbr.rel (%p622) target = $region40
        $region39: #{tpu_custom_call.1} parent=11 // pred_region
          %s626 = ssub.s32 256, 256
          %627 = vsyncadd [#allocation13], %s626
          %s628 = sshll.u32 [#allocation14], 4
          %s629 = int_to_ptr.vmem [resolvable:$true] %s628
          %634 = dma.hbm_to_vmem [thread:$0]  %s8, 256, %s629, [#allocation13], 64, 64, 4
        $region40: #{tpu_custom_call.1} parent=11 // pred_fallthru
          _
        // Predicated region
        $region41: #{tpu_custom_call.1} parent=11 // pred_check
          %p635 = pneg %p258
        $region42: #{tpu_custom_call.1} parent=11 // pred_check_branch
          %637 = sbr.rel (%p635) target = $region44
        $region43: #{tpu_custom_call.1} parent=11 // pred_region
          _
        $region44: #{tpu_custom_call.1} parent=11 // pred_fallthru
          _
        // Predicated region
        $region45: #{tpu_custom_call.1} parent=11 // pred_check
          %p638 = pneg %p279
        $region46: #{tpu_custom_call.1} parent=11 // pred_check_branch
          %640 = sbr.rel (%p638) target = $region48
        $region47: #{tpu_custom_call.1} parent=11 // pred_region
          %s642 = ssub.s32 16, 16
          %643 = vsyncadd [#allocation16], %s642
          %s645 = sshll.u32 [#allocation15], 4
          %s646 = int_to_ptr.vmem [resolvable:$true] %s645
          %648 = dma.hbm_to_vmem [thread:$0]  %s10, 16, %s646, [#allocation16]
        $region48: #{tpu_custom_call.1} parent=11 // pred_fallthru
          _
        // Predicated region
        $region49: #{tpu_custom_call.1} parent=11 // pred_check
          %p649 = pneg %p300
        $region50: #{tpu_custom_call.1} parent=11 // pred_check_branch
          %651 = sbr.rel (%p649) target = $region52
        $region51: #{tpu_custom_call.1} parent=11 // pred_region
          %s653 = ssub.s32 16, 16
          %654 = vsyncadd [#allocation16], %s653
          %s656 = sshll.u32 [#allocation17], 4
          %s657 = int_to_ptr.vmem [resolvable:$true] %s656
          %659 = dma.hbm_to_vmem [thread:$0]  %s11, 16, %s657, [#allocation16]
        $region52: #{tpu_custom_call.1} parent=11 // pred_fallthru
          _
        // Predicated region
        $region53: #{tpu_custom_call.1} parent=11 // pred_check
          %p660 = pneg %p321
        $region54: #{tpu_custom_call.1} parent=11 // pred_check_branch
          %662 = sbr.rel (%p660) target = $region56
        $region55: #{tpu_custom_call.1} parent=11 // pred_region
          %s664 = ssub.s32 16, 16
          %665 = vsyncadd [#allocation19], %s664
          %s667 = sshll.u32 [#allocation18], 4
          %s668 = int_to_ptr.vmem [resolvable:$true] %s667
          %670 = dma.hbm_to_vmem [thread:$0]  %s12, 16, %s668, [#allocation19]
        $region56: #{tpu_custom_call.1} parent=11 // pred_fallthru
          _
        // Predicated region
        $region57: #{tpu_custom_call.1} parent=11 // pred_check
          %p671 = pneg %p342
        $region58: #{tpu_custom_call.1} parent=11 // pred_check_branch
          %673 = sbr.rel (%p671) target = $region60
        $region59: #{tpu_custom_call.1} parent=11 // pred_region
          _
        $region60: #{tpu_custom_call.1} parent=11 // pred_fallthru
          _
        // Predicated region
        $region61: #{tpu_custom_call.1} parent=11 // pred_check
          %p674 = pneg %p363
        $region62: #{tpu_custom_call.1} parent=11 // pred_check_branch
          %676 = sbr.rel (%p674) target = $region64
        $region63: #{tpu_custom_call.1} parent=11 // pred_region
          %s678 = ssub.s32 16, 16
          %679 = vsyncadd [#allocation19], %s678
          %s681 = sshll.u32 [#allocation20], 4
          %s682 = int_to_ptr.vmem [resolvable:$true] %s681
          %684 = dma.hbm_to_vmem [thread:$0]  %s14, 16, %s682, [#allocation19]
        $region64: #{tpu_custom_call.1} parent=11 // pred_fallthru
          _
        // Predicated region
        $region65: #{tpu_custom_call.1} parent=11 // pred_check
          %p685 = pneg %p384
        $region66: #{tpu_custom_call.1} parent=11 // pred_check_branch
          %687 = sbr.rel (%p685) target = $region68
        $region67: #{tpu_custom_call.1} parent=11 // pred_region
          _
        $region68: #{tpu_custom_call.1} parent=11 // pred_fallthru
          _
        // Predicated region
        $region69: #{tpu_custom_call.1} parent=11 // pred_check
          %p688 = pneg %p405
        $region70: #{tpu_custom_call.1} parent=11 // pred_check_branch
          %690 = sbr.rel (%p688) target = $region72
        $region71: #{tpu_custom_call.1} parent=11 // pred_region
          %s692 = ssub.s32 16, 16
          %693 = vsyncadd [#allocation22], %s692
          %s695 = sshll.u32 [#allocation21], 4
          %s696 = int_to_ptr.vmem [resolvable:$true] %s695
          %698 = dma.hbm_to_vmem [thread:$0]  %s16, 16, %s696, [#allocation22]
        $region72: #{tpu_custom_call.1} parent=11 // pred_fallthru
          _
        // Predicated region
        $region73: #{tpu_custom_call.1} parent=11 // pred_check
          %p699 = pneg %p426
        $region74: #{tpu_custom_call.1} parent=11 // pred_check_branch
          %701 = sbr.rel (%p699) target = $region76
        $region75: #{tpu_custom_call.1} parent=11 // pred_region
          %s703 = ssub.s32 16, 16
          %704 = vsyncadd [#allocation22], %s703
          %s706 = sshll.u32 [#allocation23], 4
          %s707 = int_to_ptr.vmem [resolvable:$true] %s706
          %709 = dma.hbm_to_vmem [thread:$0]  %s17, 16, %s707, [#allocation22]
        $region76: #{tpu_custom_call.1} parent=11 // pred_fallthru
          _
        // Predicated region
        $region77: #{tpu_custom_call.1} parent=11 // pred_check
          %p710 = pneg %p447
        $region78: #{tpu_custom_call.1} parent=11 // pred_check_branch
          %712 = sbr.rel (%p710) target = $region80
        $region79: #{tpu_custom_call.1} parent=11 // pred_region
          _
        $region80: #{tpu_custom_call.1} parent=11 // pred_fallthru
          _
        // Predicated region
        $region81: #{tpu_custom_call.1} parent=11 // pred_check
          %p713 = pneg %p468
        $region82: #{tpu_custom_call.1} parent=11 // pred_check_branch
          %715 = sbr.rel (%p713) target = $region84
        $region83: #{tpu_custom_call.1} parent=11 // pred_region
          _
        $region84: #{tpu_custom_call.1} parent=11 // pred_fallthru
          _
        // Predicated region
        $region85: #{tpu_custom_call.1} parent=11 // pred_check
          %p716 = pneg %p489
        $region86: #{tpu_custom_call.1} parent=11 // pred_check_branch
          %718 = sbr.rel (%p716) target = $region88
        $region87: #{tpu_custom_call.1} parent=11 // pred_region
          _
        $region88: #{tpu_custom_call.1} parent=11 // pred_fallthru
          _
        // Predicated region
        $region89: #{tpu_custom_call.1} parent=11 // pred_check
          %p719 = pneg %p510
        $region90: #{tpu_custom_call.1} parent=11 // pred_check_branch
          %721 = sbr.rel (%p719) target = $region92
        $region91: #{tpu_custom_call.1} parent=11 // pred_region
          _
        $region92: #{tpu_custom_call.1} parent=11 // pred_fallthru
          _
        // Predicated region
        $region93: #{tpu_custom_call.1} parent=11 // pred_check
          %p722 = pneg %p531
        $region94: #{tpu_custom_call.1} parent=11 // pred_check_branch
          %724 = sbr.rel (%p722) target = $region96
        $region95: #{tpu_custom_call.1} parent=11 // pred_region
          _
        $region96: #{tpu_custom_call.1} parent=11 // pred_fallthru
          _
      $region12: #{tpu_custom_call.1} parent=5 // pred_fallthru
        _
      %p725 = scmp.lt.s32.totalorder %s38, 2
      // Predicated region
      $region97: #{tpu_custom_call.1} parent=5 // pred_check
        %p726 = pneg %p725
      $region98: #{tpu_custom_call.1} parent=5 // pred_check_branch
        %728 = sbr.rel (%p726) target = $region100
      $region99: #{tpu_custom_call.1} parent=5 // pred_region
        // Predicated region
        $region101: #{tpu_custom_call.1} parent=99 // pred_check
          %p729 = pneg %p58
        $region102: #{tpu_custom_call.1} parent=99 // pred_check_branch
          %731 = sbr.rel (%p729) target = $region104
        $region103: #{tpu_custom_call.1} parent=99 // pred_region
          %p732 = scmp.lt.s32.totalorder %s38, 1
          %s733 = scalar_select %p732, %s38, 1
          %s734 = smul.addr %s733, 8
          %s735 = scalar_lea.vmem %s0, %s734
        $region104: #{tpu_custom_call.1} parent=99 // pred_fallthru
          _
        // Predicated region
        $region105: #{tpu_custom_call.1} parent=99 // pred_check
          %p736 = pneg %p84
        $region106: #{tpu_custom_call.1} parent=99 // pred_check_branch
          %738 = sbr.rel (%p736) target = $region108
        $region107: #{tpu_custom_call.1} parent=99 // pred_region
          %p739 = scmp.lt.s32.totalorder %s38, 1
          %s740 = scalar_select %p739, %s38, 1
          %s741 = smul.addr %s740, 8
          %s742 = scalar_lea.vmem %s1, %s741
        $region108: #{tpu_custom_call.1} parent=99 // pred_fallthru
          _
      $region100: #{tpu_custom_call.1} parent=5 // pred_fallthru
        _
      %p743 = scmp.le.s32.totalorder 1, %s38
      %p744 = scmp.lt.s32.totalorder %s38, 3
      %p745 = pnand %p743, %p744
      %p746 = pneg %p745
      // Predicated region
      $region109: #{tpu_custom_call.1} parent=5 // pred_check
        _
      $region110: #{tpu_custom_call.1} parent=5 // pred_check_branch
        %748 = sbr.rel (%p745) target = $region112
      $region111: #{tpu_custom_call.1} parent=5 // pred_region
        %s749 = ssub.s32 %s38, 1
        // Predicated region
        $region113: #{tpu_custom_call.1} parent=111 // pred_check
          %p750 = pneg %p111
        $region114: #{tpu_custom_call.1} parent=111 // pred_check_branch
          %752 = sbr.rel (%p750) target = $region116
        $region115: #{tpu_custom_call.1} parent=111 // pred_region
          %753 = dma.done [#allocation7], 16
        $region116: #{tpu_custom_call.1} parent=111 // pred_fallthru
          _
        // Predicated region
        $region117: #{tpu_custom_call.1} parent=111 // pred_check
          %p754 = pneg %p132
        $region118: #{tpu_custom_call.1} parent=111 // pred_check_branch
          %756 = sbr.rel (%p754) target = $region120
        $region119: #{tpu_custom_call.1} parent=111 // pred_region
          %757 = dma.done [#allocation10], 16
        $region120: #{tpu_custom_call.1} parent=111 // pred_fallthru
          _
        // Predicated region
        $region121: #{tpu_custom_call.1} parent=111 // pred_check
          %p758 = pneg %p153
        $region122: #{tpu_custom_call.1} parent=111 // pred_check_branch
          %760 = sbr.rel (%p758) target = $region124
        $region123: #{tpu_custom_call.1} parent=111 // pred_region
          %761 = dma.done [#allocation10], 16
        $region124: #{tpu_custom_call.1} parent=111 // pred_fallthru
          _
        // Predicated region
        $region125: #{tpu_custom_call.1} parent=111 // pred_check
          %p762 = pneg %p174
        $region126: #{tpu_custom_call.1} parent=111 // pred_check_branch
          %764 = sbr.rel (%p762) target = $region128
        $region127: #{tpu_custom_call.1} parent=111 // pred_region
          %765 = dma.done [#allocation13], 16
        $region128: #{tpu_custom_call.1} parent=111 // pred_fallthru
          _
        // Predicated region
        $region129: #{tpu_custom_call.1} parent=111 // pred_check
          %p766 = pneg %p237
        $region130: #{tpu_custom_call.1} parent=111 // pred_check_branch
          %768 = sbr.rel (%p766) target = $region132
        $region131: #{tpu_custom_call.1} parent=111 // pred_region
          %769 = dma.done [#allocation13], 256
        $region132: #{tpu_custom_call.1} parent=111 // pred_fallthru
          _
        // Predicated region
        $region133: #{tpu_custom_call.1} parent=111 // pred_check
          %p770 = pneg %p279
        $region134: #{tpu_custom_call.1} parent=111 // pred_check_branch
          %772 = sbr.rel (%p770) target = $region136
        $region135: #{tpu_custom_call.1} parent=111 // pred_region
          %773 = dma.done [#allocation16], 16
        $region136: #{tpu_custom_call.1} parent=111 // pred_fallthru
          _
        // Predicated region
        $region137: #{tpu_custom_call.1} parent=111 // pred_check
          %p774 = pneg %p300
        $region138: #{tpu_custom_call.1} parent=111 // pred_check_branch
          %776 = sbr.rel (%p774) target = $region140
        $region139: #{tpu_custom_call.1} parent=111 // pred_region
          %777 = dma.done [#allocation16], 16
        $region140: #{tpu_custom_call.1} parent=111 // pred_fallthru
          _
        // Predicated region
        $region141: #{tpu_custom_call.1} parent=111 // pred_check
          %p778 = pneg %p321
        $region142: #{tpu_custom_call.1} parent=111 // pred_check_branch
          %780 = sbr.rel (%p778) target = $region144
        $region143: #{tpu_custom_call.1} parent=111 // pred_region
          %781 = dma.done [#allocation19], 16
        $region144: #{tpu_custom_call.1} parent=111 // pred_fallthru
          _
        // Predicated region
        $region145: #{tpu_custom_call.1} parent=111 // pred_check
          %p782 = pneg %p363
        $region146: #{tpu_custom_call.1} parent=111 // pred_check_branch
          %784 = sbr.rel (%p782) target = $region148
        $region147: #{tpu_custom_call.1} parent=111 // pred_region
          %785 = dma.done [#allocation19], 16
        $region148: #{tpu_custom_call.1} parent=111 // pred_fallthru
          _
        // Predicated region
        $region149: #{tpu_custom_call.1} parent=111 // pred_check
          %p786 = pneg %p405
        $region150: #{tpu_custom_call.1} parent=111 // pred_check_branch
          %788 = sbr.rel (%p786) target = $region152
        $region151: #{tpu_custom_call.1} parent=111 // pred_region
          %789 = dma.done [#allocation22], 16
        $region152: #{tpu_custom_call.1} parent=111 // pred_fallthru
          _
        // Predicated region
        $region153: #{tpu_custom_call.1} parent=111 // pred_check
          %p790 = pneg %p426
        $region154: #{tpu_custom_call.1} parent=111 // pred_check_branch
          %792 = sbr.rel (%p790) target = $region156
        $region155: #{tpu_custom_call.1} parent=111 // pred_region
          %793 = dma.done [#allocation22], 16
        $region156: #{tpu_custom_call.1} parent=111 // pred_fallthru
          _
        %p794 = scmp.lt.s32.totalorder %s43, 1
        %s795 = scalar_select %p794, %s43, 1
        %s796 = smul.addr %s795, 8
        %s797 = scalar_lea.vmem %s0, %s796
        %p798 = pneg %p64
        %p799 = pneg %p61
        %p800 = scmp.lt.s32.totalorder %s43, 1
        %s801 = scalar_select %p800, %s43, 1
        %s802 = smul.addr %s801, 8
        %s803 = scalar_lea.vmem %s1, %s802
        %p804 = pneg %p90
        %p805 = pneg %p87
        %p806 = pneg %p111
        %p807 = pneg %p108
        %p808 = pneg %p132
        %p809 = pneg %p129
        %p810 = pneg %p153
        %p811 = pneg %p150
        %p812 = pneg %p174
        %p813 = pneg %p171
        %p814 = pneg %p195
        %p815 = pneg %p192
        %p816 = pneg %p216
        %p817 = pneg %p213
        %p818 = pneg %p237
        %p819 = pneg %p234
        %p820 = pneg %p258
        %p821 = pneg %p255
        %p822 = pneg %p279
        %p823 = pneg %p276
        %p824 = pneg %p300
        %p825 = pneg %p297
        %p826 = pneg %p321
        %p827 = pneg %p318
        %p828 = pneg %p342
        %p829 = pneg %p339
        %p830 = pneg %p363
        %p831 = pneg %p360
        %p832 = pneg %p384
        %p833 = pneg %p381
        %p834 = pneg %p405
        %p835 = pneg %p402
        %p836 = pneg %p426
        %p837 = pneg %p423
        %p838 = pneg %p447
        %p839 = pneg %p444
        %p840 = pneg %p468
        %p841 = pneg %p465
        %p842 = pneg %p489
        %p843 = pneg %p486
        %p844 = pneg %p510
        %p845 = pneg %p507
        %p846 = pneg %p531
        %p847 = pneg %p528
        %p848 = pneg %p557
        %p849 = pneg %p554
        %s850 = sand.u32 %s544, 1
        %s851 = scalar_lea.sflag [#allocation8], %s850
        %s852 = sand.u32 %s544, 1
        %s853 = smul.addr %s852, 8
        %s854 = scalar_lea.vmem [#allocation24], %s853
        %p855 = scmp.lt.s32.totalorder %s43, 1
        %s856 = scalar_select %p855, %s43, 1
        %s857 = smul.addr %s856, 8
        %s858 = scalar_lea.vmem %s0, %s857
        %p859 = scmp.lt.s32.totalorder %s43, 1
        %s860 = scalar_select %p859, %s43, 1
        %s861 = smul.addr %s860, 8
        %s862 = scalar_lea.vmem %s1, %s861
        %v864 = vld [vmem:[%s858] sm:$0xff]
        %v865 = vld [vmem:[#allocation6] sm:$0x1]
        %v866 = vld [vmem:[#allocation9] sm:$0x1]
        %vm867 = vcmask 261120
        %v868 = vsel %vm867, %v864, 0.0
        %869 = vadd.xlane.f32.xlu0 %v868
        %v870 = vpop.xlane.xlu0 %869
        %v871 = vrcp.pop 32.0
        %v872 = vmul.f32 %v870, %v871
        %v873 = vsub.f32 %v864, %v872
        %v874 = vmul.f32 %v873, %v873
        %v875 = vsel %vm867, %v874, 0.0
        %876 = vadd.xlane.f32.xlu0 %v875
        %v877 = vpop.xlane.xlu0 %876
        %v878 = vmul.f32 %v877, %v871
        %v879 = vadd.f32 %v878, 1e-05
        %v880 = vrsqrt.pop %v879
        %v881 = vmul.f32 %v873, %v880
        %v883 = vlaneseq
        %v884 = vshrl.u32 %v883, 7
        %v885 = vsub.s32 0, %v884
        %v886 = vrot.slane %v865, %v885
        %v888 = vmul.f32 %v881, %v886
        %v890 = vlaneseq
        %v891 = vshrl.u32 %v890, 7
        %v892 = vsub.s32 0, %v891
        %v893 = vrot.slane %v866, %v892
        %v895 = vadd.f32 %v888, %v893
        %v896 = vld [vmem:[%s862] sm:$0xff]
        %v897 = vld [vmem:[#allocation11] sm:$0x1]
        %v898 = vld [vmem:[#allocation12] sm:$0x1]
        %v899 = vsel %vm867, %v896, 0.0
        %900 = vadd.xlane.f32.xlu0 %v899
        %v901 = vpop.xlane.xlu0 %900
        %v902 = vmul.f32 %v901, %v871
        %v903 = vsub.f32 %v896, %v902
        %v904 = vmul.f32 %v903, %v903
        %v905 = vsel %vm867, %v904, 0.0
        %906 = vadd.xlane.f32.xlu0 %v905
        %v907 = vpop.xlane.xlu0 %906
        %v908 = vmul.f32 %v907, %v871
        %v909 = vadd.f32 %v908, 1e-05
        %v910 = vrsqrt.pop %v909
        %v911 = vmul.f32 %v903, %v910
        %v913 = vlaneseq
        %v914 = vshrl.u32 %v913, 7
        %v915 = vsub.s32 0, %v914
        %v916 = vrot.slane %v897, %v915
        %v918 = vmul.f32 %v911, %v916
        %v920 = vlaneseq
        %v921 = vshrl.u32 %v920, 7
        %v922 = vsub.s32 0, %v921
        %v923 = vrot.slane %v898, %v922
        %v925 = vadd.f32 %v918, %v923
        %v926 = vpack.c.bf16 %v925, %v895
        %v927 = vld [vmem:[%s6] sm:$0xf]
        %v928 = vld [vmem:[%s6 + $0x4] sm:$0xf]
        %v929 = vld [vmem:[%s6 + $0x8] sm:$0xf]
        %v930 = vld [vmem:[%s6 + $0xc] sm:$0xf]
        %v935 = vunpack.c.l.b16 %v927
        %v936 = vunpack.c.l.b16 %v928
        %v937 = vunpack.c.l.b16 %v929
        %v938 = vunpack.c.l.b16 %v930
        %v939 = vpack.c.b16 %v936, %v935
        %v940 = vpack.c.b16 %v938, %v937
        %v944 = vsel %vm867, %v926, 0
        %946 = vmatprep.subr.bf16.mxu0 0
        %947 = vmatpush1.bf16.msra.mxu0 %v939
        %948 = vmatprep.subr.bf16.mxu0 0
        %949 = vmatpush1.bf16.msra.mxu0 %v940
        %950 = vmatprep.subr.bf16.mxu0 0
        %951 = vmatpush1.bf16.msra.mxu0 0
        %952 = vmatprep.subr.bf16.mxu0 0
        %953 = vmatpush1.bf16.msra.mxu0 0
        %954 = vmatprep.subr.bf16.mxu0 0
        %955 = vmatpush1.bf16.msra.mxu0 0
        %956 = vmatprep.subr.bf16.mxu0 0
        %957 = vmatpush1.bf16.msra.mxu0 0
        %958 = vmatprep.subr.bf16.mxu0 0
        %959 = vmatpush1.bf16.msra.mxu0 0
        %960 = vmatprep.subr.bf16.mxu0 0
        %961 = vmatpush1.bf16.msra.mxu0 0
        %962 = vmatprep.subr.bf16.mxu0 0
        %963 = vmatpush1.bf16.msra.mxu0 0
        %964 = vmatprep.subr.bf16.mxu0 0
        %965 = vmatpush1.bf16.msra.mxu0 0
        %966 = vmatprep.subr.bf16.mxu0 0
        %967 = vmatpush1.bf16.msra.mxu0 0
        %968 = vmatprep.subr.bf16.mxu0 0
        %969 = vmatpush1.bf16.msra.mxu0 0
        %970 = vmatprep.subr.bf16.mxu0 0
        %971 = vmatpush1.bf16.msra.mxu0 0
        %972 = vmatprep.subr.bf16.mxu0 0
        %973 = vmatpush1.bf16.msra.mxu0 0
        %974 = vmatprep.subr.bf16.mxu0 0
        %975 = vmatpush1.bf16.msra.mxu0 0
        %976 = vmatprep.subr.bf16.mxu0 0
        %977 = vmatpush1.bf16.msra.mxu0 0
        %978 = vmatprep.mubr.bf16.mxu0 0
        %979 = vmatmul.mubr.bf16.gmra.mrb[0].mxu0 %v944
        %v980 = vpop.f32.mrb[0].mxu0
        %v981 = vadd.f32 0.0, %v980
        %v982 = vpop.f32.mrb[0].mxu0
        %v983 = vpop.f32.mrb[0].mxu0
        %v984 = vadd.f32 0.0, %v983
        %v985 = vpop.f32.mrb[0].mxu0
        %986 = vdwg.mxu0
        %987 = vst.msk [vmem:[#allocation2] sm:$0xff] %vm867, %v984
        %s988 = scalar_lea.vmem [#allocation2], 8
        %989 = vst.msk [vmem:[%s988] sm:$0xff] %vm867, %v981
        %v990 = vld [vmem:[%s7] sm:$0xf]
        %v991 = vld [vmem:[%s7 + $0x4] sm:$0xf]
        %v992 = vld [vmem:[%s7 + $0x8] sm:$0xf]
        %v993 = vld [vmem:[%s7 + $0xc] sm:$0xf]
        %v998 = vunpack.c.l.b16 %v990
        %v999 = vunpack.c.l.b16 %v991
        %v1000 = vunpack.c.l.b16 %v992
        %v1001 = vunpack.c.l.b16 %v993
        %v1002 = vpack.c.b16 %v999, %v998
        %v1003 = vpack.c.b16 %v1001, %v1000
        %1006 = vmatprep.subr.bf16.mxu0 0
        %1007 = vmatpush1.bf16.msra.mxu0 %v1002
        %1008 = vmatprep.subr.bf16.mxu0 0
        %1009 = vmatpush1.bf16.msra.mxu0 %v1003
        %1010 = vmatprep.subr.bf16.mxu0 0
        %1011 = vmatpush1.bf16.msra.mxu0 0
        %1012 = vmatprep.subr.bf16.mxu0 0
        %1013 = vmatpush1.bf16.msra.mxu0 0
        %1014 = vmatprep.subr.bf16.mxu0 0
        %1015 = vmatpush1.bf16.msra.mxu0 0
        %1016 = vmatprep.subr.bf16.mxu0 0
        %1017 = vmatpush1.bf16.msra.mxu0 0
        %1018 = vmatprep.subr.bf16.mxu0 0
        %1019 = vmatpush1.bf16.msra.mxu0 0
        %1020 = vmatprep.subr.bf16.mxu0 0
        %1021 = vmatpush1.bf16.msra.mxu0 0
        %1022 = vmatprep.subr.bf16.mxu0 0
        %1023 = vmatpush1.bf16.msra.mxu0 0
        %1024 = vmatprep.subr.bf16.mxu0 0
        %1025 = vmatpush1.bf16.msra.mxu0 0
        %1026 = vmatprep.subr.bf16.mxu0 0
        %1027 = vmatpush1.bf16.msra.mxu0 0
        %1028 = vmatprep.subr.bf16.mxu0 0
        %1029 = vmatpush1.bf16.msra.mxu0 0
        %1030 = vmatprep.subr.bf16.mxu0 0
        %1031 = vmatpush1.bf16.msra.mxu0 0
        %1032 = vmatprep.subr.bf16.mxu0 0
        %1033 = vmatpush1.bf16.msra.mxu0 0
        %1034 = vmatprep.subr.bf16.mxu0 0
        %1035 = vmatpush1.bf16.msra.mxu0 0
        %1036 = vmatprep.subr.bf16.mxu0 0
        %1037 = vmatpush1.bf16.msra.mxu0 0
        %1038 = vmatprep.mubr.bf16.mxu0 0
        %1039 = vmatmul.mubr.bf16.gmra.mrb[0].mxu0 %v944
        %v1040 = vpop.f32.mrb[0].mxu0
        %v1041 = vadd.f32 0.0, %v1040
        %v1042 = vpop.f32.mrb[0].mxu0
        %v1043 = vpop.f32.mrb[0].mxu0
        %v1044 = vadd.f32 0.0, %v1043
        %v1045 = vpop.f32.mrb[0].mxu0
        %1046 = vdwg.mxu0
        %1047 = vst.msk [vmem:[#allocation3] sm:$0xff] %vm867, %v1041
        %1048 = vst.msk [vmem:[#allocation3 + $0x8] sm:$0xff] %vm867, %v1044
        %v1049 = vld [vmem:[#allocation14] sm:$0xf]
        %v1050 = vld [vmem:[#allocation14 + $0x4] sm:$0xf]
        %v1051 = vld [vmem:[#allocation14 + $0x8] sm:$0xf]
        %v1052 = vld [vmem:[#allocation14 + $0xc] sm:$0xf]
        %v1057 = vunpack.c.l.b16 %v1049
        %v1058 = vunpack.c.l.b16 %v1050
        %v1059 = vunpack.c.l.b16 %v1051
        %v1060 = vunpack.c.l.b16 %v1052
        %v1061 = vpack.c.b16 %v1058, %v1057
        %v1062 = vpack.c.b16 %v1060, %v1059
        %1065 = vmatprep.subr.bf16.mxu0 0
        %1066 = vmatpush1.bf16.msra.mxu0 %v1061
        %1067 = vmatprep.subr.bf16.mxu0 0
        %1068 = vmatpush1.bf16.msra.mxu0 %v1062
        %1069 = vmatprep.subr.bf16.mxu0 0
        %1070 = vmatpush1.bf16.msra.mxu0 0
        %1071 = vmatprep.subr.bf16.mxu0 0
        %1072 = vmatpush1.bf16.msra.mxu0 0
        %1073 = vmatprep.subr.bf16.mxu0 0
        %1074 = vmatpush1.bf16.msra.mxu0 0
        %1075 = vmatprep.subr.bf16.mxu0 0
        %1076 = vmatpush1.bf16.msra.mxu0 0
        %1077 = vmatprep.subr.bf16.mxu0 0
        %1078 = vmatpush1.bf16.msra.mxu0 0
        %1079 = vmatprep.subr.bf16.mxu0 0
        %1080 = vmatpush1.bf16.msra.mxu0 0
        %1081 = vmatprep.subr.bf16.mxu0 0
        %1082 = vmatpush1.bf16.msra.mxu0 0
        %1083 = vmatprep.subr.bf16.mxu0 0
        %1084 = vmatpush1.bf16.msra.mxu0 0
        %1085 = vmatprep.subr.bf16.mxu0 0
        %1086 = vmatpush1.bf16.msra.mxu0 0
        %1087 = vmatprep.subr.bf16.mxu0 0
        %1088 = vmatpush1.bf16.msra.mxu0 0
        %1089 = vmatprep.subr.bf16.mxu0 0
        %1090 = vmatpush1.bf16.msra.mxu0 0
        %1091 = vmatprep.subr.bf16.mxu0 0
        %1092 = vmatpush1.bf16.msra.mxu0 0
        %1093 = vmatprep.subr.bf16.mxu0 0
        %1094 = vmatpush1.bf16.msra.mxu0 0
        %1095 = vmatprep.subr.bf16.mxu0 0
        %1096 = vmatpush1.bf16.msra.mxu0 0
        %1097 = vmatprep.mubr.bf16.mxu0 0
        %1098 = vmatmul.mubr.bf16.gmra.mrb[0].mxu0 %v944
        %v1099 = vpop.f32.mrb[0].mxu0
        %v1100 = vadd.f32 0.0, %v1099
        %v1101 = vpop.f32.mrb[0].mxu0
        %v1102 = vpop.f32.mrb[0].mxu0
        %v1103 = vadd.f32 0.0, %v1102
        %v1104 = vpop.f32.mrb[0].mxu0
        %1105 = vdwg.mxu0
        %1106 = vst.msk [vmem:[#allocation4] sm:$0xff] %vm867, %v1100
        %1107 = vst.msk [vmem:[#allocation4 + $0x8] sm:$0xff] %vm867, %v1103
        %v1108 = vld [vmem:[#allocation2] sm:$0xff]
        %v1109 = vld [vmem:[#allocation2 + $0x8] sm:$0xff]
        %v1110 = vld [vmem:[#allocation3] sm:$0xff]
        %v1111 = vld [vmem:[#allocation3 + $0x8] sm:$0xff]
        %v1112 = vld [vmem:[#allocation4] sm:$0xff]
        %v1113 = vld [vmem:[#allocation4 + $0x8] sm:$0xff]
        %vm1114 = vcmask 31744
        %v1116 = vsel %vm1114, %v1108, 0
        %v1119 = vsel %vm1114, %v1110, 0
        %1121 = vmatprep.subr.mxu0 0.0
        %1122 = vmatpush1.xpose.msra.mxu0 %v1119
        %1123 = vmatprep.subr.mxu0 0.0
        %1124 = vmatpush1.xpose.msra.mxu0 0.0
        %1125 = vmatprep.subr.mxu0 0.0
        %1126 = vmatpush1.xpose.msra.mxu0 0.0
        %1127 = vmatprep.subr.mxu0 0.0
        %1128 = vmatpush1.xpose.msra.mxu0 0.0
        %1129 = vmatprep.subr.mxu0 0.0
        %1130 = vmatpush1.xpose.msra.mxu0 0.0
        %1131 = vmatprep.subr.mxu0 0.0
        %1132 = vmatpush1.xpose.msra.mxu0 0.0
        %1133 = vmatprep.subr.mxu0 0.0
        %1134 = vmatpush1.xpose.msra.mxu0 0.0
        %1135 = vmatprep.subr.mxu0 0.0
        %1136 = vmatpush1.xpose.msra.mxu0 0.0
        %1137 = vmatprep.subr.mxu0 0.0
        %1138 = vmatpush1.xpose.msra.mxu0 0.0
        %1139 = vmatprep.subr.mxu0 0.0
        %1140 = vmatpush1.xpose.msra.mxu0 0.0
        %1141 = vmatprep.subr.mxu0 0.0
        %1142 = vmatpush1.xpose.msra.mxu0 0.0
        %1143 = vmatprep.subr.mxu0 0.0
        %1144 = vmatpush1.xpose.msra.mxu0 0.0
        %1145 = vmatprep.subr.mxu0 0.0
        %1146 = vmatpush1.xpose.msra.mxu0 0.0
        %1147 = vmatprep.subr.mxu0 0.0
        %1148 = vmatpush1.xpose.msra.mxu0 0.0
        %1149 = vmatprep.subr.mxu0 0.0
        %1150 = vmatpush1.xpose.msra.mxu0 0.0
        %1151 = vmatprep.subr.mxu0 0.0
        %1152 = vmatpush1.xpose.msra.mxu0 0.0
        %1153 = vmatprep.subr.mxu0 0.0
        %1154 = vmatpush1.xpose.msra.mxu0 0.0
        %1155 = vmatprep.subr.mxu0 0.0
        %1156 = vmatpush1.xpose.msra.mxu0 0.0
        %1157 = vmatprep.subr.mxu0 0.0
        %1158 = vmatpush1.xpose.msra.mxu0 0.0
        %1159 = vmatprep.subr.mxu0 0.0
        %1160 = vmatpush1.xpose.msra.mxu0 0.0
        %1161 = vmatprep.subr.mxu0 0.0
        %1162 = vmatpush1.xpose.msra.mxu0 0.0
        %1163 = vmatprep.subr.mxu0 0.0
        %1164 = vmatpush1.xpose.msra.mxu0 0.0
        %1165 = vmatprep.subr.mxu0 0.0
        %1166 = vmatpush1.xpose.msra.mxu0 0.0
        %1167 = vmatprep.subr.mxu0 0.0
        %1168 = vmatpush1.xpose.msra.mxu0 0.0
        %1169 = vmatprep.subr.mxu0 0.0
        %1170 = vmatpush1.xpose.msra.mxu0 0.0
        %1171 = vmatprep.subr.mxu0 0.0
        %1172 = vmatpush1.xpose.msra.mxu0 0.0
        %1173 = vmatprep.subr.mxu0 0.0
        %1174 = vmatpush1.xpose.msra.mxu0 0.0
        %1175 = vmatprep.subr.mxu0 0.0
        %1176 = vmatpush1.xpose.msra.mxu0 0.0
        %1177 = vmatprep.subr.mxu0 0.0
        %1178 = vmatpush1.xpose.msra.mxu0 0.0
        %1179 = vmatprep.subr.mxu0 0.0
        %1180 = vmatpush1.xpose.msra.mxu0 0.0
        %1181 = vmatprep.subr.mxu0 0.0
        %1182 = vmatpush1.xpose.msra.mxu0 0.0
        %1183 = vmatprep.subr.mxu0 0.0
        %1184 = vmatpush1.xpose.msra.mxu0 0.0
        %1185 = vmatprep.mubr.f32.mxu0 0.0
        %1186 = vmatmul.mubr.f32.gmra.mrb[0].mxu0 %v1116
        %v1187 = vpop.f32.mrb[0].mxu0
        %v1188 = vadd.f32 0.0, %v1187
        %v1189 = vpop.f32.mrb[0].mxu0
        %1190 = vdwg.mxu0
        %v1192 = vsel %vm1114, %v1109, 0
        %v1195 = vsel %vm1114, %v1111, 0
        %1197 = vmatprep.subr.mxu0 0.0
        %1198 = vmatpush1.xpose.msra.mxu0 %v1195
        %1199 = vmatprep.subr.mxu0 0.0
        %1200 = vmatpush1.xpose.msra.mxu0 0.0
        %1201 = vmatprep.subr.mxu0 0.0
        %1202 = vmatpush1.xpose.msra.mxu0 0.0
        %1203 = vmatprep.subr.mxu0 0.0
        %1204 = vmatpush1.xpose.msra.mxu0 0.0
        %1205 = vmatprep.subr.mxu0 0.0
        %1206 = vmatpush1.xpose.msra.mxu0 0.0
        %1207 = vmatprep.subr.mxu0 0.0
        %1208 = vmatpush1.xpose.msra.mxu0 0.0
        %1209 = vmatprep.subr.mxu0 0.0
        %1210 = vmatpush1.xpose.msra.mxu0 0.0
        %1211 = vmatprep.subr.mxu0 0.0
        %1212 = vmatpush1.xpose.msra.mxu0 0.0
        %1213 = vmatprep.subr.mxu0 0.0
        %1214 = vmatpush1.xpose.msra.mxu0 0.0
        %1215 = vmatprep.subr.mxu0 0.0
        %1216 = vmatpush1.xpose.msra.mxu0 0.0
        %1217 = vmatprep.subr.mxu0 0.0
        %1218 = vmatpush1.xpose.msra.mxu0 0.0
        %1219 = vmatprep.subr.mxu0 0.0
        %1220 = vmatpush1.xpose.msra.mxu0 0.0
        %1221 = vmatprep.subr.mxu0 0.0
        %1222 = vmatpush1.xpose.msra.mxu0 0.0
        %1223 = vmatprep.subr.mxu0 0.0
        %1224 = vmatpush1.xpose.msra.mxu0 0.0
        %1225 = vmatprep.subr.mxu0 0.0
        %1226 = vmatpush1.xpose.msra.mxu0 0.0
        %1227 = vmatprep.subr.mxu0 0.0
        %1228 = vmatpush1.xpose.msra.mxu0 0.0
        %1229 = vmatprep.subr.mxu0 0.0
        %1230 = vmatpush1.xpose.msra.mxu0 0.0
        %1231 = vmatprep.subr.mxu0 0.0
        %1232 = vmatpush1.xpose.msra.mxu0 0.0
        %1233 = vmatprep.subr.mxu0 0.0
        %1234 = vmatpush1.xpose.msra.mxu0 0.0
        %1235 = vmatprep.subr.mxu0 0.0
        %1236 = vmatpush1.xpose.msra.mxu0 0.0
        %1237 = vmatprep.subr.mxu0 0.0
        %1238 = vmatpush1.xpose.msra.mxu0 0.0
        %1239 = vmatprep.subr.mxu0 0.0
        %1240 = vmatpush1.xpose.msra.mxu0 0.0
        %1241 = vmatprep.subr.mxu0 0.0
        %1242 = vmatpush1.xpose.msra.mxu0 0.0
        %1243 = vmatprep.subr.mxu0 0.0
        %1244 = vmatpush1.xpose.msra.mxu0 0.0
        %1245 = vmatprep.subr.mxu0 0.0
        %1246 = vmatpush1.xpose.msra.mxu0 0.0
        %1247 = vmatprep.subr.mxu0 0.0
        %1248 = vmatpush1.xpose.msra.mxu0 0.0
        %1249 = vmatprep.subr.mxu0 0.0
        %1250 = vmatpush1.xpose.msra.mxu0 0.0
        %1251 = vmatprep.subr.mxu0 0.0
        %1252 = vmatpush1.xpose.msra.mxu0 0.0
        %1253 = vmatprep.subr.mxu0 0.0
        %1254 = vmatpush1.xpose.msra.mxu0 0.0
        %1255 = vmatprep.subr.mxu0 0.0
        %1256 = vmatpush1.xpose.msra.mxu0 0.0
        %1257 = vmatprep.subr.mxu0 0.0
        %1258 = vmatpush1.xpose.msra.mxu0 0.0
        %1259 = vmatprep.subr.mxu0 0.0
        %1260 = vmatpush1.xpose.msra.mxu0 0.0
        %1261 = vmatprep.mubr.f32.mxu0 0.0
        %1262 = vmatmul.mubr.f32.gmra.mrb[0].mxu0 %v1192
        %v1263 = vpop.f32.mrb[0].mxu0
        %v1264 = vadd.f32 0.0, %v1263
        %v1265 = vpop.f32.mrb[0].mxu0
        %1266 = vdwg.mxu0
        %vm1267 = vcmask 64512
        %v1268 = vsel %vm1267, %v1188, -inf
        %1269 = vmax.xlane.f32.xlu0 %v1268
        %v1270 = vpop.xlane.xlu0 %1269
        %v1271 = vsel %vm1267, %v1264, -inf
        %1272 = vmax.xlane.f32.xlu0 %v1271
        %v1273 = vpop.xlane.xlu0 %1272
        %v1274 = vsub.f32 %v1188, %v1270
        %v1275 = vsub.f32 %v1264, %v1273
        %v1276 = vmul.f32 %v1274, 1.442695
        %v1277 = vpow.pop %v1276
        %v1278 = vmul.f32 %v1275, 1.442695
        %v1279 = vpow.pop %v1278
        %v1280 = vsel %vm1267, %v1277, 0.0
        %1281 = vadd.xlane.f32.xlu0 %v1280
        %v1282 = vpop.xlane.xlu0 %1281
        %v1283 = vsel %vm1267, %v1279, 0.0
        %1284 = vadd.xlane.f32.xlu0 %v1283
        %v1285 = vpop.xlane.xlu0 %1284
        %v1286 = vrcp.pop %v1282
        %v1287 = vrcp.pop %v1285
        %v1288 = vmul.f32 %v1277, %v1286
        %v1289 = vmul.f32 %v1279, %v1287
        %v1291 = vsel %vm1267, %v1288, 0
        %1293 = vmatprep.subr.mxu0 0.0
        %1294 = vmatpush1.msra.mxu0 %v1112
        %1295 = vmatprep.subr.mxu0 0.0
        %1296 = vmatpush1.msra.mxu0 0.0
        %1297 = vmatprep.subr.mxu0 0.0
        %1298 = vmatpush1.msra.mxu0 0.0
        %1299 = vmatprep.subr.mxu0 0.0
        %1300 = vmatpush1.msra.mxu0 0.0
        %1301 = vmatprep.subr.mxu0 0.0
        %1302 = vmatpush1.msra.mxu0 0.0
        %1303 = vmatprep.subr.mxu0 0.0
        %1304 = vmatpush1.msra.mxu0 0.0
        %1305 = vmatprep.subr.mxu0 0.0
        %1306 = vmatpush1.msra.mxu0 0.0
        %1307 = vmatprep.subr.mxu0 0.0
        %1308 = vmatpush1.msra.mxu0 0.0
        %1309 = vmatprep.subr.mxu0 0.0
        %1310 = vmatpush1.msra.mxu0 0.0
        %1311 = vmatprep.subr.mxu0 0.0
        %1312 = vmatpush1.msra.mxu0 0.0
        %1313 = vmatprep.subr.mxu0 0.0
        %1314 = vmatpush1.msra.mxu0 0.0
        %1315 = vmatprep.subr.mxu0 0.0
        %1316 = vmatpush1.msra.mxu0 0.0
        %1317 = vmatprep.subr.mxu0 0.0
        %1318 = vmatpush1.msra.mxu0 0.0
        %1319 = vmatprep.subr.mxu0 0.0
        %1320 = vmatpush1.msra.mxu0 0.0
        %1321 = vmatprep.subr.mxu0 0.0
        %1322 = vmatpush1.msra.mxu0 0.0
        %1323 = vmatprep.subr.mxu0 0.0
        %1324 = vmatpush1.msra.mxu0 0.0
        %1325 = vmatprep.subr.mxu0 0.0
        %1326 = vmatpush1.msra.mxu0 0.0
        %1327 = vmatprep.subr.mxu0 0.0
        %1328 = vmatpush1.msra.mxu0 0.0
        %1329 = vmatprep.subr.mxu0 0.0
        %1330 = vmatpush1.msra.mxu0 0.0
        %1331 = vmatprep.subr.mxu0 0.0
        %1332 = vmatpush1.msra.mxu0 0.0
        %1333 = vmatprep.subr.mxu0 0.0
        %1334 = vmatpush1.msra.mxu0 0.0
        %1335 = vmatprep.subr.mxu0 0.0
        %1336 = vmatpush1.msra.mxu0 0.0
        %1337 = vmatprep.subr.mxu0 0.0
        %1338 = vmatpush1.msra.mxu0 0.0
        %1339 = vmatprep.subr.mxu0 0.0
        %1340 = vmatpush1.msra.mxu0 0.0
        %1341 = vmatprep.subr.mxu0 0.0
        %1342 = vmatpush1.msra.mxu0 0.0
        %1343 = vmatprep.subr.mxu0 0.0
        %1344 = vmatpush1.msra.mxu0 0.0
        %1345 = vmatprep.subr.mxu0 0.0
        %1346 = vmatpush1.msra.mxu0 0.0
        %1347 = vmatprep.subr.mxu0 0.0
        %1348 = vmatpush1.msra.mxu0 0.0
        %1349 = vmatprep.subr.mxu0 0.0
        %1350 = vmatpush1.msra.mxu0 0.0
        %1351 = vmatprep.subr.mxu0 0.0
        %1352 = vmatpush1.msra.mxu0 0.0
        %1353 = vmatprep.subr.mxu0 0.0
        %1354 = vmatpush1.msra.mxu0 0.0
        %1355 = vmatprep.subr.mxu0 0.0
        %1356 = vmatpush1.msra.mxu0 0.0
        %1357 = vmatprep.mubr.f32.mxu0 0.0
        %1358 = vmatmul.mubr.f32.gmra.mrb[0].mxu0 %v1291
        %v1359 = vpop.f32.mrb[0].mxu0
        %v1360 = vadd.f32 0.0, %v1359
        %v1361 = vpop.f32.mrb[0].mxu0
        %1362 = vdwg.mxu0
        %v1364 = vsel %vm1267, %v1289, 0
        %1366 = vmatprep.subr.mxu0 0.0
        %1367 = vmatpush1.msra.mxu0 %v1113
        %1368 = vmatprep.subr.mxu0 0.0
        %1369 = vmatpush1.msra.mxu0 0.0
        %1370 = vmatprep.subr.mxu0 0.0
        %1371 = vmatpush1.msra.mxu0 0.0
        %1372 = vmatprep.subr.mxu0 0.0
        %1373 = vmatpush1.msra.mxu0 0.0
        %1374 = vmatprep.subr.mxu0 0.0
        %1375 = vmatpush1.msra.mxu0 0.0
        %1376 = vmatprep.subr.mxu0 0.0
        %1377 = vmatpush1.msra.mxu0 0.0
        %1378 = vmatprep.subr.mxu0 0.0
        %1379 = vmatpush1.msra.mxu0 0.0
        %1380 = vmatprep.subr.mxu0 0.0
        %1381 = vmatpush1.msra.mxu0 0.0
        %1382 = vmatprep.subr.mxu0 0.0
        %1383 = vmatpush1.msra.mxu0 0.0
        %1384 = vmatprep.subr.mxu0 0.0
        %1385 = vmatpush1.msra.mxu0 0.0
        %1386 = vmatprep.subr.mxu0 0.0
        %1387 = vmatpush1.msra.mxu0 0.0
        %1388 = vmatprep.subr.mxu0 0.0
        %1389 = vmatpush1.msra.mxu0 0.0
        %1390 = vmatprep.subr.mxu0 0.0
        %1391 = vmatpush1.msra.mxu0 0.0
        %1392 = vmatprep.subr.mxu0 0.0
        %1393 = vmatpush1.msra.mxu0 0.0
        %1394 = vmatprep.subr.mxu0 0.0
        %1395 = vmatpush1.msra.mxu0 0.0
        %1396 = vmatprep.subr.mxu0 0.0
        %1397 = vmatpush1.msra.mxu0 0.0
        %1398 = vmatprep.subr.mxu0 0.0
        %1399 = vmatpush1.msra.mxu0 0.0
        %1400 = vmatprep.subr.mxu0 0.0
        %1401 = vmatpush1.msra.mxu0 0.0
        %1402 = vmatprep.subr.mxu0 0.0
        %1403 = vmatpush1.msra.mxu0 0.0
        %1404 = vmatprep.subr.mxu0 0.0
        %1405 = vmatpush1.msra.mxu0 0.0
        %1406 = vmatprep.subr.mxu0 0.0
        %1407 = vmatpush1.msra.mxu0 0.0
        %1408 = vmatprep.subr.mxu0 0.0
        %1409 = vmatpush1.msra.mxu0 0.0
        %1410 = vmatprep.subr.mxu0 0.0
        %1411 = vmatpush1.msra.mxu0 0.0
        %1412 = vmatprep.subr.mxu0 0.0
        %1413 = vmatpush1.msra.mxu0 0.0
        %1414 = vmatprep.subr.mxu0 0.0
        %1415 = vmatpush1.msra.mxu0 0.0
        %1416 = vmatprep.subr.mxu0 0.0
        %1417 = vmatpush1.msra.mxu0 0.0
        %1418 = vmatprep.subr.mxu0 0.0
        %1419 = vmatpush1.msra.mxu0 0.0
        %1420 = vmatprep.subr.mxu0 0.0
        %1421 = vmatpush1.msra.mxu0 0.0
        %1422 = vmatprep.subr.mxu0 0.0
        %1423 = vmatpush1.msra.mxu0 0.0
        %1424 = vmatprep.subr.mxu0 0.0
        %1425 = vmatpush1.msra.mxu0 0.0
        %1426 = vmatprep.subr.mxu0 0.0
        %1427 = vmatpush1.msra.mxu0 0.0
        %1428 = vmatprep.subr.mxu0 0.0
        %1429 = vmatpush1.msra.mxu0 0.0
        %1430 = vmatprep.mubr.f32.mxu0 0.0
        %1431 = vmatmul.mubr.f32.gmra.mrb[0].mxu0 %v1364
        %v1432 = vpop.f32.mrb[0].mxu0
        %v1433 = vadd.f32 0.0, %v1432
        %v1434 = vpop.f32.mrb[0].mxu0
        %1435 = vdwg.mxu0
        %1436 = vst.msk [vmem:[#allocation5] sm:$0xff] %vm1114, %v1360
        %1437 = vst.msk [vmem:[#allocation5 + $0x8] sm:$0xff] %vm1114, %v1433
        %v1438 = vld [vmem:[#allocation2] sm:$0xff]
        %v1439 = vld [vmem:[#allocation2 + $0x8] sm:$0xff]
        %v1440 = vld [vmem:[#allocation3] sm:$0xff]
        %v1441 = vld [vmem:[#allocation3 + $0x8] sm:$0xff]
        %v1442 = vld [vmem:[#allocation4] sm:$0xff]
        %v1443 = vld [vmem:[#allocation4 + $0x8] sm:$0xff]
        %1445 = vrot.lane.b32.xlu0 %v1438, 124
        %v1446 = vpop.permute.xlu0 %1445
        %1448 = vrot.lane.b32.xlu0 %v1440, 124
        %v1449 = vpop.permute.xlu0 %1448
        %v1450 = vsel %vm1114, %v1446, 0
        %v1452 = vsel %vm1114, %v1449, 0
        %1454 = vmatprep.subr.mxu0 0.0
        %1455 = vmatpush1.xpose.msra.mxu0 %v1452
        %1456 = vmatprep.subr.mxu0 0.0
        %1457 = vmatpush1.xpose.msra.mxu0 0.0
        %1458 = vmatprep.subr.mxu0 0.0
        %1459 = vmatpush1.xpose.msra.mxu0 0.0
        %1460 = vmatprep.subr.mxu0 0.0
        %1461 = vmatpush1.xpose.msra.mxu0 0.0
        %1462 = vmatprep.subr.mxu0 0.0
        %1463 = vmatpush1.xpose.msra.mxu0 0.0
        %1464 = vmatprep.subr.mxu0 0.0
        %1465 = vmatpush1.xpose.msra.mxu0 0.0
        %1466 = vmatprep.subr.mxu0 0.0
        %1467 = vmatpush1.xpose.msra.mxu0 0.0
        %1468 = vmatprep.subr.mxu0 0.0
        %1469 = vmatpush1.xpose.msra.mxu0 0.0
        %1470 = vmatprep.subr.mxu0 0.0
        %1471 = vmatpush1.xpose.msra.mxu0 0.0
        %1472 = vmatprep.subr.mxu0 0.0
        %1473 = vmatpush1.xpose.msra.mxu0 0.0
        %1474 = vmatprep.subr.mxu0 0.0
        %1475 = vmatpush1.xpose.msra.mxu0 0.0
        %1476 = vmatprep.subr.mxu0 0.0
        %1477 = vmatpush1.xpose.msra.mxu0 0.0
        %1478 = vmatprep.subr.mxu0 0.0
        %1479 = vmatpush1.xpose.msra.mxu0 0.0
        %1480 = vmatprep.subr.mxu0 0.0
        %1481 = vmatpush1.xpose.msra.mxu0 0.0
        %1482 = vmatprep.subr.mxu0 0.0
        %1483 = vmatpush1.xpose.msra.mxu0 0.0
        %1484 = vmatprep.subr.mxu0 0.0
        %1485 = vmatpush1.xpose.msra.mxu0 0.0
        %1486 = vmatprep.subr.mxu0 0.0
        %1487 = vmatpush1.xpose.msra.mxu0 0.0
        %1488 = vmatprep.subr.mxu0 0.0
        %1489 = vmatpush1.xpose.msra.mxu0 0.0
        %1490 = vmatprep.subr.mxu0 0.0
        %1491 = vmatpush1.xpose.msra.mxu0 0.0
        %1492 = vmatprep.subr.mxu0 0.0
        %1493 = vmatpush1.xpose.msra.mxu0 0.0
        %1494 = vmatprep.subr.mxu0 0.0
        %1495 = vmatpush1.xpose.msra.mxu0 0.0
        %1496 = vmatprep.subr.mxu0 0.0
        %1497 = vmatpush1.xpose.msra.mxu0 0.0
        %1498 = vmatprep.subr.mxu0 0.0
        %1499 = vmatpush1.xpose.msra.mxu0 0.0
        %1500 = vmatprep.subr.mxu0 0.0
        %1501 = vmatpush1.xpose.msra.mxu0 0.0
        %1502 = vmatprep.subr.mxu0 0.0
        %1503 = vmatpush1.xpose.msra.mxu0 0.0
        %1504 = vmatprep.subr.mxu0 0.0
        %1505 = vmatpush1.xpose.msra.mxu0 0.0
        %1506 = vmatprep.subr.mxu0 0.0
        %1507 = vmatpush1.xpose.msra.mxu0 0.0
        %1508 = vmatprep.subr.mxu0 0.0
        %1509 = vmatpush1.xpose.msra.mxu0 0.0
        %1510 = vmatprep.subr.mxu0 0.0
        %1511 = vmatpush1.xpose.msra.mxu0 0.0
        %1512 = vmatprep.subr.mxu0 0.0
        %1513 = vmatpush1.xpose.msra.mxu0 0.0
        %1514 = vmatprep.subr.mxu0 0.0
        %1515 = vmatpush1.xpose.msra.mxu0 0.0
        %1516 = vmatprep.subr.mxu0 0.0
        %1517 = vmatpush1.xpose.msra.mxu0 0.0
        %1518 = vmatprep.mubr.f32.mxu0 0.0
        %1519 = vmatmul.mubr.f32.gmra.mrb[0].mxu0 %v1450
        %v1520 = vpop.f32.mrb[0].mxu0
        %v1521 = vadd.f32 0.0, %v1520
        %v1522 = vpop.f32.mrb[0].mxu0
        %1523 = vdwg.mxu0
        %1525 = vrot.lane.b32.xlu0 %v1439, 124
        %v1526 = vpop.permute.xlu0 %1525
        %1528 = vrot.lane.b32.xlu0 %v1441, 124
        %v1529 = vpop.permute.xlu0 %1528
        %v1530 = vsel %vm1114, %v1526, 0
        %v1532 = vsel %vm1114, %v1529, 0
        %1534 = vmatprep.subr.mxu0 0.0
        %1535 = vmatpush1.xpose.msra.mxu0 %v1532
        %1536 = vmatprep.subr.mxu0 0.0
        %1537 = vmatpush1.xpose.msra.mxu0 0.0
        %1538 = vmatprep.subr.mxu0 0.0
        %1539 = vmatpush1.xpose.msra.mxu0 0.0
        %1540 = vmatprep.subr.mxu0 0.0
        %1541 = vmatpush1.xpose.msra.mxu0 0.0
        %1542 = vmatprep.subr.mxu0 0.0
        %1543 = vmatpush1.xpose.msra.mxu0 0.0
        %1544 = vmatprep.subr.mxu0 0.0
        %1545 = vmatpush1.xpose.msra.mxu0 0.0
        %1546 = vmatprep.subr.mxu0 0.0
        %1547 = vmatpush1.xpose.msra.mxu0 0.0
        %1548 = vmatprep.subr.mxu0 0.0
        %1549 = vmatpush1.xpose.msra.mxu0 0.0
        %1550 = vmatprep.subr.mxu0 0.0
        %1551 = vmatpush1.xpose.msra.mxu0 0.0
        %1552 = vmatprep.subr.mxu0 0.0
        %1553 = vmatpush1.xpose.msra.mxu0 0.0
        %1554 = vmatprep.subr.mxu0 0.0
        %1555 = vmatpush1.xpose.msra.mxu0 0.0
        %1556 = vmatprep.subr.mxu0 0.0
        %1557 = vmatpush1.xpose.msra.mxu0 0.0
        %1558 = vmatprep.subr.mxu0 0.0
        %1559 = vmatpush1.xpose.msra.mxu0 0.0
        %1560 = vmatprep.subr.mxu0 0.0
        %1561 = vmatpush1.xpose.msra.mxu0 0.0
        %1562 = vmatprep.subr.mxu0 0.0
        %1563 = vmatpush1.xpose.msra.mxu0 0.0
        %1564 = vmatprep.subr.mxu0 0.0
        %1565 = vmatpush1.xpose.msra.mxu0 0.0
        %1566 = vmatprep.subr.mxu0 0.0
        %1567 = vmatpush1.xpose.msra.mxu0 0.0
        %1568 = vmatprep.subr.mxu0 0.0
        %1569 = vmatpush1.xpose.msra.mxu0 0.0
        %1570 = vmatprep.subr.mxu0 0.0
        %1571 = vmatpush1.xpose.msra.mxu0 0.0
        %1572 = vmatprep.subr.mxu0 0.0
        %1573 = vmatpush1.xpose.msra.mxu0 0.0
        %1574 = vmatprep.subr.mxu0 0.0
        %1575 = vmatpush1.xpose.msra.mxu0 0.0
        %1576 = vmatprep.subr.mxu0 0.0
        %1577 = vmatpush1.xpose.msra.mxu0 0.0
        %1578 = vmatprep.subr.mxu0 0.0
        %1579 = vmatpush1.xpose.msra.mxu0 0.0
        %1580 = vmatprep.subr.mxu0 0.0
        %1581 = vmatpush1.xpose.msra.mxu0 0.0
        %1582 = vmatprep.subr.mxu0 0.0
        %1583 = vmatpush1.xpose.msra.mxu0 0.0
        %1584 = vmatprep.subr.mxu0 0.0
        %1585 = vmatpush1.xpose.msra.mxu0 0.0
        %1586 = vmatprep.subr.mxu0 0.0
        %1587 = vmatpush1.xpose.msra.mxu0 0.0
        %1588 = vmatprep.subr.mxu0 0.0
        %1589 = vmatpush1.xpose.msra.mxu0 0.0
        %1590 = vmatprep.subr.mxu0 0.0
        %1591 = vmatpush1.xpose.msra.mxu0 0.0
        %1592 = vmatprep.subr.mxu0 0.0
        %1593 = vmatpush1.xpose.msra.mxu0 0.0
        %1594 = vmatprep.subr.mxu0 0.0
        %1595 = vmatpush1.xpose.msra.mxu0 0.0
        %1596 = vmatprep.subr.mxu0 0.0
        %1597 = vmatpush1.xpose.msra.mxu0 0.0
        %1598 = vmatprep.mubr.f32.mxu0 0.0
        %1599 = vmatmul.mubr.f32.gmra.mrb[0].mxu0 %v1530
        %v1600 = vpop.f32.mrb[0].mxu0
        %v1601 = vadd.f32 0.0, %v1600
        %v1602 = vpop.f32.mrb[0].mxu0
        %1603 = vdwg.mxu0
        %v1604 = vsel %vm1267, %v1521, -inf
        %1605 = vmax.xlane.f32.xlu0 %v1604
        %v1606 = vpop.xlane.xlu0 %1605
        %v1607 = vsel %vm1267, %v1601, -inf
        %1608 = vmax.xlane.f32.xlu0 %v1607
        %v1609 = vpop.xlane.xlu0 %1608
        %v1610 = vsub.f32 %v1521, %v1606
        %v1611 = vsub.f32 %v1601, %v1609
        %v1612 = vmul.f32 %v1610, 1.442695
        %v1613 = vpow.pop %v1612
        %v1614 = vmul.f32 %v1611, 1.442695
        %v1615 = vpow.pop %v1614
        %v1616 = vsel %vm1267, %v1613, 0.0
        %1617 = vadd.xlane.f32.xlu0 %v1616
        %v1618 = vpop.xlane.xlu0 %1617
        %v1619 = vsel %vm1267, %v1615, 0.0
        %1620 = vadd.xlane.f32.xlu0 %v1619
        %v1621 = vpop.xlane.xlu0 %1620
        %v1622 = vrcp.pop %v1618
        %v1623 = vrcp.pop %v1621
        %v1624 = vmul.f32 %v1613, %v1622
        %v1625 = vmul.f32 %v1615, %v1623
        %1627 = vrot.lane.b32.xlu0 %v1442, 124
        %v1628 = vpop.permute.xlu0 %1627
        %v1631 = vsel %vm1267, %v1624, 0
        %1633 = vmatprep.subr.mxu0 0.0
        %1634 = vmatpush1.msra.mxu0 %v1628
        %1635 = vmatprep.subr.mxu0 0.0
        %1636 = vmatpush1.msra.mxu0 0.0
        %1637 = vmatprep.subr.mxu0 0.0
        %1638 = vmatpush1.msra.mxu0 0.0
        %1639 = vmatprep.subr.mxu0 0.0
        %1640 = vmatpush1.msra.mxu0 0.0
        %1641 = vmatprep.subr.mxu0 0.0
        %1642 = vmatpush1.msra.mxu0 0.0
        %1643 = vmatprep.subr.mxu0 0.0
        %1644 = vmatpush1.msra.mxu0 0.0
        %1645 = vmatprep.subr.mxu0 0.0
        %1646 = vmatpush1.msra.mxu0 0.0
        %1647 = vmatprep.subr.mxu0 0.0
        %1648 = vmatpush1.msra.mxu0 0.0
        %1649 = vmatprep.subr.mxu0 0.0
        %1650 = vmatpush1.msra.mxu0 0.0
        %1651 = vmatprep.subr.mxu0 0.0
        %1652 = vmatpush1.msra.mxu0 0.0
        %1653 = vmatprep.subr.mxu0 0.0
        %1654 = vmatpush1.msra.mxu0 0.0
        %1655 = vmatprep.subr.mxu0 0.0
        %1656 = vmatpush1.msra.mxu0 0.0
        %1657 = vmatprep.subr.mxu0 0.0
        %1658 = vmatpush1.msra.mxu0 0.0
        %1659 = vmatprep.subr.mxu0 0.0
        %1660 = vmatpush1.msra.mxu0 0.0
        %1661 = vmatprep.subr.mxu0 0.0
        %1662 = vmatpush1.msra.mxu0 0.0
        %1663 = vmatprep.subr.mxu0 0.0
        %1664 = vmatpush1.msra.mxu0 0.0
        %1665 = vmatprep.subr.mxu0 0.0
        %1666 = vmatpush1.msra.mxu0 0.0
        %1667 = vmatprep.subr.mxu0 0.0
        %1668 = vmatpush1.msra.mxu0 0.0
        %1669 = vmatprep.subr.mxu0 0.0
        %1670 = vmatpush1.msra.mxu0 0.0
        %1671 = vmatprep.subr.mxu0 0.0
        %1672 = vmatpush1.msra.mxu0 0.0
        %1673 = vmatprep.subr.mxu0 0.0
        %1674 = vmatpush1.msra.mxu0 0.0
        %1675 = vmatprep.subr.mxu0 0.0
        %1676 = vmatpush1.msra.mxu0 0.0
        %1677 = vmatprep.subr.mxu0 0.0
        %1678 = vmatpush1.msra.mxu0 0.0
        %1679 = vmatprep.subr.mxu0 0.0
        %1680 = vmatpush1.msra.mxu0 0.0
        %1681 = vmatprep.subr.mxu0 0.0
        %1682 = vmatpush1.msra.mxu0 0.0
        %1683 = vmatprep.subr.mxu0 0.0
        %1684 = vmatpush1.msra.mxu0 0.0
        %1685 = vmatprep.subr.mxu0 0.0
        %1686 = vmatpush1.msra.mxu0 0.0
        %1687 = vmatprep.subr.mxu0 0.0
        %1688 = vmatpush1.msra.mxu0 0.0
        %1689 = vmatprep.subr.mxu0 0.0
        %1690 = vmatpush1.msra.mxu0 0.0
        %1691 = vmatprep.subr.mxu0 0.0
        %1692 = vmatpush1.msra.mxu0 0.0
        %1693 = vmatprep.subr.mxu0 0.0
        %1694 = vmatpush1.msra.mxu0 0.0
        %1695 = vmatprep.subr.mxu0 0.0
        %1696 = vmatpush1.msra.mxu0 0.0
        %1697 = vmatprep.mubr.f32.mxu0 0.0
        %1698 = vmatmul.mubr.f32.gmra.mrb[0].mxu0 %v1631
        %v1699 = vpop.f32.mrb[0].mxu0
        %v1700 = vadd.f32 0.0, %v1699
        %v1701 = vpop.f32.mrb[0].mxu0
        %1702 = vdwg.mxu0
        %1704 = vrot.lane.b32.xlu0 %v1443, 124
        %v1705 = vpop.permute.xlu0 %1704
        %v1708 = vsel %vm1267, %v1625, 0
        %1710 = vmatprep.subr.mxu0 0.0
        %1711 = vmatpush1.msra.mxu0 %v1705
        %1712 = vmatprep.subr.mxu0 0.0
        %1713 = vmatpush1.msra.mxu0 0.0
        %1714 = vmatprep.subr.mxu0 0.0
        %1715 = vmatpush1.msra.mxu0 0.0
        %1716 = vmatprep.subr.mxu0 0.0
        %1717 = vmatpush1.msra.mxu0 0.0
        %1718 = vmatprep.subr.mxu0 0.0
        %1719 = vmatpush1.msra.mxu0 0.0
        %1720 = vmatprep.subr.mxu0 0.0
        %1721 = vmatpush1.msra.mxu0 0.0
        %1722 = vmatprep.subr.mxu0 0.0
        %1723 = vmatpush1.msra.mxu0 0.0
        %1724 = vmatprep.subr.mxu0 0.0
        %1725 = vmatpush1.msra.mxu0 0.0
        %1726 = vmatprep.subr.mxu0 0.0
        %1727 = vmatpush1.msra.mxu0 0.0
        %1728 = vmatprep.subr.mxu0 0.0
        %1729 = vmatpush1.msra.mxu0 0.0
        %1730 = vmatprep.subr.mxu0 0.0
        %1731 = vmatpush1.msra.mxu0 0.0
        %1732 = vmatprep.subr.mxu0 0.0
        %1733 = vmatpush1.msra.mxu0 0.0
        %1734 = vmatprep.subr.mxu0 0.0
        %1735 = vmatpush1.msra.mxu0 0.0
        %1736 = vmatprep.subr.mxu0 0.0
        %1737 = vmatpush1.msra.mxu0 0.0
        %1738 = vmatprep.subr.mxu0 0.0
        %1739 = vmatpush1.msra.mxu0 0.0
        %1740 = vmatprep.subr.mxu0 0.0
        %1741 = vmatpush1.msra.mxu0 0.0
        %1742 = vmatprep.subr.mxu0 0.0
        %1743 = vmatpush1.msra.mxu0 0.0
        %1744 = vmatprep.subr.mxu0 0.0
        %1745 = vmatpush1.msra.mxu0 0.0
        %1746 = vmatprep.subr.mxu0 0.0
        %1747 = vmatpush1.msra.mxu0 0.0
        %1748 = vmatprep.subr.mxu0 0.0
        %1749 = vmatpush1.msra.mxu0 0.0
        %1750 = vmatprep.subr.mxu0 0.0
        %1751 = vmatpush1.msra.mxu0 0.0
        %1752 = vmatprep.subr.mxu0 0.0
        %1753 = vmatpush1.msra.mxu0 0.0
        %1754 = vmatprep.subr.mxu0 0.0
        %1755 = vmatpush1.msra.mxu0 0.0
        %1756 = vmatprep.subr.mxu0 0.0
        %1757 = vmatpush1.msra.mxu0 0.0
        %1758 = vmatprep.subr.mxu0 0.0
        %1759 = vmatpush1.msra.mxu0 0.0
        %1760 = vmatprep.subr.mxu0 0.0
        %1761 = vmatpush1.msra.mxu0 0.0
        %1762 = vmatprep.subr.mxu0 0.0
        %1763 = vmatpush1.msra.mxu0 0.0
        %1764 = vmatprep.subr.mxu0 0.0
        %1765 = vmatpush1.msra.mxu0 0.0
        %1766 = vmatprep.subr.mxu0 0.0
        %1767 = vmatpush1.msra.mxu0 0.0
        %1768 = vmatprep.subr.mxu0 0.0
        %1769 = vmatpush1.msra.mxu0 0.0
        %1770 = vmatprep.subr.mxu0 0.0
        %1771 = vmatpush1.msra.mxu0 0.0
        %1772 = vmatprep.subr.mxu0 0.0
        %1773 = vmatpush1.msra.mxu0 0.0
        %1774 = vmatprep.mubr.f32.mxu0 0.0
        %1775 = vmatmul.mubr.f32.gmra.mrb[0].mxu0 %v1708
        %v1776 = vpop.f32.mrb[0].mxu0
        %v1777 = vadd.f32 0.0, %v1776
        %v1778 = vpop.f32.mrb[0].mxu0
        %1779 = vdwg.mxu0
        %1782 = vrot.lane.b32.xlu0 %v1700, 4
        %v1783 = vpop.permute.xlu0 %1782
        %1784 = vrot.lane.b32.xlu0 %v1777, 4
        %v1785 = vpop.permute.xlu0 %1784
        %vm1788 = vcmask 64544
        %1789 = vst.msk [vmem:[#allocation5] sm:$0xff] %vm1788, %v1783
        %1790 = vst.msk [vmem:[#allocation5 + $0x8] sm:$0xff] %vm1788, %v1785
        %v1791 = vld [vmem:[#allocation2] sm:$0xff]
        %v1792 = vld [vmem:[#allocation2 + $0x8] sm:$0xff]
        %v1793 = vld [vmem:[#allocation3] sm:$0xff]
        %v1794 = vld [vmem:[#allocation3 + $0x8] sm:$0xff]
        %v1795 = vld [vmem:[#allocation4] sm:$0xff]
        %v1796 = vld [vmem:[#allocation4 + $0x8] sm:$0xff]
        %1798 = vrot.lane.b32.xlu0 %v1791, 120
        %v1799 = vpop.permute.xlu0 %1798
        %1801 = vrot.lane.b32.xlu0 %v1793, 120
        %v1802 = vpop.permute.xlu0 %1801
        %v1803 = vsel %vm1114, %v1799, 0
        %v1805 = vsel %vm1114, %v1802, 0
        %1807 = vmatprep.subr.mxu0 0.0
        %1808 = vmatpush1.xpose.msra.mxu0 %v1805
        %1809 = vmatprep.subr.mxu0 0.0
        %1810 = vmatpush1.xpose.msra.mxu0 0.0
        %1811 = vmatprep.subr.mxu0 0.0
        %1812 = vmatpush1.xpose.msra.mxu0 0.0
        %1813 = vmatprep.subr.mxu0 0.0
        %1814 = vmatpush1.xpose.msra.mxu0 0.0
        %1815 = vmatprep.subr.mxu0 0.0
        %1816 = vmatpush1.xpose.msra.mxu0 0.0
        %1817 = vmatprep.subr.mxu0 0.0
        %1818 = vmatpush1.xpose.msra.mxu0 0.0
        %1819 = vmatprep.subr.mxu0 0.0
        %1820 = vmatpush1.xpose.msra.mxu0 0.0
        %1821 = vmatprep.subr.mxu0 0.0
        %1822 = vmatpush1.xpose.msra.mxu0 0.0
        %1823 = vmatprep.subr.mxu0 0.0
        %1824 = vmatpush1.xpose.msra.mxu0 0.0
        %1825 = vmatprep.subr.mxu0 0.0
        %1826 = vmatpush1.xpose.msra.mxu0 0.0
        %1827 = vmatprep.subr.mxu0 0.0
        %1828 = vmatpush1.xpose.msra.mxu0 0.0
        %1829 = vmatprep.subr.mxu0 0.0
        %1830 = vmatpush1.xpose.msra.mxu0 0.0
        %1831 = vmatprep.subr.mxu0 0.0
        %1832 = vmatpush1.xpose.msra.mxu0 0.0
        %1833 = vmatprep.subr.mxu0 0.0
        %1834 = vmatpush1.xpose.msra.mxu0 0.0
        %1835 = vmatprep.subr.mxu0 0.0
        %1836 = vmatpush1.xpose.msra.mxu0 0.0
        %1837 = vmatprep.subr.mxu0 0.0
        %1838 = vmatpush1.xpose.msra.mxu0 0.0
        %1839 = vmatprep.subr.mxu0 0.0
        %1840 = vmatpush1.xpose.msra.mxu0 0.0
        %1841 = vmatprep.subr.mxu0 0.0
        %1842 = vmatpush1.xpose.msra.mxu0 0.0
        %1843 = vmatprep.subr.mxu0 0.0
        %1844 = vmatpush1.xpose.msra.mxu0 0.0
        %1845 = vmatprep.subr.mxu0 0.0
        %1846 = vmatpush1.xpose.msra.mxu0 0.0
        %1847 = vmatprep.subr.mxu0 0.0
        %1848 = vmatpush1.xpose.msra.mxu0 0.0
        %1849 = vmatprep.subr.mxu0 0.0
        %1850 = vmatpush1.xpose.msra.mxu0 0.0
        %1851 = vmatprep.subr.mxu0 0.0
        %1852 = vmatpush1.xpose.msra.mxu0 0.0
        %1853 = vmatprep.subr.mxu0 0.0
        %1854 = vmatpush1.xpose.msra.mxu0 0.0
        %1855 = vmatprep.subr.mxu0 0.0
        %1856 = vmatpush1.xpose.msra.mxu0 0.0
        %1857 = vmatprep.subr.mxu0 0.0
        %1858 = vmatpush1.xpose.msra.mxu0 0.0
        %1859 = vmatprep.subr.mxu0 0.0
        %1860 = vmatpush1.xpose.msra.mxu0 0.0
        %1861 = vmatprep.subr.mxu0 0.0
        %1862 = vmatpush1.xpose.msra.mxu0 0.0
        %1863 = vmatprep.subr.mxu0 0.0
        %1864 = vmatpush1.xpose.msra.mxu0 0.0
        %1865 = vmatprep.subr.mxu0 0.0
        %1866 = vmatpush1.xpose.msra.mxu0 0.0
        %1867 = vmatprep.subr.mxu0 0.0
        %1868 = vmatpush1.xpose.msra.mxu0 0.0
        %1869 = vmatprep.subr.mxu0 0.0
        %1870 = vmatpush1.xpose.msra.mxu0 0.0
        %1871 = vmatprep.mubr.f32.mxu0 0.0
        %1872 = vmatmul.mubr.f32.gmra.mrb[0].mxu0 %v1803
        %v1873 = vpop.f32.mrb[0].mxu0
        %v1874 = vadd.f32 0.0, %v1873
        %v1875 = vpop.f32.mrb[0].mxu0
        %1876 = vdwg.mxu0
        %1878 = vrot.lane.b32.xlu0 %v1792, 120
        %v1879 = vpop.permute.xlu0 %1878
        %1881 = vrot.lane.b32.xlu0 %v1794, 120
        %v1882 = vpop.permute.xlu0 %1881
        %v1883 = vsel %vm1114, %v1879, 0
        %v1885 = vsel %vm1114, %v1882, 0
        %1887 = vmatprep.subr.mxu0 0.0
        %1888 = vmatpush1.xpose.msra.mxu0 %v1885
        %1889 = vmatprep.subr.mxu0 0.0
        %1890 = vmatpush1.xpose.msra.mxu0 0.0
        %1891 = vmatprep.subr.mxu0 0.0
        %1892 = vmatpush1.xpose.msra.mxu0 0.0
        %1893 = vmatprep.subr.mxu0 0.0
        %1894 = vmatpush1.xpose.msra.mxu0 0.0
        %1895 = vmatprep.subr.mxu0 0.0
        %1896 = vmatpush1.xpose.msra.mxu0 0.0
        %1897 = vmatprep.subr.mxu0 0.0
        %1898 = vmatpush1.xpose.msra.mxu0 0.0
        %1899 = vmatprep.subr.mxu0 0.0
        %1900 = vmatpush1.xpose.msra.mxu0 0.0
        %1901 = vmatprep.subr.mxu0 0.0
        %1902 = vmatpush1.xpose.msra.mxu0 0.0
        %1903 = vmatprep.subr.mxu0 0.0
        %1904 = vmatpush1.xpose.msra.mxu0 0.0
        %1905 = vmatprep.subr.mxu0 0.0
        %1906 = vmatpush1.xpose.msra.mxu0 0.0
        %1907 = vmatprep.subr.mxu0 0.0
        %1908 = vmatpush1.xpose.msra.mxu0 0.0
        %1909 = vmatprep.subr.mxu0 0.0
        %1910 = vmatpush1.xpose.msra.mxu0 0.0
        %1911 = vmatprep.subr.mxu0 0.0
        %1912 = vmatpush1.xpose.msra.mxu0 0.0
        %1913 = vmatprep.subr.mxu0 0.0
        %1914 = vmatpush1.xpose.msra.mxu0 0.0
        %1915 = vmatprep.subr.mxu0 0.0
        %1916 = vmatpush1.xpose.msra.mxu0 0.0
        %1917 = vmatprep.subr.mxu0 0.0
        %1918 = vmatpush1.xpose.msra.mxu0 0.0
        %1919 = vmatprep.subr.mxu0 0.0
        %1920 = vmatpush1.xpose.msra.mxu0 0.0
        %1921 = vmatprep.subr.mxu0 0.0
        %1922 = vmatpush1.xpose.msra.mxu0 0.0
        %1923 = vmatprep.subr.mxu0 0.0
        %1924 = vmatpush1.xpose.msra.mxu0 0.0
        %1925 = vmatprep.subr.mxu0 0.0
        %1926 = vmatpush1.xpose.msra.mxu0 0.0
        %1927 = vmatprep.subr.mxu0 0.0
        %1928 = vmatpush1.xpose.msra.mxu0 0.0
        %1929 = vmatprep.subr.mxu0 0.0
        %1930 = vmatpush1.xpose.msra.mxu0 0.0
        %1931 = vmatprep.subr.mxu0 0.0
        %1932 = vmatpush1.xpose.msra.mxu0 0.0
        %1933 = vmatprep.subr.mxu0 0.0
        %1934 = vmatpush1.xpose.msra.mxu0 0.0
        %1935 = vmatprep.subr.mxu0 0.0
        %1936 = vmatpush1.xpose.msra.mxu0 0.0
        %1937 = vmatprep.subr.mxu0 0.0
        %1938 = vmatpush1.xpose.msra.mxu0 0.0
        %1939 = vmatprep.subr.mxu0 0.0
        %1940 = vmatpush1.xpose.msra.mxu0 0.0
        %1941 = vmatprep.subr.mxu0 0.0
        %1942 = vmatpush1.xpose.msra.mxu0 0.0
        %1943 = vmatprep.subr.mxu0 0.0
        %1944 = vmatpush1.xpose.msra.mxu0 0.0
        %1945 = vmatprep.subr.mxu0 0.0
        %1946 = vmatpush1.xpose.msra.mxu0 0.0
        %1947 = vmatprep.subr.mxu0 0.0
        %1948 = vmatpush1.xpose.msra.mxu0 0.0
        %1949 = vmatprep.subr.mxu0 0.0
        %1950 = vmatpush1.xpose.msra.mxu0 0.0
        %1951 = vmatprep.mubr.f32.mxu0 0.0
        %1952 = vmatmul.mubr.f32.gmra.mrb[0].mxu0 %v1883
        %v1953 = vpop.f32.mrb[0].mxu0
        %v1954 = vadd.f32 0.0, %v1953
        %v1955 = vpop.f32.mrb[0].mxu0
        %1956 = vdwg.mxu0
        %v1957 = vsel %vm1267, %v1874, -inf
        %1958 = vmax.xlane.f32.xlu0 %v1957
        %v1959 = vpop.xlane.xlu0 %1958
        %v1960 = vsel %vm1267, %v1954, -inf
        %1961 = vmax.xlane.f32.xlu0 %v1960
        %v1962 = vpop.xlane.xlu0 %1961
        %v1963 = vsub.f32 %v1874, %v1959
        %v1964 = vsub.f32 %v1954, %v1962
        %v1965 = vmul.f32 %v1963, 1.442695
        %v1966 = vpow.pop %v1965
        %v1967 = vmul.f32 %v1964, 1.442695
        %v1968 = vpow.pop %v1967
        %v1969 = vsel %vm1267, %v1966, 0.0
        %1970 = vadd.xlane.f32.xlu0 %v1969
        %v1971 = vpop.xlane.xlu0 %1970
        %v1972 = vsel %vm1267, %v1968, 0.0
        %1973 = vadd.xlane.f32.xlu0 %v1972
        %v1974 = vpop.xlane.xlu0 %1973
        %v1975 = vrcp.pop %v1971
        %v1976 = vrcp.pop %v1974
        %v1977 = vmul.f32 %v1966, %v1975
        %v1978 = vmul.f32 %v1968, %v1976
        %1980 = vrot.lane.b32.xlu0 %v1795, 120
        %v1981 = vpop.permute.xlu0 %1980
        %v1984 = vsel %vm1267, %v1977, 0
        %1986 = vmatprep.subr.mxu0 0.0
        %1987 = vmatpush1.msra.mxu0 %v1981
        %1988 = vmatprep.subr.mxu0 0.0
        %1989 = vmatpush1.msra.mxu0 0.0
        %1990 = vmatprep.subr.mxu0 0.0
        %1991 = vmatpush1.msra.mxu0 0.0
        %1992 = vmatprep.subr.mxu0 0.0
        %1993 = vmatpush1.msra.mxu0 0.0
        %1994 = vmatprep.subr.mxu0 0.0
        %1995 = vmatpush1.msra.mxu0 0.0
        %1996 = vmatprep.subr.mxu0 0.0
        %1997 = vmatpush1.msra.mxu0 0.0
        %1998 = vmatprep.subr.mxu0 0.0
        %1999 = vmatpush1.msra.mxu0 0.0
        %2000 = vmatprep.subr.mxu0 0.0
        %2001 = vmatpush1.msra.mxu0 0.0
        %2002 = vmatprep.subr.mxu0 0.0
        %2003 = vmatpush1.msra.mxu0 0.0
        %2004 = vmatprep.subr.mxu0 0.0
        %2005 = vmatpush1.msra.mxu0 0.0
        %2006 = vmatprep.subr.mxu0 0.0
        %2007 = vmatpush1.msra.mxu0 0.0
        %2008 = vmatprep.subr.mxu0 0.0
        %2009 = vmatpush1.msra.mxu0 0.0
        %2010 = vmatprep.subr.mxu0 0.0
        %2011 = vmatpush1.msra.mxu0 0.0
        %2012 = vmatprep.subr.mxu0 0.0
        %2013 = vmatpush1.msra.mxu0 0.0
        %2014 = vmatprep.subr.mxu0 0.0
        %2015 = vmatpush1.msra.mxu0 0.0
        %2016 = vmatprep.subr.mxu0 0.0
        %2017 = vmatpush1.msra.mxu0 0.0
        %2018 = vmatprep.subr.mxu0 0.0
        %2019 = vmatpush1.msra.mxu0 0.0
        %2020 = vmatprep.subr.mxu0 0.0
        %2021 = vmatpush1.msra.mxu0 0.0
        %2022 = vmatprep.subr.mxu0 0.0
        %2023 = vmatpush1.msra.mxu0 0.0
        %2024 = vmatprep.subr.mxu0 0.0
        %2025 = vmatpush1.msra.mxu0 0.0
        %2026 = vmatprep.subr.mxu0 0.0
        %2027 = vmatpush1.msra.mxu0 0.0
        %2028 = vmatprep.subr.mxu0 0.0
        %2029 = vmatpush1.msra.mxu0 0.0
        %2030 = vmatprep.subr.mxu0 0.0
        %2031 = vmatpush1.msra.mxu0 0.0
        %2032 = vmatprep.subr.mxu0 0.0
        %2033 = vmatpush1.msra.mxu0 0.0
        %2034 = vmatprep.subr.mxu0 0.0
        %2035 = vmatpush1.msra.mxu0 0.0
        %2036 = vmatprep.subr.mxu0 0.0
        %2037 = vmatpush1.msra.mxu0 0.0
        %2038 = vmatprep.subr.mxu0 0.0
        %2039 = vmatpush1.msra.mxu0 0.0
        %2040 = vmatprep.subr.mxu0 0.0
        %2041 = vmatpush1.msra.mxu0 0.0
        %2042 = vmatprep.subr.mxu0 0.0
        %2043 = vmatpush1.msra.mxu0 0.0
        %2044 = vmatprep.subr.mxu0 0.0
        %2045 = vmatpush1.msra.mxu0 0.0
        %2046 = vmatprep.subr.mxu0 0.0
        %2047 = vmatpush1.msra.mxu0 0.0
        %2048 = vmatprep.subr.mxu0 0.0
        %2049 = vmatpush1.msra.mxu0 0.0
        %2050 = vmatprep.mubr.f32.mxu0 0.0
        %2051 = vmatmul.mubr.f32.gmra.mrb[0].mxu0 %v1984
        %v2052 = vpop.f32.mrb[0].mxu0
        %v2053 = vadd.f32 0.0, %v2052
        %v2054 = vpop.f32.mrb[0].mxu0
        %2055 = vdwg.mxu0
        %2057 = vrot.lane.b32.xlu0 %v1796, 120
        %v2058 = vpop.permute.xlu0 %2057
        %v2061 = vsel %vm1267, %v1978, 0
        %2063 = vmatprep.subr.mxu0 0.0
        %2064 = vmatpush1.msra.mxu0 %v2058
        %2065 = vmatprep.subr.mxu0 0.0
        %2066 = vmatpush1.msra.mxu0 0.0
        %2067 = vmatprep.subr.mxu0 0.0
        %2068 = vmatpush1.msra.mxu0 0.0
        %2069 = vmatprep.subr.mxu0 0.0
        %2070 = vmatpush1.msra.mxu0 0.0
        %2071 = vmatprep.subr.mxu0 0.0
        %2072 = vmatpush1.msra.mxu0 0.0
        %2073 = vmatprep.subr.mxu0 0.0
        %2074 = vmatpush1.msra.mxu0 0.0
        %2075 = vmatprep.subr.mxu0 0.0
        %2076 = vmatpush1.msra.mxu0 0.0
        %2077 = vmatprep.subr.mxu0 0.0
        %2078 = vmatpush1.msra.mxu0 0.0
        %2079 = vmatprep.subr.mxu0 0.0
        %2080 = vmatpush1.msra.mxu0 0.0
        %2081 = vmatprep.subr.mxu0 0.0
        %2082 = vmatpush1.msra.mxu0 0.0
        %2083 = vmatprep.subr.mxu0 0.0
        %2084 = vmatpush1.msra.mxu0 0.0
        %2085 = vmatprep.subr.mxu0 0.0
        %2086 = vmatpush1.msra.mxu0 0.0
        %2087 = vmatprep.subr.mxu0 0.0
        %2088 = vmatpush1.msra.mxu0 0.0
        %2089 = vmatprep.subr.mxu0 0.0
        %2090 = vmatpush1.msra.mxu0 0.0
        %2091 = vmatprep.subr.mxu0 0.0
        %2092 = vmatpush1.msra.mxu0 0.0
        %2093 = vmatprep.subr.mxu0 0.0
        %2094 = vmatpush1.msra.mxu0 0.0
        %2095 = vmatprep.subr.mxu0 0.0
        %2096 = vmatpush1.msra.mxu0 0.0
        %2097 = vmatprep.subr.mxu0 0.0
        %2098 = vmatpush1.msra.mxu0 0.0
        %2099 = vmatprep.subr.mxu0 0.0
        %2100 = vmatpush1.msra.mxu0 0.0
        %2101 = vmatprep.subr.mxu0 0.0
        %2102 = vmatpush1.msra.mxu0 0.0
        %2103 = vmatprep.subr.mxu0 0.0
        %2104 = vmatpush1.msra.mxu0 0.0
        %2105 = vmatprep.subr.mxu0 0.0
        %2106 = vmatpush1.msra.mxu0 0.0
        %2107 = vmatprep.subr.mxu0 0.0
        %2108 = vmatpush1.msra.mxu0 0.0
        %2109 = vmatprep.subr.mxu0 0.0
        %2110 = vmatpush1.msra.mxu0 0.0
        %2111 = vmatprep.subr.mxu0 0.0
        %2112 = vmatpush1.msra.mxu0 0.0
        %2113 = vmatprep.subr.mxu0 0.0
        %2114 = vmatpush1.msra.mxu0 0.0
        %2115 = vmatprep.subr.mxu0 0.0
        %2116 = vmatpush1.msra.mxu0 0.0
        %2117 = vmatprep.subr.mxu0 0.0
        %2118 = vmatpush1.msra.mxu0 0.0
        %2119 = vmatprep.subr.mxu0 0.0
        %2120 = vmatpush1.msra.mxu0 0.0
        %2121 = vmatprep.subr.mxu0 0.0
        %2122 = vmatpush1.msra.mxu0 0.0
        %2123 = vmatprep.subr.mxu0 0.0
        %2124 = vmatpush1.msra.mxu0 0.0
        %2125 = vmatprep.subr.mxu0 0.0
        %2126 = vmatpush1.msra.mxu0 0.0
        %2127 = vmatprep.mubr.f32.mxu0 0.0
        %2128 = vmatmul.mubr.f32.gmra.mrb[0].mxu0 %v2061
        %v2129 = vpop.f32.mrb[0].mxu0
        %v2130 = vadd.f32 0.0, %v2129
        %v2131 = vpop.f32.mrb[0].mxu0
        %2132 = vdwg.mxu0
        %2135 = vrot.lane.b32.xlu0 %v2053, 8
        %v2136 = vpop.permute.xlu0 %2135
        %2137 = vrot.lane.b32.xlu0 %v2130, 8
        %v2138 = vpop.permute.xlu0 %2137
        %vm2141 = vcmask 97344
        %2142 = vst.msk [vmem:[#allocation5] sm:$0xff] %vm2141, %v2136
        %2143 = vst.msk [vmem:[#allocation5 + $0x8] sm:$0xff] %vm2141, %v2138
        %v2144 = vld [vmem:[#allocation2] sm:$0xff]
        %v2145 = vld [vmem:[#allocation2 + $0x8] sm:$0xff]
        %v2146 = vld [vmem:[#allocation3] sm:$0xff]
        %v2147 = vld [vmem:[#allocation3 + $0x8] sm:$0xff]
        %v2148 = vld [vmem:[#allocation4] sm:$0xff]
        %v2149 = vld [vmem:[#allocation4 + $0x8] sm:$0xff]
        %2151 = vrot.lane.b32.xlu0 %v2144, 116
        %v2152 = vpop.permute.xlu0 %2151
        %2154 = vrot.lane.b32.xlu0 %v2146, 116
        %v2155 = vpop.permute.xlu0 %2154
        %v2156 = vsel %vm1114, %v2152, 0
        %v2158 = vsel %vm1114, %v2155, 0
        %2160 = vmatprep.subr.mxu0 0.0
        %2161 = vmatpush1.xpose.msra.mxu0 %v2158
        %2162 = vmatprep.subr.mxu0 0.0
        %2163 = vmatpush1.xpose.msra.mxu0 0.0
        %2164 = vmatprep.subr.mxu0 0.0
        %2165 = vmatpush1.xpose.msra.mxu0 0.0
        %2166 = vmatprep.subr.mxu0 0.0
        %2167 = vmatpush1.xpose.msra.mxu0 0.0
        %2168 = vmatprep.subr.mxu0 0.0
        %2169 = vmatpush1.xpose.msra.mxu0 0.0
        %2170 = vmatprep.subr.mxu0 0.0
        %2171 = vmatpush1.xpose.msra.mxu0 0.0
        %2172 = vmatprep.subr.mxu0 0.0
        %2173 = vmatpush1.xpose.msra.mxu0 0.0
        %2174 = vmatprep.subr.mxu0 0.0
        %2175 = vmatpush1.xpose.msra.mxu0 0.0
        %2176 = vmatprep.subr.mxu0 0.0
        %2177 = vmatpush1.xpose.msra.mxu0 0.0
        %2178 = vmatprep.subr.mxu0 0.0
        %2179 = vmatpush1.xpose.msra.mxu0 0.0
        %2180 = vmatprep.subr.mxu0 0.0
        %2181 = vmatpush1.xpose.msra.mxu0 0.0
        %2182 = vmatprep.subr.mxu0 0.0
        %2183 = vmatpush1.xpose.msra.mxu0 0.0
        %2184 = vmatprep.subr.mxu0 0.0
        %2185 = vmatpush1.xpose.msra.mxu0 0.0
        %2186 = vmatprep.subr.mxu0 0.0
        %2187 = vmatpush1.xpose.msra.mxu0 0.0
        %2188 = vmatprep.subr.mxu0 0.0
        %2189 = vmatpush1.xpose.msra.mxu0 0.0
        %2190 = vmatprep.subr.mxu0 0.0
        %2191 = vmatpush1.xpose.msra.mxu0 0.0
        %2192 = vmatprep.subr.mxu0 0.0
        %2193 = vmatpush1.xpose.msra.mxu0 0.0
        %2194 = vmatprep.subr.mxu0 0.0
        %2195 = vmatpush1.xpose.msra.mxu0 0.0
        %2196 = vmatprep.subr.mxu0 0.0
        %2197 = vmatpush1.xpose.msra.mxu0 0.0
        %2198 = vmatprep.subr.mxu0 0.0
        %2199 = vmatpush1.xpose.msra.mxu0 0.0
        %2200 = vmatprep.subr.mxu0 0.0
        %2201 = vmatpush1.xpose.msra.mxu0 0.0
        %2202 = vmatprep.subr.mxu0 0.0
        %2203 = vmatpush1.xpose.msra.mxu0 0.0
        %2204 = vmatprep.subr.mxu0 0.0
        %2205 = vmatpush1.xpose.msra.mxu0 0.0
        %2206 = vmatprep.subr.mxu0 0.0
        %2207 = vmatpush1.xpose.msra.mxu0 0.0
        %2208 = vmatprep.subr.mxu0 0.0
        %2209 = vmatpush1.xpose.msra.mxu0 0.0
        %2210 = vmatprep.subr.mxu0 0.0
        %2211 = vmatpush1.xpose.msra.mxu0 0.0
        %2212 = vmatprep.subr.mxu0 0.0
        %2213 = vmatpush1.xpose.msra.mxu0 0.0
        %2214 = vmatprep.subr.mxu0 0.0
        %2215 = vmatpush1.xpose.msra.mxu0 0.0
        %2216 = vmatprep.subr.mxu0 0.0
        %2217 = vmatpush1.xpose.msra.mxu0 0.0
        %2218 = vmatprep.subr.mxu0 0.0
        %2219 = vmatpush1.xpose.msra.mxu0 0.0
        %2220 = vmatprep.subr.mxu0 0.0
        %2221 = vmatpush1.xpose.msra.mxu0 0.0
        %2222 = vmatprep.subr.mxu0 0.0
        %2223 = vmatpush1.xpose.msra.mxu0 0.0
        %2224 = vmatprep.mubr.f32.mxu0 0.0
        %2225 = vmatmul.mubr.f32.gmra.mrb[0].mxu0 %v2156
        %v2226 = vpop.f32.mrb[0].mxu0
        %v2227 = vadd.f32 0.0, %v2226
        %v2228 = vpop.f32.mrb[0].mxu0
        %2229 = vdwg.mxu0
        %2231 = vrot.lane.b32.xlu0 %v2145, 116
        %v2232 = vpop.permute.xlu0 %2231
        %2234 = vrot.lane.b32.xlu0 %v2147, 116
        %v2235 = vpop.permute.xlu0 %2234
        %v2236 = vsel %vm1114, %v2232, 0
        %v2238 = vsel %vm1114, %v2235, 0
        %2240 = vmatprep.subr.mxu0 0.0
        %2241 = vmatpush1.xpose.msra.mxu0 %v2238
        %2242 = vmatprep.subr.mxu0 0.0
        %2243 = vmatpush1.xpose.msra.mxu0 0.0
        %2244 = vmatprep.subr.mxu0 0.0
        %2245 = vmatpush1.xpose.msra.mxu0 0.0
        %2246 = vmatprep.subr.mxu0 0.0
        %2247 = vmatpush1.xpose.msra.mxu0 0.0
        %2248 = vmatprep.subr.mxu0 0.0
        %2249 = vmatpush1.xpose.msra.mxu0 0.0
        %2250 = vmatprep.subr.mxu0 0.0
        %2251 = vmatpush1.xpose.msra.mxu0 0.0
        %2252 = vmatprep.subr.mxu0 0.0
        %2253 = vmatpush1.xpose.msra.mxu0 0.0
        %2254 = vmatprep.subr.mxu0 0.0
        %2255 = vmatpush1.xpose.msra.mxu0 0.0
        %2256 = vmatprep.subr.mxu0 0.0
        %2257 = vmatpush1.xpose.msra.mxu0 0.0
        %2258 = vmatprep.subr.mxu0 0.0
        %2259 = vmatpush1.xpose.msra.mxu0 0.0
        %2260 = vmatprep.subr.mxu0 0.0
        %2261 = vmatpush1.xpose.msra.mxu0 0.0
        %2262 = vmatprep.subr.mxu0 0.0
        %2263 = vmatpush1.xpose.msra.mxu0 0.0
        %2264 = vmatprep.subr.mxu0 0.0
        %2265 = vmatpush1.xpose.msra.mxu0 0.0
        %2266 = vmatprep.subr.mxu0 0.0
        %2267 = vmatpush1.xpose.msra.mxu0 0.0
        %2268 = vmatprep.subr.mxu0 0.0
        %2269 = vmatpush1.xpose.msra.mxu0 0.0
        %2270 = vmatprep.subr.mxu0 0.0
        %2271 = vmatpush1.xpose.msra.mxu0 0.0
        %2272 = vmatprep.subr.mxu0 0.0
        %2273 = vmatpush1.xpose.msra.mxu0 0.0
        %2274 = vmatprep.subr.mxu0 0.0
        %2275 = vmatpush1.xpose.msra.mxu0 0.0
        %2276 = vmatprep.subr.mxu0 0.0
        %2277 = vmatpush1.xpose.msra.mxu0 0.0
        %2278 = vmatprep.subr.mxu0 0.0
        %2279 = vmatpush1.xpose.msra.mxu0 0.0
        %2280 = vmatprep.subr.mxu0 0.0
        %2281 = vmatpush1.xpose.msra.mxu0 0.0
        %2282 = vmatprep.subr.mxu0 0.0
        %2283 = vmatpush1.xpose.msra.mxu0 0.0
        %2284 = vmatprep.subr.mxu0 0.0
        %2285 = vmatpush1.xpose.msra.mxu0 0.0
        %2286 = vmatprep.subr.mxu0 0.0
        %2287 = vmatpush1.xpose.msra.mxu0 0.0
        %2288 = vmatprep.subr.mxu0 0.0
        %2289 = vmatpush1.xpose.msra.mxu0 0.0
        %2290 = vmatprep.subr.mxu0 0.0
        %2291 = vmatpush1.xpose.msra.mxu0 0.0
        %2292 = vmatprep.subr.mxu0 0.0
        %2293 = vmatpush1.xpose.msra.mxu0 0.0
        %2294 = vmatprep.subr.mxu0 0.0
        %2295 = vmatpush1.xpose.msra.mxu0 0.0
        %2296 = vmatprep.subr.mxu0 0.0
        %2297 = vmatpush1.xpose.msra.mxu0 0.0
        %2298 = vmatprep.subr.mxu0 0.0
        %2299 = vmatpush1.xpose.msra.mxu0 0.0
        %2300 = vmatprep.subr.mxu0 0.0
        %2301 = vmatpush1.xpose.msra.mxu0 0.0
        %2302 = vmatprep.subr.mxu0 0.0
        %2303 = vmatpush1.xpose.msra.mxu0 0.0
        %2304 = vmatprep.mubr.f32.mxu0 0.0
        %2305 = vmatmul.mubr.f32.gmra.mrb[0].mxu0 %v2236
        %v2306 = vpop.f32.mrb[0].mxu0
        %v2307 = vadd.f32 0.0, %v2306
        %v2308 = vpop.f32.mrb[0].mxu0
        %2309 = vdwg.mxu0
        %v2310 = vsel %vm1267, %v2227, -inf
        %2311 = vmax.xlane.f32.xlu0 %v2310
        %v2312 = vpop.xlane.xlu0 %2311
        %v2313 = vsel %vm1267, %v2307, -inf
        %2314 = vmax.xlane.f32.xlu0 %v2313
        %v2315 = vpop.xlane.xlu0 %2314
        %v2316 = vsub.f32 %v2227, %v2312
        %v2317 = vsub.f32 %v2307, %v2315
        %v2318 = vmul.f32 %v2316, 1.442695
        %v2319 = vpow.pop %v2318
        %v2320 = vmul.f32 %v2317, 1.442695
        %v2321 = vpow.pop %v2320
        %v2322 = vsel %vm1267, %v2319, 0.0
        %2323 = vadd.xlane.f32.xlu0 %v2322
        %v2324 = vpop.xlane.xlu0 %2323
        %v2325 = vsel %vm1267, %v2321, 0.0
        %2326 = vadd.xlane.f32.xlu0 %v2325
        %v2327 = vpop.xlane.xlu0 %2326
        %v2328 = vrcp.pop %v2324
        %v2329 = vrcp.pop %v2327
        %v2330 = vmul.f32 %v2319, %v2328
        %v2331 = vmul.f32 %v2321, %v2329
        %2333 = vrot.lane.b32.xlu0 %v2148, 116
        %v2334 = vpop.permute.xlu0 %2333
        %v2337 = vsel %vm1267, %v2330, 0
        %2339 = vmatprep.subr.mxu0 0.0
        %2340 = vmatpush1.msra.mxu0 %v2334
        %2341 = vmatprep.subr.mxu0 0.0
        %2342 = vmatpush1.msra.mxu0 0.0
        %2343 = vmatprep.subr.mxu0 0.0
        %2344 = vmatpush1.msra.mxu0 0.0
        %2345 = vmatprep.subr.mxu0 0.0
        %2346 = vmatpush1.msra.mxu0 0.0
        %2347 = vmatprep.subr.mxu0 0.0
        %2348 = vmatpush1.msra.mxu0 0.0
        %2349 = vmatprep.subr.mxu0 0.0
        %2350 = vmatpush1.msra.mxu0 0.0
        %2351 = vmatprep.subr.mxu0 0.0
        %2352 = vmatpush1.msra.mxu0 0.0
        %2353 = vmatprep.subr.mxu0 0.0
        %2354 = vmatpush1.msra.mxu0 0.0
        %2355 = vmatprep.subr.mxu0 0.0
        %2356 = vmatpush1.msra.mxu0 0.0
        %2357 = vmatprep.subr.mxu0 0.0
        %2358 = vmatpush1.msra.mxu0 0.0
        %2359 = vmatprep.subr.mxu0 0.0
        %2360 = vmatpush1.msra.mxu0 0.0
        %2361 = vmatprep.subr.mxu0 0.0
        %2362 = vmatpush1.msra.mxu0 0.0
        %2363 = vmatprep.subr.mxu0 0.0
        %2364 = vmatpush1.msra.mxu0 0.0
        %2365 = vmatprep.subr.mxu0 0.0
        %2366 = vmatpush1.msra.mxu0 0.0
        %2367 = vmatprep.subr.mxu0 0.0
        %2368 = vmatpush1.msra.mxu0 0.0
        %2369 = vmatprep.subr.mxu0 0.0
        %2370 = vmatpush1.msra.mxu0 0.0
        %2371 = vmatprep.subr.mxu0 0.0
        %2372 = vmatpush1.msra.mxu0 0.0
        %2373 = vmatprep.subr.mxu0 0.0
        %2374 = vmatpush1.msra.mxu0 0.0
        %2375 = vmatprep.subr.mxu0 0.0
        %2376 = vmatpush1.msra.mxu0 0.0
        %2377 = vmatprep.subr.mxu0 0.0
        %2378 = vmatpush1.msra.mxu0 0.0
        %2379 = vmatprep.subr.mxu0 0.0
        %2380 = vmatpush1.msra.mxu0 0.0
        %2381 = vmatprep.subr.mxu0 0.0
        %2382 = vmatpush1.msra.mxu0 0.0
        %2383 = vmatprep.subr.mxu0 0.0
        %2384 = vmatpush1.msra.mxu0 0.0
        %2385 = vmatprep.subr.mxu0 0.0
        %2386 = vmatpush1.msra.mxu0 0.0
        %2387 = vmatprep.subr.mxu0 0.0
        %2388 = vmatpush1.msra.mxu0 0.0
        %2389 = vmatprep.subr.mxu0 0.0
        %2390 = vmatpush1.msra.mxu0 0.0
        %2391 = vmatprep.subr.mxu0 0.0
        %2392 = vmatpush1.msra.mxu0 0.0
        %2393 = vmatprep.subr.mxu0 0.0
        %2394 = vmatpush1.msra.mxu0 0.0
        %2395 = vmatprep.subr.mxu0 0.0
        %2396 = vmatpush1.msra.mxu0 0.0
        %2397 = vmatprep.subr.mxu0 0.0
        %2398 = vmatpush1.msra.mxu0 0.0
        %2399 = vmatprep.subr.mxu0 0.0
        %2400 = vmatpush1.msra.mxu0 0.0
        %2401 = vmatprep.subr.mxu0 0.0
        %2402 = vmatpush1.msra.mxu0 0.0
        %2403 = vmatprep.mubr.f32.mxu0 0.0
        %2404 = vmatmul.mubr.f32.gmra.mrb[0].mxu0 %v2337
        %v2405 = vpop.f32.mrb[0].mxu0
        %v2406 = vadd.f32 0.0, %v2405
        %v2407 = vpop.f32.mrb[0].mxu0
        %2408 = vdwg.mxu0
        %2410 = vrot.lane.b32.xlu0 %v2149, 116
        %v2411 = vpop.permute.xlu0 %2410
        %v2414 = vsel %vm1267, %v2331, 0
        %2416 = vmatprep.subr.mxu0 0.0
        %2417 = vmatpush1.msra.mxu0 %v2411
        %2418 = vmatprep.subr.mxu0 0.0
        %2419 = vmatpush1.msra.mxu0 0.0
        %2420 = vmatprep.subr.mxu0 0.0
        %2421 = vmatpush1.msra.mxu0 0.0
        %2422 = vmatprep.subr.mxu0 0.0
        %2423 = vmatpush1.msra.mxu0 0.0
        %2424 = vmatprep.subr.mxu0 0.0
        %2425 = vmatpush1.msra.mxu0 0.0
        %2426 = vmatprep.subr.mxu0 0.0
        %2427 = vmatpush1.msra.mxu0 0.0
        %2428 = vmatprep.subr.mxu0 0.0
        %2429 = vmatpush1.msra.mxu0 0.0
        %2430 = vmatprep.subr.mxu0 0.0
        %2431 = vmatpush1.msra.mxu0 0.0
        %2432 = vmatprep.subr.mxu0 0.0
        %2433 = vmatpush1.msra.mxu0 0.0
        %2434 = vmatprep.subr.mxu0 0.0
        %2435 = vmatpush1.msra.mxu0 0.0
        %2436 = vmatprep.subr.mxu0 0.0
        %2437 = vmatpush1.msra.mxu0 0.0
        %2438 = vmatprep.subr.mxu0 0.0
        %2439 = vmatpush1.msra.mxu0 0.0
        %2440 = vmatprep.subr.mxu0 0.0
        %2441 = vmatpush1.msra.mxu0 0.0
        %2442 = vmatprep.subr.mxu0 0.0
        %2443 = vmatpush1.msra.mxu0 0.0
        %2444 = vmatprep.subr.mxu0 0.0
        %2445 = vmatpush1.msra.mxu0 0.0
        %2446 = vmatprep.subr.mxu0 0.0
        %2447 = vmatpush1.msra.mxu0 0.0
        %2448 = vmatprep.subr.mxu0 0.0
        %2449 = vmatpush1.msra.mxu0 0.0
        %2450 = vmatprep.subr.mxu0 0.0
        %2451 = vmatpush1.msra.mxu0 0.0
        %2452 = vmatprep.subr.mxu0 0.0
        %2453 = vmatpush1.msra.mxu0 0.0
        %2454 = vmatprep.subr.mxu0 0.0
        %2455 = vmatpush1.msra.mxu0 0.0
        %2456 = vmatprep.subr.mxu0 0.0
        %2457 = vmatpush1.msra.mxu0 0.0
        %2458 = vmatprep.subr.mxu0 0.0
        %2459 = vmatpush1.msra.mxu0 0.0
        %2460 = vmatprep.subr.mxu0 0.0
        %2461 = vmatpush1.msra.mxu0 0.0
        %2462 = vmatprep.subr.mxu0 0.0
        %2463 = vmatpush1.msra.mxu0 0.0
        %2464 = vmatprep.subr.mxu0 0.0
        %2465 = vmatpush1.msra.mxu0 0.0
        %2466 = vmatprep.subr.mxu0 0.0
        %2467 = vmatpush1.msra.mxu0 0.0
        %2468 = vmatprep.subr.mxu0 0.0
        %2469 = vmatpush1.msra.mxu0 0.0
        %2470 = vmatprep.subr.mxu0 0.0
        %2471 = vmatpush1.msra.mxu0 0.0
        %2472 = vmatprep.subr.mxu0 0.0
        %2473 = vmatpush1.msra.mxu0 0.0
        %2474 = vmatprep.subr.mxu0 0.0
        %2475 = vmatpush1.msra.mxu0 0.0
        %2476 = vmatprep.subr.mxu0 0.0
        %2477 = vmatpush1.msra.mxu0 0.0
        %2478 = vmatprep.subr.mxu0 0.0
        %2479 = vmatpush1.msra.mxu0 0.0
        %2480 = vmatprep.mubr.f32.mxu0 0.0
        %2481 = vmatmul.mubr.f32.gmra.mrb[0].mxu0 %v2414
        %v2482 = vpop.f32.mrb[0].mxu0
        %v2483 = vadd.f32 0.0, %v2482
        %v2484 = vpop.f32.mrb[0].mxu0
        %2485 = vdwg.mxu0
        %2488 = vrot.lane.b32.xlu0 %v2406, 12
        %v2489 = vpop.permute.xlu0 %2488
        %2490 = vrot.lane.b32.xlu0 %v2483, 12
        %v2491 = vpop.permute.xlu0 %2490
        %vm2494 = vcmask 130144
        %2495 = vst.msk [vmem:[#allocation5] sm:$0xff] %vm2494, %v2489
        %2496 = vst.msk [vmem:[#allocation5 + $0x8] sm:$0xff] %vm2494, %v2491
        %v2497 = vld [vmem:[#allocation2] sm:$0xff]
        %v2498 = vld [vmem:[#allocation2 + $0x8] sm:$0xff]
        %v2499 = vld [vmem:[#allocation3] sm:$0xff]
        %v2500 = vld [vmem:[#allocation3 + $0x8] sm:$0xff]
        %v2501 = vld [vmem:[#allocation4] sm:$0xff]
        %v2502 = vld [vmem:[#allocation4 + $0x8] sm:$0xff]
        %2504 = vrot.lane.b32.xlu0 %v2497, 112
        %v2505 = vpop.permute.xlu0 %2504
        %2507 = vrot.lane.b32.xlu0 %v2499, 112
        %v2508 = vpop.permute.xlu0 %2507
        %v2509 = vsel %vm1114, %v2505, 0
        %v2511 = vsel %vm1114, %v2508, 0
        %2513 = vmatprep.subr.mxu0 0.0
        %2514 = vmatpush1.xpose.msra.mxu0 %v2511
        %2515 = vmatprep.subr.mxu0 0.0
        %2516 = vmatpush1.xpose.msra.mxu0 0.0
        %2517 = vmatprep.subr.mxu0 0.0
        %2518 = vmatpush1.xpose.msra.mxu0 0.0
        %2519 = vmatprep.subr.mxu0 0.0
        %2520 = vmatpush1.xpose.msra.mxu0 0.0
        %2521 = vmatprep.subr.mxu0 0.0
        %2522 = vmatpush1.xpose.msra.mxu0 0.0
        %2523 = vmatprep.subr.mxu0 0.0
        %2524 = vmatpush1.xpose.msra.mxu0 0.0
        %2525 = vmatprep.subr.mxu0 0.0
        %2526 = vmatpush1.xpose.msra.mxu0 0.0
        %2527 = vmatprep.subr.mxu0 0.0
        %2528 = vmatpush1.xpose.msra.mxu0 0.0
        %2529 = vmatprep.subr.mxu0 0.0
        %2530 = vmatpush1.xpose.msra.mxu0 0.0
        %2531 = vmatprep.subr.mxu0 0.0
        %2532 = vmatpush1.xpose.msra.mxu0 0.0
        %2533 = vmatprep.subr.mxu0 0.0
        %2534 = vmatpush1.xpose.msra.mxu0 0.0
        %2535 = vmatprep.subr.mxu0 0.0
        %2536 = vmatpush1.xpose.msra.mxu0 0.0
        %2537 = vmatprep.subr.mxu0 0.0
        %2538 = vmatpush1.xpose.msra.mxu0 0.0
        %2539 = vmatprep.subr.mxu0 0.0
        %2540 = vmatpush1.xpose.msra.mxu0 0.0
        %2541 = vmatprep.subr.mxu0 0.0
        %2542 = vmatpush1.xpose.msra.mxu0 0.0
        %2543 = vmatprep.subr.mxu0 0.0
        %2544 = vmatpush1.xpose.msra.mxu0 0.0
        %2545 = vmatprep.subr.mxu0 0.0
        %2546 = vmatpush1.xpose.msra.mxu0 0.0
        %2547 = vmatprep.subr.mxu0 0.0
        %2548 = vmatpush1.xpose.msra.mxu0 0.0
        %2549 = vmatprep.subr.mxu0 0.0
        %2550 = vmatpush1.xpose.msra.mxu0 0.0
        %2551 = vmatprep.subr.mxu0 0.0
        %2552 = vmatpush1.xpose.msra.mxu0 0.0
        %2553 = vmatprep.subr.mxu0 0.0
        %2554 = vmatpush1.xpose.msra.mxu0 0.0
        %2555 = vmatprep.subr.mxu0 0.0
        %2556 = vmatpush1.xpose.msra.mxu0 0.0
        %2557 = vmatprep.subr.mxu0 0.0
        %2558 = vmatpush1.xpose.msra.mxu0 0.0
        %2559 = vmatprep.subr.mxu0 0.0
        %2560 = vmatpush1.xpose.msra.mxu0 0.0
        %2561 = vmatprep.subr.mxu0 0.0
        %2562 = vmatpush1.xpose.msra.mxu0 0.0
        %2563 = vmatprep.subr.mxu0 0.0
        %2564 = vmatpush1.xpose.msra.mxu0 0.0
        %2565 = vmatprep.subr.mxu0 0.0
        %2566 = vmatpush1.xpose.msra.mxu0 0.0
        %2567 = vmatprep.subr.mxu0 0.0
        %2568 = vmatpush1.xpose.msra.mxu0 0.0
        %2569 = vmatprep.subr.mxu0 0.0
        %2570 = vmatpush1.xpose.msra.mxu0 0.0
        %2571 = vmatprep.subr.mxu0 0.0
        %2572 = vmatpush1.xpose.msra.mxu0 0.0
        %2573 = vmatprep.subr.mxu0 0.0
        %2574 = vmatpush1.xpose.msra.mxu0 0.0
        %2575 = vmatprep.subr.mxu0 0.0
        %2576 = vmatpush1.xpose.msra.mxu0 0.0
        %2577 = vmatprep.mubr.f32.mxu0 0.0
        %2578 = vmatmul.mubr.f32.gmra.mrb[0].mxu0 %v2509
        %v2579 = vpop.f32.mrb[0].mxu0
        %v2580 = vadd.f32 0.0, %v2579
        %v2581 = vpop.f32.mrb[0].mxu0
        %2582 = vdwg.mxu0
        %2584 = vrot.lane.b32.xlu0 %v2498, 112
        %v2585 = vpop.permute.xlu0 %2584
        %2587 = vrot.lane.b32.xlu0 %v2500, 112
        %v2588 = vpop.permute.xlu0 %2587
        %v2589 = vsel %vm1114, %v2585, 0
        %v2591 = vsel %vm1114, %v2588, 0
        %2593 = vmatprep.subr.mxu0 0.0
        %2594 = vmatpush1.xpose.msra.mxu0 %v2591
        %2595 = vmatprep.subr.mxu0 0.0
        %2596 = vmatpush1.xpose.msra.mxu0 0.0
        %2597 = vmatprep.subr.mxu0 0.0
        %2598 = vmatpush1.xpose.msra.mxu0 0.0
        %2599 = vmatprep.subr.mxu0 0.0
        %2600 = vmatpush1.xpose.msra.mxu0 0.0
        %2601 = vmatprep.subr.mxu0 0.0
        %2602 = vmatpush1.xpose.msra.mxu0 0.0
        %2603 = vmatprep.subr.mxu0 0.0
        %2604 = vmatpush1.xpose.msra.mxu0 0.0
        %2605 = vmatprep.subr.mxu0 0.0
        %2606 = vmatpush1.xpose.msra.mxu0 0.0
        %2607 = vmatprep.subr.mxu0 0.0
        %2608 = vmatpush1.xpose.msra.mxu0 0.0
        %2609 = vmatprep.subr.mxu0 0.0
        %2610 = vmatpush1.xpose.msra.mxu0 0.0
        %2611 = vmatprep.subr.mxu0 0.0
        %2612 = vmatpush1.xpose.msra.mxu0 0.0
        %2613 = vmatprep.subr.mxu0 0.0
        %2614 = vmatpush1.xpose.msra.mxu0 0.0
        %2615 = vmatprep.subr.mxu0 0.0
        %2616 = vmatpush1.xpose.msra.mxu0 0.0
        %2617 = vmatprep.subr.mxu0 0.0
        %2618 = vmatpush1.xpose.msra.mxu0 0.0
        %2619 = vmatprep.subr.mxu0 0.0
        %2620 = vmatpush1.xpose.msra.mxu0 0.0
        %2621 = vmatprep.subr.mxu0 0.0
        %2622 = vmatpush1.xpose.msra.mxu0 0.0
        %2623 = vmatprep.subr.mxu0 0.0
        %2624 = vmatpush1.xpose.msra.mxu0 0.0
        %2625 = vmatprep.subr.mxu0 0.0
        %2626 = vmatpush1.xpose.msra.mxu0 0.0
        %2627 = vmatprep.subr.mxu0 0.0
        %2628 = vmatpush1.xpose.msra.mxu0 0.0
        %2629 = vmatprep.subr.mxu0 0.0
        %2630 = vmatpush1.xpose.msra.mxu0 0.0
        %2631 = vmatprep.subr.mxu0 0.0
        %2632 = vmatpush1.xpose.msra.mxu0 0.0
        %2633 = vmatprep.subr.mxu0 0.0
        %2634 = vmatpush1.xpose.msra.mxu0 0.0
        %2635 = vmatprep.subr.mxu0 0.0
        %2636 = vmatpush1.xpose.msra.mxu0 0.0
        %2637 = vmatprep.subr.mxu0 0.0
        %2638 = vmatpush1.xpose.msra.mxu0 0.0
        %2639 = vmatprep.subr.mxu0 0.0
        %2640 = vmatpush1.xpose.msra.mxu0 0.0
        %2641 = vmatprep.subr.mxu0 0.0
        %2642 = vmatpush1.xpose.msra.mxu0 0.0
        %2643 = vmatprep.subr.mxu0 0.0
        %2644 = vmatpush1.xpose.msra.mxu0 0.0
        %2645 = vmatprep.subr.mxu0 0.0
        %2646 = vmatpush1.xpose.msra.mxu0 0.0
        %2647 = vmatprep.subr.mxu0 0.0
        %2648 = vmatpush1.xpose.msra.mxu0 0.0
        %2649 = vmatprep.subr.mxu0 0.0
        %2650 = vmatpush1.xpose.msra.mxu0 0.0
        %2651 = vmatprep.subr.mxu0 0.0
        %2652 = vmatpush1.xpose.msra.mxu0 0.0
        %2653 = vmatprep.subr.mxu0 0.0
        %2654 = vmatpush1.xpose.msra.mxu0 0.0
        %2655 = vmatprep.subr.mxu0 0.0
        %2656 = vmatpush1.xpose.msra.mxu0 0.0
        %2657 = vmatprep.mubr.f32.mxu0 0.0
        %2658 = vmatmul.mubr.f32.gmra.mrb[0].mxu0 %v2589
        %v2659 = vpop.f32.mrb[0].mxu0
        %v2660 = vadd.f32 0.0, %v2659
        %v2661 = vpop.f32.mrb[0].mxu0
        %2662 = vdwg.mxu0
        %v2663 = vsel %vm1267, %v2580, -inf
        %2664 = vmax.xlane.f32.xlu0 %v2663
        %v2665 = vpop.xlane.xlu0 %2664
        %v2666 = vsel %vm1267, %v2660, -inf
        %2667 = vmax.xlane.f32.xlu0 %v2666
        %v2668 = vpop.xlane.xlu0 %2667
        %v2669 = vsub.f32 %v2580, %v2665
        %v2670 = vsub.f32 %v2660, %v2668
        %v2671 = vmul.f32 %v2669, 1.442695
        %v2672 = vpow.pop %v2671
        %v2673 = vmul.f32 %v2670, 1.442695
        %v2674 = vpow.pop %v2673
        %v2675 = vsel %vm1267, %v2672, 0.0
        %2676 = vadd.xlane.f32.xlu0 %v2675
        %v2677 = vpop.xlane.xlu0 %2676
        %v2678 = vsel %vm1267, %v2674, 0.0
        %2679 = vadd.xlane.f32.xlu0 %v2678
        %v2680 = vpop.xlane.xlu0 %2679
        %v2681 = vrcp.pop %v2677
        %v2682 = vrcp.pop %v2680
        %v2683 = vmul.f32 %v2672, %v2681
        %v2684 = vmul.f32 %v2674, %v2682
        %2686 = vrot.lane.b32.xlu0 %v2501, 112
        %v2687 = vpop.permute.xlu0 %2686
        %v2690 = vsel %vm1267, %v2683, 0
        %2692 = vmatprep.subr.mxu0 0.0
        %2693 = vmatpush1.msra.mxu0 %v2687
        %2694 = vmatprep.subr.mxu0 0.0
        %2695 = vmatpush1.msra.mxu0 0.0
        %2696 = vmatprep.subr.mxu0 0.0
        %2697 = vmatpush1.msra.mxu0 0.0
        %2698 = vmatprep.subr.mxu0 0.0
        %2699 = vmatpush1.msra.mxu0 0.0
        %2700 = vmatprep.subr.mxu0 0.0
        %2701 = vmatpush1.msra.mxu0 0.0
        %2702 = vmatprep.subr.mxu0 0.0
        %2703 = vmatpush1.msra.mxu0 0.0
        %2704 = vmatprep.subr.mxu0 0.0
        %2705 = vmatpush1.msra.mxu0 0.0
        %2706 = vmatprep.subr.mxu0 0.0
        %2707 = vmatpush1.msra.mxu0 0.0
        %2708 = vmatprep.subr.mxu0 0.0
        %2709 = vmatpush1.msra.mxu0 0.0
        %2710 = vmatprep.subr.mxu0 0.0
        %2711 = vmatpush1.msra.mxu0 0.0
        %2712 = vmatprep.subr.mxu0 0.0
        %2713 = vmatpush1.msra.mxu0 0.0
        %2714 = vmatprep.subr.mxu0 0.0
        %2715 = vmatpush1.msra.mxu0 0.0
        %2716 = vmatprep.subr.mxu0 0.0
        %2717 = vmatpush1.msra.mxu0 0.0
        %2718 = vmatprep.subr.mxu0 0.0
        %2719 = vmatpush1.msra.mxu0 0.0
        %2720 = vmatprep.subr.mxu0 0.0
        %2721 = vmatpush1.msra.mxu0 0.0
        %2722 = vmatprep.subr.mxu0 0.0
        %2723 = vmatpush1.msra.mxu0 0.0
        %2724 = vmatprep.subr.mxu0 0.0
        %2725 = vmatpush1.msra.mxu0 0.0
        %2726 = vmatprep.subr.mxu0 0.0
        %2727 = vmatpush1.msra.mxu0 0.0
        %2728 = vmatprep.subr.mxu0 0.0
        %2729 = vmatpush1.msra.mxu0 0.0
        %2730 = vmatprep.subr.mxu0 0.0
        %2731 = vmatpush1.msra.mxu0 0.0
        %2732 = vmatprep.subr.mxu0 0.0
        %2733 = vmatpush1.msra.mxu0 0.0
        %2734 = vmatprep.subr.mxu0 0.0
        %2735 = vmatpush1.msra.mxu0 0.0
        %2736 = vmatprep.subr.mxu0 0.0
        %2737 = vmatpush1.msra.mxu0 0.0
        %2738 = vmatprep.subr.mxu0 0.0
        %2739 = vmatpush1.msra.mxu0 0.0
        %2740 = vmatprep.subr.mxu0 0.0
        %2741 = vmatpush1.msra.mxu0 0.0
        %2742 = vmatprep.subr.mxu0 0.0
        %2743 = vmatpush1.msra.mxu0 0.0
        %2744 = vmatprep.subr.mxu0 0.0
        %2745 = vmatpush1.msra.mxu0 0.0
        %2746 = vmatprep.subr.mxu0 0.0
        %2747 = vmatpush1.msra.mxu0 0.0
        %2748 = vmatprep.subr.mxu0 0.0
        %2749 = vmatpush1.msra.mxu0 0.0
        %2750 = vmatprep.subr.mxu0 0.0
        %2751 = vmatpush1.msra.mxu0 0.0
        %2752 = vmatprep.subr.mxu0 0.0
        %2753 = vmatpush1.msra.mxu0 0.0
        %2754 = vmatprep.subr.mxu0 0.0
        %2755 = vmatpush1.msra.mxu0 0.0
        %2756 = vmatprep.mubr.f32.mxu0 0.0
        %2757 = vmatmul.mubr.f32.gmra.mrb[0].mxu0 %v2690
        %v2758 = vpop.f32.mrb[0].mxu0
        %v2759 = vadd.f32 0.0, %v2758
        %v2760 = vpop.f32.mrb[0].mxu0
        %2761 = vdwg.mxu0
        %2763 = vrot.lane.b32.xlu0 %v2502, 112
        %v2764 = vpop.permute.xlu0 %2763
        %v2767 = vsel %vm1267, %v2684, 0
        %2769 = vmatprep.subr.mxu0 0.0
        %2770 = vmatpush1.msra.mxu0 %v2764
        %2771 = vmatprep.subr.mxu0 0.0
        %2772 = vmatpush1.msra.mxu0 0.0
        %2773 = vmatprep.subr.mxu0 0.0
        %2774 = vmatpush1.msra.mxu0 0.0
        %2775 = vmatprep.subr.mxu0 0.0
        %2776 = vmatpush1.msra.mxu0 0.0
        %2777 = vmatprep.subr.mxu0 0.0
        %2778 = vmatpush1.msra.mxu0 0.0
        %2779 = vmatprep.subr.mxu0 0.0
        %2780 = vmatpush1.msra.mxu0 0.0
        %2781 = vmatprep.subr.mxu0 0.0
        %2782 = vmatpush1.msra.mxu0 0.0
        %2783 = vmatprep.subr.mxu0 0.0
        %2784 = vmatpush1.msra.mxu0 0.0
        %2785 = vmatprep.subr.mxu0 0.0
        %2786 = vmatpush1.msra.mxu0 0.0
        %2787 = vmatprep.subr.mxu0 0.0
        %2788 = vmatpush1.msra.mxu0 0.0
        %2789 = vmatprep.subr.mxu0 0.0
        %2790 = vmatpush1.msra.mxu0 0.0
        %2791 = vmatprep.subr.mxu0 0.0
        %2792 = vmatpush1.msra.mxu0 0.0
        %2793 = vmatprep.subr.mxu0 0.0
        %2794 = vmatpush1.msra.mxu0 0.0
        %2795 = vmatprep.subr.mxu0 0.0
        %2796 = vmatpush1.msra.mxu0 0.0
        %2797 = vmatprep.subr.mxu0 0.0
        %2798 = vmatpush1.msra.mxu0 0.0
        %2799 = vmatprep.subr.mxu0 0.0
        %2800 = vmatpush1.msra.mxu0 0.0
        %2801 = vmatprep.subr.mxu0 0.0
        %2802 = vmatpush1.msra.mxu0 0.0
        %2803 = vmatprep.subr.mxu0 0.0
        %2804 = vmatpush1.msra.mxu0 0.0
        %2805 = vmatprep.subr.mxu0 0.0
        %2806 = vmatpush1.msra.mxu0 0.0
        %2807 = vmatprep.subr.mxu0 0.0
        %2808 = vmatpush1.msra.mxu0 0.0
        %2809 = vmatprep.subr.mxu0 0.0
        %2810 = vmatpush1.msra.mxu0 0.0
        %2811 = vmatprep.subr.mxu0 0.0
        %2812 = vmatpush1.msra.mxu0 0.0
        %2813 = vmatprep.subr.mxu0 0.0
        %2814 = vmatpush1.msra.mxu0 0.0
        %2815 = vmatprep.subr.mxu0 0.0
        %2816 = vmatpush1.msra.mxu0 0.0
        %2817 = vmatprep.subr.mxu0 0.0
        %2818 = vmatpush1.msra.mxu0 0.0
        %2819 = vmatprep.subr.mxu0 0.0
        %2820 = vmatpush1.msra.mxu0 0.0
        %2821 = vmatprep.subr.mxu0 0.0
        %2822 = vmatpush1.msra.mxu0 0.0
        %2823 = vmatprep.subr.mxu0 0.0
        %2824 = vmatpush1.msra.mxu0 0.0
        %2825 = vmatprep.subr.mxu0 0.0
        %2826 = vmatpush1.msra.mxu0 0.0
        %2827 = vmatprep.subr.mxu0 0.0
        %2828 = vmatpush1.msra.mxu0 0.0
        %2829 = vmatprep.subr.mxu0 0.0
        %2830 = vmatpush1.msra.mxu0 0.0
        %2831 = vmatprep.subr.mxu0 0.0
        %2832 = vmatpush1.msra.mxu0 0.0
        %2833 = vmatprep.mubr.f32.mxu0 0.0
        %2834 = vmatmul.mubr.f32.gmra.mrb[0].mxu0 %v2767
        %v2835 = vpop.f32.mrb[0].mxu0
        %v2836 = vadd.f32 0.0, %v2835
        %v2837 = vpop.f32.mrb[0].mxu0
        %2838 = vdwg.mxu0
        %2841 = vrot.lane.b32.xlu0 %v2759, 16
        %v2842 = vpop.permute.xlu0 %2841
        %2843 = vrot.lane.b32.xlu0 %v2836, 16
        %v2844 = vpop.permute.xlu0 %2843
        %vm2847 = vcmask 162944
        %2848 = vst.msk [vmem:[#allocation5] sm:$0xff] %vm2847, %v2842
        %2849 = vst.msk [vmem:[#allocation5 + $0x8] sm:$0xff] %vm2847, %v2844
        %v2850 = vld [vmem:[#allocation2] sm:$0xff]
        %v2851 = vld [vmem:[#allocation2 + $0x8] sm:$0xff]
        %v2852 = vld [vmem:[#allocation3] sm:$0xff]
        %v2853 = vld [vmem:[#allocation3 + $0x8] sm:$0xff]
        %v2854 = vld [vmem:[#allocation4] sm:$0xff]
        %v2855 = vld [vmem:[#allocation4 + $0x8] sm:$0xff]
        %2857 = vrot.lane.b32.xlu0 %v2850, 108
        %v2858 = vpop.permute.xlu0 %2857
        %2860 = vrot.lane.b32.xlu0 %v2852, 108
        %v2861 = vpop.permute.xlu0 %2860
        %v2862 = vsel %vm1114, %v2858, 0
        %v2864 = vsel %vm1114, %v2861, 0
        %2866 = vmatprep.subr.mxu0 0.0
        %2867 = vmatpush1.xpose.msra.mxu0 %v2864
        %2868 = vmatprep.subr.mxu0 0.0
        %2869 = vmatpush1.xpose.msra.mxu0 0.0
        %2870 = vmatprep.subr.mxu0 0.0
        %2871 = vmatpush1.xpose.msra.mxu0 0.0
        %2872 = vmatprep.subr.mxu0 0.0
        %2873 = vmatpush1.xpose.msra.mxu0 0.0
        %2874 = vmatprep.subr.mxu0 0.0
        %2875 = vmatpush1.xpose.msra.mxu0 0.0
        %2876 = vmatprep.subr.mxu0 0.0
        %2877 = vmatpush1.xpose.msra.mxu0 0.0
        %2878 = vmatprep.subr.mxu0 0.0
        %2879 = vmatpush1.xpose.msra.mxu0 0.0
        %2880 = vmatprep.subr.mxu0 0.0
        %2881 = vmatpush1.xpose.msra.mxu0 0.0
        %2882 = vmatprep.subr.mxu0 0.0
        %2883 = vmatpush1.xpose.msra.mxu0 0.0
        %2884 = vmatprep.subr.mxu0 0.0
        %2885 = vmatpush1.xpose.msra.mxu0 0.0
        %2886 = vmatprep.subr.mxu0 0.0
        %2887 = vmatpush1.xpose.msra.mxu0 0.0
        %2888 = vmatprep.subr.mxu0 0.0
        %2889 = vmatpush1.xpose.msra.mxu0 0.0
        %2890 = vmatprep.subr.mxu0 0.0
        %2891 = vmatpush1.xpose.msra.mxu0 0.0
        %2892 = vmatprep.subr.mxu0 0.0
        %2893 = vmatpush1.xpose.msra.mxu0 0.0
        %2894 = vmatprep.subr.mxu0 0.0
        %2895 = vmatpush1.xpose.msra.mxu0 0.0
        %2896 = vmatprep.subr.mxu0 0.0
        %2897 = vmatpush1.xpose.msra.mxu0 0.0
        %2898 = vmatprep.subr.mxu0 0.0
        %2899 = vmatpush1.xpose.msra.mxu0 0.0
        %2900 = vmatprep.subr.mxu0 0.0
        %2901 = vmatpush1.xpose.msra.mxu0 0.0
        %2902 = vmatprep.subr.mxu0 0.0
        %2903 = vmatpush1.xpose.msra.mxu0 0.0
        %2904 = vmatprep.subr.mxu0 0.0
        %2905 = vmatpush1.xpose.msra.mxu0 0.0
        %2906 = vmatprep.subr.mxu0 0.0
        %2907 = vmatpush1.xpose.msra.mxu0 0.0
        %2908 = vmatprep.subr.mxu0 0.0
        %2909 = vmatpush1.xpose.msra.mxu0 0.0
        %2910 = vmatprep.subr.mxu0 0.0
        %2911 = vmatpush1.xpose.msra.mxu0 0.0
        %2912 = vmatprep.subr.mxu0 0.0
        %2913 = vmatpush1.xpose.msra.mxu0 0.0
        %2914 = vmatprep.subr.mxu0 0.0
        %2915 = vmatpush1.xpose.msra.mxu0 0.0
        %2916 = vmatprep.subr.mxu0 0.0
        %2917 = vmatpush1.xpose.msra.mxu0 0.0
        %2918 = vmatprep.subr.mxu0 0.0
        %2919 = vmatpush1.xpose.msra.mxu0 0.0
        %2920 = vmatprep.subr.mxu0 0.0
        %2921 = vmatpush1.xpose.msra.mxu0 0.0
        %2922 = vmatprep.subr.mxu0 0.0
        %2923 = vmatpush1.xpose.msra.mxu0 0.0
        %2924 = vmatprep.subr.mxu0 0.0
        %2925 = vmatpush1.xpose.msra.mxu0 0.0
        %2926 = vmatprep.subr.mxu0 0.0
        %2927 = vmatpush1.xpose.msra.mxu0 0.0
        %2928 = vmatprep.subr.mxu0 0.0
        %2929 = vmatpush1.xpose.msra.mxu0 0.0
        %2930 = vmatprep.mubr.f32.mxu0 0.0
        %2931 = vmatmul.mubr.f32.gmra.mrb[0].mxu0 %v2862
        %v2932 = vpop.f32.mrb[0].mxu0
        %v2933 = vadd.f32 0.0, %v2932
        %v2934 = vpop.f32.mrb[0].mxu0
        %2935 = vdwg.mxu0
        %2937 = vrot.lane.b32.xlu0 %v2851, 108
        %v2938 = vpop.permute.xlu0 %2937
        %2940 = vrot.lane.b32.xlu0 %v2853, 108
        %v2941 = vpop.permute.xlu0 %2940
        %v2942 = vsel %vm1114, %v2938, 0
        %v2944 = vsel %vm1114, %v2941, 0
        %2946 = vmatprep.subr.mxu0 0.0
        %2947 = vmatpush1.xpose.msra.mxu0 %v2944
        %2948 = vmatprep.subr.mxu0 0.0
        %2949 = vmatpush1.xpose.msra.mxu0 0.0
        %2950 = vmatprep.subr.mxu0 0.0
        %2951 = vmatpush1.xpose.msra.mxu0 0.0
        %2952 = vmatprep.subr.mxu0 0.0
        %2953 = vmatpush1.xpose.msra.mxu0 0.0
        %2954 = vmatprep.subr.mxu0 0.0
        %2955 = vmatpush1.xpose.msra.mxu0 0.0
        %2956 = vmatprep.subr.mxu0 0.0
        %2957 = vmatpush1.xpose.msra.mxu0 0.0
        %2958 = vmatprep.subr.mxu0 0.0
        %2959 = vmatpush1.xpose.msra.mxu0 0.0
        %2960 = vmatprep.subr.mxu0 0.0
        %2961 = vmatpush1.xpose.msra.mxu0 0.0
        %2962 = vmatprep.subr.mxu0 0.0
        %2963 = vmatpush1.xpose.msra.mxu0 0.0
        %2964 = vmatprep.subr.mxu0 0.0
        %2965 = vmatpush1.xpose.msra.mxu0 0.0
        %2966 = vmatprep.subr.mxu0 0.0
        %2967 = vmatpush1.xpose.msra.mxu0 0.0
        %2968 = vmatprep.subr.mxu0 0.0
        %2969 = vmatpush1.xpose.msra.mxu0 0.0
        %2970 = vmatprep.subr.mxu0 0.0
        %2971 = vmatpush1.xpose.msra.mxu0 0.0
        %2972 = vmatprep.subr.mxu0 0.0
        %2973 = vmatpush1.xpose.msra.mxu0 0.0
        %2974 = vmatprep.subr.mxu0 0.0
        %2975 = vmatpush1.xpose.msra.mxu0 0.0
        %2976 = vmatprep.subr.mxu0 0.0
        %2977 = vmatpush1.xpose.msra.mxu0 0.0
        %2978 = vmatprep.subr.mxu0 0.0
        %2979 = vmatpush1.xpose.msra.mxu0 0.0
        %2980 = vmatprep.subr.mxu0 0.0
        %2981 = vmatpush1.xpose.msra.mxu0 0.0
        %2982 = vmatprep.subr.mxu0 0.0
        %2983 = vmatpush1.xpose.msra.mxu0 0.0
        %2984 = vmatprep.subr.mxu0 0.0
        %2985 = vmatpush1.xpose.msra.mxu0 0.0
        %2986 = vmatprep.subr.mxu0 0.0
        %2987 = vmatpush1.xpose.msra.mxu0 0.0
        %2988 = vmatprep.subr.mxu0 0.0
        %2989 = vmatpush1.xpose.msra.mxu0 0.0
        %2990 = vmatprep.subr.mxu0 0.0
        %2991 = vmatpush1.xpose.msra.mxu0 0.0
        %2992 = vmatprep.subr.mxu0 0.0
        %2993 = vmatpush1.xpose.msra.mxu0 0.0
        %2994 = vmatprep.subr.mxu0 0.0
        %2995 = vmatpush1.xpose.msra.mxu0 0.0
        %2996 = vmatprep.subr.mxu0 0.0
        %2997 = vmatpush1.xpose.msra.mxu0 0.0
        %2998 = vmatprep.subr.mxu0 0.0
        %2999 = vmatpush1.xpose.msra.mxu0 0.0
        %3000 = vmatprep.subr.mxu0 0.0
        %3001 = vmatpush1.xpose.msra.mxu0 0.0
        %3002 = vmatprep.subr.mxu0 0.0
        %3003 = vmatpush1.xpose.msra.mxu0 0.0
        %3004 = vmatprep.subr.mxu0 0.0
        %3005 = vmatpush1.xpose.msra.mxu0 0.0
        %3006 = vmatprep.subr.mxu0 0.0
        %3007 = vmatpush1.xpose.msra.mxu0 0.0
        %3008 = vmatprep.subr.mxu0 0.0
        %3009 = vmatpush1.xpose.msra.mxu0 0.0
        %3010 = vmatprep.mubr.f32.mxu0 0.0
        %3011 = vmatmul.mubr.f32.gmra.mrb[0].mxu0 %v2942
        %v3012 = vpop.f32.mrb[0].mxu0
        %v3013 = vadd.f32 0.0, %v3012
        %v3014 = vpop.f32.mrb[0].mxu0
        %3015 = vdwg.mxu0
        %v3016 = vsel %vm1267, %v2933, -inf
        %3017 = vmax.xlane.f32.xlu0 %v3016
        %v3018 = vpop.xlane.xlu0 %3017
        %v3019 = vsel %vm1267, %v3013, -inf
        %3020 = vmax.xlane.f32.xlu0 %v3019
        %v3021 = vpop.xlane.xlu0 %3020
        %v3022 = vsub.f32 %v2933, %v3018
        %v3023 = vsub.f32 %v3013, %v3021
        %v3024 = vmul.f32 %v3022, 1.442695
        %v3025 = vpow.pop %v3024
        %v3026 = vmul.f32 %v3023, 1.442695
        %v3027 = vpow.pop %v3026
        %v3028 = vsel %vm1267, %v3025, 0.0
        %3029 = vadd.xlane.f32.xlu0 %v3028
        %v3030 = vpop.xlane.xlu0 %3029
        %v3031 = vsel %vm1267, %v3027, 0.0
        %3032 = vadd.xlane.f32.xlu0 %v3031
        %v3033 = vpop.xlane.xlu0 %3032
        %v3034 = vrcp.pop %v3030
        %v3035 = vrcp.pop %v3033
        %v3036 = vmul.f32 %v3025, %v3034
        %v3037 = vmul.f32 %v3027, %v3035
        %3039 = vrot.lane.b32.xlu0 %v2854, 108
        %v3040 = vpop.permute.xlu0 %3039
        %v3043 = vsel %vm1267, %v3036, 0
        %3045 = vmatprep.subr.mxu0 0.0
        %3046 = vmatpush1.msra.mxu0 %v3040
        %3047 = vmatprep.subr.mxu0 0.0
        %3048 = vmatpush1.msra.mxu0 0.0
        %3049 = vmatprep.subr.mxu0 0.0
        %3050 = vmatpush1.msra.mxu0 0.0
        %3051 = vmatprep.subr.mxu0 0.0
        %3052 = vmatpush1.msra.mxu0 0.0
        %3053 = vmatprep.subr.mxu0 0.0
        %3054 = vmatpush1.msra.mxu0 0.0
        %3055 = vmatprep.subr.mxu0 0.0
        %3056 = vmatpush1.msra.mxu0 0.0
        %3057 = vmatprep.subr.mxu0 0.0
        %3058 = vmatpush1.msra.mxu0 0.0
        %3059 = vmatprep.subr.mxu0 0.0
        %3060 = vmatpush1.msra.mxu0 0.0
        %3061 = vmatprep.subr.mxu0 0.0
        %3062 = vmatpush1.msra.mxu0 0.0
        %3063 = vmatprep.subr.mxu0 0.0
        %3064 = vmatpush1.msra.mxu0 0.0
        %3065 = vmatprep.subr.mxu0 0.0
        %3066 = vmatpush1.msra.mxu0 0.0
        %3067 = vmatprep.subr.mxu0 0.0
        %3068 = vmatpush1.msra.mxu0 0.0
        %3069 = vmatprep.subr.mxu0 0.0
        %3070 = vmatpush1.msra.mxu0 0.0
        %3071 = vmatprep.subr.mxu0 0.0
        %3072 = vmatpush1.msra.mxu0 0.0
        %3073 = vmatprep.subr.mxu0 0.0
        %3074 = vmatpush1.msra.mxu0 0.0
        %3075 = vmatprep.subr.mxu0 0.0
        %3076 = vmatpush1.msra.mxu0 0.0
        %3077 = vmatprep.subr.mxu0 0.0
        %3078 = vmatpush1.msra.mxu0 0.0
        %3079 = vmatprep.subr.mxu0 0.0
        %3080 = vmatpush1.msra.mxu0 0.0
        %3081 = vmatprep.subr.mxu0 0.0
        %3082 = vmatpush1.msra.mxu0 0.0
        %3083 = vmatprep.subr.mxu0 0.0
        %3084 = vmatpush1.msra.mxu0 0.0
        %3085 = vmatprep.subr.mxu0 0.0
        %3086 = vmatpush1.msra.mxu0 0.0
        %3087 = vmatprep.subr.mxu0 0.0
        %3088 = vmatpush1.msra.mxu0 0.0
        %3089 = vmatprep.subr.mxu0 0.0
        %3090 = vmatpush1.msra.mxu0 0.0
        %3091 = vmatprep.subr.mxu0 0.0
        %3092 = vmatpush1.msra.mxu0 0.0
        %3093 = vmatprep.subr.mxu0 0.0
        %3094 = vmatpush1.msra.mxu0 0.0
        %3095 = vmatprep.subr.mxu0 0.0
        %3096 = vmatpush1.msra.mxu0 0.0
        %3097 = vmatprep.subr.mxu0 0.0
        %3098 = vmatpush1.msra.mxu0 0.0
        %3099 = vmatprep.subr.mxu0 0.0
        %3100 = vmatpush1.msra.mxu0 0.0
        %3101 = vmatprep.subr.mxu0 0.0
        %3102 = vmatpush1.msra.mxu0 0.0
        %3103 = vmatprep.subr.mxu0 0.0
        %3104 = vmatpush1.msra.mxu0 0.0
        %3105 = vmatprep.subr.mxu0 0.0
        %3106 = vmatpush1.msra.mxu0 0.0
        %3107 = vmatprep.subr.mxu0 0.0
        %3108 = vmatpush1.msra.mxu0 0.0
        %3109 = vmatprep.mubr.f32.mxu0 0.0
        %3110 = vmatmul.mubr.f32.gmra.mrb[0].mxu0 %v3043
        %v3111 = vpop.f32.mrb[0].mxu0
        %v3112 = vadd.f32 0.0, %v3111
        %v3113 = vpop.f32.mrb[0].mxu0
        %3114 = vdwg.mxu0
        %3116 = vrot.lane.b32.xlu0 %v2855, 108
        %v3117 = vpop.permute.xlu0 %3116
        %v3120 = vsel %vm1267, %v3037, 0
        %3122 = vmatprep.subr.mxu0 0.0
        %3123 = vmatpush1.msra.mxu0 %v3117
        %3124 = vmatprep.subr.mxu0 0.0
        %3125 = vmatpush1.msra.mxu0 0.0
        %3126 = vmatprep.subr.mxu0 0.0
        %3127 = vmatpush1.msra.mxu0 0.0
        %3128 = vmatprep.subr.mxu0 0.0
        %3129 = vmatpush1.msra.mxu0 0.0
        %3130 = vmatprep.subr.mxu0 0.0
        %3131 = vmatpush1.msra.mxu0 0.0
        %3132 = vmatprep.subr.mxu0 0.0
        %3133 = vmatpush1.msra.mxu0 0.0
        %3134 = vmatprep.subr.mxu0 0.0
        %3135 = vmatpush1.msra.mxu0 0.0
        %3136 = vmatprep.subr.mxu0 0.0
        %3137 = vmatpush1.msra.mxu0 0.0
        %3138 = vmatprep.subr.mxu0 0.0
        %3139 = vmatpush1.msra.mxu0 0.0
        %3140 = vmatprep.subr.mxu0 0.0
        %3141 = vmatpush1.msra.mxu0 0.0
        %3142 = vmatprep.subr.mxu0 0.0
        %3143 = vmatpush1.msra.mxu0 0.0
        %3144 = vmatprep.subr.mxu0 0.0
        %3145 = vmatpush1.msra.mxu0 0.0
        %3146 = vmatprep.subr.mxu0 0.0
        %3147 = vmatpush1.msra.mxu0 0.0
        %3148 = vmatprep.subr.mxu0 0.0
        %3149 = vmatpush1.msra.mxu0 0.0
        %3150 = vmatprep.subr.mxu0 0.0
        %3151 = vmatpush1.msra.mxu0 0.0
        %3152 = vmatprep.subr.mxu0 0.0
        %3153 = vmatpush1.msra.mxu0 0.0
        %3154 = vmatprep.subr.mxu0 0.0
        %3155 = vmatpush1.msra.mxu0 0.0
        %3156 = vmatprep.subr.mxu0 0.0
        %3157 = vmatpush1.msra.mxu0 0.0
        %3158 = vmatprep.subr.mxu0 0.0
        %3159 = vmatpush1.msra.mxu0 0.0
        %3160 = vmatprep.subr.mxu0 0.0
        %3161 = vmatpush1.msra.mxu0 0.0
        %3162 = vmatprep.subr.mxu0 0.0
        %3163 = vmatpush1.msra.mxu0 0.0
        %3164 = vmatprep.subr.mxu0 0.0
        %3165 = vmatpush1.msra.mxu0 0.0
        %3166 = vmatprep.subr.mxu0 0.0
        %3167 = vmatpush1.msra.mxu0 0.0
        %3168 = vmatprep.subr.mxu0 0.0
        %3169 = vmatpush1.msra.mxu0 0.0
        %3170 = vmatprep.subr.mxu0 0.0
        %3171 = vmatpush1.msra.mxu0 0.0
        %3172 = vmatprep.subr.mxu0 0.0
        %3173 = vmatpush1.msra.mxu0 0.0
        %3174 = vmatprep.subr.mxu0 0.0
        %3175 = vmatpush1.msra.mxu0 0.0
        %3176 = vmatprep.subr.mxu0 0.0
        %3177 = vmatpush1.msra.mxu0 0.0
        %3178 = vmatprep.subr.mxu0 0.0
        %3179 = vmatpush1.msra.mxu0 0.0
        %3180 = vmatprep.subr.mxu0 0.0
        %3181 = vmatpush1.msra.mxu0 0.0
        %3182 = vmatprep.subr.mxu0 0.0
        %3183 = vmatpush1.msra.mxu0 0.0
        %3184 = vmatprep.subr.mxu0 0.0
        %3185 = vmatpush1.msra.mxu0 0.0
        %3186 = vmatprep.mubr.f32.mxu0 0.0
        %3187 = vmatmul.mubr.f32.gmra.mrb[0].mxu0 %v3120
        %v3188 = vpop.f32.mrb[0].mxu0
        %v3189 = vadd.f32 0.0, %v3188
        %v3190 = vpop.f32.mrb[0].mxu0
        %3191 = vdwg.mxu0
        %3194 = vrot.lane.b32.xlu0 %v3112, 20
        %v3195 = vpop.permute.xlu0 %3194
        %3196 = vrot.lane.b32.xlu0 %v3189, 20
        %v3197 = vpop.permute.xlu0 %3196
        %vm3200 = vcmask 195744
        %3201 = vst.msk [vmem:[#allocation5] sm:$0xff] %vm3200, %v3195
        %3202 = vst.msk [vmem:[#allocation5 + $0x8] sm:$0xff] %vm3200, %v3197
        %v3203 = vld [vmem:[#allocation2] sm:$0xff]
        %v3204 = vld [vmem:[#allocation2 + $0x8] sm:$0xff]
        %v3205 = vld [vmem:[#allocation3] sm:$0xff]
        %v3206 = vld [vmem:[#allocation3 + $0x8] sm:$0xff]
        %v3207 = vld [vmem:[#allocation4] sm:$0xff]
        %v3208 = vld [vmem:[#allocation4 + $0x8] sm:$0xff]
        %3210 = vrot.lane.b32.xlu0 %v3203, 104
        %v3211 = vpop.permute.xlu0 %3210
        %3213 = vrot.lane.b32.xlu0 %v3205, 104
        %v3214 = vpop.permute.xlu0 %3213
        %v3215 = vsel %vm1114, %v3211, 0
        %v3217 = vsel %vm1114, %v3214, 0
        %3219 = vmatprep.subr.mxu0 0.0
        %3220 = vmatpush1.xpose.msra.mxu0 %v3217
        %3221 = vmatprep.subr.mxu0 0.0
        %3222 = vmatpush1.xpose.msra.mxu0 0.0
        %3223 = vmatprep.subr.mxu0 0.0
        %3224 = vmatpush1.xpose.msra.mxu0 0.0
        %3225 = vmatprep.subr.mxu0 0.0
        %3226 = vmatpush1.xpose.msra.mxu0 0.0
        %3227 = vmatprep.subr.mxu0 0.0
        %3228 = vmatpush1.xpose.msra.mxu0 0.0
        %3229 = vmatprep.subr.mxu0 0.0
        %3230 = vmatpush1.xpose.msra.mxu0 0.0
        %3231 = vmatprep.subr.mxu0 0.0
        %3232 = vmatpush1.xpose.msra.mxu0 0.0
        %3233 = vmatprep.subr.mxu0 0.0
        %3234 = vmatpush1.xpose.msra.mxu0 0.0
        %3235 = vmatprep.subr.mxu0 0.0
        %3236 = vmatpush1.xpose.msra.mxu0 0.0
        %3237 = vmatprep.subr.mxu0 0.0
        %3238 = vmatpush1.xpose.msra.mxu0 0.0
        %3239 = vmatprep.subr.mxu0 0.0
        %3240 = vmatpush1.xpose.msra.mxu0 0.0
        %3241 = vmatprep.subr.mxu0 0.0
        %3242 = vmatpush1.xpose.msra.mxu0 0.0
        %3243 = vmatprep.subr.mxu0 0.0
        %3244 = vmatpush1.xpose.msra.mxu0 0.0
        %3245 = vmatprep.subr.mxu0 0.0
        %3246 = vmatpush1.xpose.msra.mxu0 0.0
        %3247 = vmatprep.subr.mxu0 0.0
        %3248 = vmatpush1.xpose.msra.mxu0 0.0
        %3249 = vmatprep.subr.mxu0 0.0
        %3250 = vmatpush1.xpose.msra.mxu0 0.0
        %3251 = vmatprep.subr.mxu0 0.0
        %3252 = vmatpush1.xpose.msra.mxu0 0.0
        %3253 = vmatprep.subr.mxu0 0.0
        %3254 = vmatpush1.xpose.msra.mxu0 0.0
        %3255 = vmatprep.subr.mxu0 0.0
        %3256 = vmatpush1.xpose.msra.mxu0 0.0
        %3257 = vmatprep.subr.mxu0 0.0
        %3258 = vmatpush1.xpose.msra.mxu0 0.0
        %3259 = vmatprep.subr.mxu0 0.0
        %3260 = vmatpush1.xpose.msra.mxu0 0.0
        %3261 = vmatprep.subr.mxu0 0.0
        %3262 = vmatpush1.xpose.msra.mxu0 0.0
        %3263 = vmatprep.subr.mxu0 0.0
        %3264 = vmatpush1.xpose.msra.mxu0 0.0
        %3265 = vmatprep.subr.mxu0 0.0
        %3266 = vmatpush1.xpose.msra.mxu0 0.0
        %3267 = vmatprep.subr.mxu0 0.0
        %3268 = vmatpush1.xpose.msra.mxu0 0.0
        %3269 = vmatprep.subr.mxu0 0.0
        %3270 = vmatpush1.xpose.msra.mxu0 0.0
        %3271 = vmatprep.subr.mxu0 0.0
        %3272 = vmatpush1.xpose.msra.mxu0 0.0
        %3273 = vmatprep.subr.mxu0 0.0
        %3274 = vmatpush1.xpose.msra.mxu0 0.0
        %3275 = vmatprep.subr.mxu0 0.0
        %3276 = vmatpush1.xpose.msra.mxu0 0.0
        %3277 = vmatprep.subr.mxu0 0.0
        %3278 = vmatpush1.xpose.msra.mxu0 0.0
        %3279 = vmatprep.subr.mxu0 0.0
        %3280 = vmatpush1.xpose.msra.mxu0 0.0
        %3281 = vmatprep.subr.mxu0 0.0
        %3282 = vmatpush1.xpose.msra.mxu0 0.0
        %3283 = vmatprep.mubr.f32.mxu0 0.0
        %3284 = vmatmul.mubr.f32.gmra.mrb[0].mxu0 %v3215
        %v3285 = vpop.f32.mrb[0].mxu0
        %v3286 = vadd.f32 0.0, %v3285
        %v3287 = vpop.f32.mrb[0].mxu0
        %3288 = vdwg.mxu0
        %3290 = vrot.lane.b32.xlu0 %v3204, 104
        %v3291 = vpop.permute.xlu0 %3290
        %3293 = vrot.lane.b32.xlu0 %v3206, 104
        %v3294 = vpop.permute.xlu0 %3293
        %v3295 = vsel %vm1114, %v3291, 0
        %v3297 = vsel %vm1114, %v3294, 0
        %3299 = vmatprep.subr.mxu0 0.0
        %3300 = vmatpush1.xpose.msra.mxu0 %v3297
        %3301 = vmatprep.subr.mxu0 0.0
        %3302 = vmatpush1.xpose.msra.mxu0 0.0
        %3303 = vmatprep.subr.mxu0 0.0
        %3304 = vmatpush1.xpose.msra.mxu0 0.0
        %3305 = vmatprep.subr.mxu0 0.0
        %3306 = vmatpush1.xpose.msra.mxu0 0.0
        %3307 = vmatprep.subr.mxu0 0.0
        %3308 = vmatpush1.xpose.msra.mxu0 0.0
        %3309 = vmatprep.subr.mxu0 0.0
        %3310 = vmatpush1.xpose.msra.mxu0 0.0
        %3311 = vmatprep.subr.mxu0 0.0
        %3312 = vmatpush1.xpose.msra.mxu0 0.0
        %3313 = vmatprep.subr.mxu0 0.0
        %3314 = vmatpush1.xpose.msra.mxu0 0.0
        %3315 = vmatprep.subr.mxu0 0.0
        %3316 = vmatpush1.xpose.msra.mxu0 0.0
        %3317 = vmatprep.subr.mxu0 0.0
        %3318 = vmatpush1.xpose.msra.mxu0 0.0
        %3319 = vmatprep.subr.mxu0 0.0
        %3320 = vmatpush1.xpose.msra.mxu0 0.0
        %3321 = vmatprep.subr.mxu0 0.0
        %3322 = vmatpush1.xpose.msra.mxu0 0.0
        %3323 = vmatprep.subr.mxu0 0.0
        %3324 = vmatpush1.xpose.msra.mxu0 0.0
        %3325 = vmatprep.subr.mxu0 0.0
        %3326 = vmatpush1.xpose.msra.mxu0 0.0
        %3327 = vmatprep.subr.mxu0 0.0
        %3328 = vmatpush1.xpose.msra.mxu0 0.0
        %3329 = vmatprep.subr.mxu0 0.0
        %3330 = vmatpush1.xpose.msra.mxu0 0.0
        %3331 = vmatprep.subr.mxu0 0.0
        %3332 = vmatpush1.xpose.msra.mxu0 0.0
        %3333 = vmatprep.subr.mxu0 0.0
        %3334 = vmatpush1.xpose.msra.mxu0 0.0
        %3335 = vmatprep.subr.mxu0 0.0
        %3336 = vmatpush1.xpose.msra.mxu0 0.0
        %3337 = vmatprep.subr.mxu0 0.0
        %3338 = vmatpush1.xpose.msra.mxu0 0.0
        %3339 = vmatprep.subr.mxu0 0.0
        %3340 = vmatpush1.xpose.msra.mxu0 0.0
        %3341 = vmatprep.subr.mxu0 0.0
        %3342 = vmatpush1.xpose.msra.mxu0 0.0
        %3343 = vmatprep.subr.mxu0 0.0
        %3344 = vmatpush1.xpose.msra.mxu0 0.0
        %3345 = vmatprep.subr.mxu0 0.0
        %3346 = vmatpush1.xpose.msra.mxu0 0.0
        %3347 = vmatprep.subr.mxu0 0.0
        %3348 = vmatpush1.xpose.msra.mxu0 0.0
        %3349 = vmatprep.subr.mxu0 0.0
        %3350 = vmatpush1.xpose.msra.mxu0 0.0
        %3351 = vmatprep.subr.mxu0 0.0
        %3352 = vmatpush1.xpose.msra.mxu0 0.0
        %3353 = vmatprep.subr.mxu0 0.0
        %3354 = vmatpush1.xpose.msra.mxu0 0.0
        %3355 = vmatprep.subr.mxu0 0.0
        %3356 = vmatpush1.xpose.msra.mxu0 0.0
        %3357 = vmatprep.subr.mxu0 0.0
        %3358 = vmatpush1.xpose.msra.mxu0 0.0
        %3359 = vmatprep.subr.mxu0 0.0
        %3360 = vmatpush1.xpose.msra.mxu0 0.0
        %3361 = vmatprep.subr.mxu0 0.0
        %3362 = vmatpush1.xpose.msra.mxu0 0.0
        %3363 = vmatprep.mubr.f32.mxu0 0.0
        %3364 = vmatmul.mubr.f32.gmra.mrb[0].mxu0 %v3295
        %v3365 = vpop.f32.mrb[0].mxu0
        %v3366 = vadd.f32 0.0, %v3365
        %v3367 = vpop.f32.mrb[0].mxu0
        %3368 = vdwg.mxu0
        %v3369 = vsel %vm1267, %v3286, -inf
        %3370 = vmax.xlane.f32.xlu0 %v3369
        %v3371 = vpop.xlane.xlu0 %3370
        %v3372 = vsel %vm1267, %v3366, -inf
        %3373 = vmax.xlane.f32.xlu0 %v3372
        %v3374 = vpop.xlane.xlu0 %3373
        %v3375 = vsub.f32 %v3286, %v3371
        %v3376 = vsub.f32 %v3366, %v3374
        %v3377 = vmul.f32 %v3375, 1.442695
        %v3378 = vpow.pop %v3377
        %v3379 = vmul.f32 %v3376, 1.442695
        %v3380 = vpow.pop %v3379
        %v3381 = vsel %vm1267, %v3378, 0.0
        %3382 = vadd.xlane.f32.xlu0 %v3381
        %v3383 = vpop.xlane.xlu0 %3382
        %v3384 = vsel %vm1267, %v3380, 0.0
        %3385 = vadd.xlane.f32.xlu0 %v3384
        %v3386 = vpop.xlane.xlu0 %3385
        %v3387 = vrcp.pop %v3383
        %v3388 = vrcp.pop %v3386
        %v3389 = vmul.f32 %v3378, %v3387
        %v3390 = vmul.f32 %v3380, %v3388
        %3392 = vrot.lane.b32.xlu0 %v3207, 104
        %v3393 = vpop.permute.xlu0 %3392
        %v3396 = vsel %vm1267, %v3389, 0
        %3398 = vmatprep.subr.mxu0 0.0
        %3399 = vmatpush1.msra.mxu0 %v3393
        %3400 = vmatprep.subr.mxu0 0.0
        %3401 = vmatpush1.msra.mxu0 0.0
        %3402 = vmatprep.subr.mxu0 0.0
        %3403 = vmatpush1.msra.mxu0 0.0
        %3404 = vmatprep.subr.mxu0 0.0
        %3405 = vmatpush1.msra.mxu0 0.0
        %3406 = vmatprep.subr.mxu0 0.0
        %3407 = vmatpush1.msra.mxu0 0.0
        %3408 = vmatprep.subr.mxu0 0.0
        %3409 = vmatpush1.msra.mxu0 0.0
        %3410 = vmatprep.subr.mxu0 0.0
        %3411 = vmatpush1.msra.mxu0 0.0
        %3412 = vmatprep.subr.mxu0 0.0
        %3413 = vmatpush1.msra.mxu0 0.0
        %3414 = vmatprep.subr.mxu0 0.0
        %3415 = vmatpush1.msra.mxu0 0.0
        %3416 = vmatprep.subr.mxu0 0.0
        %3417 = vmatpush1.msra.mxu0 0.0
        %3418 = vmatprep.subr.mxu0 0.0
        %3419 = vmatpush1.msra.mxu0 0.0
        %3420 = vmatprep.subr.mxu0 0.0
        %3421 = vmatpush1.msra.mxu0 0.0
        %3422 = vmatprep.subr.mxu0 0.0
        %3423 = vmatpush1.msra.mxu0 0.0
        %3424 = vmatprep.subr.mxu0 0.0
        %3425 = vmatpush1.msra.mxu0 0.0
        %3426 = vmatprep.subr.mxu0 0.0
        %3427 = vmatpush1.msra.mxu0 0.0
        %3428 = vmatprep.subr.mxu0 0.0
        %3429 = vmatpush1.msra.mxu0 0.0
        %3430 = vmatprep.subr.mxu0 0.0
        %3431 = vmatpush1.msra.mxu0 0.0
        %3432 = vmatprep.subr.mxu0 0.0
        %3433 = vmatpush1.msra.mxu0 0.0
        %3434 = vmatprep.subr.mxu0 0.0
        %3435 = vmatpush1.msra.mxu0 0.0
        %3436 = vmatprep.subr.mxu0 0.0
        %3437 = vmatpush1.msra.mxu0 0.0
        %3438 = vmatprep.subr.mxu0 0.0
        %3439 = vmatpush1.msra.mxu0 0.0
        %3440 = vmatprep.subr.mxu0 0.0
        %3441 = vmatpush1.msra.mxu0 0.0
        %3442 = vmatprep.subr.mxu0 0.0
        %3443 = vmatpush1.msra.mxu0 0.0
        %3444 = vmatprep.subr.mxu0 0.0
        %3445 = vmatpush1.msra.mxu0 0.0
        %3446 = vmatprep.subr.mxu0 0.0
        %3447 = vmatpush1.msra.mxu0 0.0
        %3448 = vmatprep.subr.mxu0 0.0
        %3449 = vmatpush1.msra.mxu0 0.0
        %3450 = vmatprep.subr.mxu0 0.0
        %3451 = vmatpush1.msra.mxu0 0.0
        %3452 = vmatprep.subr.mxu0 0.0
        %3453 = vmatpush1.msra.mxu0 0.0
        %3454 = vmatprep.subr.mxu0 0.0
        %3455 = vmatpush1.msra.mxu0 0.0
        %3456 = vmatprep.subr.mxu0 0.0
        %3457 = vmatpush1.msra.mxu0 0.0
        %3458 = vmatprep.subr.mxu0 0.0
        %3459 = vmatpush1.msra.mxu0 0.0
        %3460 = vmatprep.subr.mxu0 0.0
        %3461 = vmatpush1.msra.mxu0 0.0
        %3462 = vmatprep.mubr.f32.mxu0 0.0
        %3463 = vmatmul.mubr.f32.gmra.mrb[0].mxu0 %v3396
        %v3464 = vpop.f32.mrb[0].mxu0
        %v3465 = vadd.f32 0.0, %v3464
        %v3466 = vpop.f32.mrb[0].mxu0
        %3467 = vdwg.mxu0
        %3469 = vrot.lane.b32.xlu0 %v3208, 104
        %v3470 = vpop.permute.xlu0 %3469
        %v3473 = vsel %vm1267, %v3390, 0
        %3475 = vmatprep.subr.mxu0 0.0
        %3476 = vmatpush1.msra.mxu0 %v3470
        %3477 = vmatprep.subr.mxu0 0.0
        %3478 = vmatpush1.msra.mxu0 0.0
        %3479 = vmatprep.subr.mxu0 0.0
        %3480 = vmatpush1.msra.mxu0 0.0
        %3481 = vmatprep.subr.mxu0 0.0
        %3482 = vmatpush1.msra.mxu0 0.0
        %3483 = vmatprep.subr.mxu0 0.0
        %3484 = vmatpush1.msra.mxu0 0.0
        %3485 = vmatprep.subr.mxu0 0.0
        %3486 = vmatpush1.msra.mxu0 0.0
        %3487 = vmatprep.subr.mxu0 0.0
        %3488 = vmatpush1.msra.mxu0 0.0
        %3489 = vmatprep.subr.mxu0 0.0
        %3490 = vmatpush1.msra.mxu0 0.0
        %3491 = vmatprep.subr.mxu0 0.0
        %3492 = vmatpush1.msra.mxu0 0.0
        %3493 = vmatprep.subr.mxu0 0.0
        %3494 = vmatpush1.msra.mxu0 0.0
        %3495 = vmatprep.subr.mxu0 0.0
        %3496 = vmatpush1.msra.mxu0 0.0
        %3497 = vmatprep.subr.mxu0 0.0
        %3498 = vmatpush1.msra.mxu0 0.0
        %3499 = vmatprep.subr.mxu0 0.0
        %3500 = vmatpush1.msra.mxu0 0.0
        %3501 = vmatprep.subr.mxu0 0.0
        %3502 = vmatpush1.msra.mxu0 0.0
        %3503 = vmatprep.subr.mxu0 0.0
        %3504 = vmatpush1.msra.mxu0 0.0
        %3505 = vmatprep.subr.mxu0 0.0
        %3506 = vmatpush1.msra.mxu0 0.0
        %3507 = vmatprep.subr.mxu0 0.0
        %3508 = vmatpush1.msra.mxu0 0.0
        %3509 = vmatprep.subr.mxu0 0.0
        %3510 = vmatpush1.msra.mxu0 0.0
        %3511 = vmatprep.subr.mxu0 0.0
        %3512 = vmatpush1.msra.mxu0 0.0
        %3513 = vmatprep.subr.mxu0 0.0
        %3514 = vmatpush1.msra.mxu0 0.0
        %3515 = vmatprep.subr.mxu0 0.0
        %3516 = vmatpush1.msra.mxu0 0.0
        %3517 = vmatprep.subr.mxu0 0.0
        %3518 = vmatpush1.msra.mxu0 0.0
        %3519 = vmatprep.subr.mxu0 0.0
        %3520 = vmatpush1.msra.mxu0 0.0
        %3521 = vmatprep.subr.mxu0 0.0
        %3522 = vmatpush1.msra.mxu0 0.0
        %3523 = vmatprep.subr.mxu0 0.0
        %3524 = vmatpush1.msra.mxu0 0.0
        %3525 = vmatprep.subr.mxu0 0.0
        %3526 = vmatpush1.msra.mxu0 0.0
        %3527 = vmatprep.subr.mxu0 0.0
        %3528 = vmatpush1.msra.mxu0 0.0
        %3529 = vmatprep.subr.mxu0 0.0
        %3530 = vmatpush1.msra.mxu0 0.0
        %3531 = vmatprep.subr.mxu0 0.0
        %3532 = vmatpush1.msra.mxu0 0.0
        %3533 = vmatprep.subr.mxu0 0.0
        %3534 = vmatpush1.msra.mxu0 0.0
        %3535 = vmatprep.subr.mxu0 0.0
        %3536 = vmatpush1.msra.mxu0 0.0
        %3537 = vmatprep.subr.mxu0 0.0
        %3538 = vmatpush1.msra.mxu0 0.0
        %3539 = vmatprep.mubr.f32.mxu0 0.0
        %3540 = vmatmul.mubr.f32.gmra.mrb[0].mxu0 %v3473
        %v3541 = vpop.f32.mrb[0].mxu0
        %v3542 = vadd.f32 0.0, %v3541
        %v3543 = vpop.f32.mrb[0].mxu0
        %3544 = vdwg.mxu0
        %3547 = vrot.lane.b32.xlu0 %v3465, 24
        %v3548 = vpop.permute.xlu0 %3547
        %3549 = vrot.lane.b32.xlu0 %v3542, 24
        %v3550 = vpop.permute.xlu0 %3549
        %vm3553 = vcmask 228544
        %3554 = vst.msk [vmem:[#allocation5] sm:$0xff] %vm3553, %v3548
        %3555 = vst.msk [vmem:[#allocation5 + $0x8] sm:$0xff] %vm3553, %v3550
        %v3556 = vld [vmem:[#allocation2] sm:$0xff]
        %v3557 = vld [vmem:[#allocation2 + $0x8] sm:$0xff]
        %v3558 = vld [vmem:[#allocation3] sm:$0xff]
        %v3559 = vld [vmem:[#allocation3 + $0x8] sm:$0xff]
        %v3560 = vld [vmem:[#allocation4] sm:$0xff]
        %v3561 = vld [vmem:[#allocation4 + $0x8] sm:$0xff]
        %3563 = vrot.lane.b32.xlu0 %v3556, 100
        %v3564 = vpop.permute.xlu0 %3563
        %3566 = vrot.lane.b32.xlu0 %v3558, 100
        %v3567 = vpop.permute.xlu0 %3566
        %v3568 = vsel %vm1114, %v3564, 0
        %v3570 = vsel %vm1114, %v3567, 0
        %3572 = vmatprep.subr.mxu0 0.0
        %3573 = vmatpush1.xpose.msra.mxu0 %v3570
        %3574 = vmatprep.subr.mxu0 0.0
        %3575 = vmatpush1.xpose.msra.mxu0 0.0
        %3576 = vmatprep.subr.mxu0 0.0
        %3577 = vmatpush1.xpose.msra.mxu0 0.0
        %3578 = vmatprep.subr.mxu0 0.0
        %3579 = vmatpush1.xpose.msra.mxu0 0.0
        %3580 = vmatprep.subr.mxu0 0.0
        %3581 = vmatpush1.xpose.msra.mxu0 0.0
        %3582 = vmatprep.subr.mxu0 0.0
        %3583 = vmatpush1.xpose.msra.mxu0 0.0
        %3584 = vmatprep.subr.mxu0 0.0
        %3585 = vmatpush1.xpose.msra.mxu0 0.0
        %3586 = vmatprep.subr.mxu0 0.0
        %3587 = vmatpush1.xpose.msra.mxu0 0.0
        %3588 = vmatprep.subr.mxu0 0.0
        %3589 = vmatpush1.xpose.msra.mxu0 0.0
        %3590 = vmatprep.subr.mxu0 0.0
        %3591 = vmatpush1.xpose.msra.mxu0 0.0
        %3592 = vmatprep.subr.mxu0 0.0
        %3593 = vmatpush1.xpose.msra.mxu0 0.0
        %3594 = vmatprep.subr.mxu0 0.0
        %3595 = vmatpush1.xpose.msra.mxu0 0.0
        %3596 = vmatprep.subr.mxu0 0.0
        %3597 = vmatpush1.xpose.msra.mxu0 0.0
        %3598 = vmatprep.subr.mxu0 0.0
        %3599 = vmatpush1.xpose.msra.mxu0 0.0
        %3600 = vmatprep.subr.mxu0 0.0
        %3601 = vmatpush1.xpose.msra.mxu0 0.0
        %3602 = vmatprep.subr.mxu0 0.0
        %3603 = vmatpush1.xpose.msra.mxu0 0.0
        %3604 = vmatprep.subr.mxu0 0.0
        %3605 = vmatpush1.xpose.msra.mxu0 0.0
        %3606 = vmatprep.subr.mxu0 0.0
        %3607 = vmatpush1.xpose.msra.mxu0 0.0
        %3608 = vmatprep.subr.mxu0 0.0
        %3609 = vmatpush1.xpose.msra.mxu0 0.0
        %3610 = vmatprep.subr.mxu0 0.0
        %3611 = vmatpush1.xpose.msra.mxu0 0.0
        %3612 = vmatprep.subr.mxu0 0.0
        %3613 = vmatpush1.xpose.msra.mxu0 0.0
        %3614 = vmatprep.subr.mxu0 0.0
        %3615 = vmatpush1.xpose.msra.mxu0 0.0
        %3616 = vmatprep.subr.mxu0 0.0
        %3617 = vmatpush1.xpose.msra.mxu0 0.0
        %3618 = vmatprep.subr.mxu0 0.0
        %3619 = vmatpush1.xpose.msra.mxu0 0.0
        %3620 = vmatprep.subr.mxu0 0.0
        %3621 = vmatpush1.xpose.msra.mxu0 0.0
        %3622 = vmatprep.subr.mxu0 0.0
        %3623 = vmatpush1.xpose.msra.mxu0 0.0
        %3624 = vmatprep.subr.mxu0 0.0
        %3625 = vmatpush1.xpose.msra.mxu0 0.0
        %3626 = vmatprep.subr.mxu0 0.0
        %3627 = vmatpush1.xpose.msra.mxu0 0.0
        %3628 = vmatprep.subr.mxu0 0.0
        %3629 = vmatpush1.xpose.msra.mxu0 0.0
        %3630 = vmatprep.subr.mxu0 0.0
        %3631 = vmatpush1.xpose.msra.mxu0 0.0
        %3632 = vmatprep.subr.mxu0 0.0
        %3633 = vmatpush1.xpose.msra.mxu0 0.0
        %3634 = vmatprep.subr.mxu0 0.0
        %3635 = vmatpush1.xpose.msra.mxu0 0.0
        %3636 = vmatprep.mubr.f32.mxu0 0.0
        %3637 = vmatmul.mubr.f32.gmra.mrb[0].mxu0 %v3568
        %v3638 = vpop.f32.mrb[0].mxu0
        %v3639 = vadd.f32 0.0, %v3638
        %v3640 = vpop.f32.mrb[0].mxu0
        %3641 = vdwg.mxu0
        %3643 = vrot.lane.b32.xlu0 %v3557, 100
        %v3644 = vpop.permute.xlu0 %3643
        %3646 = vrot.lane.b32.xlu0 %v3559, 100
        %v3647 = vpop.permute.xlu0 %3646
        %v3648 = vsel %vm1114, %v3644, 0
        %v3650 = vsel %vm1114, %v3647, 0
        %3652 = vmatprep.subr.mxu0 0.0
        %3653 = vmatpush1.xpose.msra.mxu0 %v3650
        %3654 = vmatprep.subr.mxu0 0.0
        %3655 = vmatpush1.xpose.msra.mxu0 0.0
        %3656 = vmatprep.subr.mxu0 0.0
        %3657 = vmatpush1.xpose.msra.mxu0 0.0
        %3658 = vmatprep.subr.mxu0 0.0
        %3659 = vmatpush1.xpose.msra.mxu0 0.0
        %3660 = vmatprep.subr.mxu0 0.0
        %3661 = vmatpush1.xpose.msra.mxu0 0.0
        %3662 = vmatprep.subr.mxu0 0.0
        %3663 = vmatpush1.xpose.msra.mxu0 0.0
        %3664 = vmatprep.subr.mxu0 0.0
        %3665 = vmatpush1.xpose.msra.mxu0 0.0
        %3666 = vmatprep.subr.mxu0 0.0
        %3667 = vmatpush1.xpose.msra.mxu0 0.0
        %3668 = vmatprep.subr.mxu0 0.0
        %3669 = vmatpush1.xpose.msra.mxu0 0.0
        %3670 = vmatprep.subr.mxu0 0.0
        %3671 = vmatpush1.xpose.msra.mxu0 0.0
        %3672 = vmatprep.subr.mxu0 0.0
        %3673 = vmatpush1.xpose.msra.mxu0 0.0
        %3674 = vmatprep.subr.mxu0 0.0
        %3675 = vmatpush1.xpose.msra.mxu0 0.0
        %3676 = vmatprep.subr.mxu0 0.0
        %3677 = vmatpush1.xpose.msra.mxu0 0.0
        %3678 = vmatprep.subr.mxu0 0.0
        %3679 = vmatpush1.xpose.msra.mxu0 0.0
        %3680 = vmatprep.subr.mxu0 0.0
        %3681 = vmatpush1.xpose.msra.mxu0 0.0
        %3682 = vmatprep.subr.mxu0 0.0
        %3683 = vmatpush1.xpose.msra.mxu0 0.0
        %3684 = vmatprep.subr.mxu0 0.0
        %3685 = vmatpush1.xpose.msra.mxu0 0.0
        %3686 = vmatprep.subr.mxu0 0.0
        %3687 = vmatpush1.xpose.msra.mxu0 0.0
        %3688 = vmatprep.subr.mxu0 0.0
        %3689 = vmatpush1.xpose.msra.mxu0 0.0
        %3690 = vmatprep.subr.mxu0 0.0
        %3691 = vmatpush1.xpose.msra.mxu0 0.0
        %3692 = vmatprep.subr.mxu0 0.0
        %3693 = vmatpush1.xpose.msra.mxu0 0.0
        %3694 = vmatprep.subr.mxu0 0.0
        %3695 = vmatpush1.xpose.msra.mxu0 0.0
        %3696 = vmatprep.subr.mxu0 0.0
        %3697 = vmatpush1.xpose.msra.mxu0 0.0
        %3698 = vmatprep.subr.mxu0 0.0
        %3699 = vmatpush1.xpose.msra.mxu0 0.0
        %3700 = vmatprep.subr.mxu0 0.0
        %3701 = vmatpush1.xpose.msra.mxu0 0.0
        %3702 = vmatprep.subr.mxu0 0.0
        %3703 = vmatpush1.xpose.msra.mxu0 0.0
        %3704 = vmatprep.subr.mxu0 0.0
        %3705 = vmatpush1.xpose.msra.mxu0 0.0
        %3706 = vmatprep.subr.mxu0 0.0
        %3707 = vmatpush1.xpose.msra.mxu0 0.0
        %3708 = vmatprep.subr.mxu0 0.0
        %3709 = vmatpush1.xpose.msra.mxu0 0.0
        %3710 = vmatprep.subr.mxu0 0.0
        %3711 = vmatpush1.xpose.msra.mxu0 0.0
        %3712 = vmatprep.subr.mxu0 0.0
        %3713 = vmatpush1.xpose.msra.mxu0 0.0
        %3714 = vmatprep.subr.mxu0 0.0
        %3715 = vmatpush1.xpose.msra.mxu0 0.0
        %3716 = vmatprep.mubr.f32.mxu0 0.0
        %3717 = vmatmul.mubr.f32.gmra.mrb[0].mxu0 %v3648
        %v3718 = vpop.f32.mrb[0].mxu0
        %v3719 = vadd.f32 0.0, %v3718
        %v3720 = vpop.f32.mrb[0].mxu0
        %3721 = vdwg.mxu0
        %v3722 = vsel %vm1267, %v3639, -inf
        %3723 = vmax.xlane.f32.xlu0 %v3722
        %v3724 = vpop.xlane.xlu0 %3723
        %v3725 = vsel %vm1267, %v3719, -inf
        %3726 = vmax.xlane.f32.xlu0 %v3725
        %v3727 = vpop.xlane.xlu0 %3726
        %v3728 = vsub.f32 %v3639, %v3724
        %v3729 = vsub.f32 %v3719, %v3727
        %v3730 = vmul.f32 %v3728, 1.442695
        %v3731 = vpow.pop %v3730
        %v3732 = vmul.f32 %v3729, 1.442695
        %v3733 = vpow.pop %v3732
        %v3734 = vsel %vm1267, %v3731, 0.0
        %3735 = vadd.xlane.f32.xlu0 %v3734
        %v3736 = vpop.xlane.xlu0 %3735
        %v3737 = vsel %vm1267, %v3733, 0.0
        %3738 = vadd.xlane.f32.xlu0 %v3737
        %v3739 = vpop.xlane.xlu0 %3738
        %v3740 = vrcp.pop %v3736
        %v3741 = vrcp.pop %v3739
        %v3742 = vmul.f32 %v3731, %v3740
        %v3743 = vmul.f32 %v3733, %v3741
        %3745 = vrot.lane.b32.xlu0 %v3560, 100
        %v3746 = vpop.permute.xlu0 %3745
        %v3749 = vsel %vm1267, %v3742, 0
        %3751 = vmatprep.subr.mxu0 0.0
        %3752 = vmatpush1.msra.mxu0 %v3746
        %3753 = vmatprep.subr.mxu0 0.0
        %3754 = vmatpush1.msra.mxu0 0.0
        %3755 = vmatprep.subr.mxu0 0.0
        %3756 = vmatpush1.msra.mxu0 0.0
        %3757 = vmatprep.subr.mxu0 0.0
        %3758 = vmatpush1.msra.mxu0 0.0
        %3759 = vmatprep.subr.mxu0 0.0
        %3760 = vmatpush1.msra.mxu0 0.0
        %3761 = vmatprep.subr.mxu0 0.0
        %3762 = vmatpush1.msra.mxu0 0.0
        %3763 = vmatprep.subr.mxu0 0.0
        %3764 = vmatpush1.msra.mxu0 0.0
        %3765 = vmatprep.subr.mxu0 0.0
        %3766 = vmatpush1.msra.mxu0 0.0
        %3767 = vmatprep.subr.mxu0 0.0
        %3768 = vmatpush1.msra.mxu0 0.0
        %3769 = vmatprep.subr.mxu0 0.0
        %3770 = vmatpush1.msra.mxu0 0.0
        %3771 = vmatprep.subr.mxu0 0.0
        %3772 = vmatpush1.msra.mxu0 0.0
        %3773 = vmatprep.subr.mxu0 0.0
        %3774 = vmatpush1.msra.mxu0 0.0
        %3775 = vmatprep.subr.mxu0 0.0
        %3776 = vmatpush1.msra.mxu0 0.0
        %3777 = vmatprep.subr.mxu0 0.0
        %3778 = vmatpush1.msra.mxu0 0.0
        %3779 = vmatprep.subr.mxu0 0.0
        %3780 = vmatpush1.msra.mxu0 0.0
        %3781 = vmatprep.subr.mxu0 0.0
        %3782 = vmatpush1.msra.mxu0 0.0
        %3783 = vmatprep.subr.mxu0 0.0
        %3784 = vmatpush1.msra.mxu0 0.0
        %3785 = vmatprep.subr.mxu0 0.0
        %3786 = vmatpush1.msra.mxu0 0.0
        %3787 = vmatprep.subr.mxu0 0.0
        %3788 = vmatpush1.msra.mxu0 0.0
        %3789 = vmatprep.subr.mxu0 0.0
        %3790 = vmatpush1.msra.mxu0 0.0
        %3791 = vmatprep.subr.mxu0 0.0
        %3792 = vmatpush1.msra.mxu0 0.0
        %3793 = vmatprep.subr.mxu0 0.0
        %3794 = vmatpush1.msra.mxu0 0.0
        %3795 = vmatprep.subr.mxu0 0.0
        %3796 = vmatpush1.msra.mxu0 0.0
        %3797 = vmatprep.subr.mxu0 0.0
        %3798 = vmatpush1.msra.mxu0 0.0
        %3799 = vmatprep.subr.mxu0 0.0
        %3800 = vmatpush1.msra.mxu0 0.0
        %3801 = vmatprep.subr.mxu0 0.0
        %3802 = vmatpush1.msra.mxu0 0.0
        %3803 = vmatprep.subr.mxu0 0.0
        %3804 = vmatpush1.msra.mxu0 0.0
        %3805 = vmatprep.subr.mxu0 0.0
        %3806 = vmatpush1.msra.mxu0 0.0
        %3807 = vmatprep.subr.mxu0 0.0
        %3808 = vmatpush1.msra.mxu0 0.0
        %3809 = vmatprep.subr.mxu0 0.0
        %3810 = vmatpush1.msra.mxu0 0.0
        %3811 = vmatprep.subr.mxu0 0.0
        %3812 = vmatpush1.msra.mxu0 0.0
        %3813 = vmatprep.subr.mxu0 0.0
        %3814 = vmatpush1.msra.mxu0 0.0
        %3815 = vmatprep.mubr.f32.mxu0 0.0
        %3816 = vmatmul.mubr.f32.gmra.mrb[0].mxu0 %v3749
        %v3817 = vpop.f32.mrb[0].mxu0
        %v3818 = vadd.f32 0.0, %v3817
        %v3819 = vpop.f32.mrb[0].mxu0
        %3820 = vdwg.mxu0
        %3822 = vrot.lane.b32.xlu0 %v3561, 100
        %v3823 = vpop.permute.xlu0 %3822
        %v3826 = vsel %vm1267, %v3743, 0
        %3828 = vmatprep.subr.mxu0 0.0
        %3829 = vmatpush1.msra.mxu0 %v3823
        %3830 = vmatprep.subr.mxu0 0.0
        %3831 = vmatpush1.msra.mxu0 0.0
        %3832 = vmatprep.subr.mxu0 0.0
        %3833 = vmatpush1.msra.mxu0 0.0
        %3834 = vmatprep.subr.mxu0 0.0
        %3835 = vmatpush1.msra.mxu0 0.0
        %3836 = vmatprep.subr.mxu0 0.0
        %3837 = vmatpush1.msra.mxu0 0.0
        %3838 = vmatprep.subr.mxu0 0.0
        %3839 = vmatpush1.msra.mxu0 0.0
        %3840 = vmatprep.subr.mxu0 0.0
        %3841 = vmatpush1.msra.mxu0 0.0
        %3842 = vmatprep.subr.mxu0 0.0
        %3843 = vmatpush1.msra.mxu0 0.0
        %3844 = vmatprep.subr.mxu0 0.0
        %3845 = vmatpush1.msra.mxu0 0.0
        %3846 = vmatprep.subr.mxu0 0.0
        %3847 = vmatpush1.msra.mxu0 0.0
        %3848 = vmatprep.subr.mxu0 0.0
        %3849 = vmatpush1.msra.mxu0 0.0
        %3850 = vmatprep.subr.mxu0 0.0
        %3851 = vmatpush1.msra.mxu0 0.0
        %3852 = vmatprep.subr.mxu0 0.0
        %3853 = vmatpush1.msra.mxu0 0.0
        %3854 = vmatprep.subr.mxu0 0.0
        %3855 = vmatpush1.msra.mxu0 0.0
        %3856 = vmatprep.subr.mxu0 0.0
        %3857 = vmatpush1.msra.mxu0 0.0
        %3858 = vmatprep.subr.mxu0 0.0
        %3859 = vmatpush1.msra.mxu0 0.0
        %3860 = vmatprep.subr.mxu0 0.0
        %3861 = vmatpush1.msra.mxu0 0.0
        %3862 = vmatprep.subr.mxu0 0.0
        %3863 = vmatpush1.msra.mxu0 0.0
        %3864 = vmatprep.subr.mxu0 0.0
        %3865 = vmatpush1.msra.mxu0 0.0
        %3866 = vmatprep.subr.mxu0 0.0
        %3867 = vmatpush1.msra.mxu0 0.0
        %3868 = vmatprep.subr.mxu0 0.0
        %3869 = vmatpush1.msra.mxu0 0.0
        %3870 = vmatprep.subr.mxu0 0.0
        %3871 = vmatpush1.msra.mxu0 0.0
        %3872 = vmatprep.subr.mxu0 0.0
        %3873 = vmatpush1.msra.mxu0 0.0
        %3874 = vmatprep.subr.mxu0 0.0
        %3875 = vmatpush1.msra.mxu0 0.0
        %3876 = vmatprep.subr.mxu0 0.0
        %3877 = vmatpush1.msra.mxu0 0.0
        %3878 = vmatprep.subr.mxu0 0.0
        %3879 = vmatpush1.msra.mxu0 0.0
        %3880 = vmatprep.subr.mxu0 0.0
        %3881 = vmatpush1.msra.mxu0 0.0
        %3882 = vmatprep.subr.mxu0 0.0
        %3883 = vmatpush1.msra.mxu0 0.0
        %3884 = vmatprep.subr.mxu0 0.0
        %3885 = vmatpush1.msra.mxu0 0.0
        %3886 = vmatprep.subr.mxu0 0.0
        %3887 = vmatpush1.msra.mxu0 0.0
        %3888 = vmatprep.subr.mxu0 0.0
        %3889 = vmatpush1.msra.mxu0 0.0
        %3890 = vmatprep.subr.mxu0 0.0
        %3891 = vmatpush1.msra.mxu0 0.0
        %3892 = vmatprep.mubr.f32.mxu0 0.0
        %3893 = vmatmul.mubr.f32.gmra.mrb[0].mxu0 %v3826
        %v3894 = vpop.f32.mrb[0].mxu0
        %v3895 = vadd.f32 0.0, %v3894
        %v3896 = vpop.f32.mrb[0].mxu0
        %3897 = vdwg.mxu0
        %3900 = vrot.lane.b32.xlu0 %v3818, 28
        %v3901 = vpop.permute.xlu0 %3900
        %3902 = vrot.lane.b32.xlu0 %v3895, 28
        %v3903 = vpop.permute.xlu0 %3902
        %vm3906 = vcmask 261344
        %3907 = vst.msk [vmem:[#allocation5] sm:$0xff] %vm3906, %v3901
        %3908 = vst.msk [vmem:[#allocation5 + $0x8] sm:$0xff] %vm3906, %v3903
        %v3909 = vld [vmem:[#allocation5] sm:$0xff]
        %v3910 = vld [vmem:[#allocation5 + $0x8] sm:$0xff]
        %v3911 = vpack.c.bf16 %v3910, %v3909
        %v3912 = vld [vmem:[%s9] sm:$0xf]
        %v3913 = vld [vmem:[%s9 + $0x4] sm:$0xf]
        %v3914 = vld [vmem:[%s9 + $0x8] sm:$0xf]
        %v3915 = vld [vmem:[%s9 + $0xc] sm:$0xf]
        %v3916 = vld [vmem:[#allocation15] sm:$0x1]
        %v3918 = vlaneseq
        %v3919 = vshrl.u32 %v3918, 7
        %v3920 = vsub.s32 0, %v3919
        %v3921 = vrot.slane %v3916, %v3920
        %v3927 = vunpack.c.l.b16 %v3912
        %v3928 = vunpack.c.l.b16 %v3913
        %v3929 = vunpack.c.l.b16 %v3914
        %v3930 = vunpack.c.l.b16 %v3915
        %v3931 = vpack.c.b16 %v3928, %v3927
        %v3932 = vpack.c.b16 %v3930, %v3929
        %v3936 = vsel %vm867, %v3911, 0
        %3938 = vmatprep.subr.bf16.mxu0 0
        %3939 = vmatpush1.bf16.msra.mxu0 %v3931
        %3940 = vmatprep.subr.bf16.mxu0 0
        %3941 = vmatpush1.bf16.msra.mxu0 %v3932
        %3942 = vmatprep.subr.bf16.mxu0 0
        %3943 = vmatpush1.bf16.msra.mxu0 0
        %3944 = vmatprep.subr.bf16.mxu0 0
        %3945 = vmatpush1.bf16.msra.mxu0 0
        %3946 = vmatprep.subr.bf16.mxu0 0
        %3947 = vmatpush1.bf16.msra.mxu0 0
        %3948 = vmatprep.subr.bf16.mxu0 0
        %3949 = vmatpush1.bf16.msra.mxu0 0
        %3950 = vmatprep.subr.bf16.mxu0 0
        %3951 = vmatpush1.bf16.msra.mxu0 0
        %3952 = vmatprep.subr.bf16.mxu0 0
        %3953 = vmatpush1.bf16.msra.mxu0 0
        %3954 = vmatprep.subr.bf16.mxu0 0
        %3955 = vmatpush1.bf16.msra.mxu0 0
        %3956 = vmatprep.subr.bf16.mxu0 0
        %3957 = vmatpush1.bf16.msra.mxu0 0
        %3958 = vmatprep.subr.bf16.mxu0 0
        %3959 = vmatpush1.bf16.msra.mxu0 0
        %3960 = vmatprep.subr.bf16.mxu0 0
        %3961 = vmatpush1.bf16.msra.mxu0 0
        %3962 = vmatprep.subr.bf16.mxu0 0
        %3963 = vmatpush1.bf16.msra.mxu0 0
        %3964 = vmatprep.subr.bf16.mxu0 0
        %3965 = vmatpush1.bf16.msra.mxu0 0
        %3966 = vmatprep.subr.bf16.mxu0 0
        %3967 = vmatpush1.bf16.msra.mxu0 0
        %3968 = vmatprep.subr.bf16.mxu0 0
        %3969 = vmatpush1.bf16.msra.mxu0 0
        %3970 = vmatprep.mubr.bf16.mxu0 0
        %3971 = vmatmul.mubr.bf16.gmra.mrb[0].mxu0 %v3936
        %v3972 = vpop.f32.mrb[0].mxu0
        %v3973 = vadd.f32 %v3921, %v3972
        %v3974 = vpop.f32.mrb[0].mxu0
        %v3975 = vpop.f32.mrb[0].mxu0
        %v3976 = vadd.f32 %v3921, %v3975
        %v3977 = vpop.f32.mrb[0].mxu0
        %3978 = vdwg.mxu0
        %v3979 = vld [vmem:[%s858] sm:$0xff]
        %v3980 = vadd.f32 %v3973, %v3979
        %v3981 = vld [vmem:[%s862] sm:$0xff]
        %v3982 = vadd.f32 %v3976, %v3981
        %v3983 = vld [vmem:[#allocation17] sm:$0x1]
        %v3984 = vld [vmem:[#allocation18] sm:$0x1]
        %v3985 = vld [vmem:[%s13] sm:$0xf]
        %v3986 = vld [vmem:[%s13 + $0x4] sm:$0xf]
        %v3987 = vld [vmem:[%s13 + $0x8] sm:$0xf]
        %v3988 = vld [vmem:[%s13 + $0xc] sm:$0xf]
        %v3989 = vld [vmem:[#allocation20] sm:$0x1]
        %v3990 = vld [vmem:[%s15] sm:$0xf]
        %v3991 = vld [vmem:[%s15 + $0x4] sm:$0xf]
        %v3992 = vld [vmem:[#allocation21] sm:$0x1]
        %v3993 = vsel %vm867, %v3980, 0.0
        %3994 = vadd.xlane.f32.xlu0 %v3993
        %v3995 = vpop.xlane.xlu0 %3994
        %v3996 = vmul.f32 %v3995, %v871
        %v3997 = vsub.f32 %v3980, %v3996
        %v3998 = vmul.f32 %v3997, %v3997
        %v3999 = vsel %vm867, %v3998, 0.0
        %4000 = vadd.xlane.f32.xlu0 %v3999
        %v4001 = vpop.xlane.xlu0 %4000
        %v4002 = vmul.f32 %v4001, %v871
        %v4003 = vadd.f32 %v4002, 1e-05
        %v4004 = vrsqrt.pop %v4003
        %v4005 = vmul.f32 %v3997, %v4004
        %v4007 = vlaneseq
        %v4008 = vshrl.u32 %v4007, 7
        %v4009 = vsub.s32 0, %v4008
        %v4010 = vrot.slane %v3983, %v4009
        %v4012 = vmul.f32 %v4005, %v4010
        %v4014 = vlaneseq
        %v4015 = vshrl.u32 %v4014, 7
        %v4016 = vsub.s32 0, %v4015
        %v4017 = vrot.slane %v3984, %v4016
        %v4019 = vadd.f32 %v4012, %v4017
        %v4020 = vpack.c.bf16 %v4019, %v4019
        %v4022 = vlaneseq
        %v4023 = vshrl.u32 %v4022, 7
        %v4024 = vsub.s32 0, %v4023
        %v4025 = vrot.slane %v3989, %v4024
        %v4031 = vunpack.c.l.b16 %v3985
        %v4032 = vunpack.c.l.b16 %v3986
        %v4033 = vunpack.c.l.b16 %v3987
        %v4034 = vunpack.c.l.b16 %v3988
        %v4035 = vpack.c.b16 %v4032, %v4031
        %v4036 = vpack.c.b16 %v4034, %v4033
        %v4040 = vsel %vm867, %v4020, 0
        %4042 = vmatprep.subr.bf16.mxu0 0
        %4043 = vmatpush1.bf16.msra.mxu0 %v4035
        %4044 = vmatprep.subr.bf16.mxu0 0
        %4045 = vmatpush1.bf16.msra.mxu0 %v4036
        %4046 = vmatprep.subr.bf16.mxu0 0
        %4047 = vmatpush1.bf16.msra.mxu0 0
        %4048 = vmatprep.subr.bf16.mxu0 0
        %4049 = vmatpush1.bf16.msra.mxu0 0
        %4050 = vmatprep.subr.bf16.mxu0 0
        %4051 = vmatpush1.bf16.msra.mxu0 0
        %4052 = vmatprep.subr.bf16.mxu0 0
        %4053 = vmatpush1.bf16.msra.mxu0 0
        %4054 = vmatprep.subr.bf16.mxu0 0
        %4055 = vmatpush1.bf16.msra.mxu0 0
        %4056 = vmatprep.subr.bf16.mxu0 0
        %4057 = vmatpush1.bf16.msra.mxu0 0
        %4058 = vmatprep.subr.bf16.mxu0 0
        %4059 = vmatpush1.bf16.msra.mxu0 0
        %4060 = vmatprep.subr.bf16.mxu0 0
        %4061 = vmatpush1.bf16.msra.mxu0 0
        %4062 = vmatprep.subr.bf16.mxu0 0
        %4063 = vmatpush1.bf16.msra.mxu0 0
        %4064 = vmatprep.subr.bf16.mxu0 0
        %4065 = vmatpush1.bf16.msra.mxu0 0
        %4066 = vmatprep.subr.bf16.mxu0 0
        %4067 = vmatpush1.bf16.msra.mxu0 0
        %4068 = vmatprep.subr.bf16.mxu0 0
        %4069 = vmatpush1.bf16.msra.mxu0 0
        %4070 = vmatprep.subr.bf16.mxu0 0
        %4071 = vmatpush1.bf16.msra.mxu0 0
        %4072 = vmatprep.subr.bf16.mxu0 0
        %4073 = vmatpush1.bf16.msra.mxu0 0
        %4074 = vmatprep.mubr.bf16.mxu0 0
        %4075 = vmatmul.mubr.bf16.gmra.mrb[0].mxu0 %v4040
        %v4076 = vpop.f32.mrb[0].mxu0
        %v4077 = vadd.f32 %v4025, %v4076
        %v4078 = vpop.f32.mrb[0].mxu0
        %v4079 = vpop.f32.mrb[0].mxu0
        %v4080 = vpop.f32.mrb[0].mxu0
        %4081 = vdwg.mxu0
        %v4082 = vmul.f32 %v4077, 0.5
        %v4083 = vmul.f32 %v4077, 0.70710677
        %v4084 = verf.f32.pop %v4083
        %v4085 = vadd.f32 %v4084, 1.0
        %v4086 = vmul.f32 %v4082, %v4085
        %v4087 = vpack.c.bf16 %v4086, %v4086
        %v4089 = vlaneseq
        %v4090 = vshrl.u32 %v4089, 7
        %v4091 = vsub.s32 0, %v4090
        %v4092 = vrot.slane %v3992, %v4091
        %v4096 = vunpack.c.l.b16 %v3990
        %v4097 = vunpack.c.l.b16 %v3991
        %v4098 = vpack.c.b16 %v4097, %v4096
        %vm4100 = vcmask 130048
        %v4102 = vsel %vm4100, %v4087, 0
        %4104 = vmatprep.subr.bf16.mxu0 0
        %4105 = vmatpush1.bf16.msra.mxu0 %v4098
        %4106 = vmatprep.subr.bf16.mxu0 0
        %4107 = vmatpush1.bf16.msra.mxu0 0
        %4108 = vmatprep.subr.bf16.mxu0 0
        %4109 = vmatpush1.bf16.msra.mxu0 0
        %4110 = vmatprep.subr.bf16.mxu0 0
        %4111 = vmatpush1.bf16.msra.mxu0 0
        %4112 = vmatprep.subr.bf16.mxu0 0
        %4113 = vmatpush1.bf16.msra.mxu0 0
        %4114 = vmatprep.subr.bf16.mxu0 0
        %4115 = vmatpush1.bf16.msra.mxu0 0
        %4116 = vmatprep.subr.bf16.mxu0 0
        %4117 = vmatpush1.bf16.msra.mxu0 0
        %4118 = vmatprep.subr.bf16.mxu0 0
        %4119 = vmatpush1.bf16.msra.mxu0 0
        %4120 = vmatprep.subr.bf16.mxu0 0
        %4121 = vmatpush1.bf16.msra.mxu0 0
        %4122 = vmatprep.subr.bf16.mxu0 0
        %4123 = vmatpush1.bf16.msra.mxu0 0
        %4124 = vmatprep.subr.bf16.mxu0 0
        %4125 = vmatpush1.bf16.msra.mxu0 0
        %4126 = vmatprep.subr.bf16.mxu0 0
        %4127 = vmatpush1.bf16.msra.mxu0 0
        %4128 = vmatprep.subr.bf16.mxu0 0
        %4129 = vmatpush1.bf16.msra.mxu0 0
        %4130 = vmatprep.subr.bf16.mxu0 0
        %4131 = vmatpush1.bf16.msra.mxu0 0
        %4132 = vmatprep.subr.bf16.mxu0 0
        %4133 = vmatpush1.bf16.msra.mxu0 0
        %4134 = vmatprep.subr.bf16.mxu0 0
        %4135 = vmatpush1.bf16.msra.mxu0 0
        %4136 = vmatprep.mubr.bf16.mxu0 0
        %4137 = vmatmul.mubr.bf16.gmra.mrb[0].mxu0 %v4102
        %v4138 = vpop.f32.mrb[0].mxu0
        %v4139 = vadd.f32 %v4092, %v4138
        %v4140 = vpop.f32.mrb[0].mxu0
        %v4141 = vpop.f32.mrb[0].mxu0
        %v4142 = vpop.f32.mrb[0].mxu0
        %4143 = vdwg.mxu0
        %v4144 = vadd.f32 %v3980, %v4139
        %v4145 = vld [vmem:[#allocation23] sm:$0x1]
        %v4146 = vld [vmem:[%s18] sm:$0x1]
        %v4147 = vld [vmem:[%s19] sm:$0xf]
        %v4148 = vld [vmem:[%s19 + $0x4] sm:$0xf]
        %v4149 = vld [vmem:[%s19 + $0x8] sm:$0xf]
        %v4150 = vld [vmem:[%s19 + $0xc] sm:$0xf]
        %v4151 = vld [vmem:[%s20] sm:$0x1]
        %v4152 = vld [vmem:[%s21] sm:$0xf]
        %v4153 = vld [vmem:[%s21 + $0x4] sm:$0xf]
        %v4154 = vld [vmem:[%s22] sm:$0x1]
        %v4155 = vsel %vm867, %v3982, 0.0
        %4156 = vadd.xlane.f32.xlu0 %v4155
        %v4157 = vpop.xlane.xlu0 %4156
        %v4158 = vmul.f32 %v4157, %v871
        %v4159 = vsub.f32 %v3982, %v4158
        %v4160 = vmul.f32 %v4159, %v4159
        %v4161 = vsel %vm867, %v4160, 0.0
        %4162 = vadd.xlane.f32.xlu0 %v4161
        %v4163 = vpop.xlane.xlu0 %4162
        %v4164 = vmul.f32 %v4163, %v871
        %v4165 = vadd.f32 %v4164, 1e-05
        %v4166 = vrsqrt.pop %v4165
        %v4167 = vmul.f32 %v4159, %v4166
        %v4169 = vlaneseq
        %v4170 = vshrl.u32 %v4169, 7
        %v4171 = vsub.s32 0, %v4170
        %v4172 = vrot.slane %v4145, %v4171
        %v4174 = vmul.f32 %v4167, %v4172
        %v4176 = vlaneseq
        %v4177 = vshrl.u32 %v4176, 7
        %v4178 = vsub.s32 0, %v4177
        %v4179 = vrot.slane %v4146, %v4178
        %v4181 = vadd.f32 %v4174, %v4179
        %v4182 = vpack.c.bf16 %v4181, %v4181
        %v4184 = vlaneseq
        %v4185 = vshrl.u32 %v4184, 7
        %v4186 = vsub.s32 0, %v4185
        %v4187 = vrot.slane %v4151, %v4186
        %v4193 = vunpack.c.l.b16 %v4147
        %v4194 = vunpack.c.l.b16 %v4148
        %v4195 = vunpack.c.l.b16 %v4149
        %v4196 = vunpack.c.l.b16 %v4150
        %v4197 = vpack.c.b16 %v4194, %v4193
        %v4198 = vpack.c.b16 %v4196, %v4195
        %v4202 = vsel %vm867, %v4182, 0
        %4204 = vmatprep.subr.bf16.mxu0 0
        %4205 = vmatpush1.bf16.msra.mxu0 %v4197
        %4206 = vmatprep.subr.bf16.mxu0 0
        %4207 = vmatpush1.bf16.msra.mxu0 %v4198
        %4208 = vmatprep.subr.bf16.mxu0 0
        %4209 = vmatpush1.bf16.msra.mxu0 0
        %4210 = vmatprep.subr.bf16.mxu0 0
        %4211 = vmatpush1.bf16.msra.mxu0 0
        %4212 = vmatprep.subr.bf16.mxu0 0
        %4213 = vmatpush1.bf16.msra.mxu0 0
        %4214 = vmatprep.subr.bf16.mxu0 0
        %4215 = vmatpush1.bf16.msra.mxu0 0
        %4216 = vmatprep.subr.bf16.mxu0 0
        %4217 = vmatpush1.bf16.msra.mxu0 0
        %4218 = vmatprep.subr.bf16.mxu0 0
        %4219 = vmatpush1.bf16.msra.mxu0 0
        %4220 = vmatprep.subr.bf16.mxu0 0
        %4221 = vmatpush1.bf16.msra.mxu0 0
        %4222 = vmatprep.subr.bf16.mxu0 0
        %4223 = vmatpush1.bf16.msra.mxu0 0
        %4224 = vmatprep.subr.bf16.mxu0 0
        %4225 = vmatpush1.bf16.msra.mxu0 0
        %4226 = vmatprep.subr.bf16.mxu0 0
        %4227 = vmatpush1.bf16.msra.mxu0 0
        %4228 = vmatprep.subr.bf16.mxu0 0
        %4229 = vmatpush1.bf16.msra.mxu0 0
        %4230 = vmatprep.subr.bf16.mxu0 0
        %4231 = vmatpush1.bf16.msra.mxu0 0
        %4232 = vmatprep.subr.bf16.mxu0 0
        %4233 = vmatpush1.bf16.msra.mxu0 0
        %4234 = vmatprep.subr.bf16.mxu0 0
        %4235 = vmatpush1.bf16.msra.mxu0 0
        %4236 = vmatprep.mubr.bf16.mxu0 0
        %4237 = vmatmul.mubr.bf16.gmra.mrb[0].mxu0 %v4202
        %v4238 = vpop.f32.mrb[0].mxu0
        %v4239 = vadd.f32 %v4187, %v4238
        %v4240 = vpop.f32.mrb[0].mxu0
        %v4241 = vpop.f32.mrb[0].mxu0
        %v4242 = vpop.f32.mrb[0].mxu0
        %4243 = vdwg.mxu0
        %v4244 = vmul.f32 %v4239, 0.5
        %v4245 = vmul.f32 %v4239, 0.70710677
        %v4246 = verf.f32.pop %v4245
        %v4247 = vadd.f32 %v4246, 1.0
        %v4248 = vmul.f32 %v4244, %v4247
        %v4249 = vpack.c.bf16 %v4248, %v4248
        %v4251 = vlaneseq
        %v4252 = vshrl.u32 %v4251, 7
        %v4253 = vsub.s32 0, %v4252
        %v4254 = vrot.slane %v4154, %v4253
        %v4258 = vunpack.c.l.b16 %v4152
        %v4259 = vunpack.c.l.b16 %v4153
        %v4260 = vpack.c.b16 %v4259, %v4258
        %v4263 = vsel %vm4100, %v4249, 0
        %4265 = vmatprep.subr.bf16.mxu0 0
        %4266 = vmatpush1.bf16.msra.mxu0 %v4260
        %4267 = vmatprep.subr.bf16.mxu0 0
        %4268 = vmatpush1.bf16.msra.mxu0 0
        %4269 = vmatprep.subr.bf16.mxu0 0
        %4270 = vmatpush1.bf16.msra.mxu0 0
        %4271 = vmatprep.subr.bf16.mxu0 0
        %4272 = vmatpush1.bf16.msra.mxu0 0
        %4273 = vmatprep.subr.bf16.mxu0 0
        %4274 = vmatpush1.bf16.msra.mxu0 0
        %4275 = vmatprep.subr.bf16.mxu0 0
        %4276 = vmatpush1.bf16.msra.mxu0 0
        %4277 = vmatprep.subr.bf16.mxu0 0
        %4278 = vmatpush1.bf16.msra.mxu0 0
        %4279 = vmatprep.subr.bf16.mxu0 0
        %4280 = vmatpush1.bf16.msra.mxu0 0
        %4281 = vmatprep.subr.bf16.mxu0 0
        %4282 = vmatpush1.bf16.msra.mxu0 0
        %4283 = vmatprep.subr.bf16.mxu0 0
        %4284 = vmatpush1.bf16.msra.mxu0 0
        %4285 = vmatprep.subr.bf16.mxu0 0
        %4286 = vmatpush1.bf16.msra.mxu0 0
        %4287 = vmatprep.subr.bf16.mxu0 0
        %4288 = vmatpush1.bf16.msra.mxu0 0
        %4289 = vmatprep.subr.bf16.mxu0 0
        %4290 = vmatpush1.bf16.msra.mxu0 0
        %4291 = vmatprep.subr.bf16.mxu0 0
        %4292 = vmatpush1.bf16.msra.mxu0 0
        %4293 = vmatprep.subr.bf16.mxu0 0
        %4294 = vmatpush1.bf16.msra.mxu0 0
        %4295 = vmatprep.subr.bf16.mxu0 0
        %4296 = vmatpush1.bf16.msra.mxu0 0
        %4297 = vmatprep.mubr.bf16.mxu0 0
        %4298 = vmatmul.mubr.bf16.gmra.mrb[0].mxu0 %v4263
        %v4299 = vpop.f32.mrb[0].mxu0
        %v4300 = vadd.f32 %v4254, %v4299
        %v4301 = vpop.f32.mrb[0].mxu0
        %v4302 = vpop.f32.mrb[0].mxu0
        %v4303 = vpop.f32.mrb[0].mxu0
        %4304 = vdwg.mxu0
        %v4305 = vadd.f32 %v3982, %v4300
        %4307 = vrot.lane.b32.xlu0 %v4305, 32
        %v4308 = vpop.permute.xlu0 %4307
        %v4310 = vsel %vm867, %v4144, %v4308
        %vm4311 = vcmask 523264
        %4312 = vst.msk [vmem:[%s854] sm:$0xff] %vm4311, %v4310
        %s4313 = sand.u32 %s544, 1
        %s4314 = scalar_lea.sflag [#allocation8], %s4313
        %s4315 = sand.u32 %s544, 1
        %s4316 = smul.addr %s4315, 8
        %s4317 = scalar_lea.vmem [#allocation24], %s4316
        // Predicated region
        $region157: #{tpu_custom_call.1} parent=111 // pred_check
          %p4318 = pneg %p554
        $region158: #{tpu_custom_call.1} parent=111 // pred_check_branch
          %4320 = sbr.rel (%p4318) target = $region160
        $region159: #{tpu_custom_call.1} parent=111 // pred_region
          %s4322 = ssub.s32 128, 128
          %4323 = vsyncadd %s4314, %s4322
          %s4324 = smul.addr %s43, 128
          %s4325 = scalar_lea.hbm %s23, %s4324
          %s4327 = sshll.u32 %s4317, 4
          %s4328 = int_to_ptr.vmem [resolvable:$true] %s4327
          %4330 = dma.vmem_to_hbm [thread:$0]  %s4328, 128, %s4325, %s4314
        $region160: #{tpu_custom_call.1} parent=111 // pred_fallthru
          _
      $region112: #{tpu_custom_call.1} parent=5 // pred_fallthru
        _
      %p4331 = scmp.le.s32.totalorder 2, %s38
      // Predicated region
      $region161: #{tpu_custom_call.1} parent=5 // pred_check
        %p4332 = pneg %p4331
      $region162: #{tpu_custom_call.1} parent=5 // pred_check_branch
        %4334 = sbr.rel (%p4332) target = $region164
      $region163: #{tpu_custom_call.1} parent=5 // pred_region
        %s4335 = ssub.s32 %s38, 2
        // Predicated region
        $region165: #{tpu_custom_call.1} parent=163 // pred_check
          %p4336 = pneg %p560
        $region166: #{tpu_custom_call.1} parent=163 // pred_check_branch
          %4338 = sbr.rel (%p4336) target = $region168
        $region167: #{tpu_custom_call.1} parent=163 // pred_region
          %s4339 = sand.u32 %s545, 1
          %s4340 = scalar_lea.sflag [#allocation8], %s4339
          %s4341 = sand.u32 %s545, 1
          %s4342 = smul.addr %s4341, 8
          %s4343 = scalar_lea.vmem [#allocation24], %s4342
          %4344 = dma.done %s4340, 128
        $region168: #{tpu_custom_call.1} parent=163 // pred_fallthru
          _
      $region164: #{tpu_custom_call.1} parent=5 // pred_fallthru
        _
    $region6: #{tpu_custom_call.1} parent=1 // loop_footer
      %s42 = sadd.s32 1, %s38
    $region7: #{tpu_custom_call.1} parent=1 // loop_footer_branch
      %37 = sbr.rel target = $region3
    $region8: #{tpu_custom_call.1} parent=1 // loop_exit
      _
    %4345 = vsyncpa [#allocation7], 1
    %s4346 = scalar_lea.sflag [#allocation7], 1
    %4347 = vsyncpa %s4346, 1
    %4348 = vsyncpa [#allocation10], 1
    %4349 = vsyncpa [#allocation13], 1
    %4350 = vsyncpa [#allocation16], 1
    %4351 = vsyncpa [#allocation19], 1
    %4352 = vsyncpa [#allocation22], 1
    %4353 = vsyncpa [#allocation8], 1
    %s4354 = scalar_lea.sflag [#allocation8], 1
    %4355 = vsyncpa %s4354, 1

</llo_original>
